<compile_context>
chip_gen: v6e
topology: v6e:2x2x1
jax: 0.10.0
libtpu: 0.0.40
codegen_flags: <defaults>
</compile_context>

<pallas_src>
import jax
import jax.numpy as jnp
import numpy as np
from jax.experimental import pallas as pl
from jax.experimental.pallas import tpu as pltpu


C_PAD = 128          # every channel dim padded to one 128-lane vreg width
NEG_SLOPE = 0.2
GN_EPS = 1e-5

# Flattened padded-activation geometry.
W16 = 18             # padded width of the 16x16 activations
W8 = 10              # padded width of the  8x8 activations
B16 = 13             # row offset of padded-image origin inside the p16 buffer
B8 = 5               # row offset of padded-image origin inside the p8 buffer
P16_ROWS = 352       # p16 scratch rows (>= B16 + 38 + 288, multiple of 16)
P8_ROWS = 112        # p8  scratch rows (>= B8 + 22 + 80,  multiple of 16)
M1 = 288             # layer-1 lhs rows (16x16 outputs in width-18 layout)
M2 = 80              # layer 2-4 lhs rows (8x8 outputs in width-10 layout)

# Select+scatter matrix for the stride-2 layer: row i (-> p8 row 16+i, i.e.
# padded position (i//10, i%10) shifted by the +1 border) picks stride-1
# output row 36*oy + 2*ox; rows landing on pad columns are all-zero.
_DSEL_NP = np.zeros((M2, M1), np.float32)
for _i in range(M2):
    _oy, _ox = _i // W8, _i % W8
    if _ox < 8:
        _DSEL_NP[_i, 36 * _oy + 2 * _ox] = 1.0

# Row-validity mask for the width-10 output layout (1 for the 64 real rows).
_MASK8_NP = np.zeros((M2, C_PAD), np.float32)
for _i in range(M2):
    if _i % W8 < 8:
        _MASK8_NP[_i, :] = 1.0


# ----------------------------------------------------------------------------
# Fused Pallas kernel: one batch sample per grid step.
# ----------------------------------------------------------------------------
def _fused_discriminator_kernel(x_ref, w0_ref, w_ref, dsel_ref, m8_ref,
                                g_ref, b_ref, out_ref, p16, p8):
    """Whole d_layers=2 Discriminator forward for ONE sample.

    x_ref   : (1, 288, 128) bf16 layer-0 im2col lhs (27 real cols, pad rows 0)
    w0_ref  : (128, 128)    bf16 layer-0 folded weight (27 real rows, 32 cols)
    w_ref   : (4, 9, 128, 128) bf16 layers 1-4 weights, tap-major (Cin, Cout)
    dsel_ref: (80, 288)     bf16 stride-2 select+scatter matrix
    m8_ref  : (80, 128)     f32  row-validity mask for the 8x8 layout
    g_ref   : (2, 128)      f32  GroupNorm gammas (conv layers 2 and 3)
    b_ref   : (2, 128)      f32  GroupNorm betas  (conv layers 2 and 3)
    out_ref : (1, 80, 128)  f32  final conv output (row 10*y+x, lane 0 real)
    p16     : (352, 128)    bf16 scratch, flattened padded 16x16 activation
    p8      : (112, 128)    bf16 scratch, flattened padded  8x8 activation
    """

    def leaky(v):
        return jnp.where(v >= 0.0, v, NEG_SLOPE * v)

    def conv3x3(src, base, wp, m, layer):
        # 9 shifted CONTIGUOUS views of the flattened padded activation, each
        # feeding one (m,128)@(128,128) bf16 matmul with f32 accumulation.
        acc = None
        for kh in range(3):
            for kw in range(3):
                start = base + kh * wp + kw
                lhs = src[start:start + m, :]
                d = jnp.dot(lhs, w_ref[layer, 3 * kh + kw],
                            preferred_element_type=jnp.float32)
                acc = d if acc is None else acc + d
        return acc

    def gn_leaky(v, idx):
        # GroupNorm(num_groups=1) over the 64 real rows x 128 real channels.
        mask = m8_ref[...]
        vm = v * mask
        cnt = 64.0 * 128.0
        s = jnp.sum(vm)
        s2 = jnp.sum(vm * vm)          # single pass: sum & sumsq together
        mean = s / cnt
        var = s2 / cnt - mean * mean
        y = (v - mean) * jax.lax.rsqrt(var + GN_EPS)
        y = y * g_ref[idx:idx + 1, :] + b_ref[idx:idx + 1, :]
        return leaky(y) * mask         # re-zero pad rows before writeback

    # Zero only the never-written border strips (every step: v7x-safe).
    p16[0:32, :] = jnp.zeros((32, C_PAD), jnp.bfloat16)
    p16[320:352, :] = jnp.zeros((32, C_PAD), jnp.bfloat16)
    p8[0:16, :] = jnp.zeros((16, C_PAD), jnp.bfloat16)
    p8[96:112, :] = jnp.zeros((16, C_PAD), jnp.bfloat16)

    # --- layer 0: Conv(3->32, s=1) + LeakyReLU, folded into ONE matmul -------
    a0 = leaky(jnp.dot(x_ref[0], w0_ref[...],
                       preferred_element_type=jnp.float32))      # (288, 128)
    p16[32:320, :] = a0.astype(jnp.bfloat16)                     # aligned store

    # --- layer 1: Conv(32->64, s=2) + LeakyReLU --------------------------------
    # Stride-1 conv, then a 0/1 select+scatter matmul drops the stride-2 grid
    # directly into the padded 8x8 layout (pad columns come out exactly 0).
    a1f = conv3x3(p16, B16, W16, M1, 0)                          # (288, 128)
    a1 = leaky(jnp.dot(dsel_ref[...], a1f.astype(jnp.bfloat16),
                       preferred_element_type=jnp.float32))      # (80, 128)
    p8[16:96, :] = a1.astype(jnp.bfloat16)

    # --- layer 2: Conv(64->128, s=1) + GroupNorm + LeakyReLU -------------------
    a2 = gn_leaky(conv3x3(p8, B8, W8, M2, 1), 0)
    p8[16:96, :] = a2.astype(jnp.bfloat16)

    # --- layer 3: Conv(128->128, s=1) + GroupNorm + LeakyReLU ------------------
    a3 = gn_leaky(conv3x3(p8, B8, W8, M2, 2), 1)
    p8[16:96, :] = a3.astype(jnp.bfloat16)

    # --- layer 4: Conv(128->1, s=1), no activation -----------------------------
    out_ref[0] = conv3x3(p8, B8, W8, M2, 3)                      # (80, 128)


# ----------------------------------------------------------------------------
# Wrapper / glue
# ----------------------------------------------------------------------------
def _pack_conv_weight(w_oihw):
    """(Cout, Cin, 3, 3) -> (9, 128, 128) tap-major, zero padded."""
    cout, cin = w_oihw.shape[0], w_oihw.shape[1]
    wt = jnp.transpose(w_oihw, (2, 3, 1, 0)).reshape(9, cin, cout)
    return jnp.zeros((9, C_PAD, C_PAD), jnp.float32).at[:, :cin, :cout].set(wt)


def _pack_layer0_weight(w_oihw):
    """(32, 3, 3, 3) -> (128, 128): row = (kh*3+kw)*3 + cin, col = cout."""
    cout = w_oihw.shape[0]
    wt = jnp.transpose(w_oihw, (2, 3, 1, 0)).reshape(27, cout)
    return jnp.zeros((C_PAD, C_PAD), jnp.float32).at[:27, :cout].set(wt)


@jax.jit
def _discriminator_forward_impl(x_nchw, weights, gammas, betas):
    n = x_nchw.shape[0]

    # Layer-0 im2col built by XLA: (N,16,16,27) in the width-18 row layout,
    # garbage rows (x >= 16) and pad channels exactly zero, cast once to bf16.
    x_nhwc = jnp.transpose(x_nchw, (0, 2, 3, 1)).astype(jnp.float32)
    xp = jnp.pad(x_nhwc, ((0, 0), (1, 1), (1, 1), (0, 0)))        # (N,18,18,3)
    taps = [xp[:, kh:kh + 16, kw:kw + 16, :]
            for kh in range(3) for kw in range(3)]
    im = jnp.concatenate(taps, axis=-1)                           # (N,16,16,27)
    im = jnp.pad(im, ((0, 0), (0, 0), (0, 2), (0, C_PAD - 27)))   # (N,16,18,128)
    x_im2col = im.reshape(n, M1, C_PAD).astype(jnp.bfloat16)

    w0 = _pack_layer0_weight(weights[0]).astype(jnp.bfloat16)
    wrest = jnp.stack([_pack_conv_weight(w) for w in weights[1:]]
                      ).astype(jnp.bfloat16)                      # (4,9,128,128)
    g = jnp.stack([jnp.asarray(x, jnp.float32) for x in gammas])  # (2, 128)
    b = jnp.stack([jnp.asarray(x, jnp.float32) for x in betas])   # (2, 128)
    dsel = jnp.asarray(_DSEL_NP, jnp.bfloat16)
    mask8 = jnp.asarray(_MASK8_NP, jnp.float32)

    out = pl.pallas_call(
        _fused_discriminator_kernel,
        out_shape=jax.ShapeDtypeStruct((n, M2, C_PAD), jnp.float32),
        grid_spec=pltpu.PrefetchScalarGridSpec(
            num_scalar_prefetch=0,
            grid=(n,),
            in_specs=[
                pl.BlockSpec((1, M1, C_PAD), lambda i: (i, 0, 0)),
                pl.BlockSpec((C_PAD, C_PAD), lambda i: (0, 0)),
                pl.BlockSpec((4, 9, C_PAD, C_PAD), lambda i: (0, 0, 0, 0)),
                pl.BlockSpec((M2, M1), lambda i: (0, 0)),
                pl.BlockSpec((M2, C_PAD), lambda i: (0, 0)),
                pl.BlockSpec((2, C_PAD), lambda i: (0, 0)),
                pl.BlockSpec((2, C_PAD), lambda i: (0, 0)),
            ],
            out_specs=pl.BlockSpec((1, M2, C_PAD), lambda i: (i, 0, 0)),
            scratch_shapes=[
                pltpu.VMEM((P16_ROWS, C_PAD), jnp.bfloat16),
                pltpu.VMEM((P8_ROWS, C_PAD), jnp.bfloat16),
            ],
        ),
        compiler_params=pltpu.CompilerParams(
            dimension_semantics=("parallel",),
            vmem_limit_bytes=32 * 1024 * 1024,
        ),
    )(x_im2col, w0, wrest, dsel, mask8, g, b)

    # Rows are 10*y+x (x<8 real), lane 0 is the single real output channel.
    vals = out[:, :, 0].reshape(n, 8, W8)[:, :, :8]
    return vals[:, None, :, :]                                    # (N,1,8,8)


def discriminator_forward_pallas(x_nchw, params):
    # TODO(synk): the fused kernel is specialised to the d_layers=2 topology on
    # 16x16 inputs; other args.d_layers / resolutions need a re-derived kernel.
    assert len(params) == 5
    assert tuple(p["stride"] for p in params) == (1, 2, 1, 1, 1)
    assert [p["gn"] is not None for p in params] == [False, False, True, True, False]
    assert x_nchw.shape[1:] == (3, 16, 16), x_nchw.shape
    weights = tuple(p["w"] for p in params)
    expected = ((32, 3), (64, 32), (128, 64), (128, 128), (1, 128))
    assert tuple((w.shape[0], w.shape[1]) for w in weights) == expected
    gammas = tuple(p["gn"][0] for p in params if p["gn"] is not None)
    betas = tuple(p["gn"][1] for p in params if p["gn"] is not None)
    return _discriminator_forward_impl(x_nchw, weights, gammas, betas)


# ----------------------------------------------------------------------------
# Parameter construction (deterministic, in-script)
# ----------------------------------------------------------------------------
def spectral_normalize(w_oihw, key, n_iter=30, eps=1e-12):
    """W / sigma_max(W) with W flattened to (Cout, Cin*Kh*Kw), power iteration."""
    cout = w_oihw.shape[0]
    wm = w_oihw.reshape(cout, -1)
    u = jax.random.normal(key, (cout,), dtype=jnp.float32)
    u = u / (jnp.linalg.norm(u) + eps)
    v = None
    for _ in range(n_iter):
        v = wm.T @ u
        v = v / (jnp.linalg.norm(v) + eps)
        u = wm @ v
        u = u / (jnp.linalg.norm(u) + eps)
    sigma = u @ (wm @ v)
    return w_oihw / sigma


def build_discriminator_params(key, d_layers=2):
    """Mirrors Discriminator.__init__ layer shapes for the given d_layers."""
    # TODO(synk): init_D_weights / spectral-norm (u, v) buffer state from a
    # PyTorch checkpoint are not reproducible here; weights use a deterministic
    # N(0, 0.02) init and the converged spectral norm is applied instead.
    specs = []  # (cin, cout, stride, has_gn, has_act)
    channel, out_channel = 32, 32
    specs.append((3, channel, 1, False, True))
    for _ in range(1, d_layers):
        specs.append((out_channel, channel * 2, 2, False, True))
        specs.append((channel * 2, channel * 4, 1, True, True))
        out_channel = channel * 4
        channel *= 2
    specs.append((channel * 2, channel * 2, 1, True, True))
    specs.append((channel * 2, 1, 1, False, False))

    params = []
    for (cin, cout, stride, has_gn, has_act) in specs:
        key, kw, ku = jax.random.split(key, 3)
        w = 0.02 * jax.random.normal(kw, (cout, cin, 3, 3), dtype=jnp.float32)
        w = spectral_normalize(w, ku)
        gn = None
        if has_gn:
            gn = (jnp.ones((cout,), jnp.float32), jnp.zeros((cout,), jnp.float32))
        params.append(dict(w=w, stride=stride, gn=gn, act=has_act))
    return params


# ----------------------------------------------------------------------------
# Pure-JAX reference (f32, matches PyTorch semantics) for validation
# ----------------------------------------------------------------------------
def discriminator_forward_ref(x_nchw, params):
    x = x_nchw
    for p in params:
        x = jax.lax.conv_general_dilated(
            x, p["w"], window_strides=(p["stride"],) * 2,
            padding=((1, 1), (1, 1)),
            dimension_numbers=("NCHW", "OIHW", "NCHW"),
            precision=jax.lax.Precision.HIGHEST,
        )
        if p["gn"] is not None:
            gamma, beta = p["gn"]
            mean = jnp.mean(x, axis=(1, 2, 3), keepdims=True)
            var = jnp.mean((x - mean) ** 2, axis=(1, 2, 3), keepdims=True)
            x = (x - mean) * jax.lax.rsqrt(var + GN_EPS)
            x = x * gamma.reshape(1, -1, 1, 1) + beta.reshape(1, -1, 1, 1)
        if p["act"]:
            x = jnp.where(x >= 0.0, x, NEG_SLOPE * x)
    return x


# ----------------------------------------------------------------------------
if __name__ == "__main__":
    key = jax.random.PRNGKey(0)
    k_params, k_x = jax.random.split(key)

    params = build_discriminator_params(k_params, d_layers=2)
    x = jax.random.normal(k_x, (2, 3, 16, 16), dtype=jnp.float32)  # NCHW

    out = jax.block_until_ready(discriminator_forward_pallas(x, params))
    ref = jax.block_until_ready(discriminator_forward_ref(x, params))

    assert out.shape == (2, 1, 8, 8), out.shape
    assert bool(jnp.all(jnp.isfinite(out)))
    # Kernel uses bf16 MXU operands with f32 accumulation; reference is f32.
    np.testing.assert_allclose(np.asarray(out), np.asarray(ref), rtol=2e-2, atol=2e-2)

    print("KERNEL_OK")
</pallas_src>

<mosaic_0001>
module attributes {stable_mosaic.version = 11 : i64} {
  func.func @_fused_discriminator_kernel(%arg0: i32, %arg1: memref<1x288x128xbf16, #tpu.memory_space<vmem>>, %arg2: memref<128x128xbf16, #tpu.memory_space<vmem>>, %arg3: memref<4x9x128x128xbf16, #tpu.memory_space<vmem>>, %arg4: memref<80x288xbf16, #tpu.memory_space<vmem>>, %arg5: memref<80x128xf32, #tpu.memory_space<vmem>>, %arg6: memref<2x128xf32, #tpu.memory_space<vmem>>, %arg7: memref<2x128xf32, #tpu.memory_space<vmem>>, %arg8: memref<1x80x128xf32, #tpu.memory_space<vmem>>, %arg9: memref<352x128xbf16, #tpu.memory_space<vmem>>, %arg10: memref<112x128xbf16, #tpu.memory_space<vmem>>) attributes {dimension_semantics = [#tpu.dimension_semantics<parallel>], iteration_bounds = array<i64: 2>, scalar_prefetch = 0 : i64, scratch_operands = 2 : i64, tpu.core_type = #tpu.core_type<tc>, window_params = [{transform_indices = @transform_0, window_bounds = array<i64: 1, 288, 128>}, {pipeline_mode = #tpu.pipeline_mode<synchronous>, transform_indices = @transform_1, window_bounds = array<i64: 128, 128>}, {pipeline_mode = #tpu.pipeline_mode<synchronous>, transform_indices = @transform_2, window_bounds = array<i64: 4, 9, 128, 128>}, {pipeline_mode = #tpu.pipeline_mode<synchronous>, transform_indices = @transform_3, window_bounds = array<i64: 80, 288>}, {pipeline_mode = #tpu.pipeline_mode<synchronous>, transform_indices = @transform_4, window_bounds = array<i64: 80, 128>}, {pipeline_mode = #tpu.pipeline_mode<synchronous>, transform_indices = @transform_5, window_bounds = array<i64: 2, 128>}, {pipeline_mode = #tpu.pipeline_mode<synchronous>, transform_indices = @transform_6, window_bounds = array<i64: 2, 128>}, {transform_indices = @transform_7, window_bounds = array<i64: 1, 80, 128>}]} {
    %cst = arith.constant 0.000000e+00 : bf16
    %0 = vector.broadcast %cst : bf16 to vector<32x128xbf16>
    %c0 = arith.constant 0 : index
    %c0_0 = arith.constant 0 : index
    %1 = vector.load %arg9[%c0, %c0_0] : memref<352x128xbf16, #tpu.memory_space<vmem>>, vector<32x128xbf16>
    tpu.vector_store %arg9[%c0, %c0_0], %0 {strides = array<i32>} : memref<352x128xbf16, #tpu.memory_space<vmem>>, vector<32x128xbf16>,
    %cst_1 = arith.constant 0.000000e+00 : bf16
    %2 = vector.broadcast %cst_1 : bf16 to vector<32x128xbf16>
    %c320 = arith.constant 320 : index
    %c0_2 = arith.constant 0 : index
    %3 = vector.load %arg9[%c320, %c0_2] : memref<352x128xbf16, #tpu.memory_space<vmem>>, vector<32x128xbf16>
    tpu.vector_store %arg9[%c320, %c0_2], %2 {strides = array<i32>} : memref<352x128xbf16, #tpu.memory_space<vmem>>, vector<32x128xbf16>,
    %cst_3 = arith.constant 0.000000e+00 : bf16
    %4 = vector.broadcast %cst_3 : bf16 to vector<16x128xbf16>
    %c0_4 = arith.constant 0 : index
    %c0_5 = arith.constant 0 : index
    %5 = vector.load %arg10[%c0_4, %c0_5] : memref<112x128xbf16, #tpu.memory_space<vmem>>, vector<16x128xbf16>
    tpu.vector_store %arg10[%c0_4, %c0_5], %4 {strides = array<i32>} : memref<112x128xbf16, #tpu.memory_space<vmem>>, vector<16x128xbf16>,
    %cst_6 = arith.constant 0.000000e+00 : bf16
    %6 = vector.broadcast %cst_6 : bf16 to vector<16x128xbf16>
    %c96 = arith.constant 96 : index
    %c0_7 = arith.constant 0 : index
    %7 = vector.load %arg10[%c96, %c0_7] : memref<112x128xbf16, #tpu.memory_space<vmem>>, vector<16x128xbf16>
    tpu.vector_store %arg10[%c96, %c0_7], %6 {strides = array<i32>} : memref<112x128xbf16, #tpu.memory_space<vmem>>, vector<16x128xbf16>,
    %c0_8 = arith.constant 0 : index
    %c0_9 = arith.constant 0 : index
    %c0_10 = arith.constant 0 : index
    %8 = vector.load %arg1[%c0_8, %c0_9, %c0_10] : memref<1x288x128xbf16, #tpu.memory_space<vmem>>, vector<1x288x128xbf16>
    %9 = vector.shape_cast %8 : vector<1x288x128xbf16> to vector<288x128xbf16>
    %c0_11 = arith.constant 0 : index
    %c0_12 = arith.constant 0 : index
    %10 = vector.load %arg2[%c0_11, %c0_12] : memref<128x128xbf16, #tpu.memory_space<vmem>>, vector<128x128xbf16>
    %cst_13 = arith.constant dense<0.000000e+00> : vector<288x128xf32>
    %11 = tpu.matmul %9, %10, %cst_13 {dimension_numbers = #tpu.dot_dimension_numbers<[1], [0], [0], [1], [0, 0, 1, 1], [], []>} : vector<288x128xbf16>, vector<128x128xbf16>, vector<288x128xf32> -> vector<288x128xf32>
    %cst_14 = arith.constant 0.000000e+00 : f32
    %12 = vector.broadcast %cst_14 : f32 to vector<288x128xf32>
    %13 = arith.cmpf oge, %11, %12 : vector<288x128xf32>
    %cst_15 = arith.constant 2.000000e-01 : f32
    %14 = vector.broadcast %cst_15 : f32 to vector<288x128xf32>
    %15 = arith.mulf %14, %11 : vector<288x128xf32>
    %16 = arith.select %13, %11, %15 : vector<288x128xi1>, vector<288x128xf32>
    %17 = arith.truncf %16 : vector<288x128xf32> to vector<288x128xbf16>
    %c32 = arith.constant 32 : index
    %c0_16 = arith.constant 0 : index
    %18 = vector.load %arg9[%c32, %c0_16] : memref<352x128xbf16, #tpu.memory_space<vmem>>, vector<288x128xbf16>
    tpu.vector_store %arg9[%c32, %c0_16], %17 {strides = array<i32>} : memref<352x128xbf16, #tpu.memory_space<vmem>>, vector<288x128xbf16>,
    %c13 = arith.constant 13 : index
    %c0_17 = arith.constant 0 : index
    %19 = vector.load %arg9[%c13, %c0_17] : memref<352x128xbf16, #tpu.memory_space<vmem>>, vector<288x128xbf16>
    %c0_18 = arith.constant 0 : index
    %c0_19 = arith.constant 0 : index
    %c0_20 = arith.constant 0 : index
    %c0_21 = arith.constant 0 : index
    %20 = vector.load %arg3[%c0_18, %c0_19, %c0_20, %c0_21] : memref<4x9x128x128xbf16, #tpu.memory_space<vmem>>, vector<1x1x128x128xbf16>
    %21 = vector.shape_cast %20 : vector<1x1x128x128xbf16> to vector<128x128xbf16>
    %cst_22 = arith.constant dense<0.000000e+00> : vector<288x128xf32>
    %22 = tpu.matmul %19, %21, %cst_22 {dimension_numbers = #tpu.dot_dimension_numbers<[1], [0], [0], [1], [0, 0, 1, 1], [], []>} : vector<288x128xbf16>, vector<128x128xbf16>, vector<288x128xf32> -> vector<288x128xf32>
    %c14 = arith.constant 14 : index
    %c0_23 = arith.constant 0 : index
    %23 = vector.load %arg9[%c14, %c0_23] : memref<352x128xbf16, #tpu.memory_space<vmem>>, vector<288x128xbf16>
    %c0_24 = arith.constant 0 : index
    %c1 = arith.constant 1 : index
    %c0_25 = arith.constant 0 : index
    %c0_26 = arith.constant 0 : index
    %24 = vector.load %arg3[%c0_24, %c1, %c0_25, %c0_26] : memref<4x9x128x128xbf16, #tpu.memory_space<vmem>>, vector<1x1x128x128xbf16>
    %25 = vector.shape_cast %24 : vector<1x1x128x128xbf16> to vector<128x128xbf16>
    %cst_27 = arith.constant dense<0.000000e+00> : vector<288x128xf32>
    %26 = tpu.matmul %23, %25, %cst_27 {dimension_numbers = #tpu.dot_dimension_numbers<[1], [0], [0], [1], [0, 0, 1, 1], [], []>} : vector<288x128xbf16>, vector<128x128xbf16>, vector<288x128xf32> -> vector<288x128xf32>
    %27 = arith.addf %22, %26 : vector<288x128xf32>
    %c15 = arith.constant 15 : index
    %c0_28 = arith.constant 0 : index
    %28 = vector.load %arg9[%c15, %c0_28] : memref<352x128xbf16, #tpu.memory_space<vmem>>, vector<288x128xbf16>
    %c0_29 = arith.constant 0 : index
    %c2 = arith.constant 2 : index
    %c0_30 = arith.constant 0 : index
    %c0_31 = arith.constant 0 : index
    %29 = vector.load %arg3[%c0_29, %c2, %c0_30, %c0_31] : memref<4x9x128x128xbf16, #tpu.memory_space<vmem>>, vector<1x1x128x128xbf16>
    %30 = vector.shape_cast %29 : vector<1x1x128x128xbf16> to vector<128x128xbf16>
    %cst_32 = arith.constant dense<0.000000e+00> : vector<288x128xf32>
    %31 = tpu.matmul %28, %30, %cst_32 {dimension_numbers = #tpu.dot_dimension_numbers<[1], [0], [0], [1], [0, 0, 1, 1], [], []>} : vector<288x128xbf16>, vector<128x128xbf16>, vector<288x128xf32> -> vector<288x128xf32>
    %32 = arith.addf %27, %31 : vector<288x128xf32>
    %c31 = arith.constant 31 : index
    %c0_33 = arith.constant 0 : index
    %33 = vector.load %arg9[%c31, %c0_33] : memref<352x128xbf16, #tpu.memory_space<vmem>>, vector<288x128xbf16>
    %c0_34 = arith.constant 0 : index
    %c3 = arith.constant 3 : index
    %c0_35 = arith.constant 0 : index
    %c0_36 = arith.constant 0 : index
    %34 = vector.load %arg3[%c0_34, %c3, %c0_35, %c0_36] : memref<4x9x128x128xbf16, #tpu.memory_space<vmem>>, vector<1x1x128x128xbf16>
    %35 = vector.shape_cast %34 : vector<1x1x128x128xbf16> to vector<128x128xbf16>
    %cst_37 = arith.constant dense<0.000000e+00> : vector<288x128xf32>
    %36 = tpu.matmul %33, %35, %cst_37 {dimension_numbers = #tpu.dot_dimension_numbers<[1], [0], [0], [1], [0, 0, 1, 1], [], []>} : vector<288x128xbf16>, vector<128x128xbf16>, vector<288x128xf32> -> vector<288x128xf32>
    %37 = arith.addf %32, %36 : vector<288x128xf32>
    %c32_38 = arith.constant 32 : index
    %c0_39 = arith.constant 0 : index
    %38 = vector.load %arg9[%c32_38, %c0_39] : memref<352x128xbf16, #tpu.memory_space<vmem>>, vector<288x128xbf16>
    %c0_40 = arith.constant 0 : index
    %c4 = arith.constant 4 : index
    %c0_41 = arith.constant 0 : index
    %c0_42 = arith.constant 0 : index
    %39 = vector.load %arg3[%c0_40, %c4, %c0_41, %c0_42] : memref<4x9x128x128xbf16, #tpu.memory_space<vmem>>, vector<1x1x128x128xbf16>
    %40 = vector.shape_cast %39 : vector<1x1x128x128xbf16> to vector<128x128xbf16>
    %cst_43 = arith.constant dense<0.000000e+00> : vector<288x128xf32>
    %41 = tpu.matmul %38, %40, %cst_43 {dimension_numbers = #tpu.dot_dimension_numbers<[1], [0], [0], [1], [0, 0, 1, 1], [], []>} : vector<288x128xbf16>, vector<128x128xbf16>, vector<288x128xf32> -> vector<288x128xf32>
    %42 = arith.addf %37, %41 : vector<288x128xf32>
    %c33 = arith.constant 33 : index
    %c0_44 = arith.constant 0 : index
    %43 = vector.load %arg9[%c33, %c0_44] : memref<352x128xbf16, #tpu.memory_space<vmem>>, vector<288x128xbf16>
    %c0_45 = arith.constant 0 : index
    %c5 = arith.constant 5 : index
    %c0_46 = arith.constant 0 : index
    %c0_47 = arith.constant 0 : index
    %44 = vector.load %arg3[%c0_45, %c5, %c0_46, %c0_47] : memref<4x9x128x128xbf16, #tpu.memory_space<vmem>>, vector<1x1x128x128xbf16>
    %45 = vector.shape_cast %44 : vector<1x1x128x128xbf16> to vector<128x128xbf16>
    %cst_48 = arith.constant dense<0.000000e+00> : vector<288x128xf32>
    %46 = tpu.matmul %43, %45, %cst_48 {dimension_numbers = #tpu.dot_dimension_numbers<[1], [0], [0], [1], [0, 0, 1, 1], [], []>} : vector<288x128xbf16>, vector<128x128xbf16>, vector<288x128xf32> -> vector<288x128xf32>
    %47 = arith.addf %42, %46 : vector<288x128xf32>
    %c49 = arith.constant 49 : index
    %c0_49 = arith.constant 0 : index
    %48 = vector.load %arg9[%c49, %c0_49] : memref<352x128xbf16, #tpu.memory_space<vmem>>, vector<288x128xbf16>
    %c0_50 = arith.constant 0 : index
    %c6 = arith.constant 6 : index
    %c0_51 = arith.constant 0 : index
    %c0_52 = arith.constant 0 : index
    %49 = vector.load %arg3[%c0_50, %c6, %c0_51, %c0_52] : memref<4x9x128x128xbf16, #tpu.memory_space<vmem>>, vector<1x1x128x128xbf16>
    %50 = vector.shape_cast %49 : vector<1x1x128x128xbf16> to vector<128x128xbf16>
    %cst_53 = arith.constant dense<0.000000e+00> : vector<288x128xf32>
    %51 = tpu.matmul %48, %50, %cst_53 {dimension_numbers = #tpu.dot_dimension_numbers<[1], [0], [0], [1], [0, 0, 1, 1], [], []>} : vector<288x128xbf16>, vector<128x128xbf16>, vector<288x128xf32> -> vector<288x128xf32>
    %52 = arith.addf %47, %51 : vector<288x128xf32>
    %c50 = arith.constant 50 : index
    %c0_54 = arith.constant 0 : index
    %53 = vector.load %arg9[%c50, %c0_54] : memref<352x128xbf16, #tpu.memory_space<vmem>>, vector<288x128xbf16>
    %c0_55 = arith.constant 0 : index
    %c7 = arith.constant 7 : index
    %c0_56 = arith.constant 0 : index
    %c0_57 = arith.constant 0 : index
    %54 = vector.load %arg3[%c0_55, %c7, %c0_56, %c0_57] : memref<4x9x128x128xbf16, #tpu.memory_space<vmem>>, vector<1x1x128x128xbf16>
    %55 = vector.shape_cast %54 : vector<1x1x128x128xbf16> to vector<128x128xbf16>
    %cst_58 = arith.constant dense<0.000000e+00> : vector<288x128xf32>
    %56 = tpu.matmul %53, %55, %cst_58 {dimension_numbers = #tpu.dot_dimension_numbers<[1], [0], [0], [1], [0, 0, 1, 1], [], []>} : vector<288x128xbf16>, vector<128x128xbf16>, vector<288x128xf32> -> vector<288x128xf32>
    %57 = arith.addf %52, %56 : vector<288x128xf32>
    %c51 = arith.constant 51 : index
    %c0_59 = arith.constant 0 : index
    %58 = vector.load %arg9[%c51, %c0_59] : memref<352x128xbf16, #tpu.memory_space<vmem>>, vector<288x128xbf16>
    %c0_60 = arith.constant 0 : index
    %c8 = arith.constant 8 : index
    %c0_61 = arith.constant 0 : index
    %c0_62 = arith.constant 0 : index
    %59 = vector.load %arg3[%c0_60, %c8, %c0_61, %c0_62] : memref<4x9x128x128xbf16, #tpu.memory_space<vmem>>, vector<1x1x128x128xbf16>
    %60 = vector.shape_cast %59 : vector<1x1x128x128xbf16> to vector<128x128xbf16>
    %cst_63 = arith.constant dense<0.000000e+00> : vector<288x128xf32>
    %61 = tpu.matmul %58, %60, %cst_63 {dimension_numbers = #tpu.dot_dimension_numbers<[1], [0], [0], [1], [0, 0, 1, 1], [], []>} : vector<288x128xbf16>, vector<128x128xbf16>, vector<288x128xf32> -> vector<288x128xf32>
    %62 = arith.addf %57, %61 : vector<288x128xf32>
    %c0_64 = arith.constant 0 : index
    %c0_65 = arith.constant 0 : index
    %63 = vector.load %arg4[%c0_64, %c0_65] : memref<80x288xbf16, #tpu.memory_space<vmem>>, vector<80x288xbf16>
    %64 = arith.truncf %62 : vector<288x128xf32> to vector<288x128xbf16>
    %cst_66 = arith.constant dense<0.000000e+00> : vector<80x128xf32>
    %65 = tpu.matmul %63, %64, %cst_66 {dimension_numbers = #tpu.dot_dimension_numbers<[1], [0], [0], [1], [0, 0, 1, 1], [], []>} : vector<80x288xbf16>, vector<288x128xbf16>, vector<80x128xf32> -> vector<80x128xf32>
    %cst_67 = arith.constant 0.000000e+00 : f32
    %66 = vector.broadcast %cst_67 : f32 to vector<80x128xf32>
    %67 = arith.cmpf oge, %65, %66 : vector<80x128xf32>
    %cst_68 = arith.constant 2.000000e-01 : f32
    %68 = vector.broadcast %cst_68 : f32 to vector<80x128xf32>
    %69 = arith.mulf %68, %65 : vector<80x128xf32>
    %70 = arith.select %67, %65, %69 : vector<80x128xi1>, vector<80x128xf32>
    %71 = arith.truncf %70 : vector<80x128xf32> to vector<80x128xbf16>
    %c16 = arith.constant 16 : index
    %c0_69 = arith.constant 0 : index
    %72 = vector.load %arg10[%c16, %c0_69] : memref<112x128xbf16, #tpu.memory_space<vmem>>, vector<80x128xbf16>
    tpu.vector_store %arg10[%c16, %c0_69], %71 {strides = array<i32>} : memref<112x128xbf16, #tpu.memory_space<vmem>>, vector<80x128xbf16>,
    %c5_70 = arith.constant 5 : index
    %c0_71 = arith.constant 0 : index
    %73 = vector.load %arg10[%c5_70, %c0_71] : memref<112x128xbf16, #tpu.memory_space<vmem>>, vector<80x128xbf16>
    %c1_72 = arith.constant 1 : index
    %c0_73 = arith.constant 0 : index
    %c0_74 = arith.constant 0 : index
    %c0_75 = arith.constant 0 : index
    %74 = vector.load %arg3[%c1_72, %c0_73, %c0_74, %c0_75] : memref<4x9x128x128xbf16, #tpu.memory_space<vmem>>, vector<1x1x128x128xbf16>
    %75 = vector.shape_cast %74 : vector<1x1x128x128xbf16> to vector<128x128xbf16>
    %cst_76 = arith.constant dense<0.000000e+00> : vector<80x128xf32>
    %76 = tpu.matmul %73, %75, %cst_76 {dimension_numbers = #tpu.dot_dimension_numbers<[1], [0], [0], [1], [0, 0, 1, 1], [], []>} : vector<80x128xbf16>, vector<128x128xbf16>, vector<80x128xf32> -> vector<80x128xf32>
    %c6_77 = arith.constant 6 : index
    %c0_78 = arith.constant 0 : index
    %77 = vector.load %arg10[%c6_77, %c0_78] : memref<112x128xbf16, #tpu.memory_space<vmem>>, vector<80x128xbf16>
    %c1_79 = arith.constant 1 : index
    %c1_80 = arith.constant 1 : index
    %c0_81 = arith.constant 0 : index
    %c0_82 = arith.constant 0 : index
    %78 = vector.load %arg3[%c1_79, %c1_80, %c0_81, %c0_82] : memref<4x9x128x128xbf16, #tpu.memory_space<vmem>>, vector<1x1x128x128xbf16>
    %79 = vector.shape_cast %78 : vector<1x1x128x128xbf16> to vector<128x128xbf16>
    %cst_83 = arith.constant dense<0.000000e+00> : vector<80x128xf32>
    %80 = tpu.matmul %77, %79, %cst_83 {dimension_numbers = #tpu.dot_dimension_numbers<[1], [0], [0], [1], [0, 0, 1, 1], [], []>} : vector<80x128xbf16>, vector<128x128xbf16>, vector<80x128xf32> -> vector<80x128xf32>
    %81 = arith.addf %76, %80 : vector<80x128xf32>
    %c7_84 = arith.constant 7 : index
    %c0_85 = arith.constant 0 : index
    %82 = vector.load %arg10[%c7_84, %c0_85] : memref<112x128xbf16, #tpu.memory_space<vmem>>, vector<80x128xbf16>
    %c1_86 = arith.constant 1 : index
    %c2_87 = arith.constant 2 : index
    %c0_88 = arith.constant 0 : index
    %c0_89 = arith.constant 0 : index
    %83 = vector.load %arg3[%c1_86, %c2_87, %c0_88, %c0_89] : memref<4x9x128x128xbf16, #tpu.memory_space<vmem>>, vector<1x1x128x128xbf16>
    %84 = vector.shape_cast %83 : vector<1x1x128x128xbf16> to vector<128x128xbf16>
    %cst_90 = arith.constant dense<0.000000e+00> : vector<80x128xf32>
    %85 = tpu.matmul %82, %84, %cst_90 {dimension_numbers = #tpu.dot_dimension_numbers<[1], [0], [0], [1], [0, 0, 1, 1], [], []>} : vector<80x128xbf16>, vector<128x128xbf16>, vector<80x128xf32> -> vector<80x128xf32>
    %86 = arith.addf %81, %85 : vector<80x128xf32>
    %c15_91 = arith.constant 15 : index
    %c0_92 = arith.constant 0 : index
    %87 = vector.load %arg10[%c15_91, %c0_92] : memref<112x128xbf16, #tpu.memory_space<vmem>>, vector<80x128xbf16>
    %c1_93 = arith.constant 1 : index
    %c3_94 = arith.constant 3 : index
    %c0_95 = arith.constant 0 : index
    %c0_96 = arith.constant 0 : index
    %88 = vector.load %arg3[%c1_93, %c3_94, %c0_95, %c0_96] : memref<4x9x128x128xbf16, #tpu.memory_space<vmem>>, vector<1x1x128x128xbf16>
    %89 = vector.shape_cast %88 : vector<1x1x128x128xbf16> to vector<128x128xbf16>
    %cst_97 = arith.constant dense<0.000000e+00> : vector<80x128xf32>
    %90 = tpu.matmul %87, %89, %cst_97 {dimension_numbers = #tpu.dot_dimension_numbers<[1], [0], [0], [1], [0, 0, 1, 1], [], []>} : vector<80x128xbf16>, vector<128x128xbf16>, vector<80x128xf32> -> vector<80x128xf32>
    %91 = arith.addf %86, %90 : vector<80x128xf32>
    %c16_98 = arith.constant 16 : index
    %c0_99 = arith.constant 0 : index
    %92 = vector.load %arg10[%c16_98, %c0_99] : memref<112x128xbf16, #tpu.memory_space<vmem>>, vector<80x128xbf16>
    %c1_100 = arith.constant 1 : index
    %c4_101 = arith.constant 4 : index
    %c0_102 = arith.constant 0 : index
    %c0_103 = arith.constant 0 : index
    %93 = vector.load %arg3[%c1_100, %c4_101, %c0_102, %c0_103] : memref<4x9x128x128xbf16, #tpu.memory_space<vmem>>, vector<1x1x128x128xbf16>
    %94 = vector.shape_cast %93 : vector<1x1x128x128xbf16> to vector<128x128xbf16>
    %cst_104 = arith.constant dense<0.000000e+00> : vector<80x128xf32>
    %95 = tpu.matmul %92, %94, %cst_104 {dimension_numbers = #tpu.dot_dimension_numbers<[1], [0], [0], [1], [0, 0, 1, 1], [], []>} : vector<80x128xbf16>, vector<128x128xbf16>, vector<80x128xf32> -> vector<80x128xf32>
    %96 = arith.addf %91, %95 : vector<80x128xf32>
    %c17 = arith.constant 17 : index
    %c0_105 = arith.constant 0 : index
    %97 = vector.load %arg10[%c17, %c0_105] : memref<112x128xbf16, #tpu.memory_space<vmem>>, vector<80x128xbf16>
    %c1_106 = arith.constant 1 : index
    %c5_107 = arith.constant 5 : index
    %c0_108 = arith.constant 0 : index
    %c0_109 = arith.constant 0 : index
    %98 = vector.load %arg3[%c1_106, %c5_107, %c0_108, %c0_109] : memref<4x9x128x128xbf16, #tpu.memory_space<vmem>>, vector<1x1x128x128xbf16>
    %99 = vector.shape_cast %98 : vector<1x1x128x128xbf16> to vector<128x128xbf16>
    %cst_110 = arith.constant dense<0.000000e+00> : vector<80x128xf32>
    %100 = tpu.matmul %97, %99, %cst_110 {dimension_numbers = #tpu.dot_dimension_numbers<[1], [0], [0], [1], [0, 0, 1, 1], [], []>} : vector<80x128xbf16>, vector<128x128xbf16>, vector<80x128xf32> -> vector<80x128xf32>
    %101 = arith.addf %96, %100 : vector<80x128xf32>
    %c25 = arith.constant 25 : index
    %c0_111 = arith.constant 0 : index
    %102 = vector.load %arg10[%c25, %c0_111] : memref<112x128xbf16, #tpu.memory_space<vmem>>, vector<80x128xbf16>
    %c1_112 = arith.constant 1 : index
    %c6_113 = arith.constant 6 : index
    %c0_114 = arith.constant 0 : index
    %c0_115 = arith.constant 0 : index
    %103 = vector.load %arg3[%c1_112, %c6_113, %c0_114, %c0_115] : memref<4x9x128x128xbf16, #tpu.memory_space<vmem>>, vector<1x1x128x128xbf16>
    %104 = vector.shape_cast %103 : vector<1x1x128x128xbf16> to vector<128x128xbf16>
    %cst_116 = arith.constant dense<0.000000e+00> : vector<80x128xf32>
    %105 = tpu.matmul %102, %104, %cst_116 {dimension_numbers = #tpu.dot_dimension_numbers<[1], [0], [0], [1], [0, 0, 1, 1], [], []>} : vector<80x128xbf16>, vector<128x128xbf16>, vector<80x128xf32> -> vector<80x128xf32>
    %106 = arith.addf %101, %105 : vector<80x128xf32>
    %c26 = arith.constant 26 : index
    %c0_117 = arith.constant 0 : index
    %107 = vector.load %arg10[%c26, %c0_117] : memref<112x128xbf16, #tpu.memory_space<vmem>>, vector<80x128xbf16>
    %c1_118 = arith.constant 1 : index
    %c7_119 = arith.constant 7 : index
    %c0_120 = arith.constant 0 : index
    %c0_121 = arith.constant 0 : index
    %108 = vector.load %arg3[%c1_118, %c7_119, %c0_120, %c0_121] : memref<4x9x128x128xbf16, #tpu.memory_space<vmem>>, vector<1x1x128x128xbf16>
    %109 = vector.shape_cast %108 : vector<1x1x128x128xbf16> to vector<128x128xbf16>
    %cst_122 = arith.constant dense<0.000000e+00> : vector<80x128xf32>
    %110 = tpu.matmul %107, %109, %cst_122 {dimension_numbers = #tpu.dot_dimension_numbers<[1], [0], [0], [1], [0, 0, 1, 1], [], []>} : vector<80x128xbf16>, vector<128x128xbf16>, vector<80x128xf32> -> vector<80x128xf32>
    %111 = arith.addf %106, %110 : vector<80x128xf32>
    %c27 = arith.constant 27 : index
    %c0_123 = arith.constant 0 : index
    %112 = vector.load %arg10[%c27, %c0_123] : memref<112x128xbf16, #tpu.memory_space<vmem>>, vector<80x128xbf16>
    %c1_124 = arith.constant 1 : index
    %c8_125 = arith.constant 8 : index
    %c0_126 = arith.constant 0 : index
    %c0_127 = arith.constant 0 : index
    %113 = vector.load %arg3[%c1_124, %c8_125, %c0_126, %c0_127] : memref<4x9x128x128xbf16, #tpu.memory_space<vmem>>, vector<1x1x128x128xbf16>
    %114 = vector.shape_cast %113 : vector<1x1x128x128xbf16> to vector<128x128xbf16>
    %cst_128 = arith.constant dense<0.000000e+00> : vector<80x128xf32>
    %115 = tpu.matmul %112, %114, %cst_128 {dimension_numbers = #tpu.dot_dimension_numbers<[1], [0], [0], [1], [0, 0, 1, 1], [], []>} : vector<80x128xbf16>, vector<128x128xbf16>, vector<80x128xf32> -> vector<80x128xf32>
    %116 = arith.addf %111, %115 : vector<80x128xf32>
    %c0_129 = arith.constant 0 : index
    %c0_130 = arith.constant 0 : index
    %117 = vector.load %arg5[%c0_129, %c0_130] : memref<80x128xf32, #tpu.memory_space<vmem>>, vector<80x128xf32>
    %118 = arith.mulf %116, %117 : vector<80x128xf32>
    %119 = vector.shape_cast %118 : vector<80x128xf32> to vector<1x80x128xf32>
    %cst_131 = arith.constant dense<0.000000e+00> : vector<1xf32>
    %120 = vector.multi_reduction <add>, %119, %cst_131 [1, 2] : vector<1x80x128xf32> to vector<1xf32>
    %121 = vector.shape_cast %120 : vector<1xf32> to vector<1x1x1xf32>
    %122 = vector.extract %121[0, 0, 0] : f32 from vector<1x1x1xf32>
    %123 = arith.mulf %118, %118 : vector<80x128xf32>
    %124 = vector.shape_cast %123 : vector<80x128xf32> to vector<1x80x128xf32>
    %cst_132 = arith.constant dense<0.000000e+00> : vector<1xf32>
    %125 = vector.multi_reduction <add>, %124, %cst_132 [1, 2] : vector<1x80x128xf32> to vector<1xf32>
    %126 = vector.shape_cast %125 : vector<1xf32> to vector<1x1x1xf32>
    %127 = vector.extract %126[0, 0, 0] : f32 from vector<1x1x1xf32>
    %cst_133 = arith.constant 8.192000e+03 : f32
    %128 = arith.divf %122, %cst_133 : f32
    %cst_134 = arith.constant 8.192000e+03 : f32
    %129 = arith.divf %127, %cst_134 : f32
    %130 = arith.mulf %128, %128 : f32
    %131 = arith.subf %129, %130 : f32
    %132 = vector.broadcast %128 : f32 to vector<80x128xf32>
    %133 = arith.subf %116, %132 : vector<80x128xf32>
    %cst_135 = arith.constant 9.99999974E-6 : f32
    %134 = arith.addf %131, %cst_135 : f32
    %135 = math.rsqrt %134 : f32
    %136 = vector.broadcast %135 : f32 to vector<80x128xf32>
    %137 = arith.mulf %133, %136 : vector<80x128xf32>
    %c0_136 = arith.constant 0 : index
    %c0_137 = arith.constant 0 : index
    %138 = vector.load %arg6[%c0_136, %c0_137] : memref<2x128xf32, #tpu.memory_space<vmem>>, vector<1x128xf32>
    %139 = vector.broadcast %138 : vector<1x128xf32> to vector<80x128xf32>
    %140 = arith.mulf %137, %139 : vector<80x128xf32>
    %c0_138 = arith.constant 0 : index
    %c0_139 = arith.constant 0 : index
    %141 = vector.load %arg7[%c0_138, %c0_139] : memref<2x128xf32, #tpu.memory_space<vmem>>, vector<1x128xf32>
    %142 = vector.broadcast %141 : vector<1x128xf32> to vector<80x128xf32>
    %143 = arith.addf %140, %142 : vector<80x128xf32>
    %cst_140 = arith.constant 0.000000e+00 : f32
    %144 = vector.broadcast %cst_140 : f32 to vector<80x128xf32>
    %145 = arith.cmpf oge, %143, %144 : vector<80x128xf32>
    %cst_141 = arith.constant 2.000000e-01 : f32
    %146 = vector.broadcast %cst_141 : f32 to vector<80x128xf32>
    %147 = arith.mulf %146, %143 : vector<80x128xf32>
    %148 = arith.select %145, %143, %147 : vector<80x128xi1>, vector<80x128xf32>
    %149 = arith.mulf %148, %117 : vector<80x128xf32>
    %150 = arith.truncf %149 : vector<80x128xf32> to vector<80x128xbf16>
    %c16_142 = arith.constant 16 : index
    %c0_143 = arith.constant 0 : index
    %151 = vector.load %arg10[%c16_142, %c0_143] : memref<112x128xbf16, #tpu.memory_space<vmem>>, vector<80x128xbf16>
    tpu.vector_store %arg10[%c16_142, %c0_143], %150 {strides = array<i32>} : memref<112x128xbf16, #tpu.memory_space<vmem>>, vector<80x128xbf16>,
    %c5_144 = arith.constant 5 : index
    %c0_145 = arith.constant 0 : index
    %152 = vector.load %arg10[%c5_144, %c0_145] : memref<112x128xbf16, #tpu.memory_space<vmem>>, vector<80x128xbf16>
    %c2_146 = arith.constant 2 : index
    %c0_147 = arith.constant 0 : index
    %c0_148 = arith.constant 0 : index
    %c0_149 = arith.constant 0 : index
    %153 = vector.load %arg3[%c2_146, %c0_147, %c0_148, %c0_149] : memref<4x9x128x128xbf16, #tpu.memory_space<vmem>>, vector<1x1x128x128xbf16>
    %154 = vector.shape_cast %153 : vector<1x1x128x128xbf16> to vector<128x128xbf16>
    %cst_150 = arith.constant dense<0.000000e+00> : vector<80x128xf32>
    %155 = tpu.matmul %152, %154, %cst_150 {dimension_numbers = #tpu.dot_dimension_numbers<[1], [0], [0], [1], [0, 0, 1, 1], [], []>} : vector<80x128xbf16>, vector<128x128xbf16>, vector<80x128xf32> -> vector<80x128xf32>
    %c6_151 = arith.constant 6 : index
    %c0_152 = arith.constant 0 : index
    %156 = vector.load %arg10[%c6_151, %c0_152] : memref<112x128xbf16, #tpu.memory_space<vmem>>, vector<80x128xbf16>
    %c2_153 = arith.constant 2 : index
    %c1_154 = arith.constant 1 : index
    %c0_155 = arith.constant 0 : index
    %c0_156 = arith.constant 0 : index
    %157 = vector.load %arg3[%c2_153, %c1_154, %c0_155, %c0_156] : memref<4x9x128x128xbf16, #tpu.memory_space<vmem>>, vector<1x1x128x128xbf16>
    %158 = vector.shape_cast %157 : vector<1x1x128x128xbf16> to vector<128x128xbf16>
    %cst_157 = arith.constant dense<0.000000e+00> : vector<80x128xf32>
    %159 = tpu.matmul %156, %158, %cst_157 {dimension_numbers = #tpu.dot_dimension_numbers<[1], [0], [0], [1], [0, 0, 1, 1], [], []>} : vector<80x128xbf16>, vector<128x128xbf16>, vector<80x128xf32> -> vector<80x128xf32>
    %160 = arith.addf %155, %159 : vector<80x128xf32>
    %c7_158 = arith.constant 7 : index
    %c0_159 = arith.constant 0 : index
    %161 = vector.load %arg10[%c7_158, %c0_159] : memref<112x128xbf16, #tpu.memory_space<vmem>>, vector<80x128xbf16>
    %c2_160 = arith.constant 2 : index
    %c2_161 = arith.constant 2 : index
    %c0_162 = arith.constant 0 : index
    %c0_163 = arith.constant 0 : index
    %162 = vector.load %arg3[%c2_160, %c2_161, %c0_162, %c0_163] : memref<4x9x128x128xbf16, #tpu.memory_space<vmem>>, vector<1x1x128x128xbf16>
    %163 = vector.shape_cast %162 : vector<1x1x128x128xbf16> to vector<128x128xbf16>
    %cst_164 = arith.constant dense<0.000000e+00> : vector<80x128xf32>
    %164 = tpu.matmul %161, %163, %cst_164 {dimension_numbers = #tpu.dot_dimension_numbers<[1], [0], [0], [1], [0, 0, 1, 1], [], []>} : vector<80x128xbf16>, vector<128x128xbf16>, vector<80x128xf32> -> vector<80x128xf32>
    %165 = arith.addf %160, %164 : vector<80x128xf32>
    %c15_165 = arith.constant 15 : index
    %c0_166 = arith.constant 0 : index
    %166 = vector.load %arg10[%c15_165, %c0_166] : memref<112x128xbf16, #tpu.memory_space<vmem>>, vector<80x128xbf16>
    %c2_167 = arith.constant 2 : index
    %c3_168 = arith.constant 3 : index
    %c0_169 = arith.constant 0 : index
    %c0_170 = arith.constant 0 : index
    %167 = vector.load %arg3[%c2_167, %c3_168, %c0_169, %c0_170] : memref<4x9x128x128xbf16, #tpu.memory_space<vmem>>, vector<1x1x128x128xbf16>
    %168 = vector.shape_cast %167 : vector<1x1x128x128xbf16> to vector<128x128xbf16>
    %cst_171 = arith.constant dense<0.000000e+00> : vector<80x128xf32>
    %169 = tpu.matmul %166, %168, %cst_171 {dimension_numbers = #tpu.dot_dimension_numbers<[1], [0], [0], [1], [0, 0, 1, 1], [], []>} : vector<80x128xbf16>, vector<128x128xbf16>, vector<80x128xf32> -> vector<80x128xf32>
    %170 = arith.addf %165, %169 : vector<80x128xf32>
    %c16_172 = arith.constant 16 : index
    %c0_173 = arith.constant 0 : index
    %171 = vector.load %arg10[%c16_172, %c0_173] : memref<112x128xbf16, #tpu.memory_space<vmem>>, vector<80x128xbf16>
    %c2_174 = arith.constant 2 : index
    %c4_175 = arith.constant 4 : index
    %c0_176 = arith.constant 0 : index
    %c0_177 = arith.constant 0 : index
    %172 = vector.load %arg3[%c2_174, %c4_175, %c0_176, %c0_177] : memref<4x9x128x128xbf16, #tpu.memory_space<vmem>>, vector<1x1x128x128xbf16>
    %173 = vector.shape_cast %172 : vector<1x1x128x128xbf16> to vector<128x128xbf16>
    %cst_178 = arith.constant dense<0.000000e+00> : vector<80x128xf32>
    %174 = tpu.matmul %171, %173, %cst_178 {dimension_numbers = #tpu.dot_dimension_numbers<[1], [0], [0], [1], [0, 0, 1, 1], [], []>} : vector<80x128xbf16>, vector<128x128xbf16>, vector<80x128xf32> -> vector<80x128xf32>
    %175 = arith.addf %170, %174 : vector<80x128xf32>
    %c17_179 = arith.constant 17 : index
    %c0_180 = arith.constant 0 : index
    %176 = vector.load %arg10[%c17_179, %c0_180] : memref<112x128xbf16, #tpu.memory_space<vmem>>, vector<80x128xbf16>
    %c2_181 = arith.constant 2 : index
    %c5_182 = arith.constant 5 : index
    %c0_183 = arith.constant 0 : index
    %c0_184 = arith.constant 0 : index
    %177 = vector.load %arg3[%c2_181, %c5_182, %c0_183, %c0_184] : memref<4x9x128x128xbf16, #tpu.memory_space<vmem>>, vector<1x1x128x128xbf16>
    %178 = vector.shape_cast %177 : vector<1x1x128x128xbf16> to vector<128x128xbf16>
    %cst_185 = arith.constant dense<0.000000e+00> : vector<80x128xf32>
    %179 = tpu.matmul %176, %178, %cst_185 {dimension_numbers = #tpu.dot_dimension_numbers<[1], [0], [0], [1], [0, 0, 1, 1], [], []>} : vector<80x128xbf16>, vector<128x128xbf16>, vector<80x128xf32> -> vector<80x128xf32>
    %180 = arith.addf %175, %179 : vector<80x128xf32>
    %c25_186 = arith.constant 25 : index
    %c0_187 = arith.constant 0 : index
    %181 = vector.load %arg10[%c25_186, %c0_187] : memref<112x128xbf16, #tpu.memory_space<vmem>>, vector<80x128xbf16>
    %c2_188 = arith.constant 2 : index
    %c6_189 = arith.constant 6 : index
    %c0_190 = arith.constant 0 : index
    %c0_191 = arith.constant 0 : index
    %182 = vector.load %arg3[%c2_188, %c6_189, %c0_190, %c0_191] : memref<4x9x128x128xbf16, #tpu.memory_space<vmem>>, vector<1x1x128x128xbf16>
    %183 = vector.shape_cast %182 : vector<1x1x128x128xbf16> to vector<128x128xbf16>
    %cst_192 = arith.constant dense<0.000000e+00> : vector<80x128xf32>
    %184 = tpu.matmul %181, %183, %cst_192 {dimension_numbers = #tpu.dot_dimension_numbers<[1], [0], [0], [1], [0, 0, 1, 1], [], []>} : vector<80x128xbf16>, vector<128x128xbf16>, vector<80x128xf32> -> vector<80x128xf32>
    %185 = arith.addf %180, %184 : vector<80x128xf32>
    %c26_193 = arith.constant 26 : index
    %c0_194 = arith.constant 0 : index
    %186 = vector.load %arg10[%c26_193, %c0_194] : memref<112x128xbf16, #tpu.memory_space<vmem>>, vector<80x128xbf16>
    %c2_195 = arith.constant 2 : index
    %c7_196 = arith.constant 7 : index
    %c0_197 = arith.constant 0 : index
    %c0_198 = arith.constant 0 : index
    %187 = vector.load %arg3[%c2_195, %c7_196, %c0_197, %c0_198] : memref<4x9x128x128xbf16, #tpu.memory_space<vmem>>, vector<1x1x128x128xbf16>
    %188 = vector.shape_cast %187 : vector<1x1x128x128xbf16> to vector<128x128xbf16>
    %cst_199 = arith.constant dense<0.000000e+00> : vector<80x128xf32>
    %189 = tpu.matmul %186, %188, %cst_199 {dimension_numbers = #tpu.dot_dimension_numbers<[1], [0], [0], [1], [0, 0, 1, 1], [], []>} : vector<80x128xbf16>, vector<128x128xbf16>, vector<80x128xf32> -> vector<80x128xf32>
    %190 = arith.addf %185, %189 : vector<80x128xf32>
    %c27_200 = arith.constant 27 : index
    %c0_201 = arith.constant 0 : index
    %191 = vector.load %arg10[%c27_200, %c0_201] : memref<112x128xbf16, #tpu.memory_space<vmem>>, vector<80x128xbf16>
    %c2_202 = arith.constant 2 : index
    %c8_203 = arith.constant 8 : index
    %c0_204 = arith.constant 0 : index
    %c0_205 = arith.constant 0 : index
    %192 = vector.load %arg3[%c2_202, %c8_203, %c0_204, %c0_205] : memref<4x9x128x128xbf16, #tpu.memory_space<vmem>>, vector<1x1x128x128xbf16>
    %193 = vector.shape_cast %192 : vector<1x1x128x128xbf16> to vector<128x128xbf16>
    %cst_206 = arith.constant dense<0.000000e+00> : vector<80x128xf32>
    %194 = tpu.matmul %191, %193, %cst_206 {dimension_numbers = #tpu.dot_dimension_numbers<[1], [0], [0], [1], [0, 0, 1, 1], [], []>} : vector<80x128xbf16>, vector<128x128xbf16>, vector<80x128xf32> -> vector<80x128xf32>
    %195 = arith.addf %190, %194 : vector<80x128xf32>
    %c0_207 = arith.constant 0 : index
    %c0_208 = arith.constant 0 : index
    %196 = vector.load %arg5[%c0_207, %c0_208] : memref<80x128xf32, #tpu.memory_space<vmem>>, vector<80x128xf32>
    %197 = arith.mulf %195, %196 : vector<80x128xf32>
    %198 = vector.shape_cast %197 : vector<80x128xf32> to vector<1x80x128xf32>
    %cst_209 = arith.constant dense<0.000000e+00> : vector<1xf32>
    %199 = vector.multi_reduction <add>, %198, %cst_209 [1, 2] : vector<1x80x128xf32> to vector<1xf32>
    %200 = vector.shape_cast %199 : vector<1xf32> to vector<1x1x1xf32>
    %201 = vector.extract %200[0, 0, 0] : f32 from vector<1x1x1xf32>
    %202 = arith.mulf %197, %197 : vector<80x128xf32>
    %203 = vector.shape_cast %202 : vector<80x128xf32> to vector<1x80x128xf32>
    %cst_210 = arith.constant dense<0.000000e+00> : vector<1xf32>
    %204 = vector.multi_reduction <add>, %203, %cst_210 [1, 2] : vector<1x80x128xf32> to vector<1xf32>
    %205 = vector.shape_cast %204 : vector<1xf32> to vector<1x1x1xf32>
    %206 = vector.extract %205[0, 0, 0] : f32 from vector<1x1x1xf32>
    %cst_211 = arith.constant 8.192000e+03 : f32
    %207 = arith.divf %201, %cst_211 : f32
    %cst_212 = arith.constant 8.192000e+03 : f32
    %208 = arith.divf %206, %cst_212 : f32
    %209 = arith.mulf %207, %207 : f32
    %210 = arith.subf %208, %209 : f32
    %211 = vector.broadcast %207 : f32 to vector<80x128xf32>
    %212 = arith.subf %195, %211 : vector<80x128xf32>
    %cst_213 = arith.constant 9.99999974E-6 : f32
    %213 = arith.addf %210, %cst_213 : f32
    %214 = math.rsqrt %213 : f32
    %215 = vector.broadcast %214 : f32 to vector<80x128xf32>
    %216 = arith.mulf %212, %215 : vector<80x128xf32>
    %c1_214 = arith.constant 1 : index
    %c0_215 = arith.constant 0 : index
    %217 = vector.load %arg6[%c1_214, %c0_215] : memref<2x128xf32, #tpu.memory_space<vmem>>, vector<1x128xf32>
    %218 = vector.broadcast %217 : vector<1x128xf32> to vector<80x128xf32>
    %219 = arith.mulf %216, %218 : vector<80x128xf32>
    %c1_216 = arith.constant 1 : index
    %c0_217 = arith.constant 0 : index
    %220 = vector.load %arg7[%c1_216, %c0_217] : memref<2x128xf32, #tpu.memory_space<vmem>>, vector<1x128xf32>
    %221 = vector.broadcast %220 : vector<1x128xf32> to vector<80x128xf32>
    %222 = arith.addf %219, %221 : vector<80x128xf32>
    %cst_218 = arith.constant 0.000000e+00 : f32
    %223 = vector.broadcast %cst_218 : f32 to vector<80x128xf32>
    %224 = arith.cmpf oge, %222, %223 : vector<80x128xf32>
    %cst_219 = arith.constant 2.000000e-01 : f32
    %225 = vector.broadcast %cst_219 : f32 to vector<80x128xf32>
    %226 = arith.mulf %225, %222 : vector<80x128xf32>
    %227 = arith.select %224, %222, %226 : vector<80x128xi1>, vector<80x128xf32>
    %228 = arith.mulf %227, %196 : vector<80x128xf32>
    %229 = arith.truncf %228 : vector<80x128xf32> to vector<80x128xbf16>
    %c16_220 = arith.constant 16 : index
    %c0_221 = arith.constant 0 : index
    %230 = vector.load %arg10[%c16_220, %c0_221] : memref<112x128xbf16, #tpu.memory_space<vmem>>, vector<80x128xbf16>
    tpu.vector_store %arg10[%c16_220, %c0_221], %229 {strides = array<i32>} : memref<112x128xbf16, #tpu.memory_space<vmem>>, vector<80x128xbf16>,
    %c5_222 = arith.constant 5 : index
    %c0_223 = arith.constant 0 : index
    %231 = vector.load %arg10[%c5_222, %c0_223] : memref<112x128xbf16, #tpu.memory_space<vmem>>, vector<80x128xbf16>
    %c3_224 = arith.constant 3 : index
    %c0_225 = arith.constant 0 : index
    %c0_226 = arith.constant 0 : index
    %c0_227 = arith.constant 0 : index
    %232 = vector.load %arg3[%c3_224, %c0_225, %c0_226, %c0_227] : memref<4x9x128x128xbf16, #tpu.memory_space<vmem>>, vector<1x1x128x128xbf16>
    %233 = vector.shape_cast %232 : vector<1x1x128x128xbf16> to vector<128x128xbf16>
    %cst_228 = arith.constant dense<0.000000e+00> : vector<80x128xf32>
    %234 = tpu.matmul %231, %233, %cst_228 {dimension_numbers = #tpu.dot_dimension_numbers<[1], [0], [0], [1], [0, 0, 1, 1], [], []>} : vector<80x128xbf16>, vector<128x128xbf16>, vector<80x128xf32> -> vector<80x128xf32>
    %c6_229 = arith.constant 6 : index
    %c0_230 = arith.constant 0 : index
    %235 = vector.load %arg10[%c6_229, %c0_230] : memref<112x128xbf16, #tpu.memory_space<vmem>>, vector<80x128xbf16>
    %c3_231 = arith.constant 3 : index
    %c1_232 = arith.constant 1 : index
    %c0_233 = arith.constant 0 : index
    %c0_234 = arith.constant 0 : index
    %236 = vector.load %arg3[%c3_231, %c1_232, %c0_233, %c0_234] : memref<4x9x128x128xbf16, #tpu.memory_space<vmem>>, vector<1x1x128x128xbf16>
    %237 = vector.shape_cast %236 : vector<1x1x128x128xbf16> to vector<128x128xbf16>
    %cst_235 = arith.constant dense<0.000000e+00> : vector<80x128xf32>
    %238 = tpu.matmul %235, %237, %cst_235 {dimension_numbers = #tpu.dot_dimension_numbers<[1], [0], [0], [1], [0, 0, 1, 1], [], []>} : vector<80x128xbf16>, vector<128x128xbf16>, vector<80x128xf32> -> vector<80x128xf32>
    %239 = arith.addf %234, %238 : vector<80x128xf32>
    %c7_236 = arith.constant 7 : index
    %c0_237 = arith.constant 0 : index
    %240 = vector.load %arg10[%c7_236, %c0_237] : memref<112x128xbf16, #tpu.memory_space<vmem>>, vector<80x128xbf16>
    %c3_238 = arith.constant 3 : index
    %c2_239 = arith.constant 2 : index
    %c0_240 = arith.constant 0 : index
    %c0_241 = arith.constant 0 : index
    %241 = vector.load %arg3[%c3_238, %c2_239, %c0_240, %c0_241] : memref<4x9x128x128xbf16, #tpu.memory_space<vmem>>, vector<1x1x128x128xbf16>
    %242 = vector.shape_cast %241 : vector<1x1x128x128xbf16> to vector<128x128xbf16>
    %cst_242 = arith.constant dense<0.000000e+00> : vector<80x128xf32>
    %243 = tpu.matmul %240, %242, %cst_242 {dimension_numbers = #tpu.dot_dimension_numbers<[1], [0], [0], [1], [0, 0, 1, 1], [], []>} : vector<80x128xbf16>, vector<128x128xbf16>, vector<80x128xf32> -> vector<80x128xf32>
    %244 = arith.addf %239, %243 : vector<80x128xf32>
    %c15_243 = arith.constant 15 : index
    %c0_244 = arith.constant 0 : index
    %245 = vector.load %arg10[%c15_243, %c0_244] : memref<112x128xbf16, #tpu.memory_space<vmem>>, vector<80x128xbf16>
    %c3_245 = arith.constant 3 : index
    %c3_246 = arith.constant 3 : index
    %c0_247 = arith.constant 0 : index
    %c0_248 = arith.constant 0 : index
    %246 = vector.load %arg3[%c3_245, %c3_246, %c0_247, %c0_248] : memref<4x9x128x128xbf16, #tpu.memory_space<vmem>>, vector<1x1x128x128xbf16>
    %247 = vector.shape_cast %246 : vector<1x1x128x128xbf16> to vector<128x128xbf16>
    %cst_249 = arith.constant dense<0.000000e+00> : vector<80x128xf32>
    %248 = tpu.matmul %245, %247, %cst_249 {dimension_numbers = #tpu.dot_dimension_numbers<[1], [0], [0], [1], [0, 0, 1, 1], [], []>} : vector<80x128xbf16>, vector<128x128xbf16>, vector<80x128xf32> -> vector<80x128xf32>
    %249 = arith.addf %244, %248 : vector<80x128xf32>
    %c16_250 = arith.constant 16 : index
    %c0_251 = arith.constant 0 : index
    %250 = vector.load %arg10[%c16_250, %c0_251] : memref<112x128xbf16, #tpu.memory_space<vmem>>, vector<80x128xbf16>
    %c3_252 = arith.constant 3 : index
    %c4_253 = arith.constant 4 : index
    %c0_254 = arith.constant 0 : index
    %c0_255 = arith.constant 0 : index
    %251 = vector.load %arg3[%c3_252, %c4_253, %c0_254, %c0_255] : memref<4x9x128x128xbf16, #tpu.memory_space<vmem>>, vector<1x1x128x128xbf16>
    %252 = vector.shape_cast %251 : vector<1x1x128x128xbf16> to vector<128x128xbf16>
    %cst_256 = arith.constant dense<0.000000e+00> : vector<80x128xf32>
    %253 = tpu.matmul %250, %252, %cst_256 {dimension_numbers = #tpu.dot_dimension_numbers<[1], [0], [0], [1], [0, 0, 1, 1], [], []>} : vector<80x128xbf16>, vector<128x128xbf16>, vector<80x128xf32> -> vector<80x128xf32>
    %254 = arith.addf %249, %253 : vector<80x128xf32>
    %c17_257 = arith.constant 17 : index
    %c0_258 = arith.constant 0 : index
    %255 = vector.load %arg10[%c17_257, %c0_258] : memref<112x128xbf16, #tpu.memory_space<vmem>>, vector<80x128xbf16>
    %c3_259 = arith.constant 3 : index
    %c5_260 = arith.constant 5 : index
    %c0_261 = arith.constant 0 : index
    %c0_262 = arith.constant 0 : index
    %256 = vector.load %arg3[%c3_259, %c5_260, %c0_261, %c0_262] : memref<4x9x128x128xbf16, #tpu.memory_space<vmem>>, vector<1x1x128x128xbf16>
    %257 = vector.shape_cast %256 : vector<1x1x128x128xbf16> to vector<128x128xbf16>
    %cst_263 = arith.constant dense<0.000000e+00> : vector<80x128xf32>
    %258 = tpu.matmul %255, %257, %cst_263 {dimension_numbers = #tpu.dot_dimension_numbers<[1], [0], [0], [1], [0, 0, 1, 1], [], []>} : vector<80x128xbf16>, vector<128x128xbf16>, vector<80x128xf32> -> vector<80x128xf32>
    %259 = arith.addf %254, %258 : vector<80x128xf32>
    %c25_264 = arith.constant 25 : index
    %c0_265 = arith.constant 0 : index
    %260 = vector.load %arg10[%c25_264, %c0_265] : memref<112x128xbf16, #tpu.memory_space<vmem>>, vector<80x128xbf16>
    %c3_266 = arith.constant 3 : index
    %c6_267 = arith.constant 6 : index
    %c0_268 = arith.constant 0 : index
    %c0_269 = arith.constant 0 : index
    %261 = vector.load %arg3[%c3_266, %c6_267, %c0_268, %c0_269] : memref<4x9x128x128xbf16, #tpu.memory_space<vmem>>, vector<1x1x128x128xbf16>
    %262 = vector.shape_cast %261 : vector<1x1x128x128xbf16> to vector<128x128xbf16>
    %cst_270 = arith.constant dense<0.000000e+00> : vector<80x128xf32>
    %263 = tpu.matmul %260, %262, %cst_270 {dimension_numbers = #tpu.dot_dimension_numbers<[1], [0], [0], [1], [0, 0, 1, 1], [], []>} : vector<80x128xbf16>, vector<128x128xbf16>, vector<80x128xf32> -> vector<80x128xf32>
    %264 = arith.addf %259, %263 : vector<80x128xf32>
    %c26_271 = arith.constant 26 : index
    %c0_272 = arith.constant 0 : index
    %265 = vector.load %arg10[%c26_271, %c0_272] : memref<112x128xbf16, #tpu.memory_space<vmem>>, vector<80x128xbf16>
    %c3_273 = arith.constant 3 : index
    %c7_274 = arith.constant 7 : index
    %c0_275 = arith.constant 0 : index
    %c0_276 = arith.constant 0 : index
    %266 = vector.load %arg3[%c3_273, %c7_274, %c0_275, %c0_276] : memref<4x9x128x128xbf16, #tpu.memory_space<vmem>>, vector<1x1x128x128xbf16>
    %267 = vector.shape_cast %266 : vector<1x1x128x128xbf16> to vector<128x128xbf16>
    %cst_277 = arith.constant dense<0.000000e+00> : vector<80x128xf32>
    %268 = tpu.matmul %265, %267, %cst_277 {dimension_numbers = #tpu.dot_dimension_numbers<[1], [0], [0], [1], [0, 0, 1, 1], [], []>} : vector<80x128xbf16>, vector<128x128xbf16>, vector<80x128xf32> -> vector<80x128xf32>
    %269 = arith.addf %264, %268 : vector<80x128xf32>
    %c27_278 = arith.constant 27 : index
    %c0_279 = arith.constant 0 : index
    %270 = vector.load %arg10[%c27_278, %c0_279] : memref<112x128xbf16, #tpu.memory_space<vmem>>, vector<80x128xbf16>
    %c3_280 = arith.constant 3 : index
    %c8_281 = arith.constant 8 : index
    %c0_282 = arith.constant 0 : index
    %c0_283 = arith.constant 0 : index
    %271 = vector.load %arg3[%c3_280, %c8_281, %c0_282, %c0_283] : memref<4x9x128x128xbf16, #tpu.memory_space<vmem>>, vector<1x1x128x128xbf16>
    %272 = vector.shape_cast %271 : vector<1x1x128x128xbf16> to vector<128x128xbf16>
    %cst_284 = arith.constant dense<0.000000e+00> : vector<80x128xf32>
    %273 = tpu.matmul %270, %272, %cst_284 {dimension_numbers = #tpu.dot_dimension_numbers<[1], [0], [0], [1], [0, 0, 1, 1], [], []>} : vector<80x128xbf16>, vector<128x128xbf16>, vector<80x128xf32> -> vector<80x128xf32>
    %274 = arith.addf %269, %273 : vector<80x128xf32>
    %c0_285 = arith.constant 0 : index
    %c0_286 = arith.constant 0 : index
    %c0_287 = arith.constant 0 : index
    %275 = vector.load %arg8[%c0_285, %c0_286, %c0_287] : memref<1x80x128xf32, #tpu.memory_space<vmem>>, vector<1x80x128xf32>
    %276 = vector.shape_cast %275 : vector<1x80x128xf32> to vector<80x128xf32>
    %277 = vector.shape_cast %274 : vector<80x128xf32> to vector<1x80x128xf32>
    tpu.vector_store %arg8[%c0_285, %c0_286, %c0_287], %277 {strides = array<i32>} : memref<1x80x128xf32, #tpu.memory_space<vmem>>, vector<1x80x128xf32>,
    return
  }
  func.func @transform_0(%arg0: i32) -> (i32, i32, i32) {
    %c0_i32 = arith.constant 0 : i32
    %c0_i32_0 = arith.constant 0 : i32
    %c0_i32_1 = arith.constant 0 : i32
    return %arg0, %c0_i32, %c0_i32_0 : i32, i32, i32
  }
  func.func @transform_1(%arg0: i32) -> (i32, i32) {
    %c0_i32 = arith.constant 0 : i32
    %c0_i32_0 = arith.constant 0 : i32
    %c0_i32_1 = arith.constant 0 : i32
    return %c0_i32, %c0_i32_0 : i32, i32
  }
  func.func @transform_2(%arg0: i32) -> (i32, i32, i32, i32) {
    %c0_i32 = arith.constant 0 : i32
    %c0_i32_0 = arith.constant 0 : i32
    %c0_i32_1 = arith.constant 0 : i32
    %c0_i32_2 = arith.constant 0 : i32
    %c0_i32_3 = arith.constant 0 : i32
    return %c0_i32, %c0_i32_0, %c0_i32_1, %c0_i32_2 : i32, i32, i32, i32
  }
  func.func @transform_3(%arg0: i32) -> (i32, i32) {
    %c0_i32 = arith.constant 0 : i32
    %c0_i32_0 = arith.constant 0 : i32
    %c0_i32_1 = arith.constant 0 : i32
    return %c0_i32, %c0_i32_0 : i32, i32
  }
  func.func @transform_4(%arg0: i32) -> (i32, i32) {
    %c0_i32 = arith.constant 0 : i32
    %c0_i32_0 = arith.constant 0 : i32
    %c0_i32_1 = arith.constant 0 : i32
    return %c0_i32, %c0_i32_0 : i32, i32
  }
  func.func @transform_5(%arg0: i32) -> (i32, i32) {
    %c0_i32 = arith.constant 0 : i32
    %c0_i32_0 = arith.constant 0 : i32
    %c0_i32_1 = arith.constant 0 : i32
    return %c0_i32, %c0_i32_0 : i32, i32
  }
  func.func @transform_6(%arg0: i32) -> (i32, i32) {
    %c0_i32 = arith.constant 0 : i32
    %c0_i32_0 = arith.constant 0 : i32
    %c0_i32_1 = arith.constant 0 : i32
    return %c0_i32, %c0_i32_0 : i32, i32
  }
  func.func @transform_7(%arg0: i32) -> (i32, i32, i32) {
    %c0_i32 = arith.constant 0 : i32
    %c0_i32_0 = arith.constant 0 : i32
    %c0_i32_1 = arith.constant 0 : i32
    return %arg0, %c0_i32, %c0_i32_0 : i32, i32, i32
  }
}

</mosaic_0001>

<llo_original>
// kernel: squeeze.1
$region0: #{squeeze.1}
  %s0 = inlined_call_operand.vmem [shape: f32[2,80], index: 0, kind: input, shape index: {}]
  %s1 = inlined_call_operand.vmem [shape: f32[2,8,10], index: 1, kind: output, shape index: {}]
  $region1: #{squeeze.1} parent=0
    #allocation0 [shape = 'u8[4096]{0}', space=vmem, size = 0x1000, scoped, tag = 'scoped mem for input reshape']
    %s3 = sshll.u32 1, 2
    %s4 = ssub.s32 %s3, 1
    %v5 = vld [vmem:[%s0] sm:%s4]
    %6 = vst [vmem:[#allocation0] sm:%s4] %v5
    %v7 = vld [vmem:[#allocation0] sm:$0x3]
    %vm8 = vcmask 80896
    %9 = vst.msk [vmem:[%s1] ss:$8 sm:$0x3] %vm8, %v7
    %v10 = vld [vmem:[#allocation0] sm:$0x3]
    %11 = vrot.lane.b32.xlu0 %v10, 118
    %v12 = vpop.permute.xlu0 %11
    %vm13 = vcmask 80896
    %s14 = scalar_lea.vmem %s1, 1
    %15 = vst.msk [vmem:[%s14] ss:$8 sm:$0x3] %vm13, %v12
    %v16 = vld [vmem:[#allocation0] sm:$0x3]
    %17 = vrot.lane.b32.xlu0 %v16, 108
    %v18 = vpop.permute.xlu0 %17
    %vm19 = vcmask 80896
    %s20 = scalar_lea.vmem %s1, 2
    %21 = vst.msk [vmem:[%s20] ss:$8 sm:$0x3] %vm19, %v18
    %v22 = vld [vmem:[#allocation0] sm:$0x3]
    %23 = vrot.lane.b32.xlu0 %v22, 98
    %v24 = vpop.permute.xlu0 %23
    %vm25 = vcmask 80896
    %s26 = scalar_lea.vmem %s1, 3
    %27 = vst.msk [vmem:[%s26] ss:$8 sm:$0x3] %vm25, %v24
    %v28 = vld [vmem:[#allocation0] sm:$0x3]
    %29 = vrot.lane.b32.xlu0 %v28, 88
    %v30 = vpop.permute.xlu0 %29
    %vm31 = vcmask 80896
    %s32 = scalar_lea.vmem %s1, 4
    %33 = vst.msk [vmem:[%s32] ss:$8 sm:$0x3] %vm31, %v30
    %v34 = vld [vmem:[#allocation0] sm:$0x3]
    %35 = vrot.lane.b32.xlu0 %v34, 78
    %v36 = vpop.permute.xlu0 %35
    %vm37 = vcmask 80896
    %s38 = scalar_lea.vmem %s1, 5
    %39 = vst.msk [vmem:[%s38] ss:$8 sm:$0x3] %vm37, %v36
    %v40 = vld [vmem:[#allocation0] sm:$0x3]
    %41 = vrot.lane.b32.xlu0 %v40, 68
    %v42 = vpop.permute.xlu0 %41
    %vm43 = vcmask 80896
    %s44 = scalar_lea.vmem %s1, 6
    %45 = vst.msk [vmem:[%s44] ss:$8 sm:$0x3] %vm43, %v42
    %v46 = vld [vmem:[#allocation0] sm:$0x3]
    %47 = vrot.lane.b32.xlu0 %v46, 58
    %v48 = vpop.permute.xlu0 %47
    %vm49 = vcmask 80896
    %s50 = scalar_lea.vmem %s1, 7
    %51 = vst.msk [vmem:[%s50] ss:$8 sm:$0x3] %vm49, %v48

// kernel: _discriminator_forward_impl.1
$region0: #{_discriminator_forward_impl.1}
  #allocation0 [shape = 'u32[]', space=smem, size = 0x4, offset = 0x4, fixed_abs, tag = 'smem constant byte address 0x4 - core index']
  #allocation1 [shape = 'u32[144,128]{1,0:T(1,128)}', space=vmem, size = 0x12000, scoped, tag = 'internal scratch']
  #allocation2 [shape = 'bf16[352,128]{1,0:T(8,128)(2,1)}', space=vmem, size = 0x16000, scoped, tag = 'scratch operand']
  #allocation3 [shape = 'bf16[112,128]{1,0:T(8,128)(2,1)}', space=vmem, size = 0x7000, scoped, tag = 'scratch operand']
  %s0 = inlined_call_operand.vmem [shape: bf16[2,288,128], index: 0, kind: input, shape index: {}]
  %s1 = inlined_call_operand.vmem [shape: bf16[128,128], index: 1, kind: input, shape index: {}]
  %s2 = inlined_call_operand.vmem [shape: bf16[4,9,128,128], index: 2, kind: input, shape index: {}]
  %s3 = inlined_call_operand.vmem [shape: bf16[80,288], index: 3, kind: input, shape index: {}]
  %s4 = inlined_call_operand.vmem [shape: f32[80,128], index: 4, kind: input, shape index: {}]
  %s5 = inlined_call_operand.vmem [shape: f32[2,128], index: 5, kind: input, shape index: {}]
  %s6 = inlined_call_operand.vmem [shape: f32[2,128], index: 6, kind: input, shape index: {}]
  %s7 = inlined_call_operand.vmem [shape: f32[2,80,128], index: 7, kind: output, shape index: {}]
  %s8 = sld [smem:[#allocation0]]
  $region61: #{_discriminator_forward_impl.1} parent=0
    _
  %s10 = ssub.s32 1, %s8
  %s11 = scalar_select 0, %s10, %s8
  loop: start=0, step=1, limit=4
  $region2: #{_discriminator_forward_impl.1} parent=0 // loop_pre_header
    _
  $region3: #{_discriminator_forward_impl.1} parent=0 // loop_header
    %s13 = sphi 0, %s17
    %p14 = scmp.ge.s32.totalorder %s13, 4
    %s23 = sphi 0, %s25
    %s26 = sphi 0, %s23
    %s27 = sphi 0, %s26
    %s43 = sphi 0, %s27
    %s47 = sphi 0, %s47
    %s49 = sphi 0, %s47
    %s50 = sphi 0, %s49
    %s64 = sphi 0, %s50
    %s68 = sphi 0, %s68
    %s70 = sphi 0, %s68
    %s71 = sphi 0, %s70
    %s85 = sphi 0, %s71
    %s89 = sphi 0, %s89
    %s91 = sphi 0, %s89
    %s92 = sphi 0, %s91
    %s106 = sphi 0, %s92
    %s110 = sphi 0, %s110
    %s112 = sphi 0, %s110
    %s113 = sphi 0, %s112
    %s127 = sphi 0, %s113
    %s131 = sphi 0, %s131
    %s133 = sphi 0, %s131
    %s134 = sphi 0, %s133
    %s148 = sphi 0, %s134
    %s152 = sphi 0, %s152
    %s154 = sphi 0, %s152
    %s155 = sphi 0, %s154
    %s169 = sphi 0, %s155
    %s175 = sphi 0, %s177
    %s178 = sphi 0, %s175
    %s179 = sphi 0, %s178
    %s195 = sphi 0, %s179
  $region4: #{_discriminator_forward_impl.1} parent=0 // loop_header_branch
    %16 = sbr.rel (%p14) target = $region8
  $region5: #{_discriminator_forward_impl.1} parent=0 // loop_body
    %s18 = ssub.s32 %s13, 1
    %s19 = ssub.s32 %s13, 2
    %s20 = sadd.s32 %s13, 1
    %s21 = ssub.s32 %s13, %s20
    %p22 = scmp.eq.s32.totalorder %s21, 0
    %s24 = sadd.s32 %s23, 1
    %s25 = scalar_select %p22, %s23, %s24
    %p28 = pneg %p22
    %p29 = scmp.eq.s32.totalorder %s13, 1
    %p30 = por %p28, %p29
    %p31 = scmp.ne.s32.totalorder %s23, %s26
    %p32 = scmp.eq.s32.totalorder %s13, 0
    %p33 = por %p31, %p32
    %p34 = scmp.ne.s32.totalorder %s23, %s26
    %p35 = scmp.eq.s32.totalorder %s18, 1
    %p36 = por %p34, %p35
    %p37 = scmp.ne.s32.totalorder %s26, %s27
    %p38 = scmp.eq.s32.totalorder %s18, 0
    %p39 = por %p37, %p38
    %p40 = scmp.ne.s32.totalorder %s26, %s27
    %p41 = scmp.eq.s32.totalorder %s19, 1
    %p42 = por %p40, %p41
    %p44 = scmp.ne.s32.totalorder %s27, %s43
    %p45 = scmp.eq.s32.totalorder %s19, 0
    %p46 = por %p44, %p45
    %s48 = sadd.s32 %s47, 1
    %p51 = scmp.eq.s32.totalorder %s13, 1
    %p52 = scmp.ne.s32.totalorder %s47, %s49
    %p53 = scmp.eq.s32.totalorder %s13, 0
    %p54 = por %p52, %p53
    %p55 = scmp.ne.s32.totalorder %s47, %s49
    %p56 = scmp.eq.s32.totalorder %s18, 1
    %p57 = por %p55, %p56
    %p58 = scmp.ne.s32.totalorder %s49, %s50
    %p59 = scmp.eq.s32.totalorder %s18, 0
    %p60 = por %p58, %p59
    %p61 = scmp.ne.s32.totalorder %s49, %s50
    %p62 = scmp.eq.s32.totalorder %s19, 1
    %p63 = por %p61, %p62
    %p65 = scmp.ne.s32.totalorder %s50, %s64
    %p66 = scmp.eq.s32.totalorder %s19, 0
    %p67 = por %p65, %p66
    %s69 = sadd.s32 %s68, 1
    %p72 = scmp.eq.s32.totalorder %s13, 1
    %p73 = scmp.ne.s32.totalorder %s68, %s70
    %p74 = scmp.eq.s32.totalorder %s13, 0
    %p75 = por %p73, %p74
    %p76 = scmp.ne.s32.totalorder %s68, %s70
    %p77 = scmp.eq.s32.totalorder %s18, 1
    %p78 = por %p76, %p77
    %p79 = scmp.ne.s32.totalorder %s70, %s71
    %p80 = scmp.eq.s32.totalorder %s18, 0
    %p81 = por %p79, %p80
    %p82 = scmp.ne.s32.totalorder %s70, %s71
    %p83 = scmp.eq.s32.totalorder %s19, 1
    %p84 = por %p82, %p83
    %p86 = scmp.ne.s32.totalorder %s71, %s85
    %p87 = scmp.eq.s32.totalorder %s19, 0
    %p88 = por %p86, %p87
    %s90 = sadd.s32 %s89, 1
    %p93 = scmp.eq.s32.totalorder %s13, 1
    %p94 = scmp.ne.s32.totalorder %s89, %s91
    %p95 = scmp.eq.s32.totalorder %s13, 0
    %p96 = por %p94, %p95
    %p97 = scmp.ne.s32.totalorder %s89, %s91
    %p98 = scmp.eq.s32.totalorder %s18, 1
    %p99 = por %p97, %p98
    %p100 = scmp.ne.s32.totalorder %s91, %s92
    %p101 = scmp.eq.s32.totalorder %s18, 0
    %p102 = por %p100, %p101
    %p103 = scmp.ne.s32.totalorder %s91, %s92
    %p104 = scmp.eq.s32.totalorder %s19, 1
    %p105 = por %p103, %p104
    %p107 = scmp.ne.s32.totalorder %s92, %s106
    %p108 = scmp.eq.s32.totalorder %s19, 0
    %p109 = por %p107, %p108
    %s111 = sadd.s32 %s110, 1
    %p114 = scmp.eq.s32.totalorder %s13, 1
    %p115 = scmp.ne.s32.totalorder %s110, %s112
    %p116 = scmp.eq.s32.totalorder %s13, 0
    %p117 = por %p115, %p116
    %p118 = scmp.ne.s32.totalorder %s110, %s112
    %p119 = scmp.eq.s32.totalorder %s18, 1
    %p120 = por %p118, %p119
    %p121 = scmp.ne.s32.totalorder %s112, %s113
    %p122 = scmp.eq.s32.totalorder %s18, 0
    %p123 = por %p121, %p122
    %p124 = scmp.ne.s32.totalorder %s112, %s113
    %p125 = scmp.eq.s32.totalorder %s19, 1
    %p126 = por %p124, %p125
    %p128 = scmp.ne.s32.totalorder %s113, %s127
    %p129 = scmp.eq.s32.totalorder %s19, 0
    %p130 = por %p128, %p129
    %s132 = sadd.s32 %s131, 1
    %p135 = scmp.eq.s32.totalorder %s13, 1
    %p136 = scmp.ne.s32.totalorder %s131, %s133
    %p137 = scmp.eq.s32.totalorder %s13, 0
    %p138 = por %p136, %p137
    %p139 = scmp.ne.s32.totalorder %s131, %s133
    %p140 = scmp.eq.s32.totalorder %s18, 1
    %p141 = por %p139, %p140
    %p142 = scmp.ne.s32.totalorder %s133, %s134
    %p143 = scmp.eq.s32.totalorder %s18, 0
    %p144 = por %p142, %p143
    %p145 = scmp.ne.s32.totalorder %s133, %s134
    %p146 = scmp.eq.s32.totalorder %s19, 1
    %p147 = por %p145, %p146
    %p149 = scmp.ne.s32.totalorder %s134, %s148
    %p150 = scmp.eq.s32.totalorder %s19, 0
    %p151 = por %p149, %p150
    %s153 = sadd.s32 %s152, 1
    %p156 = scmp.eq.s32.totalorder %s13, 1
    %p157 = scmp.ne.s32.totalorder %s152, %s154
    %p158 = scmp.eq.s32.totalorder %s13, 0
    %p159 = por %p157, %p158
    %p160 = scmp.ne.s32.totalorder %s152, %s154
    %p161 = scmp.eq.s32.totalorder %s18, 1
    %p162 = por %p160, %p161
    %p163 = scmp.ne.s32.totalorder %s154, %s155
    %p164 = scmp.eq.s32.totalorder %s18, 0
    %p165 = por %p163, %p164
    %p166 = scmp.ne.s32.totalorder %s154, %s155
    %p167 = scmp.eq.s32.totalorder %s19, 1
    %p168 = por %p166, %p167
    %p170 = scmp.ne.s32.totalorder %s155, %s169
    %p171 = scmp.eq.s32.totalorder %s19, 0
    %p172 = por %p170, %p171
    %s173 = ssub.s32 %s13, %s20
    %p174 = scmp.eq.s32.totalorder %s173, 0
    %s176 = sadd.s32 %s175, 1
    %s177 = scalar_select %p174, %s175, %s176
    %p180 = pneg %p174
    %p181 = scmp.eq.s32.totalorder %s13, 1
    %p182 = por %p180, %p181
    %p183 = scmp.ne.s32.totalorder %s175, %s178
    %p184 = scmp.eq.s32.totalorder %s13, 0
    %p185 = por %p183, %p184
    %p186 = scmp.ne.s32.totalorder %s175, %s178
    %p187 = scmp.eq.s32.totalorder %s18, 1
    %p188 = por %p186, %p187
    %p189 = scmp.ne.s32.totalorder %s178, %s179
    %p190 = scmp.eq.s32.totalorder %s18, 0
    %p191 = por %p189, %p190
    %p192 = scmp.ne.s32.totalorder %s178, %s179
    %p193 = scmp.eq.s32.totalorder %s19, 1
    %p194 = por %p192, %p193
    %p196 = scmp.ne.s32.totalorder %s179, %s195
    %p197 = scmp.eq.s32.totalorder %s19, 0
    %p198 = por %p196, %p197
    %p199 = scmp.le.s32.totalorder 1, %s13
    %p200 = scmp.lt.s32.totalorder %s13, 3
    %p201 = pnand %p199, %p200
    %p202 = pneg %p201
    // Predicated region
    $region9: #{_discriminator_forward_impl.1} parent=5 // pred_check
      _
    $region10: #{_discriminator_forward_impl.1} parent=5 // pred_check_branch
      %204 = sbr.rel (%p201) target = $region12
    $region11: #{_discriminator_forward_impl.1} parent=5 // pred_region
      %s205 = ssub.s32 %s13, 1
      // Predicated region
      $region13: #{_discriminator_forward_impl.1} parent=11 // pred_check
        %p206 = pneg %p60
      $region14: #{_discriminator_forward_impl.1} parent=11 // pred_check_branch
        %208 = sbr.rel (%p206) target = $region16
      $region15: #{_discriminator_forward_impl.1} parent=11 // pred_region
        _
      $region16: #{_discriminator_forward_impl.1} parent=11 // pred_fallthru
        _
      // Predicated region
      $region17: #{_discriminator_forward_impl.1} parent=11 // pred_check
        %p209 = pneg %p81
      $region18: #{_discriminator_forward_impl.1} parent=11 // pred_check_branch
        %211 = sbr.rel (%p209) target = $region20
      $region19: #{_discriminator_forward_impl.1} parent=11 // pred_region
        _
      $region20: #{_discriminator_forward_impl.1} parent=11 // pred_fallthru
        _
      // Predicated region
      $region21: #{_discriminator_forward_impl.1} parent=11 // pred_check
        %p212 = pneg %p102
      $region22: #{_discriminator_forward_impl.1} parent=11 // pred_check_branch
        %214 = sbr.rel (%p212) target = $region24
      $region23: #{_discriminator_forward_impl.1} parent=11 // pred_region
        _
      $region24: #{_discriminator_forward_impl.1} parent=11 // pred_fallthru
        _
      // Predicated region
      $region25: #{_discriminator_forward_impl.1} parent=11 // pred_check
        %p215 = pneg %p123
      $region26: #{_discriminator_forward_impl.1} parent=11 // pred_check_branch
        %217 = sbr.rel (%p215) target = $region28
      $region27: #{_discriminator_forward_impl.1} parent=11 // pred_region
        _
      $region28: #{_discriminator_forward_impl.1} parent=11 // pred_fallthru
        _
      // Predicated region
      $region29: #{_discriminator_forward_impl.1} parent=11 // pred_check
        %p218 = pneg %p144
      $region30: #{_discriminator_forward_impl.1} parent=11 // pred_check_branch
        %220 = sbr.rel (%p218) target = $region32
      $region31: #{_discriminator_forward_impl.1} parent=11 // pred_region
        _
      $region32: #{_discriminator_forward_impl.1} parent=11 // pred_fallthru
        _
      // Predicated region
      $region33: #{_discriminator_forward_impl.1} parent=11 // pred_check
        %p221 = pneg %p165
      $region34: #{_discriminator_forward_impl.1} parent=11 // pred_check_branch
        %223 = sbr.rel (%p221) target = $region36
      $region35: #{_discriminator_forward_impl.1} parent=11 // pred_region
        _
      $region36: #{_discriminator_forward_impl.1} parent=11 // pred_fallthru
        _
    $region12: #{_discriminator_forward_impl.1} parent=5 // pred_fallthru
      _
    %p224 = scmp.lt.s32.totalorder %s13, 2
    // Predicated region
    $region37: #{_discriminator_forward_impl.1} parent=5 // pred_check
      %p225 = pneg %p224
    $region38: #{_discriminator_forward_impl.1} parent=5 // pred_check_branch
      %227 = sbr.rel (%p225) target = $region40
    $region39: #{_discriminator_forward_impl.1} parent=5 // pred_region
      // Predicated region
      $region41: #{_discriminator_forward_impl.1} parent=39 // pred_check
        %p228 = pneg %p33
      $region42: #{_discriminator_forward_impl.1} parent=39 // pred_check_branch
        %230 = sbr.rel (%p228) target = $region44
      $region43: #{_discriminator_forward_impl.1} parent=39 // pred_region
        %p231 = scmp.lt.s32.totalorder %s13, 1
        %s232 = scalar_select %p231, %s13, 1
        %s233 = smul.addr %s232, 36
        %s234 = smul.addr %s233, 4
        %s235 = scalar_lea.vmem %s0, %s234
      $region44: #{_discriminator_forward_impl.1} parent=39 // pred_fallthru
        _
    $region40: #{_discriminator_forward_impl.1} parent=5 // pred_fallthru
      _
    %p236 = scmp.le.s32.totalorder 1, %s13
    %p237 = scmp.lt.s32.totalorder %s13, 3
    %p238 = pnand %p236, %p237
    %p239 = pneg %p238
    // Predicated region
    $region45: #{_discriminator_forward_impl.1} parent=5 // pred_check
      _
    $region46: #{_discriminator_forward_impl.1} parent=5 // pred_check_branch
      %241 = sbr.rel (%p238) target = $region48
    $region47: #{_discriminator_forward_impl.1} parent=5 // pred_region
      %s242 = ssub.s32 %s13, 1
      %p243 = scmp.lt.s32.totalorder %s18, 1
      %s244 = scalar_select %p243, %s18, 1
      %s245 = smul.addr %s244, 36
      %s246 = smul.addr %s245, 4
      %s247 = scalar_lea.vmem %s0, %s246
      %p248 = pneg %p39
      %p249 = pneg %p36
      %p250 = pneg %p60
      %p251 = pneg %p57
      %p252 = pneg %p81
      %p253 = pneg %p78
      %p254 = pneg %p102
      %p255 = pneg %p99
      %p256 = pneg %p123
      %p257 = pneg %p120
      %p258 = pneg %p144
      %p259 = pneg %p141
      %p260 = pneg %p165
      %p261 = pneg %p162
      %p262 = pneg %p191
      %p263 = pneg %p188
      %p264 = scmp.lt.s32.totalorder %s18, 1
      %s265 = scalar_select %p264, %s18, 1
      %s266 = smul.addr %s265, 10
      %s267 = smul.addr %s266, 8
      %s268 = scalar_lea.vmem %s7, %s267
      %p269 = scmp.lt.s32.totalorder %s18, 1
      %s270 = scalar_select %p269, %s18, 1
      %s271 = smul.addr %s270, 36
      %s272 = smul.addr %s271, 4
      %s273 = scalar_lea.vmem %s0, %s272
      %p274 = scmp.lt.s32.totalorder %s18, 1
      %s275 = scalar_select %p274, %s18, 1
      %s276 = smul.addr %s275, 10
      %s277 = smul.addr %s276, 8
      %s278 = scalar_lea.vmem %s7, %s277
      %280 = vst [vmem:[#allocation2] sm:$0xf] 0
      %281 = vst [vmem:[#allocation2 + $0x4] sm:$0xf] 0
      %282 = vst [vmem:[#allocation2 + $0x8] sm:$0xf] 0
      %283 = vst [vmem:[#allocation2 + $0xc] sm:$0xf] 0
      %284 = vst [vmem:[#allocation2 + $0xa0] sm:$0xf] 0
      %285 = vst [vmem:[#allocation2 + $0xa4] sm:$0xf] 0
      %286 = vst [vmem:[#allocation2 + $0xa8] sm:$0xf] 0
      %287 = vst [vmem:[#allocation2 + $0xac] sm:$0xf] 0
      %288 = vst [vmem:[#allocation3] sm:$0xf] 0
      %289 = vst [vmem:[#allocation3 + $0x4] sm:$0xf] 0
      %290 = vst [vmem:[#allocation3 + $0x30] sm:$0xf] 0
      %291 = vst [vmem:[#allocation3 + $0x34] sm:$0xf] 0
      %v292 = vld [vmem:[%s273] sm:$0xf]
      %v293 = vld [vmem:[%s273 + $0x4] sm:$0xf]
      %v294 = vld [vmem:[%s273 + $0x8] sm:$0xf]
      %v295 = vld [vmem:[%s273 + $0xc] sm:$0xf]
      %v296 = vld [vmem:[%s273 + $0x10] sm:$0xf]
      %v297 = vld [vmem:[%s273 + $0x14] sm:$0xf]
      %v298 = vld [vmem:[%s273 + $0x18] sm:$0xf]
      %v299 = vld [vmem:[%s273 + $0x1c] sm:$0xf]
      %v300 = vld [vmem:[%s273 + $0x20] sm:$0xf]
      %v301 = vld [vmem:[%s273 + $0x24] sm:$0xf]
      %v302 = vld [vmem:[%s273 + $0x28] sm:$0xf]
      %v303 = vld [vmem:[%s273 + $0x2c] sm:$0xf]
      %v304 = vld [vmem:[%s273 + $0x30] sm:$0xf]
      %v305 = vld [vmem:[%s273 + $0x34] sm:$0xf]
      %v306 = vld [vmem:[%s273 + $0x38] sm:$0xf]
      %v307 = vld [vmem:[%s273 + $0x3c] sm:$0xf]
      %v308 = vld [vmem:[%s273 + $0x40] sm:$0xf]
      %v309 = vld [vmem:[%s273 + $0x44] sm:$0xf]
      %v310 = vld [vmem:[%s273 + $0x48] sm:$0xf]
      %v311 = vld [vmem:[%s273 + $0x4c] sm:$0xf]
      %v312 = vld [vmem:[%s273 + $0x50] sm:$0xf]
      %v313 = vld [vmem:[%s273 + $0x54] sm:$0xf]
      %v314 = vld [vmem:[%s273 + $0x58] sm:$0xf]
      %v315 = vld [vmem:[%s273 + $0x5c] sm:$0xf]
      %v316 = vld [vmem:[%s273 + $0x60] sm:$0xf]
      %v317 = vld [vmem:[%s273 + $0x64] sm:$0xf]
      %v318 = vld [vmem:[%s273 + $0x68] sm:$0xf]
      %v319 = vld [vmem:[%s273 + $0x6c] sm:$0xf]
      %v320 = vld [vmem:[%s273 + $0x70] sm:$0xf]
      %v321 = vld [vmem:[%s273 + $0x74] sm:$0xf]
      %v322 = vld [vmem:[%s273 + $0x78] sm:$0xf]
      %v323 = vld [vmem:[%s273 + $0x7c] sm:$0xf]
      %v324 = vld [vmem:[%s273 + $0x80] sm:$0xf]
      %v325 = vld [vmem:[%s273 + $0x84] sm:$0xf]
      %v326 = vld [vmem:[%s273 + $0x88] sm:$0xf]
      %v327 = vld [vmem:[%s273 + $0x8c] sm:$0xf]
      %v328 = vld [vmem:[%s1] sm:$0xf]
      %v329 = vld [vmem:[%s1 + $0x4] sm:$0xf]
      %v330 = vld [vmem:[%s1 + $0x8] sm:$0xf]
      %v331 = vld [vmem:[%s1 + $0xc] sm:$0xf]
      %v332 = vld [vmem:[%s1 + $0x10] sm:$0xf]
      %v333 = vld [vmem:[%s1 + $0x14] sm:$0xf]
      %v334 = vld [vmem:[%s1 + $0x18] sm:$0xf]
      %v335 = vld [vmem:[%s1 + $0x1c] sm:$0xf]
      %v336 = vld [vmem:[%s1 + $0x20] sm:$0xf]
      %v337 = vld [vmem:[%s1 + $0x24] sm:$0xf]
      %v338 = vld [vmem:[%s1 + $0x28] sm:$0xf]
      %v339 = vld [vmem:[%s1 + $0x2c] sm:$0xf]
      %v340 = vld [vmem:[%s1 + $0x30] sm:$0xf]
      %v341 = vld [vmem:[%s1 + $0x34] sm:$0xf]
      %v342 = vld [vmem:[%s1 + $0x38] sm:$0xf]
      %v343 = vld [vmem:[%s1 + $0x3c] sm:$0xf]
      %v380 = vunpack.c.l.b16 %v292
      %v381 = vunpack.c.l.b16 %v293
      %v382 = vunpack.c.l.b16 %v294
      %v383 = vunpack.c.l.b16 %v295
      %v384 = vunpack.c.l.b16 %v296
      %v385 = vunpack.c.l.b16 %v297
      %v386 = vunpack.c.l.b16 %v298
      %v387 = vunpack.c.l.b16 %v299
      %v388 = vunpack.c.l.b16 %v300
      %v389 = vunpack.c.l.b16 %v301
      %v390 = vunpack.c.l.b16 %v302
      %v391 = vunpack.c.l.b16 %v303
      %v392 = vunpack.c.l.b16 %v304
      %v393 = vunpack.c.l.b16 %v305
      %v394 = vunpack.c.l.b16 %v306
      %v395 = vunpack.c.l.b16 %v307
      %v396 = vunpack.c.l.b16 %v308
      %v397 = vunpack.c.l.b16 %v309
      %v398 = vunpack.c.l.b16 %v310
      %v399 = vunpack.c.l.b16 %v311
      %v400 = vunpack.c.l.b16 %v312
      %v401 = vunpack.c.l.b16 %v313
      %v402 = vunpack.c.l.b16 %v314
      %v403 = vunpack.c.l.b16 %v315
      %v404 = vunpack.c.l.b16 %v316
      %v405 = vunpack.c.l.b16 %v317
      %v406 = vunpack.c.l.b16 %v318
      %v407 = vunpack.c.l.b16 %v319
      %v408 = vunpack.c.l.b16 %v320
      %v409 = vunpack.c.l.b16 %v321
      %v410 = vunpack.c.l.b16 %v322
      %v411 = vunpack.c.l.b16 %v323
      %v412 = vunpack.c.l.b16 %v324
      %v413 = vunpack.c.l.b16 %v325
      %v414 = vunpack.c.l.b16 %v326
      %v415 = vunpack.c.l.b16 %v327
      %v416 = vpack.c.b16 %v381, %v380
      %v417 = vpack.c.b16 %v383, %v382
      %v418 = vpack.c.b16 %v385, %v384
      %v419 = vpack.c.b16 %v387, %v386
      %v420 = vpack.c.b16 %v389, %v388
      %v421 = vpack.c.b16 %v391, %v390
      %v422 = vpack.c.b16 %v393, %v392
      %v423 = vpack.c.b16 %v395, %v394
      %v424 = vpack.c.b16 %v397, %v396
      %v425 = vpack.c.b16 %v399, %v398
      %v426 = vpack.c.b16 %v401, %v400
      %v427 = vpack.c.b16 %v403, %v402
      %v428 = vpack.c.b16 %v405, %v404
      %v429 = vpack.c.b16 %v407, %v406
      %v430 = vpack.c.b16 %v409, %v408
      %v431 = vpack.c.b16 %v411, %v410
      %v432 = vpack.c.b16 %v413, %v412
      %v433 = vpack.c.b16 %v415, %v414
      %v468 = vunpack.c.l.b16 %v328
      %v469 = vunpack.c.l.b16 %v329
      %v470 = vunpack.c.l.b16 %v330
      %v471 = vunpack.c.l.b16 %v331
      %v472 = vunpack.c.l.b16 %v332
      %v473 = vunpack.c.l.b16 %v333
      %v474 = vunpack.c.l.b16 %v334
      %v475 = vunpack.c.l.b16 %v335
      %v476 = vunpack.c.l.b16 %v336
      %v477 = vunpack.c.l.b16 %v337
      %v478 = vunpack.c.l.b16 %v338
      %v479 = vunpack.c.l.b16 %v339
      %v480 = vunpack.c.l.b16 %v340
      %v481 = vunpack.c.l.b16 %v341
      %v482 = vunpack.c.l.b16 %v342
      %v483 = vunpack.c.l.b16 %v343
      %v484 = vpack.c.b16 %v469, %v468
      %v485 = vpack.c.b16 %v471, %v470
      %v486 = vpack.c.b16 %v473, %v472
      %v487 = vpack.c.b16 %v475, %v474
      %v488 = vpack.c.b16 %v477, %v476
      %v489 = vpack.c.b16 %v479, %v478
      %v490 = vpack.c.b16 %v481, %v480
      %v491 = vpack.c.b16 %v483, %v482
      %500 = vmatprep.subr.bf16.mxu0 0
      %501 = vmatpush1.bf16.msra.mxu0 %v491
      %502 = vmatprep.subr.bf16.mxu0 0
      %503 = vmatpush1.bf16.msra.mxu0 %v490
      %504 = vmatprep.subr.bf16.mxu0 0
      %505 = vmatpush1.bf16.msra.mxu0 %v489
      %506 = vmatprep.subr.bf16.mxu0 0
      %507 = vmatpush1.bf16.msra.mxu0 %v488
      %508 = vmatprep.subr.bf16.mxu0 0
      %509 = vmatpush1.bf16.msra.mxu0 %v487
      %510 = vmatprep.subr.bf16.mxu0 0
      %511 = vmatpush1.bf16.msra.mxu0 %v486
      %512 = vmatprep.subr.bf16.mxu0 0
      %513 = vmatpush1.bf16.msra.mxu0 %v485
      %514 = vmatprep.subr.bf16.mxu0 0
      %515 = vmatpush1.bf16.msra.mxu0 %v484
      %516 = vmatprep.subr.bf16.mxu0 0
      %517 = vmatpush2.bf16.msra.mxu0 0
      %518 = vmatprep.subr.bf16.mxu0 0
      %519 = vmatpush2.bf16.msra.mxu0 0
      %520 = vmatprep.subr.bf16.mxu0 0
      %521 = vmatpush2.bf16.msra.mxu0 0
      %522 = vmatprep.subr.bf16.mxu0 0
      %523 = vmatpush2.bf16.msra.mxu0 0
      %524 = vmatprep.subr.bf16.mxu0 0
      %525 = vmatpush2.bf16.msra.mxu0 0
      %526 = vmatprep.subr.bf16.mxu0 0
      %527 = vmatpush2.bf16.msra.mxu0 0
      %528 = vmatprep.subr.bf16.mxu0 0
      %529 = vmatpush2.bf16.msra.mxu0 0
      %530 = vmatprep.subr.bf16.mxu0 0
      %531 = vmatpush2.bf16.msra.mxu0 0
      %532 = vmatprep.mubr.bf16.mxu0 0
      %533 = vmatmul.mubr.bf16.gmra.mxu0 %v416
      %v534 = vpop.f32.mrf.mxu0
      %v535 = vadd.f32 0.0, %v534
      %v536 = vpop.f32.mrf.mxu0
      %v537 = vpop.f32.mrf.mxu0
      %v538 = vadd.f32 0.0, %v537
      %v539 = vpop.f32.mrf.mxu0
      %540 = vmatprep.mubr.bf16.mxu0 0
      %541 = vmatmul.mubr.bf16.gmra.mxu0 %v417
      %v542 = vpop.f32.mrf.mxu0
      %v543 = vadd.f32 0.0, %v542
      %v544 = vpop.f32.mrf.mxu0
      %v545 = vpop.f32.mrf.mxu0
      %v546 = vadd.f32 0.0, %v545
      %v547 = vpop.f32.mrf.mxu0
      %548 = vmatprep.mubr.bf16.mxu0 0
      %549 = vmatmul.mubr.bf16.gmra.mxu0 %v418
      %v550 = vpop.f32.mrf.mxu0
      %v551 = vadd.f32 0.0, %v550
      %v552 = vpop.f32.mrf.mxu0
      %v553 = vpop.f32.mrf.mxu0
      %v554 = vadd.f32 0.0, %v553
      %v555 = vpop.f32.mrf.mxu0
      %556 = vmatprep.mubr.bf16.mxu0 0
      %557 = vmatmul.mubr.bf16.gmra.mxu0 %v419
      %v558 = vpop.f32.mrf.mxu0
      %v559 = vadd.f32 0.0, %v558
      %v560 = vpop.f32.mrf.mxu0
      %v561 = vpop.f32.mrf.mxu0
      %v562 = vadd.f32 0.0, %v561
      %v563 = vpop.f32.mrf.mxu0
      %564 = vmatprep.mubr.bf16.mxu0 0
      %565 = vmatmul.mubr.bf16.gmra.mxu0 %v420
      %v566 = vpop.f32.mrf.mxu0
      %v567 = vadd.f32 0.0, %v566
      %v568 = vpop.f32.mrf.mxu0
      %v569 = vpop.f32.mrf.mxu0
      %v570 = vadd.f32 0.0, %v569
      %v571 = vpop.f32.mrf.mxu0
      %572 = vmatprep.mubr.bf16.mxu0 0
      %573 = vmatmul.mubr.bf16.gmra.mxu0 %v421
      %v574 = vpop.f32.mrf.mxu0
      %v575 = vadd.f32 0.0, %v574
      %v576 = vpop.f32.mrf.mxu0
      %v577 = vpop.f32.mrf.mxu0
      %v578 = vadd.f32 0.0, %v577
      %v579 = vpop.f32.mrf.mxu0
      %580 = vmatprep.mubr.bf16.mxu0 0
      %581 = vmatmul.mubr.bf16.gmra.mxu0 %v422
      %v582 = vpop.f32.mrf.mxu0
      %v583 = vadd.f32 0.0, %v582
      %v584 = vpop.f32.mrf.mxu0
      %v585 = vpop.f32.mrf.mxu0
      %v586 = vadd.f32 0.0, %v585
      %v587 = vpop.f32.mrf.mxu0
      %588 = vmatprep.mubr.bf16.mxu0 0
      %589 = vmatmul.mubr.bf16.gmra.mxu0 %v423
      %v590 = vpop.f32.mrf.mxu0
      %v591 = vadd.f32 0.0, %v590
      %v592 = vpop.f32.mrf.mxu0
      %v593 = vpop.f32.mrf.mxu0
      %v594 = vadd.f32 0.0, %v593
      %v595 = vpop.f32.mrf.mxu0
      %596 = vmatprep.mubr.bf16.mxu0 0
      %597 = vmatmul.mubr.bf16.gmra.mxu0 %v424
      %v598 = vpop.f32.mrf.mxu0
      %v599 = vadd.f32 0.0, %v598
      %v600 = vpop.f32.mrf.mxu0
      %v601 = vpop.f32.mrf.mxu0
      %v602 = vadd.f32 0.0, %v601
      %v603 = vpop.f32.mrf.mxu0
      %604 = vmatprep.mubr.bf16.mxu0 0
      %605 = vmatmul.mubr.bf16.gmra.mxu0 %v425
      %v606 = vpop.f32.mrf.mxu0
      %v607 = vadd.f32 0.0, %v606
      %v608 = vpop.f32.mrf.mxu0
      %v609 = vpop.f32.mrf.mxu0
      %v610 = vadd.f32 0.0, %v609
      %v611 = vpop.f32.mrf.mxu0
      %612 = vmatprep.mubr.bf16.mxu0 0
      %613 = vmatmul.mubr.bf16.gmra.mxu0 %v426
      %v614 = vpop.f32.mrf.mxu0
      %v615 = vadd.f32 0.0, %v614
      %v616 = vpop.f32.mrf.mxu0
      %v617 = vpop.f32.mrf.mxu0
      %v618 = vadd.f32 0.0, %v617
      %v619 = vpop.f32.mrf.mxu0
      %620 = vmatprep.mubr.bf16.mxu0 0
      %621 = vmatmul.mubr.bf16.gmra.mxu0 %v427
      %v622 = vpop.f32.mrf.mxu0
      %v623 = vadd.f32 0.0, %v622
      %v624 = vpop.f32.mrf.mxu0
      %v625 = vpop.f32.mrf.mxu0
      %v626 = vadd.f32 0.0, %v625
      %v627 = vpop.f32.mrf.mxu0
      %628 = vmatprep.mubr.bf16.mxu0 0
      %629 = vmatmul.mubr.bf16.gmra.mxu0 %v428
      %v630 = vpop.f32.mrf.mxu0
      %v631 = vadd.f32 0.0, %v630
      %v632 = vpop.f32.mrf.mxu0
      %v633 = vpop.f32.mrf.mxu0
      %v634 = vadd.f32 0.0, %v633
      %v635 = vpop.f32.mrf.mxu0
      %636 = vmatprep.mubr.bf16.mxu0 0
      %637 = vmatmul.mubr.bf16.gmra.mxu0 %v429
      %v638 = vpop.f32.mrf.mxu0
      %v639 = vadd.f32 0.0, %v638
      %v640 = vpop.f32.mrf.mxu0
      %v641 = vpop.f32.mrf.mxu0
      %v642 = vadd.f32 0.0, %v641
      %v643 = vpop.f32.mrf.mxu0
      %644 = vmatprep.mubr.bf16.mxu0 0
      %645 = vmatmul.mubr.bf16.gmra.mxu0 %v430
      %v646 = vpop.f32.mrf.mxu0
      %v647 = vadd.f32 0.0, %v646
      %v648 = vpop.f32.mrf.mxu0
      %v649 = vpop.f32.mrf.mxu0
      %v650 = vadd.f32 0.0, %v649
      %v651 = vpop.f32.mrf.mxu0
      %652 = vmatprep.mubr.bf16.mxu0 0
      %653 = vmatmul.mubr.bf16.gmra.mxu0 %v431
      %v654 = vpop.f32.mrf.mxu0
      %v655 = vadd.f32 0.0, %v654
      %v656 = vpop.f32.mrf.mxu0
      %v657 = vpop.f32.mrf.mxu0
      %v658 = vadd.f32 0.0, %v657
      %v659 = vpop.f32.mrf.mxu0
      %660 = vmatprep.mubr.bf16.mxu0 0
      %661 = vmatmul.mubr.bf16.gmra.mxu0 %v432
      %v662 = vpop.f32.mrf.mxu0
      %v663 = vadd.f32 0.0, %v662
      %v664 = vpop.f32.mrf.mxu0
      %v665 = vpop.f32.mrf.mxu0
      %v666 = vadd.f32 0.0, %v665
      %v667 = vpop.f32.mrf.mxu0
      %668 = vmatprep.mubr.bf16.mxu0 0
      %669 = vmatmul.mubr.bf16.gmra.mxu0 %v433
      %v670 = vpop.f32.mrf.mxu0
      %v671 = vadd.f32 0.0, %v670
      %v672 = vpop.f32.mrf.mxu0
      %v673 = vpop.f32.mrf.mxu0
      %v674 = vadd.f32 0.0, %v673
      %v675 = vpop.f32.mrf.mxu0
      %676 = vdwg.mxu0
      %vm677 = vcmp.ge.f32.partialorder %v535, 0.0
      %vm678 = vcmp.ge.f32.partialorder %v538, 0.0
      %vm679 = vcmp.ge.f32.partialorder %v543, 0.0
      %vm680 = vcmp.ge.f32.partialorder %v546, 0.0
      %vm681 = vcmp.ge.f32.partialorder %v551, 0.0
      %vm682 = vcmp.ge.f32.partialorder %v554, 0.0
      %vm683 = vcmp.ge.f32.partialorder %v559, 0.0
      %vm684 = vcmp.ge.f32.partialorder %v562, 0.0
      %vm685 = vcmp.ge.f32.partialorder %v567, 0.0
      %vm686 = vcmp.ge.f32.partialorder %v570, 0.0
      %vm687 = vcmp.ge.f32.partialorder %v575, 0.0
      %vm688 = vcmp.ge.f32.partialorder %v578, 0.0
      %vm689 = vcmp.ge.f32.partialorder %v583, 0.0
      %vm690 = vcmp.ge.f32.partialorder %v586, 0.0
      %vm691 = vcmp.ge.f32.partialorder %v591, 0.0
      %vm692 = vcmp.ge.f32.partialorder %v594, 0.0
      %vm693 = vcmp.ge.f32.partialorder %v599, 0.0
      %vm694 = vcmp.ge.f32.partialorder %v602, 0.0
      %vm695 = vcmp.ge.f32.partialorder %v607, 0.0
      %vm696 = vcmp.ge.f32.partialorder %v610, 0.0
      %vm697 = vcmp.ge.f32.partialorder %v615, 0.0
      %vm698 = vcmp.ge.f32.partialorder %v618, 0.0
      %vm699 = vcmp.ge.f32.partialorder %v623, 0.0
      %vm700 = vcmp.ge.f32.partialorder %v626, 0.0
      %vm701 = vcmp.ge.f32.partialorder %v631, 0.0
      %vm702 = vcmp.ge.f32.partialorder %v634, 0.0
      %vm703 = vcmp.ge.f32.partialorder %v639, 0.0
      %vm704 = vcmp.ge.f32.partialorder %v642, 0.0
      %vm705 = vcmp.ge.f32.partialorder %v647, 0.0
      %vm706 = vcmp.ge.f32.partialorder %v650, 0.0
      %vm707 = vcmp.ge.f32.partialorder %v655, 0.0
      %vm708 = vcmp.ge.f32.partialorder %v658, 0.0
      %vm709 = vcmp.ge.f32.partialorder %v663, 0.0
      %vm710 = vcmp.ge.f32.partialorder %v666, 0.0
      %vm711 = vcmp.ge.f32.partialorder %v671, 0.0
      %vm712 = vcmp.ge.f32.partialorder %v674, 0.0
      %v713 = vmul.f32 %v535, 0.2
      %v714 = vmul.f32 %v538, 0.2
      %v715 = vmul.f32 %v543, 0.2
      %v716 = vmul.f32 %v546, 0.2
      %v717 = vmul.f32 %v551, 0.2
      %v718 = vmul.f32 %v554, 0.2
      %v719 = vmul.f32 %v559, 0.2
      %v720 = vmul.f32 %v562, 0.2
      %v721 = vmul.f32 %v567, 0.2
      %v722 = vmul.f32 %v570, 0.2
      %v723 = vmul.f32 %v575, 0.2
      %v724 = vmul.f32 %v578, 0.2
      %v725 = vmul.f32 %v583, 0.2
      %v726 = vmul.f32 %v586, 0.2
      %v727 = vmul.f32 %v591, 0.2
      %v728 = vmul.f32 %v594, 0.2
      %v729 = vmul.f32 %v599, 0.2
      %v730 = vmul.f32 %v602, 0.2
      %v731 = vmul.f32 %v607, 0.2
      %v732 = vmul.f32 %v610, 0.2
      %v733 = vmul.f32 %v615, 0.2
      %v734 = vmul.f32 %v618, 0.2
      %v735 = vmul.f32 %v623, 0.2
      %v736 = vmul.f32 %v626, 0.2
      %v737 = vmul.f32 %v631, 0.2
      %v738 = vmul.f32 %v634, 0.2
      %v739 = vmul.f32 %v639, 0.2
      %v740 = vmul.f32 %v642, 0.2
      %v741 = vmul.f32 %v647, 0.2
      %v742 = vmul.f32 %v650, 0.2
      %v743 = vmul.f32 %v655, 0.2
      %v744 = vmul.f32 %v658, 0.2
      %v745 = vmul.f32 %v663, 0.2
      %v746 = vmul.f32 %v666, 0.2
      %v747 = vmul.f32 %v671, 0.2
      %v748 = vmul.f32 %v674, 0.2
      %v749 = vsel %vm677, %v535, %v713
      %v750 = vsel %vm678, %v538, %v714
      %v751 = vsel %vm679, %v543, %v715
      %v752 = vsel %vm680, %v546, %v716
      %v753 = vsel %vm681, %v551, %v717
      %v754 = vsel %vm682, %v554, %v718
      %v755 = vsel %vm683, %v559, %v719
      %v756 = vsel %vm684, %v562, %v720
      %v757 = vsel %vm685, %v567, %v721
      %v758 = vsel %vm686, %v570, %v722
      %v759 = vsel %vm687, %v575, %v723
      %v760 = vsel %vm688, %v578, %v724
      %v761 = vsel %vm689, %v583, %v725
      %v762 = vsel %vm690, %v586, %v726
      %v763 = vsel %vm691, %v591, %v727
      %v764 = vsel %vm692, %v594, %v728
      %v765 = vsel %vm693, %v599, %v729
      %v766 = vsel %vm694, %v602, %v730
      %v767 = vsel %vm695, %v607, %v731
      %v768 = vsel %vm696, %v610, %v732
      %v769 = vsel %vm697, %v615, %v733
      %v770 = vsel %vm698, %v618, %v734
      %v771 = vsel %vm699, %v623, %v735
      %v772 = vsel %vm700, %v626, %v736
      %v773 = vsel %vm701, %v631, %v737
      %v774 = vsel %vm702, %v634, %v738
      %v775 = vsel %vm703, %v639, %v739
      %v776 = vsel %vm704, %v642, %v740
      %v777 = vsel %vm705, %v647, %v741
      %v778 = vsel %vm706, %v650, %v742
      %v779 = vsel %vm707, %v655, %v743
      %v780 = vsel %vm708, %v658, %v744
      %v781 = vsel %vm709, %v663, %v745
      %v782 = vsel %vm710, %v666, %v746
      %v783 = vsel %vm711, %v671, %v747
      %v784 = vsel %vm712, %v674, %v748
      %v785 = vpack.c.bf16 %v750, %v749
      %v786 = vpack.c.bf16 %v752, %v751
      %v787 = vpack.c.bf16 %v754, %v753
      %v788 = vpack.c.bf16 %v756, %v755
      %v789 = vpack.c.bf16 %v758, %v757
      %v790 = vpack.c.bf16 %v760, %v759
      %v791 = vpack.c.bf16 %v762, %v761
      %v792 = vpack.c.bf16 %v764, %v763
      %v793 = vpack.c.bf16 %v766, %v765
      %v794 = vpack.c.bf16 %v768, %v767
      %v795 = vpack.c.bf16 %v770, %v769
      %v796 = vpack.c.bf16 %v772, %v771
      %v797 = vpack.c.bf16 %v774, %v773
      %v798 = vpack.c.bf16 %v776, %v775
      %v799 = vpack.c.bf16 %v778, %v777
      %v800 = vpack.c.bf16 %v780, %v779
      %v801 = vpack.c.bf16 %v782, %v781
      %v802 = vpack.c.bf16 %v784, %v783
      %v821 = vunpack.c.l.b16 %v785
      %v822 = vunpack.c.h.b16 %v785
      %v823 = vunpack.c.l.b16 %v786
      %v824 = vunpack.c.h.b16 %v786
      %v825 = vunpack.c.l.b16 %v787
      %v826 = vunpack.c.h.b16 %v787
      %v827 = vunpack.c.l.b16 %v788
      %v828 = vunpack.c.h.b16 %v788
      %v829 = vunpack.c.l.b16 %v789
      %v830 = vunpack.c.h.b16 %v789
      %v831 = vunpack.c.l.b16 %v790
      %v832 = vunpack.c.h.b16 %v790
      %v833 = vunpack.c.l.b16 %v791
      %v834 = vunpack.c.h.b16 %v791
      %v835 = vunpack.c.l.b16 %v792
      %v836 = vunpack.c.h.b16 %v792
      %v837 = vunpack.c.l.b16 %v793
      %v838 = vunpack.c.h.b16 %v793
      %v839 = vunpack.c.l.b16 %v794
      %v840 = vunpack.c.h.b16 %v794
      %v841 = vunpack.c.l.b16 %v795
      %v842 = vunpack.c.h.b16 %v795
      %v843 = vunpack.c.l.b16 %v796
      %v844 = vunpack.c.h.b16 %v796
      %v845 = vunpack.c.l.b16 %v797
      %v846 = vunpack.c.h.b16 %v797
      %v847 = vunpack.c.l.b16 %v798
      %v848 = vunpack.c.h.b16 %v798
      %v849 = vunpack.c.l.b16 %v799
      %v850 = vunpack.c.h.b16 %v799
      %v851 = vunpack.c.l.b16 %v800
      %v852 = vunpack.c.h.b16 %v800
      %v853 = vunpack.c.l.b16 %v801
      %v854 = vunpack.c.h.b16 %v801
      %v855 = vunpack.c.l.b16 %v802
      %v856 = vunpack.c.h.b16 %v802
      %v857 = vpack.c.b16 %v821, %v821
      %v858 = vpack.c.b16 %v822, %v822
      %v859 = vpack.c.b16 %v823, %v823
      %v860 = vpack.c.b16 %v824, %v824
      %v861 = vpack.c.b16 %v825, %v825
      %v862 = vpack.c.b16 %v826, %v826
      %v863 = vpack.c.b16 %v827, %v827
      %v864 = vpack.c.b16 %v828, %v828
      %v865 = vpack.c.b16 %v829, %v829
      %v866 = vpack.c.b16 %v830, %v830
      %v867 = vpack.c.b16 %v831, %v831
      %v868 = vpack.c.b16 %v832, %v832
      %v869 = vpack.c.b16 %v833, %v833
      %v870 = vpack.c.b16 %v834, %v834
      %v871 = vpack.c.b16 %v835, %v835
      %v872 = vpack.c.b16 %v836, %v836
      %v873 = vpack.c.b16 %v837, %v837
      %v874 = vpack.c.b16 %v838, %v838
      %v875 = vpack.c.b16 %v839, %v839
      %v876 = vpack.c.b16 %v840, %v840
      %v877 = vpack.c.b16 %v841, %v841
      %v878 = vpack.c.b16 %v842, %v842
      %v879 = vpack.c.b16 %v843, %v843
      %v880 = vpack.c.b16 %v844, %v844
      %v881 = vpack.c.b16 %v845, %v845
      %v882 = vpack.c.b16 %v846, %v846
      %v883 = vpack.c.b16 %v847, %v847
      %v884 = vpack.c.b16 %v848, %v848
      %v885 = vpack.c.b16 %v849, %v849
      %v886 = vpack.c.b16 %v850, %v850
      %v887 = vpack.c.b16 %v851, %v851
      %v888 = vpack.c.b16 %v852, %v852
      %v889 = vpack.c.b16 %v853, %v853
      %v890 = vpack.c.b16 %v854, %v854
      %v891 = vpack.c.b16 %v855, %v855
      %v892 = vpack.c.b16 %v856, %v856
      %929 = vst [vmem:[#allocation2 + $0x10] sm:$0xf] %v857
      %930 = vst [vmem:[#allocation2 + $0x14] sm:$0xf] %v858
      %931 = vst [vmem:[#allocation2 + $0x18] sm:$0xf] %v859
      %932 = vst [vmem:[#allocation2 + $0x1c] sm:$0xf] %v860
      %933 = vst [vmem:[#allocation2 + $0x20] sm:$0xf] %v861
      %934 = vst [vmem:[#allocation2 + $0x24] sm:$0xf] %v862
      %935 = vst [vmem:[#allocation2 + $0x28] sm:$0xf] %v863
      %936 = vst [vmem:[#allocation2 + $0x2c] sm:$0xf] %v864
      %937 = vst [vmem:[#allocation2 + $0x30] sm:$0xf] %v865
      %938 = vst [vmem:[#allocation2 + $0x34] sm:$0xf] %v866
      %939 = vst [vmem:[#allocation2 + $0x38] sm:$0xf] %v867
      %940 = vst [vmem:[#allocation2 + $0x3c] sm:$0xf] %v868
      %941 = vst [vmem:[#allocation2 + $0x40] sm:$0xf] %v869
      %942 = vst [vmem:[#allocation2 + $0x44] sm:$0xf] %v870
      %943 = vst [vmem:[#allocation2 + $0x48] sm:$0xf] %v871
      %944 = vst [vmem:[#allocation2 + $0x4c] sm:$0xf] %v872
      %945 = vst [vmem:[#allocation2 + $0x50] sm:$0xf] %v873
      %946 = vst [vmem:[#allocation2 + $0x54] sm:$0xf] %v874
      %947 = vst [vmem:[#allocation2 + $0x58] sm:$0xf] %v875
      %948 = vst [vmem:[#allocation2 + $0x5c] sm:$0xf] %v876
      %949 = vst [vmem:[#allocation2 + $0x60] sm:$0xf] %v877
      %950 = vst [vmem:[#allocation2 + $0x64] sm:$0xf] %v878
      %951 = vst [vmem:[#allocation2 + $0x68] sm:$0xf] %v879
      %952 = vst [vmem:[#allocation2 + $0x6c] sm:$0xf] %v880
      %953 = vst [vmem:[#allocation2 + $0x70] sm:$0xf] %v881
      %954 = vst [vmem:[#allocation2 + $0x74] sm:$0xf] %v882
      %955 = vst [vmem:[#allocation2 + $0x78] sm:$0xf] %v883
      %956 = vst [vmem:[#allocation2 + $0x7c] sm:$0xf] %v884
      %957 = vst [vmem:[#allocation2 + $0x80] sm:$0xf] %v885
      %958 = vst [vmem:[#allocation2 + $0x84] sm:$0xf] %v886
      %959 = vst [vmem:[#allocation2 + $0x88] sm:$0xf] %v887
      %960 = vst [vmem:[#allocation2 + $0x8c] sm:$0xf] %v888
      %961 = vst [vmem:[#allocation2 + $0x90] sm:$0xf] %v889
      %962 = vst [vmem:[#allocation2 + $0x94] sm:$0xf] %v890
      %963 = vst [vmem:[#allocation2 + $0x98] sm:$0xf] %v891
      %964 = vst [vmem:[#allocation2 + $0x9c] sm:$0xf] %v892
      %v965 = vld [vmem:[#allocation2 + $0x4] sm:$0xc]
      %v966 = vld [vmem:[#allocation2 + $0x8] sm:$0xf]
      %v967 = vld [vmem:[#allocation2 + $0xc] sm:$0xf]
      %v968 = vld [vmem:[#allocation2 + $0x10] sm:$0xf]
      %v969 = vld [vmem:[#allocation2 + $0x14] sm:$0xf]
      %v970 = vld [vmem:[#allocation2 + $0x18] sm:$0xf]
      %v971 = vld [vmem:[#allocation2 + $0x1c] sm:$0xf]
      %v972 = vld [vmem:[#allocation2 + $0x20] sm:$0xf]
      %v973 = vld [vmem:[#allocation2 + $0x24] sm:$0xf]
      %v974 = vld [vmem:[#allocation2 + $0x28] sm:$0xf]
      %v975 = vld [vmem:[#allocation2 + $0x2c] sm:$0xf]
      %v976 = vld [vmem:[#allocation2 + $0x30] sm:$0xf]
      %v977 = vld [vmem:[#allocation2 + $0x34] sm:$0xf]
      %v978 = vld [vmem:[#allocation2 + $0x38] sm:$0xf]
      %v979 = vld [vmem:[#allocation2 + $0x3c] sm:$0xf]
      %v980 = vld [vmem:[#allocation2 + $0x40] sm:$0xf]
      %v981 = vld [vmem:[#allocation2 + $0x44] sm:$0xf]
      %v982 = vld [vmem:[#allocation2 + $0x48] sm:$0xf]
      %v983 = vld [vmem:[#allocation2 + $0x4c] sm:$0xf]
      %v984 = vld [vmem:[#allocation2 + $0x50] sm:$0xf]
      %v985 = vld [vmem:[#allocation2 + $0x54] sm:$0xf]
      %v986 = vld [vmem:[#allocation2 + $0x58] sm:$0xf]
      %v987 = vld [vmem:[#allocation2 + $0x5c] sm:$0xf]
      %v988 = vld [vmem:[#allocation2 + $0x60] sm:$0xf]
      %v989 = vld [vmem:[#allocation2 + $0x64] sm:$0xf]
      %v990 = vld [vmem:[#allocation2 + $0x68] sm:$0xf]
      %v991 = vld [vmem:[#allocation2 + $0x6c] sm:$0xf]
      %v992 = vld [vmem:[#allocation2 + $0x70] sm:$0xf]
      %v993 = vld [vmem:[#allocation2 + $0x74] sm:$0xf]
      %v994 = vld [vmem:[#allocation2 + $0x78] sm:$0xf]
      %v995 = vld [vmem:[#allocation2 + $0x7c] sm:$0xf]
      %v996 = vld [vmem:[#allocation2 + $0x80] sm:$0xf]
      %v997 = vld [vmem:[#allocation2 + $0x84] sm:$0xf]
      %v998 = vld [vmem:[#allocation2 + $0x88] sm:$0xf]
      %v999 = vld [vmem:[#allocation2 + $0x8c] sm:$0xf]
      %v1000 = vld [vmem:[#allocation2 + $0x90] sm:$0xf]
      %v1001 = vld [vmem:[#allocation2 + $0x94] sm:$0x7]
      %v1002 = vld [vmem:[%s2] sm:$0xf]
      %v1003 = vld [vmem:[%s2 + $0x4] sm:$0xf]
      %v1004 = vld [vmem:[%s2 + $0x8] sm:$0xf]
      %v1005 = vld [vmem:[%s2 + $0xc] sm:$0xf]
      %v1006 = vld [vmem:[%s2 + $0x10] sm:$0xf]
      %v1007 = vld [vmem:[%s2 + $0x14] sm:$0xf]
      %v1008 = vld [vmem:[%s2 + $0x18] sm:$0xf]
      %v1009 = vld [vmem:[%s2 + $0x1c] sm:$0xf]
      %v1010 = vld [vmem:[%s2 + $0x20] sm:$0xf]
      %v1011 = vld [vmem:[%s2 + $0x24] sm:$0xf]
      %v1012 = vld [vmem:[%s2 + $0x28] sm:$0xf]
      %v1013 = vld [vmem:[%s2 + $0x2c] sm:$0xf]
      %v1014 = vld [vmem:[%s2 + $0x30] sm:$0xf]
      %v1015 = vld [vmem:[%s2 + $0x34] sm:$0xf]
      %v1016 = vld [vmem:[%s2 + $0x38] sm:$0xf]
      %v1017 = vld [vmem:[%s2 + $0x3c] sm:$0xf]
      %v1018 = vld [vmem:[#allocation2 + $0x4] sm:$0x8]
      %s1019 = scalar_lea.vmem %s2, 64
      %v1020 = vld [vmem:[%s1019] sm:$0xf]
      %v1021 = vld [vmem:[%s1019 + $0x4] sm:$0xf]
      %v1022 = vld [vmem:[%s1019 + $0x8] sm:$0xf]
      %v1023 = vld [vmem:[%s1019 + $0xc] sm:$0xf]
      %v1024 = vld [vmem:[%s1019 + $0x10] sm:$0xf]
      %v1025 = vld [vmem:[%s1019 + $0x14] sm:$0xf]
      %v1026 = vld [vmem:[%s1019 + $0x18] sm:$0xf]
      %v1027 = vld [vmem:[%s1019 + $0x1c] sm:$0xf]
      %v1028 = vld [vmem:[%s1019 + $0x20] sm:$0xf]
      %v1029 = vld [vmem:[%s1019 + $0x24] sm:$0xf]
      %v1030 = vld [vmem:[%s1019 + $0x28] sm:$0xf]
      %v1031 = vld [vmem:[%s1019 + $0x2c] sm:$0xf]
      %v1032 = vld [vmem:[%s1019 + $0x30] sm:$0xf]
      %v1033 = vld [vmem:[%s1019 + $0x34] sm:$0xf]
      %v1034 = vld [vmem:[%s1019 + $0x38] sm:$0xf]
      %v1035 = vld [vmem:[%s1019 + $0x3c] sm:$0xf]
      %v1073 = vunpack.c.l.b16 %v1018
      %v1074 = vunpack.c.l.b16 %v966
      %v1075 = vunpack.c.l.b16 %v967
      %v1076 = vunpack.c.l.b16 %v968
      %v1077 = vunpack.c.l.b16 %v969
      %v1078 = vunpack.c.l.b16 %v970
      %v1079 = vunpack.c.l.b16 %v971
      %v1080 = vunpack.c.l.b16 %v972
      %v1081 = vunpack.c.l.b16 %v973
      %v1082 = vunpack.c.l.b16 %v974
      %v1083 = vunpack.c.l.b16 %v975
      %v1084 = vunpack.c.l.b16 %v976
      %v1085 = vunpack.c.l.b16 %v977
      %v1086 = vunpack.c.l.b16 %v978
      %v1087 = vunpack.c.l.b16 %v979
      %v1088 = vunpack.c.l.b16 %v980
      %v1089 = vunpack.c.l.b16 %v981
      %v1090 = vunpack.c.l.b16 %v982
      %v1091 = vunpack.c.l.b16 %v983
      %v1092 = vunpack.c.l.b16 %v984
      %v1093 = vunpack.c.l.b16 %v985
      %v1094 = vunpack.c.l.b16 %v986
      %v1095 = vunpack.c.l.b16 %v987
      %v1096 = vunpack.c.l.b16 %v988
      %v1097 = vunpack.c.l.b16 %v989
      %v1098 = vunpack.c.l.b16 %v990
      %v1099 = vunpack.c.l.b16 %v991
      %v1100 = vunpack.c.l.b16 %v992
      %v1101 = vunpack.c.l.b16 %v993
      %v1102 = vunpack.c.l.b16 %v994
      %v1103 = vunpack.c.l.b16 %v995
      %v1104 = vunpack.c.l.b16 %v996
      %v1105 = vunpack.c.l.b16 %v997
      %v1106 = vunpack.c.l.b16 %v998
      %v1107 = vunpack.c.l.b16 %v999
      %v1108 = vunpack.c.l.b16 %v1000
      %v1109 = vunpack.c.l.b16 %v1001
      %v1110 = vpack.c.b16 %v1074, %v1073
      %v1111 = vpack.c.b16 %v1076, %v1075
      %v1112 = vpack.c.b16 %v1078, %v1077
      %v1113 = vpack.c.b16 %v1080, %v1079
      %v1114 = vpack.c.b16 %v1082, %v1081
      %v1115 = vpack.c.b16 %v1084, %v1083
      %v1116 = vpack.c.b16 %v1086, %v1085
      %v1117 = vpack.c.b16 %v1088, %v1087
      %v1118 = vpack.c.b16 %v1090, %v1089
      %v1119 = vpack.c.b16 %v1092, %v1091
      %v1120 = vpack.c.b16 %v1094, %v1093
      %v1121 = vpack.c.b16 %v1096, %v1095
      %v1122 = vpack.c.b16 %v1098, %v1097
      %v1123 = vpack.c.b16 %v1100, %v1099
      %v1124 = vpack.c.b16 %v1102, %v1101
      %v1125 = vpack.c.b16 %v1104, %v1103
      %v1126 = vpack.c.b16 %v1106, %v1105
      %v1127 = vpack.c.b16 %v1108, %v1107
      %v1128 = vpack.c.b16 %v1109, %v1109
      %vm1129 = vcmask 1044480
      %v1130 = vrot.slane %v1110, 3
      %v1131 = vrot.slane %v1111, 3
      %v1132 = vsel %vm1129, %v1130, %v1131
      %v1133 = vrot.slane %v1112, 3
      %v1134 = vsel %vm1129, %v1131, %v1133
      %v1135 = vrot.slane %v1113, 3
      %v1136 = vsel %vm1129, %v1133, %v1135
      %v1137 = vrot.slane %v1114, 3
      %v1138 = vsel %vm1129, %v1135, %v1137
      %v1139 = vrot.slane %v1115, 3
      %v1140 = vsel %vm1129, %v1137, %v1139
      %v1141 = vrot.slane %v1116, 3
      %v1142 = vsel %vm1129, %v1139, %v1141
      %v1143 = vrot.slane %v1117, 3
      %v1144 = vsel %vm1129, %v1141, %v1143
      %v1145 = vrot.slane %v1118, 3
      %v1146 = vsel %vm1129, %v1143, %v1145
      %v1147 = vrot.slane %v1119, 3
      %v1148 = vsel %vm1129, %v1145, %v1147
      %v1149 = vrot.slane %v1120, 3
      %v1150 = vsel %vm1129, %v1147, %v1149
      %v1151 = vrot.slane %v1121, 3
      %v1152 = vsel %vm1129, %v1149, %v1151
      %v1153 = vrot.slane %v1122, 3
      %v1154 = vsel %vm1129, %v1151, %v1153
      %v1155 = vrot.slane %v1123, 3
      %v1156 = vsel %vm1129, %v1153, %v1155
      %v1157 = vrot.slane %v1124, 3
      %v1158 = vsel %vm1129, %v1155, %v1157
      %v1159 = vrot.slane %v1125, 3
      %v1160 = vsel %vm1129, %v1157, %v1159
      %v1161 = vrot.slane %v1126, 3
      %v1162 = vsel %vm1129, %v1159, %v1161
      %v1163 = vrot.slane %v1127, 3
      %v1164 = vsel %vm1129, %v1161, %v1163
      %v1165 = vrot.slane %v1128, 3
      %v1166 = vsel %vm1129, %v1163, %v1165
      %v1201 = vunpack.c.l.b16 %v1020
      %v1202 = vunpack.c.l.b16 %v1021
      %v1203 = vunpack.c.l.b16 %v1022
      %v1204 = vunpack.c.l.b16 %v1023
      %v1205 = vunpack.c.l.b16 %v1024
      %v1206 = vunpack.c.l.b16 %v1025
      %v1207 = vunpack.c.l.b16 %v1026
      %v1208 = vunpack.c.l.b16 %v1027
      %v1209 = vunpack.c.l.b16 %v1028
      %v1210 = vunpack.c.l.b16 %v1029
      %v1211 = vunpack.c.l.b16 %v1030
      %v1212 = vunpack.c.l.b16 %v1031
      %v1213 = vunpack.c.l.b16 %v1032
      %v1214 = vunpack.c.l.b16 %v1033
      %v1215 = vunpack.c.l.b16 %v1034
      %v1216 = vunpack.c.l.b16 %v1035
      %v1217 = vpack.c.b16 %v1202, %v1201
      %v1218 = vpack.c.b16 %v1204, %v1203
      %v1219 = vpack.c.b16 %v1206, %v1205
      %v1220 = vpack.c.b16 %v1208, %v1207
      %v1221 = vpack.c.b16 %v1210, %v1209
      %v1222 = vpack.c.b16 %v1212, %v1211
      %v1223 = vpack.c.b16 %v1214, %v1213
      %v1224 = vpack.c.b16 %v1216, %v1215
      %1233 = vmatprep.subr.bf16.mxu0 0
      %1234 = vmatpush1.bf16.msra.mxu0 %v1224
      %1235 = vmatprep.subr.bf16.mxu0 0
      %1236 = vmatpush1.bf16.msra.mxu0 %v1223
      %1237 = vmatprep.subr.bf16.mxu0 0
      %1238 = vmatpush1.bf16.msra.mxu0 %v1222
      %1239 = vmatprep.subr.bf16.mxu0 0
      %1240 = vmatpush1.bf16.msra.mxu0 %v1221
      %1241 = vmatprep.subr.bf16.mxu0 0
      %1242 = vmatpush1.bf16.msra.mxu0 %v1220
      %1243 = vmatprep.subr.bf16.mxu0 0
      %1244 = vmatpush1.bf16.msra.mxu0 %v1219
      %1245 = vmatprep.subr.bf16.mxu0 0
      %1246 = vmatpush1.bf16.msra.mxu0 %v1218
      %1247 = vmatprep.subr.bf16.mxu0 0
      %1248 = vmatpush1.bf16.msra.mxu0 %v1217
      %1249 = vmatprep.subr.bf16.mxu0 0
      %1250 = vmatpush2.bf16.msra.mxu0 0
      %1251 = vmatprep.subr.bf16.mxu0 0
      %1252 = vmatpush2.bf16.msra.mxu0 0
      %1253 = vmatprep.subr.bf16.mxu0 0
      %1254 = vmatpush2.bf16.msra.mxu0 0
      %1255 = vmatprep.subr.bf16.mxu0 0
      %1256 = vmatpush2.bf16.msra.mxu0 0
      %1257 = vmatprep.subr.bf16.mxu0 0
      %1258 = vmatpush2.bf16.msra.mxu0 0
      %1259 = vmatprep.subr.bf16.mxu0 0
      %1260 = vmatpush2.bf16.msra.mxu0 0
      %1261 = vmatprep.subr.bf16.mxu0 0
      %1262 = vmatpush2.bf16.msra.mxu0 0
      %1263 = vmatprep.subr.bf16.mxu0 0
      %1264 = vmatpush2.bf16.msra.mxu0 0
      %1265 = vmatprep.mubr.bf16.mxu0 0
      %1266 = vmatmul.mubr.bf16.gmra.mxu0 %v1132
      %v1267 = vpop.f32.mrf.mxu0
      %v1268 = vadd.f32 0.0, %v1267
      %v1269 = vpop.f32.mrf.mxu0
      %v1270 = vpop.f32.mrf.mxu0
      %v1271 = vadd.f32 0.0, %v1270
      %v1272 = vpop.f32.mrf.mxu0
      %1273 = vmatprep.mubr.bf16.mxu0 0
      %1274 = vmatmul.mubr.bf16.gmra.mxu0 %v1134
      %v1275 = vpop.f32.mrf.mxu0
      %v1276 = vadd.f32 0.0, %v1275
      %v1277 = vpop.f32.mrf.mxu0
      %v1278 = vpop.f32.mrf.mxu0
      %v1279 = vadd.f32 0.0, %v1278
      %v1280 = vpop.f32.mrf.mxu0
      %1281 = vmatprep.mubr.bf16.mxu0 0
      %1282 = vmatmul.mubr.bf16.gmra.mxu0 %v1136
      %v1283 = vpop.f32.mrf.mxu0
      %v1284 = vadd.f32 0.0, %v1283
      %v1285 = vpop.f32.mrf.mxu0
      %v1286 = vpop.f32.mrf.mxu0
      %v1287 = vadd.f32 0.0, %v1286
      %v1288 = vpop.f32.mrf.mxu0
      %1289 = vmatprep.mubr.bf16.mxu0 0
      %1290 = vmatmul.mubr.bf16.gmra.mxu0 %v1138
      %v1291 = vpop.f32.mrf.mxu0
      %v1292 = vadd.f32 0.0, %v1291
      %v1293 = vpop.f32.mrf.mxu0
      %v1294 = vpop.f32.mrf.mxu0
      %v1295 = vadd.f32 0.0, %v1294
      %v1296 = vpop.f32.mrf.mxu0
      %1297 = vmatprep.mubr.bf16.mxu0 0
      %1298 = vmatmul.mubr.bf16.gmra.mxu0 %v1140
      %v1299 = vpop.f32.mrf.mxu0
      %v1300 = vadd.f32 0.0, %v1299
      %v1301 = vpop.f32.mrf.mxu0
      %v1302 = vpop.f32.mrf.mxu0
      %v1303 = vadd.f32 0.0, %v1302
      %v1304 = vpop.f32.mrf.mxu0
      %1305 = vmatprep.mubr.bf16.mxu0 0
      %1306 = vmatmul.mubr.bf16.gmra.mxu0 %v1142
      %v1307 = vpop.f32.mrf.mxu0
      %v1308 = vadd.f32 0.0, %v1307
      %v1309 = vpop.f32.mrf.mxu0
      %v1310 = vpop.f32.mrf.mxu0
      %v1311 = vadd.f32 0.0, %v1310
      %v1312 = vpop.f32.mrf.mxu0
      %1313 = vmatprep.mubr.bf16.mxu0 0
      %1314 = vmatmul.mubr.bf16.gmra.mxu0 %v1144
      %v1315 = vpop.f32.mrf.mxu0
      %v1316 = vadd.f32 0.0, %v1315
      %v1317 = vpop.f32.mrf.mxu0
      %v1318 = vpop.f32.mrf.mxu0
      %v1319 = vadd.f32 0.0, %v1318
      %v1320 = vpop.f32.mrf.mxu0
      %1321 = vmatprep.mubr.bf16.mxu0 0
      %1322 = vmatmul.mubr.bf16.gmra.mxu0 %v1146
      %v1323 = vpop.f32.mrf.mxu0
      %v1324 = vadd.f32 0.0, %v1323
      %v1325 = vpop.f32.mrf.mxu0
      %v1326 = vpop.f32.mrf.mxu0
      %v1327 = vadd.f32 0.0, %v1326
      %v1328 = vpop.f32.mrf.mxu0
      %1329 = vmatprep.mubr.bf16.mxu0 0
      %1330 = vmatmul.mubr.bf16.gmra.mxu0 %v1148
      %v1331 = vpop.f32.mrf.mxu0
      %v1332 = vadd.f32 0.0, %v1331
      %v1333 = vpop.f32.mrf.mxu0
      %v1334 = vpop.f32.mrf.mxu0
      %v1335 = vadd.f32 0.0, %v1334
      %v1336 = vpop.f32.mrf.mxu0
      %1337 = vmatprep.mubr.bf16.mxu0 0
      %1338 = vmatmul.mubr.bf16.gmra.mxu0 %v1150
      %v1339 = vpop.f32.mrf.mxu0
      %v1340 = vadd.f32 0.0, %v1339
      %v1341 = vpop.f32.mrf.mxu0
      %v1342 = vpop.f32.mrf.mxu0
      %v1343 = vadd.f32 0.0, %v1342
      %v1344 = vpop.f32.mrf.mxu0
      %1345 = vmatprep.mubr.bf16.mxu0 0
      %1346 = vmatmul.mubr.bf16.gmra.mxu0 %v1152
      %v1347 = vpop.f32.mrf.mxu0
      %v1348 = vadd.f32 0.0, %v1347
      %v1349 = vpop.f32.mrf.mxu0
      %v1350 = vpop.f32.mrf.mxu0
      %v1351 = vadd.f32 0.0, %v1350
      %v1352 = vpop.f32.mrf.mxu0
      %1353 = vmatprep.mubr.bf16.mxu0 0
      %1354 = vmatmul.mubr.bf16.gmra.mxu0 %v1154
      %v1355 = vpop.f32.mrf.mxu0
      %v1356 = vadd.f32 0.0, %v1355
      %v1357 = vpop.f32.mrf.mxu0
      %v1358 = vpop.f32.mrf.mxu0
      %v1359 = vadd.f32 0.0, %v1358
      %v1360 = vpop.f32.mrf.mxu0
      %1361 = vmatprep.mubr.bf16.mxu0 0
      %1362 = vmatmul.mubr.bf16.gmra.mxu0 %v1156
      %v1363 = vpop.f32.mrf.mxu0
      %v1364 = vadd.f32 0.0, %v1363
      %v1365 = vpop.f32.mrf.mxu0
      %v1366 = vpop.f32.mrf.mxu0
      %v1367 = vadd.f32 0.0, %v1366
      %v1368 = vpop.f32.mrf.mxu0
      %1369 = vmatprep.mubr.bf16.mxu0 0
      %1370 = vmatmul.mubr.bf16.gmra.mxu0 %v1158
      %v1371 = vpop.f32.mrf.mxu0
      %v1372 = vadd.f32 0.0, %v1371
      %v1373 = vpop.f32.mrf.mxu0
      %v1374 = vpop.f32.mrf.mxu0
      %v1375 = vadd.f32 0.0, %v1374
      %v1376 = vpop.f32.mrf.mxu0
      %1377 = vmatprep.mubr.bf16.mxu0 0
      %1378 = vmatmul.mubr.bf16.gmra.mxu0 %v1160
      %v1379 = vpop.f32.mrf.mxu0
      %v1380 = vadd.f32 0.0, %v1379
      %v1381 = vpop.f32.mrf.mxu0
      %v1382 = vpop.f32.mrf.mxu0
      %v1383 = vadd.f32 0.0, %v1382
      %v1384 = vpop.f32.mrf.mxu0
      %1385 = vmatprep.mubr.bf16.mxu0 0
      %1386 = vmatmul.mubr.bf16.gmra.mxu0 %v1162
      %v1387 = vpop.f32.mrf.mxu0
      %v1388 = vadd.f32 0.0, %v1387
      %v1389 = vpop.f32.mrf.mxu0
      %v1390 = vpop.f32.mrf.mxu0
      %v1391 = vadd.f32 0.0, %v1390
      %v1392 = vpop.f32.mrf.mxu0
      %1393 = vmatprep.mubr.bf16.mxu0 0
      %1394 = vmatmul.mubr.bf16.gmra.mxu0 %v1164
      %v1395 = vpop.f32.mrf.mxu0
      %v1396 = vadd.f32 0.0, %v1395
      %v1397 = vpop.f32.mrf.mxu0
      %v1398 = vpop.f32.mrf.mxu0
      %v1399 = vadd.f32 0.0, %v1398
      %v1400 = vpop.f32.mrf.mxu0
      %1401 = vmatprep.mubr.bf16.mxu0 0
      %1402 = vmatmul.mubr.bf16.gmra.mxu0 %v1166
      %v1403 = vpop.f32.mrf.mxu0
      %v1404 = vadd.f32 0.0, %v1403
      %v1405 = vpop.f32.mrf.mxu0
      %v1406 = vpop.f32.mrf.mxu0
      %v1407 = vadd.f32 0.0, %v1406
      %v1408 = vpop.f32.mrf.mxu0
      %1409 = vdwg.mxu0
      %v1411 = vunpack.c.l.b16 %v965
      %v1412 = vpack.c.b16 %v1074, %v1411
      %vm1413 = vsmask.f32 5376
      %v1415 = vshrl.u32 %v1412, 16
      %v1417 = vrot.slane %v1415, 2
      %v1418 = vshll.u32 %v1412, 16
      %v1420 = vrot.slane %v1418, 3
      %v1421 = vor.u32 %v1417, %v1420
      %v1423 = vshrl.u32 %v1111, 16
      %v1425 = vrot.slane %v1423, 2
      %v1426 = vshll.u32 %v1111, 16
      %v1428 = vrot.slane %v1426, 3
      %v1429 = vor.u32 %v1425, %v1428
      %v1430 = vsel %vm1413, %v1421, %v1429
      %v1432 = vshrl.u32 %v1112, 16
      %v1434 = vrot.slane %v1432, 2
      %v1435 = vshll.u32 %v1112, 16
      %v1437 = vrot.slane %v1435, 3
      %v1438 = vor.u32 %v1434, %v1437
      %v1439 = vsel %vm1413, %v1429, %v1438
      %v1441 = vshrl.u32 %v1113, 16
      %v1443 = vrot.slane %v1441, 2
      %v1444 = vshll.u32 %v1113, 16
      %v1446 = vrot.slane %v1444, 3
      %v1447 = vor.u32 %v1443, %v1446
      %v1448 = vsel %vm1413, %v1438, %v1447
      %v1450 = vshrl.u32 %v1114, 16
      %v1452 = vrot.slane %v1450, 2
      %v1453 = vshll.u32 %v1114, 16
      %v1455 = vrot.slane %v1453, 3
      %v1456 = vor.u32 %v1452, %v1455
      %v1457 = vsel %vm1413, %v1447, %v1456
      %v1459 = vshrl.u32 %v1115, 16
      %v1461 = vrot.slane %v1459, 2
      %v1462 = vshll.u32 %v1115, 16
      %v1464 = vrot.slane %v1462, 3
      %v1465 = vor.u32 %v1461, %v1464
      %v1466 = vsel %vm1413, %v1456, %v1465
      %v1468 = vshrl.u32 %v1116, 16
      %v1470 = vrot.slane %v1468, 2
      %v1471 = vshll.u32 %v1116, 16
      %v1473 = vrot.slane %v1471, 3
      %v1474 = vor.u32 %v1470, %v1473
      %v1475 = vsel %vm1413, %v1465, %v1474
      %v1477 = vshrl.u32 %v1117, 16
      %v1479 = vrot.slane %v1477, 2
      %v1480 = vshll.u32 %v1117, 16
      %v1482 = vrot.slane %v1480, 3
      %v1483 = vor.u32 %v1479, %v1482
      %v1484 = vsel %vm1413, %v1474, %v1483
      %v1486 = vshrl.u32 %v1118, 16
      %v1488 = vrot.slane %v1486, 2
      %v1489 = vshll.u32 %v1118, 16
      %v1491 = vrot.slane %v1489, 3
      %v1492 = vor.u32 %v1488, %v1491
      %v1493 = vsel %vm1413, %v1483, %v1492
      %v1495 = vshrl.u32 %v1119, 16
      %v1497 = vrot.slane %v1495, 2
      %v1498 = vshll.u32 %v1119, 16
      %v1500 = vrot.slane %v1498, 3
      %v1501 = vor.u32 %v1497, %v1500
      %v1502 = vsel %vm1413, %v1492, %v1501
      %v1504 = vshrl.u32 %v1120, 16
      %v1506 = vrot.slane %v1504, 2
      %v1507 = vshll.u32 %v1120, 16
      %v1509 = vrot.slane %v1507, 3
      %v1510 = vor.u32 %v1506, %v1509
      %v1511 = vsel %vm1413, %v1501, %v1510
      %v1513 = vshrl.u32 %v1121, 16
      %v1515 = vrot.slane %v1513, 2
      %v1516 = vshll.u32 %v1121, 16
      %v1518 = vrot.slane %v1516, 3
      %v1519 = vor.u32 %v1515, %v1518
      %v1520 = vsel %vm1413, %v1510, %v1519
      %v1522 = vshrl.u32 %v1122, 16
      %v1524 = vrot.slane %v1522, 2
      %v1525 = vshll.u32 %v1122, 16
      %v1527 = vrot.slane %v1525, 3
      %v1528 = vor.u32 %v1524, %v1527
      %v1529 = vsel %vm1413, %v1519, %v1528
      %v1531 = vshrl.u32 %v1123, 16
      %v1533 = vrot.slane %v1531, 2
      %v1534 = vshll.u32 %v1123, 16
      %v1536 = vrot.slane %v1534, 3
      %v1537 = vor.u32 %v1533, %v1536
      %v1538 = vsel %vm1413, %v1528, %v1537
      %v1540 = vshrl.u32 %v1124, 16
      %v1542 = vrot.slane %v1540, 2
      %v1543 = vshll.u32 %v1124, 16
      %v1545 = vrot.slane %v1543, 3
      %v1546 = vor.u32 %v1542, %v1545
      %v1547 = vsel %vm1413, %v1537, %v1546
      %v1549 = vshrl.u32 %v1125, 16
      %v1551 = vrot.slane %v1549, 2
      %v1552 = vshll.u32 %v1125, 16
      %v1554 = vrot.slane %v1552, 3
      %v1555 = vor.u32 %v1551, %v1554
      %v1556 = vsel %vm1413, %v1546, %v1555
      %v1558 = vshrl.u32 %v1126, 16
      %v1560 = vrot.slane %v1558, 2
      %v1561 = vshll.u32 %v1126, 16
      %v1563 = vrot.slane %v1561, 3
      %v1564 = vor.u32 %v1560, %v1563
      %v1565 = vsel %vm1413, %v1555, %v1564
      %v1567 = vshrl.u32 %v1127, 16
      %v1569 = vrot.slane %v1567, 2
      %v1570 = vshll.u32 %v1127, 16
      %v1572 = vrot.slane %v1570, 3
      %v1573 = vor.u32 %v1569, %v1572
      %v1574 = vsel %vm1413, %v1564, %v1573
      %v1576 = vshrl.u32 %v1128, 16
      %v1578 = vrot.slane %v1576, 2
      %v1579 = vshll.u32 %v1128, 16
      %v1581 = vrot.slane %v1579, 3
      %v1582 = vor.u32 %v1578, %v1581
      %v1583 = vsel %vm1413, %v1573, %v1582
      %v1618 = vunpack.c.l.b16 %v1002
      %v1619 = vunpack.c.l.b16 %v1003
      %v1620 = vunpack.c.l.b16 %v1004
      %v1621 = vunpack.c.l.b16 %v1005
      %v1622 = vunpack.c.l.b16 %v1006
      %v1623 = vunpack.c.l.b16 %v1007
      %v1624 = vunpack.c.l.b16 %v1008
      %v1625 = vunpack.c.l.b16 %v1009
      %v1626 = vunpack.c.l.b16 %v1010
      %v1627 = vunpack.c.l.b16 %v1011
      %v1628 = vunpack.c.l.b16 %v1012
      %v1629 = vunpack.c.l.b16 %v1013
      %v1630 = vunpack.c.l.b16 %v1014
      %v1631 = vunpack.c.l.b16 %v1015
      %v1632 = vunpack.c.l.b16 %v1016
      %v1633 = vunpack.c.l.b16 %v1017
      %v1634 = vpack.c.b16 %v1619, %v1618
      %v1635 = vpack.c.b16 %v1621, %v1620
      %v1636 = vpack.c.b16 %v1623, %v1622
      %v1637 = vpack.c.b16 %v1625, %v1624
      %v1638 = vpack.c.b16 %v1627, %v1626
      %v1639 = vpack.c.b16 %v1629, %v1628
      %v1640 = vpack.c.b16 %v1631, %v1630
      %v1641 = vpack.c.b16 %v1633, %v1632
      %1650 = vmatprep.subr.bf16.mxu0 0
      %1651 = vmatpush1.bf16.msra.mxu0 %v1641
      %1652 = vmatprep.subr.bf16.mxu0 0
      %1653 = vmatpush1.bf16.msra.mxu0 %v1640
      %1654 = vmatprep.subr.bf16.mxu0 0
      %1655 = vmatpush1.bf16.msra.mxu0 %v1639
      %1656 = vmatprep.subr.bf16.mxu0 0
      %1657 = vmatpush1.bf16.msra.mxu0 %v1638
      %1658 = vmatprep.subr.bf16.mxu0 0
      %1659 = vmatpush1.bf16.msra.mxu0 %v1637
      %1660 = vmatprep.subr.bf16.mxu0 0
      %1661 = vmatpush1.bf16.msra.mxu0 %v1636
      %1662 = vmatprep.subr.bf16.mxu0 0
      %1663 = vmatpush1.bf16.msra.mxu0 %v1635
      %1664 = vmatprep.subr.bf16.mxu0 0
      %1665 = vmatpush1.bf16.msra.mxu0 %v1634
      %1666 = vmatprep.subr.bf16.mxu0 0
      %1667 = vmatpush2.bf16.msra.mxu0 0
      %1668 = vmatprep.subr.bf16.mxu0 0
      %1669 = vmatpush2.bf16.msra.mxu0 0
      %1670 = vmatprep.subr.bf16.mxu0 0
      %1671 = vmatpush2.bf16.msra.mxu0 0
      %1672 = vmatprep.subr.bf16.mxu0 0
      %1673 = vmatpush2.bf16.msra.mxu0 0
      %1674 = vmatprep.subr.bf16.mxu0 0
      %1675 = vmatpush2.bf16.msra.mxu0 0
      %1676 = vmatprep.subr.bf16.mxu0 0
      %1677 = vmatpush2.bf16.msra.mxu0 0
      %1678 = vmatprep.subr.bf16.mxu0 0
      %1679 = vmatpush2.bf16.msra.mxu0 0
      %1680 = vmatprep.subr.bf16.mxu0 0
      %1681 = vmatpush2.bf16.msra.mxu0 0
      %1682 = vmatprep.mubr.bf16.mxu0 0
      %1683 = vmatmul.mubr.bf16.gmra.mxu0 %v1430
      %v1684 = vpop.f32.mrf.mxu0
      %v1685 = vadd.f32 %v1268, %v1684
      %v1686 = vpop.f32.mrf.mxu0
      %v1687 = vpop.f32.mrf.mxu0
      %v1688 = vadd.f32 %v1271, %v1687
      %v1689 = vpop.f32.mrf.mxu0
      %1690 = vmatprep.mubr.bf16.mxu0 0
      %1691 = vmatmul.mubr.bf16.gmra.mxu0 %v1439
      %v1692 = vpop.f32.mrf.mxu0
      %v1693 = vadd.f32 %v1276, %v1692
      %v1694 = vpop.f32.mrf.mxu0
      %v1695 = vpop.f32.mrf.mxu0
      %v1696 = vadd.f32 %v1279, %v1695
      %v1697 = vpop.f32.mrf.mxu0
      %1698 = vmatprep.mubr.bf16.mxu0 0
      %1699 = vmatmul.mubr.bf16.gmra.mxu0 %v1448
      %v1700 = vpop.f32.mrf.mxu0
      %v1701 = vadd.f32 %v1284, %v1700
      %v1702 = vpop.f32.mrf.mxu0
      %v1703 = vpop.f32.mrf.mxu0
      %v1704 = vadd.f32 %v1287, %v1703
      %v1705 = vpop.f32.mrf.mxu0
      %1706 = vmatprep.mubr.bf16.mxu0 0
      %1707 = vmatmul.mubr.bf16.gmra.mxu0 %v1457
      %v1708 = vpop.f32.mrf.mxu0
      %v1709 = vadd.f32 %v1292, %v1708
      %v1710 = vpop.f32.mrf.mxu0
      %v1711 = vpop.f32.mrf.mxu0
      %v1712 = vadd.f32 %v1295, %v1711
      %v1713 = vpop.f32.mrf.mxu0
      %1714 = vmatprep.mubr.bf16.mxu0 0
      %1715 = vmatmul.mubr.bf16.gmra.mxu0 %v1466
      %v1716 = vpop.f32.mrf.mxu0
      %v1717 = vadd.f32 %v1300, %v1716
      %v1718 = vpop.f32.mrf.mxu0
      %v1719 = vpop.f32.mrf.mxu0
      %v1720 = vadd.f32 %v1303, %v1719
      %v1721 = vpop.f32.mrf.mxu0
      %1722 = vmatprep.mubr.bf16.mxu0 0
      %1723 = vmatmul.mubr.bf16.gmra.mxu0 %v1475
      %v1724 = vpop.f32.mrf.mxu0
      %v1725 = vadd.f32 %v1308, %v1724
      %v1726 = vpop.f32.mrf.mxu0
      %v1727 = vpop.f32.mrf.mxu0
      %v1728 = vadd.f32 %v1311, %v1727
      %v1729 = vpop.f32.mrf.mxu0
      %1730 = vmatprep.mubr.bf16.mxu0 0
      %1731 = vmatmul.mubr.bf16.gmra.mxu0 %v1484
      %v1732 = vpop.f32.mrf.mxu0
      %v1733 = vadd.f32 %v1316, %v1732
      %v1734 = vpop.f32.mrf.mxu0
      %v1735 = vpop.f32.mrf.mxu0
      %v1736 = vadd.f32 %v1319, %v1735
      %v1737 = vpop.f32.mrf.mxu0
      %1738 = vmatprep.mubr.bf16.mxu0 0
      %1739 = vmatmul.mubr.bf16.gmra.mxu0 %v1493
      %v1740 = vpop.f32.mrf.mxu0
      %v1741 = vadd.f32 %v1324, %v1740
      %v1742 = vpop.f32.mrf.mxu0
      %v1743 = vpop.f32.mrf.mxu0
      %v1744 = vadd.f32 %v1327, %v1743
      %v1745 = vpop.f32.mrf.mxu0
      %1746 = vmatprep.mubr.bf16.mxu0 0
      %1747 = vmatmul.mubr.bf16.gmra.mxu0 %v1502
      %v1748 = vpop.f32.mrf.mxu0
      %v1749 = vadd.f32 %v1332, %v1748
      %v1750 = vpop.f32.mrf.mxu0
      %v1751 = vpop.f32.mrf.mxu0
      %v1752 = vadd.f32 %v1335, %v1751
      %v1753 = vpop.f32.mrf.mxu0
      %1754 = vmatprep.mubr.bf16.mxu0 0
      %1755 = vmatmul.mubr.bf16.gmra.mxu0 %v1511
      %v1756 = vpop.f32.mrf.mxu0
      %v1757 = vadd.f32 %v1340, %v1756
      %v1758 = vpop.f32.mrf.mxu0
      %v1759 = vpop.f32.mrf.mxu0
      %v1760 = vadd.f32 %v1343, %v1759
      %v1761 = vpop.f32.mrf.mxu0
      %1762 = vmatprep.mubr.bf16.mxu0 0
      %1763 = vmatmul.mubr.bf16.gmra.mxu0 %v1520
      %v1764 = vpop.f32.mrf.mxu0
      %v1765 = vadd.f32 %v1348, %v1764
      %v1766 = vpop.f32.mrf.mxu0
      %v1767 = vpop.f32.mrf.mxu0
      %v1768 = vadd.f32 %v1351, %v1767
      %v1769 = vpop.f32.mrf.mxu0
      %1770 = vmatprep.mubr.bf16.mxu0 0
      %1771 = vmatmul.mubr.bf16.gmra.mxu0 %v1529
      %v1772 = vpop.f32.mrf.mxu0
      %v1773 = vadd.f32 %v1356, %v1772
      %v1774 = vpop.f32.mrf.mxu0
      %v1775 = vpop.f32.mrf.mxu0
      %v1776 = vadd.f32 %v1359, %v1775
      %v1777 = vpop.f32.mrf.mxu0
      %1778 = vmatprep.mubr.bf16.mxu0 0
      %1779 = vmatmul.mubr.bf16.gmra.mxu0 %v1538
      %v1780 = vpop.f32.mrf.mxu0
      %v1781 = vadd.f32 %v1364, %v1780
      %v1782 = vpop.f32.mrf.mxu0
      %v1783 = vpop.f32.mrf.mxu0
      %v1784 = vadd.f32 %v1367, %v1783
      %v1785 = vpop.f32.mrf.mxu0
      %1786 = vmatprep.mubr.bf16.mxu0 0
      %1787 = vmatmul.mubr.bf16.gmra.mxu0 %v1547
      %v1788 = vpop.f32.mrf.mxu0
      %v1789 = vadd.f32 %v1372, %v1788
      %v1790 = vpop.f32.mrf.mxu0
      %v1791 = vpop.f32.mrf.mxu0
      %v1792 = vadd.f32 %v1375, %v1791
      %v1793 = vpop.f32.mrf.mxu0
      %1794 = vmatprep.mubr.bf16.mxu0 0
      %1795 = vmatmul.mubr.bf16.gmra.mxu0 %v1556
      %v1796 = vpop.f32.mrf.mxu0
      %v1797 = vadd.f32 %v1380, %v1796
      %v1798 = vpop.f32.mrf.mxu0
      %v1799 = vpop.f32.mrf.mxu0
      %v1800 = vadd.f32 %v1383, %v1799
      %v1801 = vpop.f32.mrf.mxu0
      %1802 = vmatprep.mubr.bf16.mxu0 0
      %1803 = vmatmul.mubr.bf16.gmra.mxu0 %v1565
      %v1804 = vpop.f32.mrf.mxu0
      %v1805 = vadd.f32 %v1388, %v1804
      %v1806 = vpop.f32.mrf.mxu0
      %v1807 = vpop.f32.mrf.mxu0
      %v1808 = vadd.f32 %v1391, %v1807
      %v1809 = vpop.f32.mrf.mxu0
      %1810 = vmatprep.mubr.bf16.mxu0 0
      %1811 = vmatmul.mubr.bf16.gmra.mxu0 %v1574
      %v1812 = vpop.f32.mrf.mxu0
      %v1813 = vadd.f32 %v1396, %v1812
      %v1814 = vpop.f32.mrf.mxu0
      %v1815 = vpop.f32.mrf.mxu0
      %v1816 = vadd.f32 %v1399, %v1815
      %v1817 = vpop.f32.mrf.mxu0
      %1818 = vmatprep.mubr.bf16.mxu0 0
      %1819 = vmatmul.mubr.bf16.gmra.mxu0 %v1583
      %v1820 = vpop.f32.mrf.mxu0
      %v1821 = vadd.f32 %v1404, %v1820
      %v1822 = vpop.f32.mrf.mxu0
      %v1823 = vpop.f32.mrf.mxu0
      %v1824 = vadd.f32 %v1407, %v1823
      %v1825 = vpop.f32.mrf.mxu0
      %1826 = vdwg.mxu0
      %v1827 = vld [vmem:[#allocation2 + $0x94] sm:$0xf]
      %s1828 = scalar_lea.vmem %s2, 128
      %v1829 = vld [vmem:[%s1828] sm:$0xf]
      %v1830 = vld [vmem:[%s1828 + $0x4] sm:$0xf]
      %v1831 = vld [vmem:[%s1828 + $0x8] sm:$0xf]
      %v1832 = vld [vmem:[%s1828 + $0xc] sm:$0xf]
      %v1833 = vld [vmem:[%s1828 + $0x10] sm:$0xf]
      %v1834 = vld [vmem:[%s1828 + $0x14] sm:$0xf]
      %v1835 = vld [vmem:[%s1828 + $0x18] sm:$0xf]
      %v1836 = vld [vmem:[%s1828 + $0x1c] sm:$0xf]
      %v1837 = vld [vmem:[%s1828 + $0x20] sm:$0xf]
      %v1838 = vld [vmem:[%s1828 + $0x24] sm:$0xf]
      %v1839 = vld [vmem:[%s1828 + $0x28] sm:$0xf]
      %v1840 = vld [vmem:[%s1828 + $0x2c] sm:$0xf]
      %v1841 = vld [vmem:[%s1828 + $0x30] sm:$0xf]
      %v1842 = vld [vmem:[%s1828 + $0x34] sm:$0xf]
      %v1843 = vld [vmem:[%s1828 + $0x38] sm:$0xf]
      %v1844 = vld [vmem:[%s1828 + $0x3c] sm:$0xf]
      %v1846 = vunpack.c.l.b16 %v1827
      %v1847 = vpack.c.b16 %v1846, %v1846
      %vm1848 = vsmask.f32 4352
      %v1850 = vshrl.u32 %v1110, 16
      %v1852 = vrot.slane %v1850, 3
      %v1853 = vshll.u32 %v1110, 16
      %v1855 = vrot.slane %v1853, 4
      %v1856 = vor.u32 %v1852, %v1855
      %v1857 = vrot.slane %v1423, 3
      %v1858 = vrot.slane %v1426, 4
      %v1859 = vor.u32 %v1857, %v1858
      %v1860 = vsel %vm1848, %v1856, %v1859
      %v1861 = vrot.slane %v1432, 3
      %v1862 = vrot.slane %v1435, 4
      %v1863 = vor.u32 %v1861, %v1862
      %v1864 = vsel %vm1848, %v1859, %v1863
      %v1865 = vrot.slane %v1441, 3
      %v1866 = vrot.slane %v1444, 4
      %v1867 = vor.u32 %v1865, %v1866
      %v1868 = vsel %vm1848, %v1863, %v1867
      %v1869 = vrot.slane %v1450, 3
      %v1870 = vrot.slane %v1453, 4
      %v1871 = vor.u32 %v1869, %v1870
      %v1872 = vsel %vm1848, %v1867, %v1871
      %v1873 = vrot.slane %v1459, 3
      %v1874 = vrot.slane %v1462, 4
      %v1875 = vor.u32 %v1873, %v1874
      %v1876 = vsel %vm1848, %v1871, %v1875
      %v1877 = vrot.slane %v1468, 3
      %v1878 = vrot.slane %v1471, 4
      %v1879 = vor.u32 %v1877, %v1878
      %v1880 = vsel %vm1848, %v1875, %v1879
      %v1881 = vrot.slane %v1477, 3
      %v1882 = vrot.slane %v1480, 4
      %v1883 = vor.u32 %v1881, %v1882
      %v1884 = vsel %vm1848, %v1879, %v1883
      %v1885 = vrot.slane %v1486, 3
      %v1886 = vrot.slane %v1489, 4
      %v1887 = vor.u32 %v1885, %v1886
      %v1888 = vsel %vm1848, %v1883, %v1887
      %v1889 = vrot.slane %v1495, 3
      %v1890 = vrot.slane %v1498, 4
      %v1891 = vor.u32 %v1889, %v1890
      %v1892 = vsel %vm1848, %v1887, %v1891
      %v1893 = vrot.slane %v1504, 3
      %v1894 = vrot.slane %v1507, 4
      %v1895 = vor.u32 %v1893, %v1894
      %v1896 = vsel %vm1848, %v1891, %v1895
      %v1897 = vrot.slane %v1513, 3
      %v1898 = vrot.slane %v1516, 4
      %v1899 = vor.u32 %v1897, %v1898
      %v1900 = vsel %vm1848, %v1895, %v1899
      %v1901 = vrot.slane %v1522, 3
      %v1902 = vrot.slane %v1525, 4
      %v1903 = vor.u32 %v1901, %v1902
      %v1904 = vsel %vm1848, %v1899, %v1903
      %v1905 = vrot.slane %v1531, 3
      %v1906 = vrot.slane %v1534, 4
      %v1907 = vor.u32 %v1905, %v1906
      %v1908 = vsel %vm1848, %v1903, %v1907
      %v1909 = vrot.slane %v1540, 3
      %v1910 = vrot.slane %v1543, 4
      %v1911 = vor.u32 %v1909, %v1910
      %v1912 = vsel %vm1848, %v1907, %v1911
      %v1913 = vrot.slane %v1549, 3
      %v1914 = vrot.slane %v1552, 4
      %v1915 = vor.u32 %v1913, %v1914
      %v1916 = vsel %vm1848, %v1911, %v1915
      %v1917 = vrot.slane %v1558, 3
      %v1918 = vrot.slane %v1561, 4
      %v1919 = vor.u32 %v1917, %v1918
      %v1920 = vsel %vm1848, %v1915, %v1919
      %v1921 = vrot.slane %v1567, 3
      %v1922 = vrot.slane %v1570, 4
      %v1923 = vor.u32 %v1921, %v1922
      %v1924 = vsel %vm1848, %v1919, %v1923
      %v1926 = vshrl.u32 %v1847, 16
      %v1928 = vrot.slane %v1926, 3
      %v1929 = vshll.u32 %v1847, 16
      %v1931 = vrot.slane %v1929, 4
      %v1932 = vor.u32 %v1928, %v1931
      %v1933 = vsel %vm1848, %v1923, %v1932
      %v1968 = vunpack.c.l.b16 %v1829
      %v1969 = vunpack.c.l.b16 %v1830
      %v1970 = vunpack.c.l.b16 %v1831
      %v1971 = vunpack.c.l.b16 %v1832
      %v1972 = vunpack.c.l.b16 %v1833
      %v1973 = vunpack.c.l.b16 %v1834
      %v1974 = vunpack.c.l.b16 %v1835
      %v1975 = vunpack.c.l.b16 %v1836
      %v1976 = vunpack.c.l.b16 %v1837
      %v1977 = vunpack.c.l.b16 %v1838
      %v1978 = vunpack.c.l.b16 %v1839
      %v1979 = vunpack.c.l.b16 %v1840
      %v1980 = vunpack.c.l.b16 %v1841
      %v1981 = vunpack.c.l.b16 %v1842
      %v1982 = vunpack.c.l.b16 %v1843
      %v1983 = vunpack.c.l.b16 %v1844
      %v1984 = vpack.c.b16 %v1969, %v1968
      %v1985 = vpack.c.b16 %v1971, %v1970
      %v1986 = vpack.c.b16 %v1973, %v1972
      %v1987 = vpack.c.b16 %v1975, %v1974
      %v1988 = vpack.c.b16 %v1977, %v1976
      %v1989 = vpack.c.b16 %v1979, %v1978
      %v1990 = vpack.c.b16 %v1981, %v1980
      %v1991 = vpack.c.b16 %v1983, %v1982
      %2000 = vmatprep.subr.bf16.mxu0 0
      %2001 = vmatpush1.bf16.msra.mxu0 %v1991
      %2002 = vmatprep.subr.bf16.mxu0 0
      %2003 = vmatpush1.bf16.msra.mxu0 %v1990
      %2004 = vmatprep.subr.bf16.mxu0 0
      %2005 = vmatpush1.bf16.msra.mxu0 %v1989
      %2006 = vmatprep.subr.bf16.mxu0 0
      %2007 = vmatpush1.bf16.msra.mxu0 %v1988
      %2008 = vmatprep.subr.bf16.mxu0 0
      %2009 = vmatpush1.bf16.msra.mxu0 %v1987
      %2010 = vmatprep.subr.bf16.mxu0 0
      %2011 = vmatpush1.bf16.msra.mxu0 %v1986
      %2012 = vmatprep.subr.bf16.mxu0 0
      %2013 = vmatpush1.bf16.msra.mxu0 %v1985
      %2014 = vmatprep.subr.bf16.mxu0 0
      %2015 = vmatpush1.bf16.msra.mxu0 %v1984
      %2016 = vmatprep.subr.bf16.mxu0 0
      %2017 = vmatpush2.bf16.msra.mxu0 0
      %2018 = vmatprep.subr.bf16.mxu0 0
      %2019 = vmatpush2.bf16.msra.mxu0 0
      %2020 = vmatprep.subr.bf16.mxu0 0
      %2021 = vmatpush2.bf16.msra.mxu0 0
      %2022 = vmatprep.subr.bf16.mxu0 0
      %2023 = vmatpush2.bf16.msra.mxu0 0
      %2024 = vmatprep.subr.bf16.mxu0 0
      %2025 = vmatpush2.bf16.msra.mxu0 0
      %2026 = vmatprep.subr.bf16.mxu0 0
      %2027 = vmatpush2.bf16.msra.mxu0 0
      %2028 = vmatprep.subr.bf16.mxu0 0
      %2029 = vmatpush2.bf16.msra.mxu0 0
      %2030 = vmatprep.subr.bf16.mxu0 0
      %2031 = vmatpush2.bf16.msra.mxu0 0
      %2032 = vmatprep.mubr.bf16.mxu0 0
      %2033 = vmatmul.mubr.bf16.gmra.mxu0 %v1860
      %v2034 = vpop.f32.mrf.mxu0
      %v2035 = vadd.f32 0.0, %v2034
      %v2036 = vpop.f32.mrf.mxu0
      %v2037 = vpop.f32.mrf.mxu0
      %v2038 = vadd.f32 0.0, %v2037
      %v2039 = vpop.f32.mrf.mxu0
      %2040 = vmatprep.mubr.bf16.mxu0 0
      %2041 = vmatmul.mubr.bf16.gmra.mxu0 %v1864
      %v2042 = vpop.f32.mrf.mxu0
      %v2043 = vadd.f32 0.0, %v2042
      %v2044 = vpop.f32.mrf.mxu0
      %v2045 = vpop.f32.mrf.mxu0
      %v2046 = vadd.f32 0.0, %v2045
      %v2047 = vpop.f32.mrf.mxu0
      %2048 = vmatprep.mubr.bf16.mxu0 0
      %2049 = vmatmul.mubr.bf16.gmra.mxu0 %v1868
      %v2050 = vpop.f32.mrf.mxu0
      %v2051 = vadd.f32 0.0, %v2050
      %v2052 = vpop.f32.mrf.mxu0
      %v2053 = vpop.f32.mrf.mxu0
      %v2054 = vadd.f32 0.0, %v2053
      %v2055 = vpop.f32.mrf.mxu0
      %2056 = vmatprep.mubr.bf16.mxu0 0
      %2057 = vmatmul.mubr.bf16.gmra.mxu0 %v1872
      %v2058 = vpop.f32.mrf.mxu0
      %v2059 = vadd.f32 0.0, %v2058
      %v2060 = vpop.f32.mrf.mxu0
      %v2061 = vpop.f32.mrf.mxu0
      %v2062 = vadd.f32 0.0, %v2061
      %v2063 = vpop.f32.mrf.mxu0
      %2064 = vmatprep.mubr.bf16.mxu0 0
      %2065 = vmatmul.mubr.bf16.gmra.mxu0 %v1876
      %v2066 = vpop.f32.mrf.mxu0
      %v2067 = vadd.f32 0.0, %v2066
      %v2068 = vpop.f32.mrf.mxu0
      %v2069 = vpop.f32.mrf.mxu0
      %v2070 = vadd.f32 0.0, %v2069
      %v2071 = vpop.f32.mrf.mxu0
      %2072 = vmatprep.mubr.bf16.mxu0 0
      %2073 = vmatmul.mubr.bf16.gmra.mxu0 %v1880
      %v2074 = vpop.f32.mrf.mxu0
      %v2075 = vadd.f32 0.0, %v2074
      %v2076 = vpop.f32.mrf.mxu0
      %v2077 = vpop.f32.mrf.mxu0
      %v2078 = vadd.f32 0.0, %v2077
      %v2079 = vpop.f32.mrf.mxu0
      %2080 = vmatprep.mubr.bf16.mxu0 0
      %2081 = vmatmul.mubr.bf16.gmra.mxu0 %v1884
      %v2082 = vpop.f32.mrf.mxu0
      %v2083 = vadd.f32 0.0, %v2082
      %v2084 = vpop.f32.mrf.mxu0
      %v2085 = vpop.f32.mrf.mxu0
      %v2086 = vadd.f32 0.0, %v2085
      %v2087 = vpop.f32.mrf.mxu0
      %2088 = vmatprep.mubr.bf16.mxu0 0
      %2089 = vmatmul.mubr.bf16.gmra.mxu0 %v1888
      %v2090 = vpop.f32.mrf.mxu0
      %v2091 = vadd.f32 0.0, %v2090
      %v2092 = vpop.f32.mrf.mxu0
      %v2093 = vpop.f32.mrf.mxu0
      %v2094 = vadd.f32 0.0, %v2093
      %v2095 = vpop.f32.mrf.mxu0
      %2096 = vmatprep.mubr.bf16.mxu0 0
      %2097 = vmatmul.mubr.bf16.gmra.mxu0 %v1892
      %v2098 = vpop.f32.mrf.mxu0
      %v2099 = vadd.f32 0.0, %v2098
      %v2100 = vpop.f32.mrf.mxu0
      %v2101 = vpop.f32.mrf.mxu0
      %v2102 = vadd.f32 0.0, %v2101
      %v2103 = vpop.f32.mrf.mxu0
      %2104 = vmatprep.mubr.bf16.mxu0 0
      %2105 = vmatmul.mubr.bf16.gmra.mxu0 %v1896
      %v2106 = vpop.f32.mrf.mxu0
      %v2107 = vadd.f32 0.0, %v2106
      %v2108 = vpop.f32.mrf.mxu0
      %v2109 = vpop.f32.mrf.mxu0
      %v2110 = vadd.f32 0.0, %v2109
      %v2111 = vpop.f32.mrf.mxu0
      %2112 = vmatprep.mubr.bf16.mxu0 0
      %2113 = vmatmul.mubr.bf16.gmra.mxu0 %v1900
      %v2114 = vpop.f32.mrf.mxu0
      %v2115 = vadd.f32 0.0, %v2114
      %v2116 = vpop.f32.mrf.mxu0
      %v2117 = vpop.f32.mrf.mxu0
      %v2118 = vadd.f32 0.0, %v2117
      %v2119 = vpop.f32.mrf.mxu0
      %2120 = vmatprep.mubr.bf16.mxu0 0
      %2121 = vmatmul.mubr.bf16.gmra.mxu0 %v1904
      %v2122 = vpop.f32.mrf.mxu0
      %v2123 = vadd.f32 0.0, %v2122
      %v2124 = vpop.f32.mrf.mxu0
      %v2125 = vpop.f32.mrf.mxu0
      %v2126 = vadd.f32 0.0, %v2125
      %v2127 = vpop.f32.mrf.mxu0
      %2128 = vmatprep.mubr.bf16.mxu0 0
      %2129 = vmatmul.mubr.bf16.gmra.mxu0 %v1908
      %v2130 = vpop.f32.mrf.mxu0
      %v2131 = vadd.f32 0.0, %v2130
      %v2132 = vpop.f32.mrf.mxu0
      %v2133 = vpop.f32.mrf.mxu0
      %v2134 = vadd.f32 0.0, %v2133
      %v2135 = vpop.f32.mrf.mxu0
      %2136 = vmatprep.mubr.bf16.mxu0 0
      %2137 = vmatmul.mubr.bf16.gmra.mxu0 %v1912
      %v2138 = vpop.f32.mrf.mxu0
      %v2139 = vadd.f32 0.0, %v2138
      %v2140 = vpop.f32.mrf.mxu0
      %v2141 = vpop.f32.mrf.mxu0
      %v2142 = vadd.f32 0.0, %v2141
      %v2143 = vpop.f32.mrf.mxu0
      %2144 = vmatprep.mubr.bf16.mxu0 0
      %2145 = vmatmul.mubr.bf16.gmra.mxu0 %v1916
      %v2146 = vpop.f32.mrf.mxu0
      %v2147 = vadd.f32 0.0, %v2146
      %v2148 = vpop.f32.mrf.mxu0
      %v2149 = vpop.f32.mrf.mxu0
      %v2150 = vadd.f32 0.0, %v2149
      %v2151 = vpop.f32.mrf.mxu0
      %2152 = vmatprep.mubr.bf16.mxu0 0
      %2153 = vmatmul.mubr.bf16.gmra.mxu0 %v1920
      %v2154 = vpop.f32.mrf.mxu0
      %v2155 = vadd.f32 0.0, %v2154
      %v2156 = vpop.f32.mrf.mxu0
      %v2157 = vpop.f32.mrf.mxu0
      %v2158 = vadd.f32 0.0, %v2157
      %v2159 = vpop.f32.mrf.mxu0
      %2160 = vmatprep.mubr.bf16.mxu0 0
      %2161 = vmatmul.mubr.bf16.gmra.mxu0 %v1924
      %v2162 = vpop.f32.mrf.mxu0
      %v2163 = vadd.f32 0.0, %v2162
      %v2164 = vpop.f32.mrf.mxu0
      %v2165 = vpop.f32.mrf.mxu0
      %v2166 = vadd.f32 0.0, %v2165
      %v2167 = vpop.f32.mrf.mxu0
      %2168 = vmatprep.mubr.bf16.mxu0 0
      %2169 = vmatmul.mubr.bf16.gmra.mxu0 %v1933
      %v2170 = vpop.f32.mrf.mxu0
      %v2171 = vadd.f32 0.0, %v2170
      %v2172 = vpop.f32.mrf.mxu0
      %v2173 = vpop.f32.mrf.mxu0
      %v2174 = vadd.f32 0.0, %v2173
      %v2175 = vpop.f32.mrf.mxu0
      %2176 = vdwg.mxu0
      %v2177 = vadd.f32 %v1685, %v2035
      %v2178 = vadd.f32 %v1688, %v2038
      %v2179 = vadd.f32 %v1693, %v2043
      %v2180 = vadd.f32 %v1696, %v2046
      %v2181 = vadd.f32 %v1701, %v2051
      %v2182 = vadd.f32 %v1704, %v2054
      %v2183 = vadd.f32 %v1709, %v2059
      %v2184 = vadd.f32 %v1712, %v2062
      %v2185 = vadd.f32 %v1717, %v2067
      %v2186 = vadd.f32 %v1720, %v2070
      %v2187 = vadd.f32 %v1725, %v2075
      %v2188 = vadd.f32 %v1728, %v2078
      %v2189 = vadd.f32 %v1733, %v2083
      %v2190 = vadd.f32 %v1736, %v2086
      %v2191 = vadd.f32 %v1741, %v2091
      %v2192 = vadd.f32 %v1744, %v2094
      %v2193 = vadd.f32 %v1749, %v2099
      %v2194 = vadd.f32 %v1752, %v2102
      %v2195 = vadd.f32 %v1757, %v2107
      %v2196 = vadd.f32 %v1760, %v2110
      %v2197 = vadd.f32 %v1765, %v2115
      %v2198 = vadd.f32 %v1768, %v2118
      %v2199 = vadd.f32 %v1773, %v2123
      %v2200 = vadd.f32 %v1776, %v2126
      %v2201 = vadd.f32 %v1781, %v2131
      %v2202 = vadd.f32 %v1784, %v2134
      %v2203 = vadd.f32 %v1789, %v2139
      %v2204 = vadd.f32 %v1792, %v2142
      %v2205 = vadd.f32 %v1797, %v2147
      %v2206 = vadd.f32 %v1800, %v2150
      %v2207 = vadd.f32 %v1805, %v2155
      %v2208 = vadd.f32 %v1808, %v2158
      %v2209 = vadd.f32 %v1813, %v2163
      %v2210 = vadd.f32 %v1816, %v2166
      %v2211 = vadd.f32 %v1821, %v2171
      %v2212 = vadd.f32 %v1824, %v2174
      %v2213 = vld [vmem:[#allocation2 + $0xc] sm:$0x8]
      %v2214 = vld [vmem:[#allocation2 + $0x10] sm:$0xf]
      %v2215 = vld [vmem:[#allocation2 + $0x14] sm:$0xf]
      %v2216 = vld [vmem:[#allocation2 + $0x18] sm:$0xf]
      %v2217 = vld [vmem:[#allocation2 + $0x1c] sm:$0xf]
      %v2218 = vld [vmem:[#allocation2 + $0x20] sm:$0xf]
      %v2219 = vld [vmem:[#allocation2 + $0x24] sm:$0xf]
      %v2220 = vld [vmem:[#allocation2 + $0x28] sm:$0xf]
      %v2221 = vld [vmem:[#allocation2 + $0x2c] sm:$0xf]
      %v2222 = vld [vmem:[#allocation2 + $0x30] sm:$0xf]
      %v2223 = vld [vmem:[#allocation2 + $0x34] sm:$0xf]
      %v2224 = vld [vmem:[#allocation2 + $0x38] sm:$0xf]
      %v2225 = vld [vmem:[#allocation2 + $0x3c] sm:$0xf]
      %v2226 = vld [vmem:[#allocation2 + $0x40] sm:$0xf]
      %v2227 = vld [vmem:[#allocation2 + $0x44] sm:$0xf]
      %v2228 = vld [vmem:[#allocation2 + $0x48] sm:$0xf]
      %v2229 = vld [vmem:[#allocation2 + $0x4c] sm:$0xf]
      %v2230 = vld [vmem:[#allocation2 + $0x50] sm:$0xf]
      %v2231 = vld [vmem:[#allocation2 + $0x54] sm:$0xf]
      %v2232 = vld [vmem:[#allocation2 + $0x58] sm:$0xf]
      %v2233 = vld [vmem:[#allocation2 + $0x5c] sm:$0xf]
      %v2234 = vld [vmem:[#allocation2 + $0x60] sm:$0xf]
      %v2235 = vld [vmem:[#allocation2 + $0x64] sm:$0xf]
      %v2236 = vld [vmem:[#allocation2 + $0x68] sm:$0xf]
      %v2237 = vld [vmem:[#allocation2 + $0x6c] sm:$0xf]
      %v2238 = vld [vmem:[#allocation2 + $0x70] sm:$0xf]
      %v2239 = vld [vmem:[#allocation2 + $0x74] sm:$0xf]
      %v2240 = vld [vmem:[#allocation2 + $0x78] sm:$0xf]
      %v2241 = vld [vmem:[#allocation2 + $0x7c] sm:$0xf]
      %v2242 = vld [vmem:[#allocation2 + $0x80] sm:$0xf]
      %v2243 = vld [vmem:[#allocation2 + $0x84] sm:$0xf]
      %v2244 = vld [vmem:[#allocation2 + $0x88] sm:$0xf]
      %v2245 = vld [vmem:[#allocation2 + $0x8c] sm:$0xf]
      %v2246 = vld [vmem:[#allocation2 + $0x90] sm:$0xf]
      %v2247 = vld [vmem:[#allocation2 + $0x94] sm:$0xf]
      %v2248 = vld [vmem:[#allocation2 + $0x98] sm:$0xf]
      %v2249 = vld [vmem:[#allocation2 + $0x9c] sm:$0xf]
      %s2250 = scalar_lea.vmem %s2, 192
      %v2251 = vld [vmem:[%s2250] sm:$0xf]
      %v2252 = vld [vmem:[%s2250 + $0x4] sm:$0xf]
      %v2253 = vld [vmem:[%s2250 + $0x8] sm:$0xf]
      %v2254 = vld [vmem:[%s2250 + $0xc] sm:$0xf]
      %v2255 = vld [vmem:[%s2250 + $0x10] sm:$0xf]
      %v2256 = vld [vmem:[%s2250 + $0x14] sm:$0xf]
      %v2257 = vld [vmem:[%s2250 + $0x18] sm:$0xf]
      %v2258 = vld [vmem:[%s2250 + $0x1c] sm:$0xf]
      %v2259 = vld [vmem:[%s2250 + $0x20] sm:$0xf]
      %v2260 = vld [vmem:[%s2250 + $0x24] sm:$0xf]
      %v2261 = vld [vmem:[%s2250 + $0x28] sm:$0xf]
      %v2262 = vld [vmem:[%s2250 + $0x2c] sm:$0xf]
      %v2263 = vld [vmem:[%s2250 + $0x30] sm:$0xf]
      %v2264 = vld [vmem:[%s2250 + $0x34] sm:$0xf]
      %v2265 = vld [vmem:[%s2250 + $0x38] sm:$0xf]
      %v2266 = vld [vmem:[%s2250 + $0x3c] sm:$0xf]
      %v2304 = vunpack.c.l.b16 %v2213
      %v2305 = vunpack.c.l.b16 %v2214
      %v2306 = vunpack.c.l.b16 %v2215
      %v2307 = vunpack.c.l.b16 %v2216
      %v2308 = vunpack.c.l.b16 %v2217
      %v2309 = vunpack.c.l.b16 %v2218
      %v2310 = vunpack.c.l.b16 %v2219
      %v2311 = vunpack.c.l.b16 %v2220
      %v2312 = vunpack.c.l.b16 %v2221
      %v2313 = vunpack.c.l.b16 %v2222
      %v2314 = vunpack.c.l.b16 %v2223
      %v2315 = vunpack.c.l.b16 %v2224
      %v2316 = vunpack.c.l.b16 %v2225
      %v2317 = vunpack.c.l.b16 %v2226
      %v2318 = vunpack.c.l.b16 %v2227
      %v2319 = vunpack.c.l.b16 %v2228
      %v2320 = vunpack.c.l.b16 %v2229
      %v2321 = vunpack.c.l.b16 %v2230
      %v2322 = vunpack.c.l.b16 %v2231
      %v2323 = vunpack.c.l.b16 %v2232
      %v2324 = vunpack.c.l.b16 %v2233
      %v2325 = vunpack.c.l.b16 %v2234
      %v2326 = vunpack.c.l.b16 %v2235
      %v2327 = vunpack.c.l.b16 %v2236
      %v2328 = vunpack.c.l.b16 %v2237
      %v2329 = vunpack.c.l.b16 %v2238
      %v2330 = vunpack.c.l.b16 %v2239
      %v2331 = vunpack.c.l.b16 %v2240
      %v2332 = vunpack.c.l.b16 %v2241
      %v2333 = vunpack.c.l.b16 %v2242
      %v2334 = vunpack.c.l.b16 %v2243
      %v2335 = vunpack.c.l.b16 %v2244
      %v2336 = vunpack.c.l.b16 %v2245
      %v2337 = vunpack.c.l.b16 %v2246
      %v2338 = vunpack.c.l.b16 %v2247
      %v2339 = vunpack.c.l.b16 %v2248
      %v2340 = vunpack.c.l.b16 %v2249
      %v2341 = vpack.c.b16 %v2305, %v2304
      %v2342 = vpack.c.b16 %v2307, %v2306
      %v2343 = vpack.c.b16 %v2309, %v2308
      %v2344 = vpack.c.b16 %v2311, %v2310
      %v2345 = vpack.c.b16 %v2313, %v2312
      %v2346 = vpack.c.b16 %v2315, %v2314
      %v2347 = vpack.c.b16 %v2317, %v2316
      %v2348 = vpack.c.b16 %v2319, %v2318
      %v2349 = vpack.c.b16 %v2321, %v2320
      %v2350 = vpack.c.b16 %v2323, %v2322
      %v2351 = vpack.c.b16 %v2325, %v2324
      %v2352 = vpack.c.b16 %v2327, %v2326
      %v2353 = vpack.c.b16 %v2329, %v2328
      %v2354 = vpack.c.b16 %v2331, %v2330
      %v2355 = vpack.c.b16 %v2333, %v2332
      %v2356 = vpack.c.b16 %v2335, %v2334
      %v2357 = vpack.c.b16 %v2337, %v2336
      %v2358 = vpack.c.b16 %v2339, %v2338
      %v2359 = vpack.c.b16 %v2340, %v2340
      %v2361 = vshrl.u32 %v2341, 16
      %v2363 = vrot.slane %v2361, 3
      %v2364 = vshll.u32 %v2341, 16
      %v2366 = vrot.slane %v2364, 4
      %v2367 = vor.u32 %v2363, %v2366
      %v2369 = vshrl.u32 %v2342, 16
      %v2371 = vrot.slane %v2369, 3
      %v2372 = vshll.u32 %v2342, 16
      %v2374 = vrot.slane %v2372, 4
      %v2375 = vor.u32 %v2371, %v2374
      %v2376 = vsel %vm1848, %v2367, %v2375
      %v2378 = vshrl.u32 %v2343, 16
      %v2380 = vrot.slane %v2378, 3
      %v2381 = vshll.u32 %v2343, 16
      %v2383 = vrot.slane %v2381, 4
      %v2384 = vor.u32 %v2380, %v2383
      %v2385 = vsel %vm1848, %v2375, %v2384
      %v2387 = vshrl.u32 %v2344, 16
      %v2389 = vrot.slane %v2387, 3
      %v2390 = vshll.u32 %v2344, 16
      %v2392 = vrot.slane %v2390, 4
      %v2393 = vor.u32 %v2389, %v2392
      %v2394 = vsel %vm1848, %v2384, %v2393
      %v2396 = vshrl.u32 %v2345, 16
      %v2398 = vrot.slane %v2396, 3
      %v2399 = vshll.u32 %v2345, 16
      %v2401 = vrot.slane %v2399, 4
      %v2402 = vor.u32 %v2398, %v2401
      %v2403 = vsel %vm1848, %v2393, %v2402
      %v2405 = vshrl.u32 %v2346, 16
      %v2407 = vrot.slane %v2405, 3
      %v2408 = vshll.u32 %v2346, 16
      %v2410 = vrot.slane %v2408, 4
      %v2411 = vor.u32 %v2407, %v2410
      %v2412 = vsel %vm1848, %v2402, %v2411
      %v2414 = vshrl.u32 %v2347, 16
      %v2416 = vrot.slane %v2414, 3
      %v2417 = vshll.u32 %v2347, 16
      %v2419 = vrot.slane %v2417, 4
      %v2420 = vor.u32 %v2416, %v2419
      %v2421 = vsel %vm1848, %v2411, %v2420
      %v2423 = vshrl.u32 %v2348, 16
      %v2425 = vrot.slane %v2423, 3
      %v2426 = vshll.u32 %v2348, 16
      %v2428 = vrot.slane %v2426, 4
      %v2429 = vor.u32 %v2425, %v2428
      %v2430 = vsel %vm1848, %v2420, %v2429
      %v2432 = vshrl.u32 %v2349, 16
      %v2434 = vrot.slane %v2432, 3
      %v2435 = vshll.u32 %v2349, 16
      %v2437 = vrot.slane %v2435, 4
      %v2438 = vor.u32 %v2434, %v2437
      %v2439 = vsel %vm1848, %v2429, %v2438
      %v2441 = vshrl.u32 %v2350, 16
      %v2443 = vrot.slane %v2441, 3
      %v2444 = vshll.u32 %v2350, 16
      %v2446 = vrot.slane %v2444, 4
      %v2447 = vor.u32 %v2443, %v2446
      %v2448 = vsel %vm1848, %v2438, %v2447
      %v2450 = vshrl.u32 %v2351, 16
      %v2452 = vrot.slane %v2450, 3
      %v2453 = vshll.u32 %v2351, 16
      %v2455 = vrot.slane %v2453, 4
      %v2456 = vor.u32 %v2452, %v2455
      %v2457 = vsel %vm1848, %v2447, %v2456
      %v2459 = vshrl.u32 %v2352, 16
      %v2461 = vrot.slane %v2459, 3
      %v2462 = vshll.u32 %v2352, 16
      %v2464 = vrot.slane %v2462, 4
      %v2465 = vor.u32 %v2461, %v2464
      %v2466 = vsel %vm1848, %v2456, %v2465
      %v2468 = vshrl.u32 %v2353, 16
      %v2470 = vrot.slane %v2468, 3
      %v2471 = vshll.u32 %v2353, 16
      %v2473 = vrot.slane %v2471, 4
      %v2474 = vor.u32 %v2470, %v2473
      %v2475 = vsel %vm1848, %v2465, %v2474
      %v2477 = vshrl.u32 %v2354, 16
      %v2479 = vrot.slane %v2477, 3
      %v2480 = vshll.u32 %v2354, 16
      %v2482 = vrot.slane %v2480, 4
      %v2483 = vor.u32 %v2479, %v2482
      %v2484 = vsel %vm1848, %v2474, %v2483
      %v2486 = vshrl.u32 %v2355, 16
      %v2488 = vrot.slane %v2486, 3
      %v2489 = vshll.u32 %v2355, 16
      %v2491 = vrot.slane %v2489, 4
      %v2492 = vor.u32 %v2488, %v2491
      %v2493 = vsel %vm1848, %v2483, %v2492
      %v2495 = vshrl.u32 %v2356, 16
      %v2497 = vrot.slane %v2495, 3
      %v2498 = vshll.u32 %v2356, 16
      %v2500 = vrot.slane %v2498, 4
      %v2501 = vor.u32 %v2497, %v2500
      %v2502 = vsel %vm1848, %v2492, %v2501
      %v2504 = vshrl.u32 %v2357, 16
      %v2506 = vrot.slane %v2504, 3
      %v2507 = vshll.u32 %v2357, 16
      %v2509 = vrot.slane %v2507, 4
      %v2510 = vor.u32 %v2506, %v2509
      %v2511 = vsel %vm1848, %v2501, %v2510
      %v2513 = vshrl.u32 %v2358, 16
      %v2515 = vrot.slane %v2513, 3
      %v2516 = vshll.u32 %v2358, 16
      %v2518 = vrot.slane %v2516, 4
      %v2519 = vor.u32 %v2515, %v2518
      %v2520 = vsel %vm1848, %v2510, %v2519
      %v2522 = vshrl.u32 %v2359, 16
      %v2524 = vrot.slane %v2522, 3
      %v2525 = vshll.u32 %v2359, 16
      %v2527 = vrot.slane %v2525, 4
      %v2528 = vor.u32 %v2524, %v2527
      %v2529 = vsel %vm1848, %v2519, %v2528
      %v2564 = vunpack.c.l.b16 %v2251
      %v2565 = vunpack.c.l.b16 %v2252
      %v2566 = vunpack.c.l.b16 %v2253
      %v2567 = vunpack.c.l.b16 %v2254
      %v2568 = vunpack.c.l.b16 %v2255
      %v2569 = vunpack.c.l.b16 %v2256
      %v2570 = vunpack.c.l.b16 %v2257
      %v2571 = vunpack.c.l.b16 %v2258
      %v2572 = vunpack.c.l.b16 %v2259
      %v2573 = vunpack.c.l.b16 %v2260
      %v2574 = vunpack.c.l.b16 %v2261
      %v2575 = vunpack.c.l.b16 %v2262
      %v2576 = vunpack.c.l.b16 %v2263
      %v2577 = vunpack.c.l.b16 %v2264
      %v2578 = vunpack.c.l.b16 %v2265
      %v2579 = vunpack.c.l.b16 %v2266
      %v2580 = vpack.c.b16 %v2565, %v2564
      %v2581 = vpack.c.b16 %v2567, %v2566
      %v2582 = vpack.c.b16 %v2569, %v2568
      %v2583 = vpack.c.b16 %v2571, %v2570
      %v2584 = vpack.c.b16 %v2573, %v2572
      %v2585 = vpack.c.b16 %v2575, %v2574
      %v2586 = vpack.c.b16 %v2577, %v2576
      %v2587 = vpack.c.b16 %v2579, %v2578
      %2596 = vmatprep.subr.bf16.mxu0 0
      %2597 = vmatpush1.bf16.msra.mxu0 %v2587
      %2598 = vmatprep.subr.bf16.mxu0 0
      %2599 = vmatpush1.bf16.msra.mxu0 %v2586
      %2600 = vmatprep.subr.bf16.mxu0 0
      %2601 = vmatpush1.bf16.msra.mxu0 %v2585
      %2602 = vmatprep.subr.bf16.mxu0 0
      %2603 = vmatpush1.bf16.msra.mxu0 %v2584
      %2604 = vmatprep.subr.bf16.mxu0 0
      %2605 = vmatpush1.bf16.msra.mxu0 %v2583
      %2606 = vmatprep.subr.bf16.mxu0 0
      %2607 = vmatpush1.bf16.msra.mxu0 %v2582
      %2608 = vmatprep.subr.bf16.mxu0 0
      %2609 = vmatpush1.bf16.msra.mxu0 %v2581
      %2610 = vmatprep.subr.bf16.mxu0 0
      %2611 = vmatpush1.bf16.msra.mxu0 %v2580
      %2612 = vmatprep.subr.bf16.mxu0 0
      %2613 = vmatpush2.bf16.msra.mxu0 0
      %2614 = vmatprep.subr.bf16.mxu0 0
      %2615 = vmatpush2.bf16.msra.mxu0 0
      %2616 = vmatprep.subr.bf16.mxu0 0
      %2617 = vmatpush2.bf16.msra.mxu0 0
      %2618 = vmatprep.subr.bf16.mxu0 0
      %2619 = vmatpush2.bf16.msra.mxu0 0
      %2620 = vmatprep.subr.bf16.mxu0 0
      %2621 = vmatpush2.bf16.msra.mxu0 0
      %2622 = vmatprep.subr.bf16.mxu0 0
      %2623 = vmatpush2.bf16.msra.mxu0 0
      %2624 = vmatprep.subr.bf16.mxu0 0
      %2625 = vmatpush2.bf16.msra.mxu0 0
      %2626 = vmatprep.subr.bf16.mxu0 0
      %2627 = vmatpush2.bf16.msra.mxu0 0
      %2628 = vmatprep.mubr.bf16.mxu0 0
      %2629 = vmatmul.mubr.bf16.gmra.mxu0 %v2376
      %v2630 = vpop.f32.mrf.mxu0
      %v2631 = vadd.f32 0.0, %v2630
      %v2632 = vpop.f32.mrf.mxu0
      %v2633 = vpop.f32.mrf.mxu0
      %v2634 = vadd.f32 0.0, %v2633
      %v2635 = vpop.f32.mrf.mxu0
      %2636 = vmatprep.mubr.bf16.mxu0 0
      %2637 = vmatmul.mubr.bf16.gmra.mxu0 %v2385
      %v2638 = vpop.f32.mrf.mxu0
      %v2639 = vadd.f32 0.0, %v2638
      %v2640 = vpop.f32.mrf.mxu0
      %v2641 = vpop.f32.mrf.mxu0
      %v2642 = vadd.f32 0.0, %v2641
      %v2643 = vpop.f32.mrf.mxu0
      %2644 = vmatprep.mubr.bf16.mxu0 0
      %2645 = vmatmul.mubr.bf16.gmra.mxu0 %v2394
      %v2646 = vpop.f32.mrf.mxu0
      %v2647 = vadd.f32 0.0, %v2646
      %v2648 = vpop.f32.mrf.mxu0
      %v2649 = vpop.f32.mrf.mxu0
      %v2650 = vadd.f32 0.0, %v2649
      %v2651 = vpop.f32.mrf.mxu0
      %2652 = vmatprep.mubr.bf16.mxu0 0
      %2653 = vmatmul.mubr.bf16.gmra.mxu0 %v2403
      %v2654 = vpop.f32.mrf.mxu0
      %v2655 = vadd.f32 0.0, %v2654
      %v2656 = vpop.f32.mrf.mxu0
      %v2657 = vpop.f32.mrf.mxu0
      %v2658 = vadd.f32 0.0, %v2657
      %v2659 = vpop.f32.mrf.mxu0
      %2660 = vmatprep.mubr.bf16.mxu0 0
      %2661 = vmatmul.mubr.bf16.gmra.mxu0 %v2412
      %v2662 = vpop.f32.mrf.mxu0
      %v2663 = vadd.f32 0.0, %v2662
      %v2664 = vpop.f32.mrf.mxu0
      %v2665 = vpop.f32.mrf.mxu0
      %v2666 = vadd.f32 0.0, %v2665
      %v2667 = vpop.f32.mrf.mxu0
      %2668 = vmatprep.mubr.bf16.mxu0 0
      %2669 = vmatmul.mubr.bf16.gmra.mxu0 %v2421
      %v2670 = vpop.f32.mrf.mxu0
      %v2671 = vadd.f32 0.0, %v2670
      %v2672 = vpop.f32.mrf.mxu0
      %v2673 = vpop.f32.mrf.mxu0
      %v2674 = vadd.f32 0.0, %v2673
      %v2675 = vpop.f32.mrf.mxu0
      %2676 = vmatprep.mubr.bf16.mxu0 0
      %2677 = vmatmul.mubr.bf16.gmra.mxu0 %v2430
      %v2678 = vpop.f32.mrf.mxu0
      %v2679 = vadd.f32 0.0, %v2678
      %v2680 = vpop.f32.mrf.mxu0
      %v2681 = vpop.f32.mrf.mxu0
      %v2682 = vadd.f32 0.0, %v2681
      %v2683 = vpop.f32.mrf.mxu0
      %2684 = vmatprep.mubr.bf16.mxu0 0
      %2685 = vmatmul.mubr.bf16.gmra.mxu0 %v2439
      %v2686 = vpop.f32.mrf.mxu0
      %v2687 = vadd.f32 0.0, %v2686
      %v2688 = vpop.f32.mrf.mxu0
      %v2689 = vpop.f32.mrf.mxu0
      %v2690 = vadd.f32 0.0, %v2689
      %v2691 = vpop.f32.mrf.mxu0
      %2692 = vmatprep.mubr.bf16.mxu0 0
      %2693 = vmatmul.mubr.bf16.gmra.mxu0 %v2448
      %v2694 = vpop.f32.mrf.mxu0
      %v2695 = vadd.f32 0.0, %v2694
      %v2696 = vpop.f32.mrf.mxu0
      %v2697 = vpop.f32.mrf.mxu0
      %v2698 = vadd.f32 0.0, %v2697
      %v2699 = vpop.f32.mrf.mxu0
      %2700 = vmatprep.mubr.bf16.mxu0 0
      %2701 = vmatmul.mubr.bf16.gmra.mxu0 %v2457
      %v2702 = vpop.f32.mrf.mxu0
      %v2703 = vadd.f32 0.0, %v2702
      %v2704 = vpop.f32.mrf.mxu0
      %v2705 = vpop.f32.mrf.mxu0
      %v2706 = vadd.f32 0.0, %v2705
      %v2707 = vpop.f32.mrf.mxu0
      %2708 = vmatprep.mubr.bf16.mxu0 0
      %2709 = vmatmul.mubr.bf16.gmra.mxu0 %v2466
      %v2710 = vpop.f32.mrf.mxu0
      %v2711 = vadd.f32 0.0, %v2710
      %v2712 = vpop.f32.mrf.mxu0
      %v2713 = vpop.f32.mrf.mxu0
      %v2714 = vadd.f32 0.0, %v2713
      %v2715 = vpop.f32.mrf.mxu0
      %2716 = vmatprep.mubr.bf16.mxu0 0
      %2717 = vmatmul.mubr.bf16.gmra.mxu0 %v2475
      %v2718 = vpop.f32.mrf.mxu0
      %v2719 = vadd.f32 0.0, %v2718
      %v2720 = vpop.f32.mrf.mxu0
      %v2721 = vpop.f32.mrf.mxu0
      %v2722 = vadd.f32 0.0, %v2721
      %v2723 = vpop.f32.mrf.mxu0
      %2724 = vmatprep.mubr.bf16.mxu0 0
      %2725 = vmatmul.mubr.bf16.gmra.mxu0 %v2484
      %v2726 = vpop.f32.mrf.mxu0
      %v2727 = vadd.f32 0.0, %v2726
      %v2728 = vpop.f32.mrf.mxu0
      %v2729 = vpop.f32.mrf.mxu0
      %v2730 = vadd.f32 0.0, %v2729
      %v2731 = vpop.f32.mrf.mxu0
      %2732 = vmatprep.mubr.bf16.mxu0 0
      %2733 = vmatmul.mubr.bf16.gmra.mxu0 %v2493
      %v2734 = vpop.f32.mrf.mxu0
      %v2735 = vadd.f32 0.0, %v2734
      %v2736 = vpop.f32.mrf.mxu0
      %v2737 = vpop.f32.mrf.mxu0
      %v2738 = vadd.f32 0.0, %v2737
      %v2739 = vpop.f32.mrf.mxu0
      %2740 = vmatprep.mubr.bf16.mxu0 0
      %2741 = vmatmul.mubr.bf16.gmra.mxu0 %v2502
      %v2742 = vpop.f32.mrf.mxu0
      %v2743 = vadd.f32 0.0, %v2742
      %v2744 = vpop.f32.mrf.mxu0
      %v2745 = vpop.f32.mrf.mxu0
      %v2746 = vadd.f32 0.0, %v2745
      %v2747 = vpop.f32.mrf.mxu0
      %2748 = vmatprep.mubr.bf16.mxu0 0
      %2749 = vmatmul.mubr.bf16.gmra.mxu0 %v2511
      %v2750 = vpop.f32.mrf.mxu0
      %v2751 = vadd.f32 0.0, %v2750
      %v2752 = vpop.f32.mrf.mxu0
      %v2753 = vpop.f32.mrf.mxu0
      %v2754 = vadd.f32 0.0, %v2753
      %v2755 = vpop.f32.mrf.mxu0
      %2756 = vmatprep.mubr.bf16.mxu0 0
      %2757 = vmatmul.mubr.bf16.gmra.mxu0 %v2520
      %v2758 = vpop.f32.mrf.mxu0
      %v2759 = vadd.f32 0.0, %v2758
      %v2760 = vpop.f32.mrf.mxu0
      %v2761 = vpop.f32.mrf.mxu0
      %v2762 = vadd.f32 0.0, %v2761
      %v2763 = vpop.f32.mrf.mxu0
      %2764 = vmatprep.mubr.bf16.mxu0 0
      %2765 = vmatmul.mubr.bf16.gmra.mxu0 %v2529
      %v2766 = vpop.f32.mrf.mxu0
      %v2767 = vadd.f32 0.0, %v2766
      %v2768 = vpop.f32.mrf.mxu0
      %v2769 = vpop.f32.mrf.mxu0
      %v2770 = vadd.f32 0.0, %v2769
      %v2771 = vpop.f32.mrf.mxu0
      %2772 = vdwg.mxu0
      %v2773 = vadd.f32 %v2177, %v2631
      %v2774 = vadd.f32 %v2178, %v2634
      %v2775 = vadd.f32 %v2179, %v2639
      %v2776 = vadd.f32 %v2180, %v2642
      %v2777 = vadd.f32 %v2181, %v2647
      %v2778 = vadd.f32 %v2182, %v2650
      %v2779 = vadd.f32 %v2183, %v2655
      %v2780 = vadd.f32 %v2184, %v2658
      %v2781 = vadd.f32 %v2185, %v2663
      %v2782 = vadd.f32 %v2186, %v2666
      %v2783 = vadd.f32 %v2187, %v2671
      %v2784 = vadd.f32 %v2188, %v2674
      %v2785 = vadd.f32 %v2189, %v2679
      %v2786 = vadd.f32 %v2190, %v2682
      %v2787 = vadd.f32 %v2191, %v2687
      %v2788 = vadd.f32 %v2192, %v2690
      %v2789 = vadd.f32 %v2193, %v2695
      %v2790 = vadd.f32 %v2194, %v2698
      %v2791 = vadd.f32 %v2195, %v2703
      %v2792 = vadd.f32 %v2196, %v2706
      %v2793 = vadd.f32 %v2197, %v2711
      %v2794 = vadd.f32 %v2198, %v2714
      %v2795 = vadd.f32 %v2199, %v2719
      %v2796 = vadd.f32 %v2200, %v2722
      %v2797 = vadd.f32 %v2201, %v2727
      %v2798 = vadd.f32 %v2202, %v2730
      %v2799 = vadd.f32 %v2203, %v2735
      %v2800 = vadd.f32 %v2204, %v2738
      %v2801 = vadd.f32 %v2205, %v2743
      %v2802 = vadd.f32 %v2206, %v2746
      %v2803 = vadd.f32 %v2207, %v2751
      %v2804 = vadd.f32 %v2208, %v2754
      %v2805 = vadd.f32 %v2209, %v2759
      %v2806 = vadd.f32 %v2210, %v2762
      %v2807 = vadd.f32 %v2211, %v2767
      %v2808 = vadd.f32 %v2212, %v2770
      %s2809 = scalar_lea.vmem %s2, 256
      %v2810 = vld [vmem:[%s2809] sm:$0xf]
      %v2811 = vld [vmem:[%s2809 + $0x4] sm:$0xf]
      %v2812 = vld [vmem:[%s2809 + $0x8] sm:$0xf]
      %v2813 = vld [vmem:[%s2809 + $0xc] sm:$0xf]
      %v2814 = vld [vmem:[%s2809 + $0x10] sm:$0xf]
      %v2815 = vld [vmem:[%s2809 + $0x14] sm:$0xf]
      %v2816 = vld [vmem:[%s2809 + $0x18] sm:$0xf]
      %v2817 = vld [vmem:[%s2809 + $0x1c] sm:$0xf]
      %v2818 = vld [vmem:[%s2809 + $0x20] sm:$0xf]
      %v2819 = vld [vmem:[%s2809 + $0x24] sm:$0xf]
      %v2820 = vld [vmem:[%s2809 + $0x28] sm:$0xf]
      %v2821 = vld [vmem:[%s2809 + $0x2c] sm:$0xf]
      %v2822 = vld [vmem:[%s2809 + $0x30] sm:$0xf]
      %v2823 = vld [vmem:[%s2809 + $0x34] sm:$0xf]
      %v2824 = vld [vmem:[%s2809 + $0x38] sm:$0xf]
      %v2825 = vld [vmem:[%s2809 + $0x3c] sm:$0xf]
      %v2826 = vpack.c.b16 %v2306, %v2305
      %v2827 = vpack.c.b16 %v2308, %v2307
      %v2828 = vpack.c.b16 %v2310, %v2309
      %v2829 = vpack.c.b16 %v2312, %v2311
      %v2830 = vpack.c.b16 %v2314, %v2313
      %v2831 = vpack.c.b16 %v2316, %v2315
      %v2832 = vpack.c.b16 %v2318, %v2317
      %v2833 = vpack.c.b16 %v2320, %v2319
      %v2834 = vpack.c.b16 %v2322, %v2321
      %v2835 = vpack.c.b16 %v2324, %v2323
      %v2836 = vpack.c.b16 %v2326, %v2325
      %v2837 = vpack.c.b16 %v2328, %v2327
      %v2838 = vpack.c.b16 %v2330, %v2329
      %v2839 = vpack.c.b16 %v2332, %v2331
      %v2840 = vpack.c.b16 %v2334, %v2333
      %v2841 = vpack.c.b16 %v2336, %v2335
      %v2842 = vpack.c.b16 %v2338, %v2337
      %v2843 = vpack.c.b16 %v2340, %v2339
      %v2878 = vunpack.c.l.b16 %v2810
      %v2879 = vunpack.c.l.b16 %v2811
      %v2880 = vunpack.c.l.b16 %v2812
      %v2881 = vunpack.c.l.b16 %v2813
      %v2882 = vunpack.c.l.b16 %v2814
      %v2883 = vunpack.c.l.b16 %v2815
      %v2884 = vunpack.c.l.b16 %v2816
      %v2885 = vunpack.c.l.b16 %v2817
      %v2886 = vunpack.c.l.b16 %v2818
      %v2887 = vunpack.c.l.b16 %v2819
      %v2888 = vunpack.c.l.b16 %v2820
      %v2889 = vunpack.c.l.b16 %v2821
      %v2890 = vunpack.c.l.b16 %v2822
      %v2891 = vunpack.c.l.b16 %v2823
      %v2892 = vunpack.c.l.b16 %v2824
      %v2893 = vunpack.c.l.b16 %v2825
      %v2894 = vpack.c.b16 %v2879, %v2878
      %v2895 = vpack.c.b16 %v2881, %v2880
      %v2896 = vpack.c.b16 %v2883, %v2882
      %v2897 = vpack.c.b16 %v2885, %v2884
      %v2898 = vpack.c.b16 %v2887, %v2886
      %v2899 = vpack.c.b16 %v2889, %v2888
      %v2900 = vpack.c.b16 %v2891, %v2890
      %v2901 = vpack.c.b16 %v2893, %v2892
      %2910 = vmatprep.subr.bf16.mxu0 0
      %2911 = vmatpush1.bf16.msra.mxu0 %v2901
      %2912 = vmatprep.subr.bf16.mxu0 0
      %2913 = vmatpush1.bf16.msra.mxu0 %v2900
      %2914 = vmatprep.subr.bf16.mxu0 0
      %2915 = vmatpush1.bf16.msra.mxu0 %v2899
      %2916 = vmatprep.subr.bf16.mxu0 0
      %2917 = vmatpush1.bf16.msra.mxu0 %v2898
      %2918 = vmatprep.subr.bf16.mxu0 0
      %2919 = vmatpush1.bf16.msra.mxu0 %v2897
      %2920 = vmatprep.subr.bf16.mxu0 0
      %2921 = vmatpush1.bf16.msra.mxu0 %v2896
      %2922 = vmatprep.subr.bf16.mxu0 0
      %2923 = vmatpush1.bf16.msra.mxu0 %v2895
      %2924 = vmatprep.subr.bf16.mxu0 0
      %2925 = vmatpush1.bf16.msra.mxu0 %v2894
      %2926 = vmatprep.subr.bf16.mxu0 0
      %2927 = vmatpush2.bf16.msra.mxu0 0
      %2928 = vmatprep.subr.bf16.mxu0 0
      %2929 = vmatpush2.bf16.msra.mxu0 0
      %2930 = vmatprep.subr.bf16.mxu0 0
      %2931 = vmatpush2.bf16.msra.mxu0 0
      %2932 = vmatprep.subr.bf16.mxu0 0
      %2933 = vmatpush2.bf16.msra.mxu0 0
      %2934 = vmatprep.subr.bf16.mxu0 0
      %2935 = vmatpush2.bf16.msra.mxu0 0
      %2936 = vmatprep.subr.bf16.mxu0 0
      %2937 = vmatpush2.bf16.msra.mxu0 0
      %2938 = vmatprep.subr.bf16.mxu0 0
      %2939 = vmatpush2.bf16.msra.mxu0 0
      %2940 = vmatprep.subr.bf16.mxu0 0
      %2941 = vmatpush2.bf16.msra.mxu0 0
      %2942 = vmatprep.mubr.bf16.mxu0 0
      %2943 = vmatmul.mubr.bf16.gmra.mxu0 %v2826
      %v2944 = vpop.f32.mrf.mxu0
      %v2945 = vadd.f32 0.0, %v2944
      %v2946 = vpop.f32.mrf.mxu0
      %v2947 = vpop.f32.mrf.mxu0
      %v2948 = vadd.f32 0.0, %v2947
      %v2949 = vpop.f32.mrf.mxu0
      %2950 = vmatprep.mubr.bf16.mxu0 0
      %2951 = vmatmul.mubr.bf16.gmra.mxu0 %v2827
      %v2952 = vpop.f32.mrf.mxu0
      %v2953 = vadd.f32 0.0, %v2952
      %v2954 = vpop.f32.mrf.mxu0
      %v2955 = vpop.f32.mrf.mxu0
      %v2956 = vadd.f32 0.0, %v2955
      %v2957 = vpop.f32.mrf.mxu0
      %2958 = vmatprep.mubr.bf16.mxu0 0
      %2959 = vmatmul.mubr.bf16.gmra.mxu0 %v2828
      %v2960 = vpop.f32.mrf.mxu0
      %v2961 = vadd.f32 0.0, %v2960
      %v2962 = vpop.f32.mrf.mxu0
      %v2963 = vpop.f32.mrf.mxu0
      %v2964 = vadd.f32 0.0, %v2963
      %v2965 = vpop.f32.mrf.mxu0
      %2966 = vmatprep.mubr.bf16.mxu0 0
      %2967 = vmatmul.mubr.bf16.gmra.mxu0 %v2829
      %v2968 = vpop.f32.mrf.mxu0
      %v2969 = vadd.f32 0.0, %v2968
      %v2970 = vpop.f32.mrf.mxu0
      %v2971 = vpop.f32.mrf.mxu0
      %v2972 = vadd.f32 0.0, %v2971
      %v2973 = vpop.f32.mrf.mxu0
      %2974 = vmatprep.mubr.bf16.mxu0 0
      %2975 = vmatmul.mubr.bf16.gmra.mxu0 %v2830
      %v2976 = vpop.f32.mrf.mxu0
      %v2977 = vadd.f32 0.0, %v2976
      %v2978 = vpop.f32.mrf.mxu0
      %v2979 = vpop.f32.mrf.mxu0
      %v2980 = vadd.f32 0.0, %v2979
      %v2981 = vpop.f32.mrf.mxu0
      %2982 = vmatprep.mubr.bf16.mxu0 0
      %2983 = vmatmul.mubr.bf16.gmra.mxu0 %v2831
      %v2984 = vpop.f32.mrf.mxu0
      %v2985 = vadd.f32 0.0, %v2984
      %v2986 = vpop.f32.mrf.mxu0
      %v2987 = vpop.f32.mrf.mxu0
      %v2988 = vadd.f32 0.0, %v2987
      %v2989 = vpop.f32.mrf.mxu0
      %2990 = vmatprep.mubr.bf16.mxu0 0
      %2991 = vmatmul.mubr.bf16.gmra.mxu0 %v2832
      %v2992 = vpop.f32.mrf.mxu0
      %v2993 = vadd.f32 0.0, %v2992
      %v2994 = vpop.f32.mrf.mxu0
      %v2995 = vpop.f32.mrf.mxu0
      %v2996 = vadd.f32 0.0, %v2995
      %v2997 = vpop.f32.mrf.mxu0
      %2998 = vmatprep.mubr.bf16.mxu0 0
      %2999 = vmatmul.mubr.bf16.gmra.mxu0 %v2833
      %v3000 = vpop.f32.mrf.mxu0
      %v3001 = vadd.f32 0.0, %v3000
      %v3002 = vpop.f32.mrf.mxu0
      %v3003 = vpop.f32.mrf.mxu0
      %v3004 = vadd.f32 0.0, %v3003
      %v3005 = vpop.f32.mrf.mxu0
      %3006 = vmatprep.mubr.bf16.mxu0 0
      %3007 = vmatmul.mubr.bf16.gmra.mxu0 %v2834
      %v3008 = vpop.f32.mrf.mxu0
      %v3009 = vadd.f32 0.0, %v3008
      %v3010 = vpop.f32.mrf.mxu0
      %v3011 = vpop.f32.mrf.mxu0
      %v3012 = vadd.f32 0.0, %v3011
      %v3013 = vpop.f32.mrf.mxu0
      %3014 = vmatprep.mubr.bf16.mxu0 0
      %3015 = vmatmul.mubr.bf16.gmra.mxu0 %v2835
      %v3016 = vpop.f32.mrf.mxu0
      %v3017 = vadd.f32 0.0, %v3016
      %v3018 = vpop.f32.mrf.mxu0
      %v3019 = vpop.f32.mrf.mxu0
      %v3020 = vadd.f32 0.0, %v3019
      %v3021 = vpop.f32.mrf.mxu0
      %3022 = vmatprep.mubr.bf16.mxu0 0
      %3023 = vmatmul.mubr.bf16.gmra.mxu0 %v2836
      %v3024 = vpop.f32.mrf.mxu0
      %v3025 = vadd.f32 0.0, %v3024
      %v3026 = vpop.f32.mrf.mxu0
      %v3027 = vpop.f32.mrf.mxu0
      %v3028 = vadd.f32 0.0, %v3027
      %v3029 = vpop.f32.mrf.mxu0
      %3030 = vmatprep.mubr.bf16.mxu0 0
      %3031 = vmatmul.mubr.bf16.gmra.mxu0 %v2837
      %v3032 = vpop.f32.mrf.mxu0
      %v3033 = vadd.f32 0.0, %v3032
      %v3034 = vpop.f32.mrf.mxu0
      %v3035 = vpop.f32.mrf.mxu0
      %v3036 = vadd.f32 0.0, %v3035
      %v3037 = vpop.f32.mrf.mxu0
      %3038 = vmatprep.mubr.bf16.mxu0 0
      %3039 = vmatmul.mubr.bf16.gmra.mxu0 %v2838
      %v3040 = vpop.f32.mrf.mxu0
      %v3041 = vadd.f32 0.0, %v3040
      %v3042 = vpop.f32.mrf.mxu0
      %v3043 = vpop.f32.mrf.mxu0
      %v3044 = vadd.f32 0.0, %v3043
      %v3045 = vpop.f32.mrf.mxu0
      %3046 = vmatprep.mubr.bf16.mxu0 0
      %3047 = vmatmul.mubr.bf16.gmra.mxu0 %v2839
      %v3048 = vpop.f32.mrf.mxu0
      %v3049 = vadd.f32 0.0, %v3048
      %v3050 = vpop.f32.mrf.mxu0
      %v3051 = vpop.f32.mrf.mxu0
      %v3052 = vadd.f32 0.0, %v3051
      %v3053 = vpop.f32.mrf.mxu0
      %3054 = vmatprep.mubr.bf16.mxu0 0
      %3055 = vmatmul.mubr.bf16.gmra.mxu0 %v2840
      %v3056 = vpop.f32.mrf.mxu0
      %v3057 = vadd.f32 0.0, %v3056
      %v3058 = vpop.f32.mrf.mxu0
      %v3059 = vpop.f32.mrf.mxu0
      %v3060 = vadd.f32 0.0, %v3059
      %v3061 = vpop.f32.mrf.mxu0
      %3062 = vmatprep.mubr.bf16.mxu0 0
      %3063 = vmatmul.mubr.bf16.gmra.mxu0 %v2841
      %v3064 = vpop.f32.mrf.mxu0
      %v3065 = vadd.f32 0.0, %v3064
      %v3066 = vpop.f32.mrf.mxu0
      %v3067 = vpop.f32.mrf.mxu0
      %v3068 = vadd.f32 0.0, %v3067
      %v3069 = vpop.f32.mrf.mxu0
      %3070 = vmatprep.mubr.bf16.mxu0 0
      %3071 = vmatmul.mubr.bf16.gmra.mxu0 %v2842
      %v3072 = vpop.f32.mrf.mxu0
      %v3073 = vadd.f32 0.0, %v3072
      %v3074 = vpop.f32.mrf.mxu0
      %v3075 = vpop.f32.mrf.mxu0
      %v3076 = vadd.f32 0.0, %v3075
      %v3077 = vpop.f32.mrf.mxu0
      %3078 = vmatprep.mubr.bf16.mxu0 0
      %3079 = vmatmul.mubr.bf16.gmra.mxu0 %v2843
      %v3080 = vpop.f32.mrf.mxu0
      %v3081 = vadd.f32 0.0, %v3080
      %v3082 = vpop.f32.mrf.mxu0
      %v3083 = vpop.f32.mrf.mxu0
      %v3084 = vadd.f32 0.0, %v3083
      %v3085 = vpop.f32.mrf.mxu0
      %3086 = vdwg.mxu0
      %v3087 = vadd.f32 %v2773, %v2945
      %v3088 = vadd.f32 %v2774, %v2948
      %v3089 = vadd.f32 %v2775, %v2953
      %v3090 = vadd.f32 %v2776, %v2956
      %v3091 = vadd.f32 %v2777, %v2961
      %v3092 = vadd.f32 %v2778, %v2964
      %v3093 = vadd.f32 %v2779, %v2969
      %v3094 = vadd.f32 %v2780, %v2972
      %v3095 = vadd.f32 %v2781, %v2977
      %v3096 = vadd.f32 %v2782, %v2980
      %v3097 = vadd.f32 %v2783, %v2985
      %v3098 = vadd.f32 %v2784, %v2988
      %v3099 = vadd.f32 %v2785, %v2993
      %v3100 = vadd.f32 %v2786, %v2996
      %v3101 = vadd.f32 %v2787, %v3001
      %v3102 = vadd.f32 %v2788, %v3004
      %v3103 = vadd.f32 %v2789, %v3009
      %v3104 = vadd.f32 %v2790, %v3012
      %v3105 = vadd.f32 %v2791, %v3017
      %v3106 = vadd.f32 %v2792, %v3020
      %v3107 = vadd.f32 %v2793, %v3025
      %v3108 = vadd.f32 %v2794, %v3028
      %v3109 = vadd.f32 %v2795, %v3033
      %v3110 = vadd.f32 %v2796, %v3036
      %v3111 = vadd.f32 %v2797, %v3041
      %v3112 = vadd.f32 %v2798, %v3044
      %v3113 = vadd.f32 %v2799, %v3049
      %v3114 = vadd.f32 %v2800, %v3052
      %v3115 = vadd.f32 %v2801, %v3057
      %v3116 = vadd.f32 %v2802, %v3060
      %v3117 = vadd.f32 %v2803, %v3065
      %v3118 = vadd.f32 %v2804, %v3068
      %v3119 = vadd.f32 %v2805, %v3073
      %v3120 = vadd.f32 %v2806, %v3076
      %v3121 = vadd.f32 %v2807, %v3081
      %v3122 = vadd.f32 %v2808, %v3084
      %v3123 = vld [vmem:[#allocation2 + $0x10] sm:$0xf]
      %v3124 = vld [vmem:[#allocation2 + $0x14] sm:$0xf]
      %v3125 = vld [vmem:[#allocation2 + $0x18] sm:$0xf]
      %v3126 = vld [vmem:[#allocation2 + $0x1c] sm:$0xf]
      %v3127 = vld [vmem:[#allocation2 + $0x20] sm:$0xf]
      %v3128 = vld [vmem:[#allocation2 + $0x24] sm:$0xf]
      %v3129 = vld [vmem:[#allocation2 + $0x28] sm:$0xf]
      %v3130 = vld [vmem:[#allocation2 + $0x2c] sm:$0xf]
      %v3131 = vld [vmem:[#allocation2 + $0x30] sm:$0xf]
      %v3132 = vld [vmem:[#allocation2 + $0x34] sm:$0xf]
      %v3133 = vld [vmem:[#allocation2 + $0x38] sm:$0xf]
      %v3134 = vld [vmem:[#allocation2 + $0x3c] sm:$0xf]
      %v3135 = vld [vmem:[#allocation2 + $0x40] sm:$0xf]
      %v3136 = vld [vmem:[#allocation2 + $0x44] sm:$0xf]
      %v3137 = vld [vmem:[#allocation2 + $0x48] sm:$0xf]
      %v3138 = vld [vmem:[#allocation2 + $0x4c] sm:$0xf]
      %v3139 = vld [vmem:[#allocation2 + $0x50] sm:$0xf]
      %v3140 = vld [vmem:[#allocation2 + $0x54] sm:$0xf]
      %v3141 = vld [vmem:[#allocation2 + $0x58] sm:$0xf]
      %v3142 = vld [vmem:[#allocation2 + $0x5c] sm:$0xf]
      %v3143 = vld [vmem:[#allocation2 + $0x60] sm:$0xf]
      %v3144 = vld [vmem:[#allocation2 + $0x64] sm:$0xf]
      %v3145 = vld [vmem:[#allocation2 + $0x68] sm:$0xf]
      %v3146 = vld [vmem:[#allocation2 + $0x6c] sm:$0xf]
      %v3147 = vld [vmem:[#allocation2 + $0x70] sm:$0xf]
      %v3148 = vld [vmem:[#allocation2 + $0x74] sm:$0xf]
      %v3149 = vld [vmem:[#allocation2 + $0x78] sm:$0xf]
      %v3150 = vld [vmem:[#allocation2 + $0x7c] sm:$0xf]
      %v3151 = vld [vmem:[#allocation2 + $0x80] sm:$0xf]
      %v3152 = vld [vmem:[#allocation2 + $0x84] sm:$0xf]
      %v3153 = vld [vmem:[#allocation2 + $0x88] sm:$0xf]
      %v3154 = vld [vmem:[#allocation2 + $0x8c] sm:$0xf]
      %v3155 = vld [vmem:[#allocation2 + $0x90] sm:$0xf]
      %v3156 = vld [vmem:[#allocation2 + $0x94] sm:$0xf]
      %v3157 = vld [vmem:[#allocation2 + $0x98] sm:$0xf]
      %v3158 = vld [vmem:[#allocation2 + $0x9c] sm:$0xf]
      %v3159 = vld [vmem:[#allocation2 + $0xa0] sm:$0x1]
      %s3160 = scalar_lea.vmem %s2, 320
      %v3161 = vld [vmem:[%s3160] sm:$0xf]
      %v3162 = vld [vmem:[%s3160 + $0x4] sm:$0xf]
      %v3163 = vld [vmem:[%s3160 + $0x8] sm:$0xf]
      %v3164 = vld [vmem:[%s3160 + $0xc] sm:$0xf]
      %v3165 = vld [vmem:[%s3160 + $0x10] sm:$0xf]
      %v3166 = vld [vmem:[%s3160 + $0x14] sm:$0xf]
      %v3167 = vld [vmem:[%s3160 + $0x18] sm:$0xf]
      %v3168 = vld [vmem:[%s3160 + $0x1c] sm:$0xf]
      %v3169 = vld [vmem:[%s3160 + $0x20] sm:$0xf]
      %v3170 = vld [vmem:[%s3160 + $0x24] sm:$0xf]
      %v3171 = vld [vmem:[%s3160 + $0x28] sm:$0xf]
      %v3172 = vld [vmem:[%s3160 + $0x2c] sm:$0xf]
      %v3173 = vld [vmem:[%s3160 + $0x30] sm:$0xf]
      %v3174 = vld [vmem:[%s3160 + $0x34] sm:$0xf]
      %v3175 = vld [vmem:[%s3160 + $0x38] sm:$0xf]
      %v3176 = vld [vmem:[%s3160 + $0x3c] sm:$0xf]
      %v3214 = vunpack.c.l.b16 %v3123
      %v3215 = vunpack.c.l.b16 %v3124
      %v3216 = vunpack.c.l.b16 %v3125
      %v3217 = vunpack.c.l.b16 %v3126
      %v3218 = vunpack.c.l.b16 %v3127
      %v3219 = vunpack.c.l.b16 %v3128
      %v3220 = vunpack.c.l.b16 %v3129
      %v3221 = vunpack.c.l.b16 %v3130
      %v3222 = vunpack.c.l.b16 %v3131
      %v3223 = vunpack.c.l.b16 %v3132
      %v3224 = vunpack.c.l.b16 %v3133
      %v3225 = vunpack.c.l.b16 %v3134
      %v3226 = vunpack.c.l.b16 %v3135
      %v3227 = vunpack.c.l.b16 %v3136
      %v3228 = vunpack.c.l.b16 %v3137
      %v3229 = vunpack.c.l.b16 %v3138
      %v3230 = vunpack.c.l.b16 %v3139
      %v3231 = vunpack.c.l.b16 %v3140
      %v3232 = vunpack.c.l.b16 %v3141
      %v3233 = vunpack.c.l.b16 %v3142
      %v3234 = vunpack.c.l.b16 %v3143
      %v3235 = vunpack.c.l.b16 %v3144
      %v3236 = vunpack.c.l.b16 %v3145
      %v3237 = vunpack.c.l.b16 %v3146
      %v3238 = vunpack.c.l.b16 %v3147
      %v3239 = vunpack.c.l.b16 %v3148
      %v3240 = vunpack.c.l.b16 %v3149
      %v3241 = vunpack.c.l.b16 %v3150
      %v3242 = vunpack.c.l.b16 %v3151
      %v3243 = vunpack.c.l.b16 %v3152
      %v3244 = vunpack.c.l.b16 %v3153
      %v3245 = vunpack.c.l.b16 %v3154
      %v3246 = vunpack.c.l.b16 %v3155
      %v3247 = vunpack.c.l.b16 %v3156
      %v3248 = vunpack.c.l.b16 %v3157
      %v3249 = vunpack.c.l.b16 %v3158
      %v3250 = vunpack.c.l.b16 %v3159
      %v3251 = vpack.c.b16 %v3215, %v3214
      %v3252 = vpack.c.b16 %v3217, %v3216
      %v3253 = vpack.c.b16 %v3219, %v3218
      %v3254 = vpack.c.b16 %v3221, %v3220
      %v3255 = vpack.c.b16 %v3223, %v3222
      %v3256 = vpack.c.b16 %v3225, %v3224
      %v3257 = vpack.c.b16 %v3227, %v3226
      %v3258 = vpack.c.b16 %v3229, %v3228
      %v3259 = vpack.c.b16 %v3231, %v3230
      %v3260 = vpack.c.b16 %v3233, %v3232
      %v3261 = vpack.c.b16 %v3235, %v3234
      %v3262 = vpack.c.b16 %v3237, %v3236
      %v3263 = vpack.c.b16 %v3239, %v3238
      %v3264 = vpack.c.b16 %v3241, %v3240
      %v3265 = vpack.c.b16 %v3243, %v3242
      %v3266 = vpack.c.b16 %v3245, %v3244
      %v3267 = vpack.c.b16 %v3247, %v3246
      %v3268 = vpack.c.b16 %v3249, %v3248
      %v3269 = vpack.c.b16 %v3250, %v3250
      %vm3270 = vsmask.f32 7424
      %v3272 = vshrl.u32 %v3251, 16
      %v3274 = vshll.u32 %v3251, 16
      %v3276 = vrot.slane %v3274, 1
      %v3277 = vor.u32 %v3272, %v3276
      %v3279 = vshll.u32 %v3252, 16
      %v3281 = vrot.slane %v3279, 1
      %v3282 = vsel %vm3270, %v3277, %v3281
      %v3283 = vshrl.u32 %v3252, 16
      %v3285 = vor.u32 %v3283, %v3281
      %v3287 = vshll.u32 %v3253, 16
      %v3289 = vrot.slane %v3287, 1
      %v3290 = vsel %vm3270, %v3285, %v3289
      %v3291 = vshrl.u32 %v3253, 16
      %v3293 = vor.u32 %v3291, %v3289
      %v3295 = vshll.u32 %v3254, 16
      %v3297 = vrot.slane %v3295, 1
      %v3298 = vsel %vm3270, %v3293, %v3297
      %v3299 = vshrl.u32 %v3254, 16
      %v3301 = vor.u32 %v3299, %v3297
      %v3303 = vshll.u32 %v3255, 16
      %v3305 = vrot.slane %v3303, 1
      %v3306 = vsel %vm3270, %v3301, %v3305
      %v3307 = vshrl.u32 %v3255, 16
      %v3309 = vor.u32 %v3307, %v3305
      %v3311 = vshll.u32 %v3256, 16
      %v3313 = vrot.slane %v3311, 1
      %v3314 = vsel %vm3270, %v3309, %v3313
      %v3315 = vshrl.u32 %v3256, 16
      %v3317 = vor.u32 %v3315, %v3313
      %v3319 = vshll.u32 %v3257, 16
      %v3321 = vrot.slane %v3319, 1
      %v3322 = vsel %vm3270, %v3317, %v3321
      %v3323 = vshrl.u32 %v3257, 16
      %v3325 = vor.u32 %v3323, %v3321
      %v3327 = vshll.u32 %v3258, 16
      %v3329 = vrot.slane %v3327, 1
      %v3330 = vsel %vm3270, %v3325, %v3329
      %v3331 = vshrl.u32 %v3258, 16
      %v3333 = vor.u32 %v3331, %v3329
      %v3335 = vshll.u32 %v3259, 16
      %v3337 = vrot.slane %v3335, 1
      %v3338 = vsel %vm3270, %v3333, %v3337
      %v3339 = vshrl.u32 %v3259, 16
      %v3341 = vor.u32 %v3339, %v3337
      %v3343 = vshll.u32 %v3260, 16
      %v3345 = vrot.slane %v3343, 1
      %v3346 = vsel %vm3270, %v3341, %v3345
      %v3347 = vshrl.u32 %v3260, 16
      %v3349 = vor.u32 %v3347, %v3345
      %v3351 = vshll.u32 %v3261, 16
      %v3353 = vrot.slane %v3351, 1
      %v3354 = vsel %vm3270, %v3349, %v3353
      %v3355 = vshrl.u32 %v3261, 16
      %v3357 = vor.u32 %v3355, %v3353
      %v3359 = vshll.u32 %v3262, 16
      %v3361 = vrot.slane %v3359, 1
      %v3362 = vsel %vm3270, %v3357, %v3361
      %v3363 = vshrl.u32 %v3262, 16
      %v3365 = vor.u32 %v3363, %v3361
      %v3367 = vshll.u32 %v3263, 16
      %v3369 = vrot.slane %v3367, 1
      %v3370 = vsel %vm3270, %v3365, %v3369
      %v3371 = vshrl.u32 %v3263, 16
      %v3373 = vor.u32 %v3371, %v3369
      %v3375 = vshll.u32 %v3264, 16
      %v3377 = vrot.slane %v3375, 1
      %v3378 = vsel %vm3270, %v3373, %v3377
      %v3379 = vshrl.u32 %v3264, 16
      %v3381 = vor.u32 %v3379, %v3377
      %v3383 = vshll.u32 %v3265, 16
      %v3385 = vrot.slane %v3383, 1
      %v3386 = vsel %vm3270, %v3381, %v3385
      %v3387 = vshrl.u32 %v3265, 16
      %v3389 = vor.u32 %v3387, %v3385
      %v3391 = vshll.u32 %v3266, 16
      %v3393 = vrot.slane %v3391, 1
      %v3394 = vsel %vm3270, %v3389, %v3393
      %v3395 = vshrl.u32 %v3266, 16
      %v3397 = vor.u32 %v3395, %v3393
      %v3399 = vshll.u32 %v3267, 16
      %v3401 = vrot.slane %v3399, 1
      %v3402 = vsel %vm3270, %v3397, %v3401
      %v3403 = vshrl.u32 %v3267, 16
      %v3405 = vor.u32 %v3403, %v3401
      %v3407 = vshll.u32 %v3268, 16
      %v3409 = vrot.slane %v3407, 1
      %v3410 = vsel %vm3270, %v3405, %v3409
      %v3411 = vshrl.u32 %v3268, 16
      %v3413 = vor.u32 %v3411, %v3409
      %v3415 = vshll.u32 %v3269, 16
      %v3417 = vrot.slane %v3415, 1
      %v3418 = vsel %vm3270, %v3413, %v3417
      %v3453 = vunpack.c.l.b16 %v3161
      %v3454 = vunpack.c.l.b16 %v3162
      %v3455 = vunpack.c.l.b16 %v3163
      %v3456 = vunpack.c.l.b16 %v3164
      %v3457 = vunpack.c.l.b16 %v3165
      %v3458 = vunpack.c.l.b16 %v3166
      %v3459 = vunpack.c.l.b16 %v3167
      %v3460 = vunpack.c.l.b16 %v3168
      %v3461 = vunpack.c.l.b16 %v3169
      %v3462 = vunpack.c.l.b16 %v3170
      %v3463 = vunpack.c.l.b16 %v3171
      %v3464 = vunpack.c.l.b16 %v3172
      %v3465 = vunpack.c.l.b16 %v3173
      %v3466 = vunpack.c.l.b16 %v3174
      %v3467 = vunpack.c.l.b16 %v3175
      %v3468 = vunpack.c.l.b16 %v3176
      %v3469 = vpack.c.b16 %v3454, %v3453
      %v3470 = vpack.c.b16 %v3456, %v3455
      %v3471 = vpack.c.b16 %v3458, %v3457
      %v3472 = vpack.c.b16 %v3460, %v3459
      %v3473 = vpack.c.b16 %v3462, %v3461
      %v3474 = vpack.c.b16 %v3464, %v3463
      %v3475 = vpack.c.b16 %v3466, %v3465
      %v3476 = vpack.c.b16 %v3468, %v3467
      %3485 = vmatprep.subr.bf16.mxu0 0
      %3486 = vmatpush1.bf16.msra.mxu0 %v3476
      %3487 = vmatprep.subr.bf16.mxu0 0
      %3488 = vmatpush1.bf16.msra.mxu0 %v3475
      %3489 = vmatprep.subr.bf16.mxu0 0
      %3490 = vmatpush1.bf16.msra.mxu0 %v3474
      %3491 = vmatprep.subr.bf16.mxu0 0
      %3492 = vmatpush1.bf16.msra.mxu0 %v3473
      %3493 = vmatprep.subr.bf16.mxu0 0
      %3494 = vmatpush1.bf16.msra.mxu0 %v3472
      %3495 = vmatprep.subr.bf16.mxu0 0
      %3496 = vmatpush1.bf16.msra.mxu0 %v3471
      %3497 = vmatprep.subr.bf16.mxu0 0
      %3498 = vmatpush1.bf16.msra.mxu0 %v3470
      %3499 = vmatprep.subr.bf16.mxu0 0
      %3500 = vmatpush1.bf16.msra.mxu0 %v3469
      %3501 = vmatprep.subr.bf16.mxu0 0
      %3502 = vmatpush2.bf16.msra.mxu0 0
      %3503 = vmatprep.subr.bf16.mxu0 0
      %3504 = vmatpush2.bf16.msra.mxu0 0
      %3505 = vmatprep.subr.bf16.mxu0 0
      %3506 = vmatpush2.bf16.msra.mxu0 0
      %3507 = vmatprep.subr.bf16.mxu0 0
      %3508 = vmatpush2.bf16.msra.mxu0 0
      %3509 = vmatprep.subr.bf16.mxu0 0
      %3510 = vmatpush2.bf16.msra.mxu0 0
      %3511 = vmatprep.subr.bf16.mxu0 0
      %3512 = vmatpush2.bf16.msra.mxu0 0
      %3513 = vmatprep.subr.bf16.mxu0 0
      %3514 = vmatpush2.bf16.msra.mxu0 0
      %3515 = vmatprep.subr.bf16.mxu0 0
      %3516 = vmatpush2.bf16.msra.mxu0 0
      %3517 = vmatprep.mubr.bf16.mxu0 0
      %3518 = vmatmul.mubr.bf16.gmra.mxu0 %v3282
      %v3519 = vpop.f32.mrf.mxu0
      %v3520 = vadd.f32 0.0, %v3519
      %v3521 = vpop.f32.mrf.mxu0
      %v3522 = vpop.f32.mrf.mxu0
      %v3523 = vadd.f32 0.0, %v3522
      %v3524 = vpop.f32.mrf.mxu0
      %3525 = vmatprep.mubr.bf16.mxu0 0
      %3526 = vmatmul.mubr.bf16.gmra.mxu0 %v3290
      %v3527 = vpop.f32.mrf.mxu0
      %v3528 = vadd.f32 0.0, %v3527
      %v3529 = vpop.f32.mrf.mxu0
      %v3530 = vpop.f32.mrf.mxu0
      %v3531 = vadd.f32 0.0, %v3530
      %v3532 = vpop.f32.mrf.mxu0
      %3533 = vmatprep.mubr.bf16.mxu0 0
      %3534 = vmatmul.mubr.bf16.gmra.mxu0 %v3298
      %v3535 = vpop.f32.mrf.mxu0
      %v3536 = vadd.f32 0.0, %v3535
      %v3537 = vpop.f32.mrf.mxu0
      %v3538 = vpop.f32.mrf.mxu0
      %v3539 = vadd.f32 0.0, %v3538
      %v3540 = vpop.f32.mrf.mxu0
      %3541 = vmatprep.mubr.bf16.mxu0 0
      %3542 = vmatmul.mubr.bf16.gmra.mxu0 %v3306
      %v3543 = vpop.f32.mrf.mxu0
      %v3544 = vadd.f32 0.0, %v3543
      %v3545 = vpop.f32.mrf.mxu0
      %v3546 = vpop.f32.mrf.mxu0
      %v3547 = vadd.f32 0.0, %v3546
      %v3548 = vpop.f32.mrf.mxu0
      %3549 = vmatprep.mubr.bf16.mxu0 0
      %3550 = vmatmul.mubr.bf16.gmra.mxu0 %v3314
      %v3551 = vpop.f32.mrf.mxu0
      %v3552 = vadd.f32 0.0, %v3551
      %v3553 = vpop.f32.mrf.mxu0
      %v3554 = vpop.f32.mrf.mxu0
      %v3555 = vadd.f32 0.0, %v3554
      %v3556 = vpop.f32.mrf.mxu0
      %3557 = vmatprep.mubr.bf16.mxu0 0
      %3558 = vmatmul.mubr.bf16.gmra.mxu0 %v3322
      %v3559 = vpop.f32.mrf.mxu0
      %v3560 = vadd.f32 0.0, %v3559
      %v3561 = vpop.f32.mrf.mxu0
      %v3562 = vpop.f32.mrf.mxu0
      %v3563 = vadd.f32 0.0, %v3562
      %v3564 = vpop.f32.mrf.mxu0
      %3565 = vmatprep.mubr.bf16.mxu0 0
      %3566 = vmatmul.mubr.bf16.gmra.mxu0 %v3330
      %v3567 = vpop.f32.mrf.mxu0
      %v3568 = vadd.f32 0.0, %v3567
      %v3569 = vpop.f32.mrf.mxu0
      %v3570 = vpop.f32.mrf.mxu0
      %v3571 = vadd.f32 0.0, %v3570
      %v3572 = vpop.f32.mrf.mxu0
      %3573 = vmatprep.mubr.bf16.mxu0 0
      %3574 = vmatmul.mubr.bf16.gmra.mxu0 %v3338
      %v3575 = vpop.f32.mrf.mxu0
      %v3576 = vadd.f32 0.0, %v3575
      %v3577 = vpop.f32.mrf.mxu0
      %v3578 = vpop.f32.mrf.mxu0
      %v3579 = vadd.f32 0.0, %v3578
      %v3580 = vpop.f32.mrf.mxu0
      %3581 = vmatprep.mubr.bf16.mxu0 0
      %3582 = vmatmul.mubr.bf16.gmra.mxu0 %v3346
      %v3583 = vpop.f32.mrf.mxu0
      %v3584 = vadd.f32 0.0, %v3583
      %v3585 = vpop.f32.mrf.mxu0
      %v3586 = vpop.f32.mrf.mxu0
      %v3587 = vadd.f32 0.0, %v3586
      %v3588 = vpop.f32.mrf.mxu0
      %3589 = vmatprep.mubr.bf16.mxu0 0
      %3590 = vmatmul.mubr.bf16.gmra.mxu0 %v3354
      %v3591 = vpop.f32.mrf.mxu0
      %v3592 = vadd.f32 0.0, %v3591
      %v3593 = vpop.f32.mrf.mxu0
      %v3594 = vpop.f32.mrf.mxu0
      %v3595 = vadd.f32 0.0, %v3594
      %v3596 = vpop.f32.mrf.mxu0
      %3597 = vmatprep.mubr.bf16.mxu0 0
      %3598 = vmatmul.mubr.bf16.gmra.mxu0 %v3362
      %v3599 = vpop.f32.mrf.mxu0
      %v3600 = vadd.f32 0.0, %v3599
      %v3601 = vpop.f32.mrf.mxu0
      %v3602 = vpop.f32.mrf.mxu0
      %v3603 = vadd.f32 0.0, %v3602
      %v3604 = vpop.f32.mrf.mxu0
      %3605 = vmatprep.mubr.bf16.mxu0 0
      %3606 = vmatmul.mubr.bf16.gmra.mxu0 %v3370
      %v3607 = vpop.f32.mrf.mxu0
      %v3608 = vadd.f32 0.0, %v3607
      %v3609 = vpop.f32.mrf.mxu0
      %v3610 = vpop.f32.mrf.mxu0
      %v3611 = vadd.f32 0.0, %v3610
      %v3612 = vpop.f32.mrf.mxu0
      %3613 = vmatprep.mubr.bf16.mxu0 0
      %3614 = vmatmul.mubr.bf16.gmra.mxu0 %v3378
      %v3615 = vpop.f32.mrf.mxu0
      %v3616 = vadd.f32 0.0, %v3615
      %v3617 = vpop.f32.mrf.mxu0
      %v3618 = vpop.f32.mrf.mxu0
      %v3619 = vadd.f32 0.0, %v3618
      %v3620 = vpop.f32.mrf.mxu0
      %3621 = vmatprep.mubr.bf16.mxu0 0
      %3622 = vmatmul.mubr.bf16.gmra.mxu0 %v3386
      %v3623 = vpop.f32.mrf.mxu0
      %v3624 = vadd.f32 0.0, %v3623
      %v3625 = vpop.f32.mrf.mxu0
      %v3626 = vpop.f32.mrf.mxu0
      %v3627 = vadd.f32 0.0, %v3626
      %v3628 = vpop.f32.mrf.mxu0
      %3629 = vmatprep.mubr.bf16.mxu0 0
      %3630 = vmatmul.mubr.bf16.gmra.mxu0 %v3394
      %v3631 = vpop.f32.mrf.mxu0
      %v3632 = vadd.f32 0.0, %v3631
      %v3633 = vpop.f32.mrf.mxu0
      %v3634 = vpop.f32.mrf.mxu0
      %v3635 = vadd.f32 0.0, %v3634
      %v3636 = vpop.f32.mrf.mxu0
      %3637 = vmatprep.mubr.bf16.mxu0 0
      %3638 = vmatmul.mubr.bf16.gmra.mxu0 %v3402
      %v3639 = vpop.f32.mrf.mxu0
      %v3640 = vadd.f32 0.0, %v3639
      %v3641 = vpop.f32.mrf.mxu0
      %v3642 = vpop.f32.mrf.mxu0
      %v3643 = vadd.f32 0.0, %v3642
      %v3644 = vpop.f32.mrf.mxu0
      %3645 = vmatprep.mubr.bf16.mxu0 0
      %3646 = vmatmul.mubr.bf16.gmra.mxu0 %v3410
      %v3647 = vpop.f32.mrf.mxu0
      %v3648 = vadd.f32 0.0, %v3647
      %v3649 = vpop.f32.mrf.mxu0
      %v3650 = vpop.f32.mrf.mxu0
      %v3651 = vadd.f32 0.0, %v3650
      %v3652 = vpop.f32.mrf.mxu0
      %3653 = vmatprep.mubr.bf16.mxu0 0
      %3654 = vmatmul.mubr.bf16.gmra.mxu0 %v3418
      %v3655 = vpop.f32.mrf.mxu0
      %v3656 = vadd.f32 0.0, %v3655
      %v3657 = vpop.f32.mrf.mxu0
      %v3658 = vpop.f32.mrf.mxu0
      %v3659 = vadd.f32 0.0, %v3658
      %v3660 = vpop.f32.mrf.mxu0
      %3661 = vdwg.mxu0
      %v3662 = vadd.f32 %v3087, %v3520
      %v3663 = vadd.f32 %v3088, %v3523
      %v3664 = vadd.f32 %v3089, %v3528
      %v3665 = vadd.f32 %v3090, %v3531
      %v3666 = vadd.f32 %v3091, %v3536
      %v3667 = vadd.f32 %v3092, %v3539
      %v3668 = vadd.f32 %v3093, %v3544
      %v3669 = vadd.f32 %v3094, %v3547
      %v3670 = vadd.f32 %v3095, %v3552
      %v3671 = vadd.f32 %v3096, %v3555
      %v3672 = vadd.f32 %v3097, %v3560
      %v3673 = vadd.f32 %v3098, %v3563
      %v3674 = vadd.f32 %v3099, %v3568
      %v3675 = vadd.f32 %v3100, %v3571
      %v3676 = vadd.f32 %v3101, %v3576
      %v3677 = vadd.f32 %v3102, %v3579
      %v3678 = vadd.f32 %v3103, %v3584
      %v3679 = vadd.f32 %v3104, %v3587
      %v3680 = vadd.f32 %v3105, %v3592
      %v3681 = vadd.f32 %v3106, %v3595
      %v3682 = vadd.f32 %v3107, %v3600
      %v3683 = vadd.f32 %v3108, %v3603
      %v3684 = vadd.f32 %v3109, %v3608
      %v3685 = vadd.f32 %v3110, %v3611
      %v3686 = vadd.f32 %v3111, %v3616
      %v3687 = vadd.f32 %v3112, %v3619
      %v3688 = vadd.f32 %v3113, %v3624
      %v3689 = vadd.f32 %v3114, %v3627
      %v3690 = vadd.f32 %v3115, %v3632
      %v3691 = vadd.f32 %v3116, %v3635
      %v3692 = vadd.f32 %v3117, %v3640
      %v3693 = vadd.f32 %v3118, %v3643
      %v3694 = vadd.f32 %v3119, %v3648
      %v3695 = vadd.f32 %v3120, %v3651
      %v3696 = vadd.f32 %v3121, %v3656
      %v3697 = vadd.f32 %v3122, %v3659
      %v3698 = vld [vmem:[#allocation2 + $0x18] sm:$0xf]
      %v3699 = vld [vmem:[#allocation2 + $0x1c] sm:$0xf]
      %v3700 = vld [vmem:[#allocation2 + $0x20] sm:$0xf]
      %v3701 = vld [vmem:[#allocation2 + $0x24] sm:$0xf]
      %v3702 = vld [vmem:[#allocation2 + $0x28] sm:$0xf]
      %v3703 = vld [vmem:[#allocation2 + $0x2c] sm:$0xf]
      %v3704 = vld [vmem:[#allocation2 + $0x30] sm:$0xf]
      %v3705 = vld [vmem:[#allocation2 + $0x34] sm:$0xf]
      %v3706 = vld [vmem:[#allocation2 + $0x38] sm:$0xf]
      %v3707 = vld [vmem:[#allocation2 + $0x3c] sm:$0xf]
      %v3708 = vld [vmem:[#allocation2 + $0x40] sm:$0xf]
      %v3709 = vld [vmem:[#allocation2 + $0x44] sm:$0xf]
      %v3710 = vld [vmem:[#allocation2 + $0x48] sm:$0xf]
      %v3711 = vld [vmem:[#allocation2 + $0x4c] sm:$0xf]
      %v3712 = vld [vmem:[#allocation2 + $0x50] sm:$0xf]
      %v3713 = vld [vmem:[#allocation2 + $0x54] sm:$0xf]
      %v3714 = vld [vmem:[#allocation2 + $0x58] sm:$0xf]
      %v3715 = vld [vmem:[#allocation2 + $0x5c] sm:$0xf]
      %v3716 = vld [vmem:[#allocation2 + $0x60] sm:$0xf]
      %v3717 = vld [vmem:[#allocation2 + $0x64] sm:$0xf]
      %v3718 = vld [vmem:[#allocation2 + $0x68] sm:$0xf]
      %v3719 = vld [vmem:[#allocation2 + $0x6c] sm:$0xf]
      %v3720 = vld [vmem:[#allocation2 + $0x70] sm:$0xf]
      %v3721 = vld [vmem:[#allocation2 + $0x74] sm:$0xf]
      %v3722 = vld [vmem:[#allocation2 + $0x78] sm:$0xf]
      %v3723 = vld [vmem:[#allocation2 + $0x7c] sm:$0xf]
      %v3724 = vld [vmem:[#allocation2 + $0x80] sm:$0xf]
      %v3725 = vld [vmem:[#allocation2 + $0x84] sm:$0xf]
      %v3726 = vld [vmem:[#allocation2 + $0x88] sm:$0xf]
      %v3727 = vld [vmem:[#allocation2 + $0x8c] sm:$0xf]
      %v3728 = vld [vmem:[#allocation2 + $0x90] sm:$0xf]
      %v3729 = vld [vmem:[#allocation2 + $0x94] sm:$0xf]
      %v3730 = vld [vmem:[#allocation2 + $0x98] sm:$0xf]
      %v3731 = vld [vmem:[#allocation2 + $0x9c] sm:$0xf]
      %v3732 = vld [vmem:[#allocation2 + $0xa0] sm:$0xf]
      %v3733 = vld [vmem:[#allocation2 + $0xa4] sm:$0xf]
      %v3734 = vld [vmem:[#allocation2 + $0xa8] sm:$0x1]
      %s3735 = scalar_lea.vmem %s2, 384
      %v3736 = vld [vmem:[%s3735] sm:$0xf]
      %v3737 = vld [vmem:[%s3735 + $0x4] sm:$0xf]
      %v3738 = vld [vmem:[%s3735 + $0x8] sm:$0xf]
      %v3739 = vld [vmem:[%s3735 + $0xc] sm:$0xf]
      %v3740 = vld [vmem:[%s3735 + $0x10] sm:$0xf]
      %v3741 = vld [vmem:[%s3735 + $0x14] sm:$0xf]
      %v3742 = vld [vmem:[%s3735 + $0x18] sm:$0xf]
      %v3743 = vld [vmem:[%s3735 + $0x1c] sm:$0xf]
      %v3744 = vld [vmem:[%s3735 + $0x20] sm:$0xf]
      %v3745 = vld [vmem:[%s3735 + $0x24] sm:$0xf]
      %v3746 = vld [vmem:[%s3735 + $0x28] sm:$0xf]
      %v3747 = vld [vmem:[%s3735 + $0x2c] sm:$0xf]
      %v3748 = vld [vmem:[%s3735 + $0x30] sm:$0xf]
      %v3749 = vld [vmem:[%s3735 + $0x34] sm:$0xf]
      %v3750 = vld [vmem:[%s3735 + $0x38] sm:$0xf]
      %v3751 = vld [vmem:[%s3735 + $0x3c] sm:$0xf]
      %v3789 = vunpack.c.l.b16 %v3698
      %v3790 = vunpack.c.l.b16 %v3699
      %v3791 = vunpack.c.l.b16 %v3700
      %v3792 = vunpack.c.l.b16 %v3701
      %v3793 = vunpack.c.l.b16 %v3702
      %v3794 = vunpack.c.l.b16 %v3703
      %v3795 = vunpack.c.l.b16 %v3704
      %v3796 = vunpack.c.l.b16 %v3705
      %v3797 = vunpack.c.l.b16 %v3706
      %v3798 = vunpack.c.l.b16 %v3707
      %v3799 = vunpack.c.l.b16 %v3708
      %v3800 = vunpack.c.l.b16 %v3709
      %v3801 = vunpack.c.l.b16 %v3710
      %v3802 = vunpack.c.l.b16 %v3711
      %v3803 = vunpack.c.l.b16 %v3712
      %v3804 = vunpack.c.l.b16 %v3713
      %v3805 = vunpack.c.l.b16 %v3714
      %v3806 = vunpack.c.l.b16 %v3715
      %v3807 = vunpack.c.l.b16 %v3716
      %v3808 = vunpack.c.l.b16 %v3717
      %v3809 = vunpack.c.l.b16 %v3718
      %v3810 = vunpack.c.l.b16 %v3719
      %v3811 = vunpack.c.l.b16 %v3720
      %v3812 = vunpack.c.l.b16 %v3721
      %v3813 = vunpack.c.l.b16 %v3722
      %v3814 = vunpack.c.l.b16 %v3723
      %v3815 = vunpack.c.l.b16 %v3724
      %v3816 = vunpack.c.l.b16 %v3725
      %v3817 = vunpack.c.l.b16 %v3726
      %v3818 = vunpack.c.l.b16 %v3727
      %v3819 = vunpack.c.l.b16 %v3728
      %v3820 = vunpack.c.l.b16 %v3729
      %v3821 = vunpack.c.l.b16 %v3730
      %v3822 = vunpack.c.l.b16 %v3731
      %v3823 = vunpack.c.l.b16 %v3732
      %v3824 = vunpack.c.l.b16 %v3733
      %v3825 = vunpack.c.l.b16 %v3734
      %v3826 = vpack.c.b16 %v3790, %v3789
      %v3827 = vpack.c.b16 %v3792, %v3791
      %v3828 = vpack.c.b16 %v3794, %v3793
      %v3829 = vpack.c.b16 %v3796, %v3795
      %v3830 = vpack.c.b16 %v3798, %v3797
      %v3831 = vpack.c.b16 %v3800, %v3799
      %v3832 = vpack.c.b16 %v3802, %v3801
      %v3833 = vpack.c.b16 %v3804, %v3803
      %v3834 = vpack.c.b16 %v3806, %v3805
      %v3835 = vpack.c.b16 %v3808, %v3807
      %v3836 = vpack.c.b16 %v3810, %v3809
      %v3837 = vpack.c.b16 %v3812, %v3811
      %v3838 = vpack.c.b16 %v3814, %v3813
      %v3839 = vpack.c.b16 %v3816, %v3815
      %v3840 = vpack.c.b16 %v3818, %v3817
      %v3841 = vpack.c.b16 %v3820, %v3819
      %v3842 = vpack.c.b16 %v3822, %v3821
      %v3843 = vpack.c.b16 %v3824, %v3823
      %v3844 = vpack.c.b16 %v3825, %v3825
      %v3846 = vshrl.u32 %v3826, 16
      %v3848 = vshll.u32 %v3826, 16
      %v3850 = vrot.slane %v3848, 1
      %v3851 = vor.u32 %v3846, %v3850
      %v3853 = vshll.u32 %v3827, 16
      %v3855 = vrot.slane %v3853, 1
      %v3856 = vsel %vm3270, %v3851, %v3855
      %v3857 = vshrl.u32 %v3827, 16
      %v3859 = vor.u32 %v3857, %v3855
      %v3861 = vshll.u32 %v3828, 16
      %v3863 = vrot.slane %v3861, 1
      %v3864 = vsel %vm3270, %v3859, %v3863
      %v3865 = vshrl.u32 %v3828, 16
      %v3867 = vor.u32 %v3865, %v3863
      %v3869 = vshll.u32 %v3829, 16
      %v3871 = vrot.slane %v3869, 1
      %v3872 = vsel %vm3270, %v3867, %v3871
      %v3873 = vshrl.u32 %v3829, 16
      %v3875 = vor.u32 %v3873, %v3871
      %v3877 = vshll.u32 %v3830, 16
      %v3879 = vrot.slane %v3877, 1
      %v3880 = vsel %vm3270, %v3875, %v3879
      %v3881 = vshrl.u32 %v3830, 16
      %v3883 = vor.u32 %v3881, %v3879
      %v3885 = vshll.u32 %v3831, 16
      %v3887 = vrot.slane %v3885, 1
      %v3888 = vsel %vm3270, %v3883, %v3887
      %v3889 = vshrl.u32 %v3831, 16
      %v3891 = vor.u32 %v3889, %v3887
      %v3893 = vshll.u32 %v3832, 16
      %v3895 = vrot.slane %v3893, 1
      %v3896 = vsel %vm3270, %v3891, %v3895
      %v3897 = vshrl.u32 %v3832, 16
      %v3899 = vor.u32 %v3897, %v3895
      %v3901 = vshll.u32 %v3833, 16
      %v3903 = vrot.slane %v3901, 1
      %v3904 = vsel %vm3270, %v3899, %v3903
      %v3905 = vshrl.u32 %v3833, 16
      %v3907 = vor.u32 %v3905, %v3903
      %v3909 = vshll.u32 %v3834, 16
      %v3911 = vrot.slane %v3909, 1
      %v3912 = vsel %vm3270, %v3907, %v3911
      %v3913 = vshrl.u32 %v3834, 16
      %v3915 = vor.u32 %v3913, %v3911
      %v3917 = vshll.u32 %v3835, 16
      %v3919 = vrot.slane %v3917, 1
      %v3920 = vsel %vm3270, %v3915, %v3919
      %v3921 = vshrl.u32 %v3835, 16
      %v3923 = vor.u32 %v3921, %v3919
      %v3925 = vshll.u32 %v3836, 16
      %v3927 = vrot.slane %v3925, 1
      %v3928 = vsel %vm3270, %v3923, %v3927
      %v3929 = vshrl.u32 %v3836, 16
      %v3931 = vor.u32 %v3929, %v3927
      %v3933 = vshll.u32 %v3837, 16
      %v3935 = vrot.slane %v3933, 1
      %v3936 = vsel %vm3270, %v3931, %v3935
      %v3937 = vshrl.u32 %v3837, 16
      %v3939 = vor.u32 %v3937, %v3935
      %v3941 = vshll.u32 %v3838, 16
      %v3943 = vrot.slane %v3941, 1
      %v3944 = vsel %vm3270, %v3939, %v3943
      %v3945 = vshrl.u32 %v3838, 16
      %v3947 = vor.u32 %v3945, %v3943
      %v3949 = vshll.u32 %v3839, 16
      %v3951 = vrot.slane %v3949, 1
      %v3952 = vsel %vm3270, %v3947, %v3951
      %v3953 = vshrl.u32 %v3839, 16
      %v3955 = vor.u32 %v3953, %v3951
      %v3957 = vshll.u32 %v3840, 16
      %v3959 = vrot.slane %v3957, 1
      %v3960 = vsel %vm3270, %v3955, %v3959
      %v3961 = vshrl.u32 %v3840, 16
      %v3963 = vor.u32 %v3961, %v3959
      %v3965 = vshll.u32 %v3841, 16
      %v3967 = vrot.slane %v3965, 1
      %v3968 = vsel %vm3270, %v3963, %v3967
      %v3969 = vshrl.u32 %v3841, 16
      %v3971 = vor.u32 %v3969, %v3967
      %v3973 = vshll.u32 %v3842, 16
      %v3975 = vrot.slane %v3973, 1
      %v3976 = vsel %vm3270, %v3971, %v3975
      %v3977 = vshrl.u32 %v3842, 16
      %v3979 = vor.u32 %v3977, %v3975
      %v3981 = vshll.u32 %v3843, 16
      %v3983 = vrot.slane %v3981, 1
      %v3984 = vsel %vm3270, %v3979, %v3983
      %v3985 = vshrl.u32 %v3843, 16
      %v3987 = vor.u32 %v3985, %v3983
      %v3989 = vshll.u32 %v3844, 16
      %v3991 = vrot.slane %v3989, 1
      %v3992 = vsel %vm3270, %v3987, %v3991
      %v4027 = vunpack.c.l.b16 %v3736
      %v4028 = vunpack.c.l.b16 %v3737
      %v4029 = vunpack.c.l.b16 %v3738
      %v4030 = vunpack.c.l.b16 %v3739
      %v4031 = vunpack.c.l.b16 %v3740
      %v4032 = vunpack.c.l.b16 %v3741
      %v4033 = vunpack.c.l.b16 %v3742
      %v4034 = vunpack.c.l.b16 %v3743
      %v4035 = vunpack.c.l.b16 %v3744
      %v4036 = vunpack.c.l.b16 %v3745
      %v4037 = vunpack.c.l.b16 %v3746
      %v4038 = vunpack.c.l.b16 %v3747
      %v4039 = vunpack.c.l.b16 %v3748
      %v4040 = vunpack.c.l.b16 %v3749
      %v4041 = vunpack.c.l.b16 %v3750
      %v4042 = vunpack.c.l.b16 %v3751
      %v4043 = vpack.c.b16 %v4028, %v4027
      %v4044 = vpack.c.b16 %v4030, %v4029
      %v4045 = vpack.c.b16 %v4032, %v4031
      %v4046 = vpack.c.b16 %v4034, %v4033
      %v4047 = vpack.c.b16 %v4036, %v4035
      %v4048 = vpack.c.b16 %v4038, %v4037
      %v4049 = vpack.c.b16 %v4040, %v4039
      %v4050 = vpack.c.b16 %v4042, %v4041
      %4059 = vmatprep.subr.bf16.mxu0 0
      %4060 = vmatpush1.bf16.msra.mxu0 %v4050
      %4061 = vmatprep.subr.bf16.mxu0 0
      %4062 = vmatpush1.bf16.msra.mxu0 %v4049
      %4063 = vmatprep.subr.bf16.mxu0 0
      %4064 = vmatpush1.bf16.msra.mxu0 %v4048
      %4065 = vmatprep.subr.bf16.mxu0 0
      %4066 = vmatpush1.bf16.msra.mxu0 %v4047
      %4067 = vmatprep.subr.bf16.mxu0 0
      %4068 = vmatpush1.bf16.msra.mxu0 %v4046
      %4069 = vmatprep.subr.bf16.mxu0 0
      %4070 = vmatpush1.bf16.msra.mxu0 %v4045
      %4071 = vmatprep.subr.bf16.mxu0 0
      %4072 = vmatpush1.bf16.msra.mxu0 %v4044
      %4073 = vmatprep.subr.bf16.mxu0 0
      %4074 = vmatpush1.bf16.msra.mxu0 %v4043
      %4075 = vmatprep.subr.bf16.mxu0 0
      %4076 = vmatpush2.bf16.msra.mxu0 0
      %4077 = vmatprep.subr.bf16.mxu0 0
      %4078 = vmatpush2.bf16.msra.mxu0 0
      %4079 = vmatprep.subr.bf16.mxu0 0
      %4080 = vmatpush2.bf16.msra.mxu0 0
      %4081 = vmatprep.subr.bf16.mxu0 0
      %4082 = vmatpush2.bf16.msra.mxu0 0
      %4083 = vmatprep.subr.bf16.mxu0 0
      %4084 = vmatpush2.bf16.msra.mxu0 0
      %4085 = vmatprep.subr.bf16.mxu0 0
      %4086 = vmatpush2.bf16.msra.mxu0 0
      %4087 = vmatprep.subr.bf16.mxu0 0
      %4088 = vmatpush2.bf16.msra.mxu0 0
      %4089 = vmatprep.subr.bf16.mxu0 0
      %4090 = vmatpush2.bf16.msra.mxu0 0
      %4091 = vmatprep.mubr.bf16.mxu0 0
      %4092 = vmatmul.mubr.bf16.gmra.mxu0 %v3856
      %v4093 = vpop.f32.mrf.mxu0
      %v4094 = vadd.f32 0.0, %v4093
      %v4095 = vpop.f32.mrf.mxu0
      %v4096 = vpop.f32.mrf.mxu0
      %v4097 = vadd.f32 0.0, %v4096
      %v4098 = vpop.f32.mrf.mxu0
      %4099 = vmatprep.mubr.bf16.mxu0 0
      %4100 = vmatmul.mubr.bf16.gmra.mxu0 %v3864
      %v4101 = vpop.f32.mrf.mxu0
      %v4102 = vadd.f32 0.0, %v4101
      %v4103 = vpop.f32.mrf.mxu0
      %v4104 = vpop.f32.mrf.mxu0
      %v4105 = vadd.f32 0.0, %v4104
      %v4106 = vpop.f32.mrf.mxu0
      %4107 = vmatprep.mubr.bf16.mxu0 0
      %4108 = vmatmul.mubr.bf16.gmra.mxu0 %v3872
      %v4109 = vpop.f32.mrf.mxu0
      %v4110 = vadd.f32 0.0, %v4109
      %v4111 = vpop.f32.mrf.mxu0
      %v4112 = vpop.f32.mrf.mxu0
      %v4113 = vadd.f32 0.0, %v4112
      %v4114 = vpop.f32.mrf.mxu0
      %4115 = vmatprep.mubr.bf16.mxu0 0
      %4116 = vmatmul.mubr.bf16.gmra.mxu0 %v3880
      %v4117 = vpop.f32.mrf.mxu0
      %v4118 = vadd.f32 0.0, %v4117
      %v4119 = vpop.f32.mrf.mxu0
      %v4120 = vpop.f32.mrf.mxu0
      %v4121 = vadd.f32 0.0, %v4120
      %v4122 = vpop.f32.mrf.mxu0
      %4123 = vmatprep.mubr.bf16.mxu0 0
      %4124 = vmatmul.mubr.bf16.gmra.mxu0 %v3888
      %v4125 = vpop.f32.mrf.mxu0
      %v4126 = vadd.f32 0.0, %v4125
      %v4127 = vpop.f32.mrf.mxu0
      %v4128 = vpop.f32.mrf.mxu0
      %v4129 = vadd.f32 0.0, %v4128
      %v4130 = vpop.f32.mrf.mxu0
      %4131 = vmatprep.mubr.bf16.mxu0 0
      %4132 = vmatmul.mubr.bf16.gmra.mxu0 %v3896
      %v4133 = vpop.f32.mrf.mxu0
      %v4134 = vadd.f32 0.0, %v4133
      %v4135 = vpop.f32.mrf.mxu0
      %v4136 = vpop.f32.mrf.mxu0
      %v4137 = vadd.f32 0.0, %v4136
      %v4138 = vpop.f32.mrf.mxu0
      %4139 = vmatprep.mubr.bf16.mxu0 0
      %4140 = vmatmul.mubr.bf16.gmra.mxu0 %v3904
      %v4141 = vpop.f32.mrf.mxu0
      %v4142 = vadd.f32 0.0, %v4141
      %v4143 = vpop.f32.mrf.mxu0
      %v4144 = vpop.f32.mrf.mxu0
      %v4145 = vadd.f32 0.0, %v4144
      %v4146 = vpop.f32.mrf.mxu0
      %4147 = vmatprep.mubr.bf16.mxu0 0
      %4148 = vmatmul.mubr.bf16.gmra.mxu0 %v3912
      %v4149 = vpop.f32.mrf.mxu0
      %v4150 = vadd.f32 0.0, %v4149
      %v4151 = vpop.f32.mrf.mxu0
      %v4152 = vpop.f32.mrf.mxu0
      %v4153 = vadd.f32 0.0, %v4152
      %v4154 = vpop.f32.mrf.mxu0
      %4155 = vmatprep.mubr.bf16.mxu0 0
      %4156 = vmatmul.mubr.bf16.gmra.mxu0 %v3920
      %v4157 = vpop.f32.mrf.mxu0
      %v4158 = vadd.f32 0.0, %v4157
      %v4159 = vpop.f32.mrf.mxu0
      %v4160 = vpop.f32.mrf.mxu0
      %v4161 = vadd.f32 0.0, %v4160
      %v4162 = vpop.f32.mrf.mxu0
      %4163 = vmatprep.mubr.bf16.mxu0 0
      %4164 = vmatmul.mubr.bf16.gmra.mxu0 %v3928
      %v4165 = vpop.f32.mrf.mxu0
      %v4166 = vadd.f32 0.0, %v4165
      %v4167 = vpop.f32.mrf.mxu0
      %v4168 = vpop.f32.mrf.mxu0
      %v4169 = vadd.f32 0.0, %v4168
      %v4170 = vpop.f32.mrf.mxu0
      %4171 = vmatprep.mubr.bf16.mxu0 0
      %4172 = vmatmul.mubr.bf16.gmra.mxu0 %v3936
      %v4173 = vpop.f32.mrf.mxu0
      %v4174 = vadd.f32 0.0, %v4173
      %v4175 = vpop.f32.mrf.mxu0
      %v4176 = vpop.f32.mrf.mxu0
      %v4177 = vadd.f32 0.0, %v4176
      %v4178 = vpop.f32.mrf.mxu0
      %4179 = vmatprep.mubr.bf16.mxu0 0
      %4180 = vmatmul.mubr.bf16.gmra.mxu0 %v3944
      %v4181 = vpop.f32.mrf.mxu0
      %v4182 = vadd.f32 0.0, %v4181
      %v4183 = vpop.f32.mrf.mxu0
      %v4184 = vpop.f32.mrf.mxu0
      %v4185 = vadd.f32 0.0, %v4184
      %v4186 = vpop.f32.mrf.mxu0
      %4187 = vmatprep.mubr.bf16.mxu0 0
      %4188 = vmatmul.mubr.bf16.gmra.mxu0 %v3952
      %v4189 = vpop.f32.mrf.mxu0
      %v4190 = vadd.f32 0.0, %v4189
      %v4191 = vpop.f32.mrf.mxu0
      %v4192 = vpop.f32.mrf.mxu0
      %v4193 = vadd.f32 0.0, %v4192
      %v4194 = vpop.f32.mrf.mxu0
      %4195 = vmatprep.mubr.bf16.mxu0 0
      %4196 = vmatmul.mubr.bf16.gmra.mxu0 %v3960
      %v4197 = vpop.f32.mrf.mxu0
      %v4198 = vadd.f32 0.0, %v4197
      %v4199 = vpop.f32.mrf.mxu0
      %v4200 = vpop.f32.mrf.mxu0
      %v4201 = vadd.f32 0.0, %v4200
      %v4202 = vpop.f32.mrf.mxu0
      %4203 = vmatprep.mubr.bf16.mxu0 0
      %4204 = vmatmul.mubr.bf16.gmra.mxu0 %v3968
      %v4205 = vpop.f32.mrf.mxu0
      %v4206 = vadd.f32 0.0, %v4205
      %v4207 = vpop.f32.mrf.mxu0
      %v4208 = vpop.f32.mrf.mxu0
      %v4209 = vadd.f32 0.0, %v4208
      %v4210 = vpop.f32.mrf.mxu0
      %4211 = vmatprep.mubr.bf16.mxu0 0
      %4212 = vmatmul.mubr.bf16.gmra.mxu0 %v3976
      %v4213 = vpop.f32.mrf.mxu0
      %v4214 = vadd.f32 0.0, %v4213
      %v4215 = vpop.f32.mrf.mxu0
      %v4216 = vpop.f32.mrf.mxu0
      %v4217 = vadd.f32 0.0, %v4216
      %v4218 = vpop.f32.mrf.mxu0
      %4219 = vmatprep.mubr.bf16.mxu0 0
      %4220 = vmatmul.mubr.bf16.gmra.mxu0 %v3984
      %v4221 = vpop.f32.mrf.mxu0
      %v4222 = vadd.f32 0.0, %v4221
      %v4223 = vpop.f32.mrf.mxu0
      %v4224 = vpop.f32.mrf.mxu0
      %v4225 = vadd.f32 0.0, %v4224
      %v4226 = vpop.f32.mrf.mxu0
      %4227 = vmatprep.mubr.bf16.mxu0 0
      %4228 = vmatmul.mubr.bf16.gmra.mxu0 %v3992
      %v4229 = vpop.f32.mrf.mxu0
      %v4230 = vadd.f32 0.0, %v4229
      %v4231 = vpop.f32.mrf.mxu0
      %v4232 = vpop.f32.mrf.mxu0
      %v4233 = vadd.f32 0.0, %v4232
      %v4234 = vpop.f32.mrf.mxu0
      %4235 = vdwg.mxu0
      %v4236 = vadd.f32 %v3662, %v4094
      %v4237 = vadd.f32 %v3663, %v4097
      %v4238 = vadd.f32 %v3664, %v4102
      %v4239 = vadd.f32 %v3665, %v4105
      %v4240 = vadd.f32 %v3666, %v4110
      %v4241 = vadd.f32 %v3667, %v4113
      %v4242 = vadd.f32 %v3668, %v4118
      %v4243 = vadd.f32 %v3669, %v4121
      %v4244 = vadd.f32 %v3670, %v4126
      %v4245 = vadd.f32 %v3671, %v4129
      %v4246 = vadd.f32 %v3672, %v4134
      %v4247 = vadd.f32 %v3673, %v4137
      %v4248 = vadd.f32 %v3674, %v4142
      %v4249 = vadd.f32 %v3675, %v4145
      %v4250 = vadd.f32 %v3676, %v4150
      %v4251 = vadd.f32 %v3677, %v4153
      %v4252 = vadd.f32 %v3678, %v4158
      %v4253 = vadd.f32 %v3679, %v4161
      %v4254 = vadd.f32 %v3680, %v4166
      %v4255 = vadd.f32 %v3681, %v4169
      %v4256 = vadd.f32 %v3682, %v4174
      %v4257 = vadd.f32 %v3683, %v4177
      %v4258 = vadd.f32 %v3684, %v4182
      %v4259 = vadd.f32 %v3685, %v4185
      %v4260 = vadd.f32 %v3686, %v4190
      %v4261 = vadd.f32 %v3687, %v4193
      %v4262 = vadd.f32 %v3688, %v4198
      %v4263 = vadd.f32 %v3689, %v4201
      %v4264 = vadd.f32 %v3690, %v4206
      %v4265 = vadd.f32 %v3691, %v4209
      %v4266 = vadd.f32 %v3692, %v4214
      %v4267 = vadd.f32 %v3693, %v4217
      %v4268 = vadd.f32 %v3694, %v4222
      %v4269 = vadd.f32 %v3695, %v4225
      %v4270 = vadd.f32 %v3696, %v4230
      %v4271 = vadd.f32 %v3697, %v4233
      %v4272 = vld [vmem:[#allocation2 + $0x18] sm:$0xe]
      %s4273 = scalar_lea.vmem %s2, 448
      %v4274 = vld [vmem:[%s4273] sm:$0xf]
      %v4275 = vld [vmem:[%s4273 + $0x4] sm:$0xf]
      %v4276 = vld [vmem:[%s4273 + $0x8] sm:$0xf]
      %v4277 = vld [vmem:[%s4273 + $0xc] sm:$0xf]
      %v4278 = vld [vmem:[%s4273 + $0x10] sm:$0xf]
      %v4279 = vld [vmem:[%s4273 + $0x14] sm:$0xf]
      %v4280 = vld [vmem:[%s4273 + $0x18] sm:$0xf]
      %v4281 = vld [vmem:[%s4273 + $0x1c] sm:$0xf]
      %v4282 = vld [vmem:[%s4273 + $0x20] sm:$0xf]
      %v4283 = vld [vmem:[%s4273 + $0x24] sm:$0xf]
      %v4284 = vld [vmem:[%s4273 + $0x28] sm:$0xf]
      %v4285 = vld [vmem:[%s4273 + $0x2c] sm:$0xf]
      %v4286 = vld [vmem:[%s4273 + $0x30] sm:$0xf]
      %v4287 = vld [vmem:[%s4273 + $0x34] sm:$0xf]
      %v4288 = vld [vmem:[%s4273 + $0x38] sm:$0xf]
      %v4289 = vld [vmem:[%s4273 + $0x3c] sm:$0xf]
      %v4291 = vunpack.c.l.b16 %v4272
      %v4292 = vpack.c.b16 %v3790, %v4291
      %vm4293 = vcmask 1046528
      %v4294 = vrot.slane %v4292, 1
      %v4295 = vrot.slane %v3827, 1
      %v4296 = vsel %vm4293, %v4294, %v4295
      %v4297 = vrot.slane %v3828, 1
      %v4298 = vsel %vm4293, %v4295, %v4297
      %v4299 = vrot.slane %v3829, 1
      %v4300 = vsel %vm4293, %v4297, %v4299
      %v4301 = vrot.slane %v3830, 1
      %v4302 = vsel %vm4293, %v4299, %v4301
      %v4303 = vrot.slane %v3831, 1
      %v4304 = vsel %vm4293, %v4301, %v4303
      %v4305 = vrot.slane %v3832, 1
      %v4306 = vsel %vm4293, %v4303, %v4305
      %v4307 = vrot.slane %v3833, 1
      %v4308 = vsel %vm4293, %v4305, %v4307
      %v4309 = vrot.slane %v3834, 1
      %v4310 = vsel %vm4293, %v4307, %v4309
      %v4311 = vrot.slane %v3835, 1
      %v4312 = vsel %vm4293, %v4309, %v4311
      %v4313 = vrot.slane %v3836, 1
      %v4314 = vsel %vm4293, %v4311, %v4313
      %v4315 = vrot.slane %v3837, 1
      %v4316 = vsel %vm4293, %v4313, %v4315
      %v4317 = vrot.slane %v3838, 1
      %v4318 = vsel %vm4293, %v4315, %v4317
      %v4319 = vrot.slane %v3839, 1
      %v4320 = vsel %vm4293, %v4317, %v4319
      %v4321 = vrot.slane %v3840, 1
      %v4322 = vsel %vm4293, %v4319, %v4321
      %v4323 = vrot.slane %v3841, 1
      %v4324 = vsel %vm4293, %v4321, %v4323
      %v4325 = vrot.slane %v3842, 1
      %v4326 = vsel %vm4293, %v4323, %v4325
      %v4327 = vrot.slane %v3843, 1
      %v4328 = vsel %vm4293, %v4325, %v4327
      %v4329 = vrot.slane %v3844, 1
      %v4330 = vsel %vm4293, %v4327, %v4329
      %v4365 = vunpack.c.l.b16 %v4274
      %v4366 = vunpack.c.l.b16 %v4275
      %v4367 = vunpack.c.l.b16 %v4276
      %v4368 = vunpack.c.l.b16 %v4277
      %v4369 = vunpack.c.l.b16 %v4278
      %v4370 = vunpack.c.l.b16 %v4279
      %v4371 = vunpack.c.l.b16 %v4280
      %v4372 = vunpack.c.l.b16 %v4281
      %v4373 = vunpack.c.l.b16 %v4282
      %v4374 = vunpack.c.l.b16 %v4283
      %v4375 = vunpack.c.l.b16 %v4284
      %v4376 = vunpack.c.l.b16 %v4285
      %v4377 = vunpack.c.l.b16 %v4286
      %v4378 = vunpack.c.l.b16 %v4287
      %v4379 = vunpack.c.l.b16 %v4288
      %v4380 = vunpack.c.l.b16 %v4289
      %v4381 = vpack.c.b16 %v4366, %v4365
      %v4382 = vpack.c.b16 %v4368, %v4367
      %v4383 = vpack.c.b16 %v4370, %v4369
      %v4384 = vpack.c.b16 %v4372, %v4371
      %v4385 = vpack.c.b16 %v4374, %v4373
      %v4386 = vpack.c.b16 %v4376, %v4375
      %v4387 = vpack.c.b16 %v4378, %v4377
      %v4388 = vpack.c.b16 %v4380, %v4379
      %4397 = vmatprep.subr.bf16.mxu0 0
      %4398 = vmatpush1.bf16.msra.mxu0 %v4388
      %4399 = vmatprep.subr.bf16.mxu0 0
      %4400 = vmatpush1.bf16.msra.mxu0 %v4387
      %4401 = vmatprep.subr.bf16.mxu0 0
      %4402 = vmatpush1.bf16.msra.mxu0 %v4386
      %4403 = vmatprep.subr.bf16.mxu0 0
      %4404 = vmatpush1.bf16.msra.mxu0 %v4385
      %4405 = vmatprep.subr.bf16.mxu0 0
      %4406 = vmatpush1.bf16.msra.mxu0 %v4384
      %4407 = vmatprep.subr.bf16.mxu0 0
      %4408 = vmatpush1.bf16.msra.mxu0 %v4383
      %4409 = vmatprep.subr.bf16.mxu0 0
      %4410 = vmatpush1.bf16.msra.mxu0 %v4382
      %4411 = vmatprep.subr.bf16.mxu0 0
      %4412 = vmatpush1.bf16.msra.mxu0 %v4381
      %4413 = vmatprep.subr.bf16.mxu0 0
      %4414 = vmatpush2.bf16.msra.mxu0 0
      %4415 = vmatprep.subr.bf16.mxu0 0
      %4416 = vmatpush2.bf16.msra.mxu0 0
      %4417 = vmatprep.subr.bf16.mxu0 0
      %4418 = vmatpush2.bf16.msra.mxu0 0
      %4419 = vmatprep.subr.bf16.mxu0 0
      %4420 = vmatpush2.bf16.msra.mxu0 0
      %4421 = vmatprep.subr.bf16.mxu0 0
      %4422 = vmatpush2.bf16.msra.mxu0 0
      %4423 = vmatprep.subr.bf16.mxu0 0
      %4424 = vmatpush2.bf16.msra.mxu0 0
      %4425 = vmatprep.subr.bf16.mxu0 0
      %4426 = vmatpush2.bf16.msra.mxu0 0
      %4427 = vmatprep.subr.bf16.mxu0 0
      %4428 = vmatpush2.bf16.msra.mxu0 0
      %4429 = vmatprep.mubr.bf16.mxu0 0
      %4430 = vmatmul.mubr.bf16.gmra.mxu0 %v4296
      %v4431 = vpop.f32.mrf.mxu0
      %v4432 = vadd.f32 0.0, %v4431
      %v4433 = vpop.f32.mrf.mxu0
      %v4434 = vpop.f32.mrf.mxu0
      %v4435 = vadd.f32 0.0, %v4434
      %v4436 = vpop.f32.mrf.mxu0
      %4437 = vmatprep.mubr.bf16.mxu0 0
      %4438 = vmatmul.mubr.bf16.gmra.mxu0 %v4298
      %v4439 = vpop.f32.mrf.mxu0
      %v4440 = vadd.f32 0.0, %v4439
      %v4441 = vpop.f32.mrf.mxu0
      %v4442 = vpop.f32.mrf.mxu0
      %v4443 = vadd.f32 0.0, %v4442
      %v4444 = vpop.f32.mrf.mxu0
      %4445 = vmatprep.mubr.bf16.mxu0 0
      %4446 = vmatmul.mubr.bf16.gmra.mxu0 %v4300
      %v4447 = vpop.f32.mrf.mxu0
      %v4448 = vadd.f32 0.0, %v4447
      %v4449 = vpop.f32.mrf.mxu0
      %v4450 = vpop.f32.mrf.mxu0
      %v4451 = vadd.f32 0.0, %v4450
      %v4452 = vpop.f32.mrf.mxu0
      %4453 = vmatprep.mubr.bf16.mxu0 0
      %4454 = vmatmul.mubr.bf16.gmra.mxu0 %v4302
      %v4455 = vpop.f32.mrf.mxu0
      %v4456 = vadd.f32 0.0, %v4455
      %v4457 = vpop.f32.mrf.mxu0
      %v4458 = vpop.f32.mrf.mxu0
      %v4459 = vadd.f32 0.0, %v4458
      %v4460 = vpop.f32.mrf.mxu0
      %4461 = vmatprep.mubr.bf16.mxu0 0
      %4462 = vmatmul.mubr.bf16.gmra.mxu0 %v4304
      %v4463 = vpop.f32.mrf.mxu0
      %v4464 = vadd.f32 0.0, %v4463
      %v4465 = vpop.f32.mrf.mxu0
      %v4466 = vpop.f32.mrf.mxu0
      %v4467 = vadd.f32 0.0, %v4466
      %v4468 = vpop.f32.mrf.mxu0
      %4469 = vmatprep.mubr.bf16.mxu0 0
      %4470 = vmatmul.mubr.bf16.gmra.mxu0 %v4306
      %v4471 = vpop.f32.mrf.mxu0
      %v4472 = vadd.f32 0.0, %v4471
      %v4473 = vpop.f32.mrf.mxu0
      %v4474 = vpop.f32.mrf.mxu0
      %v4475 = vadd.f32 0.0, %v4474
      %v4476 = vpop.f32.mrf.mxu0
      %4477 = vmatprep.mubr.bf16.mxu0 0
      %4478 = vmatmul.mubr.bf16.gmra.mxu0 %v4308
      %v4479 = vpop.f32.mrf.mxu0
      %v4480 = vadd.f32 0.0, %v4479
      %v4481 = vpop.f32.mrf.mxu0
      %v4482 = vpop.f32.mrf.mxu0
      %v4483 = vadd.f32 0.0, %v4482
      %v4484 = vpop.f32.mrf.mxu0
      %4485 = vmatprep.mubr.bf16.mxu0 0
      %4486 = vmatmul.mubr.bf16.gmra.mxu0 %v4310
      %v4487 = vpop.f32.mrf.mxu0
      %v4488 = vadd.f32 0.0, %v4487
      %v4489 = vpop.f32.mrf.mxu0
      %v4490 = vpop.f32.mrf.mxu0
      %v4491 = vadd.f32 0.0, %v4490
      %v4492 = vpop.f32.mrf.mxu0
      %4493 = vmatprep.mubr.bf16.mxu0 0
      %4494 = vmatmul.mubr.bf16.gmra.mxu0 %v4312
      %v4495 = vpop.f32.mrf.mxu0
      %v4496 = vadd.f32 0.0, %v4495
      %v4497 = vpop.f32.mrf.mxu0
      %v4498 = vpop.f32.mrf.mxu0
      %v4499 = vadd.f32 0.0, %v4498
      %v4500 = vpop.f32.mrf.mxu0
      %4501 = vmatprep.mubr.bf16.mxu0 0
      %4502 = vmatmul.mubr.bf16.gmra.mxu0 %v4314
      %v4503 = vpop.f32.mrf.mxu0
      %v4504 = vadd.f32 0.0, %v4503
      %v4505 = vpop.f32.mrf.mxu0
      %v4506 = vpop.f32.mrf.mxu0
      %v4507 = vadd.f32 0.0, %v4506
      %v4508 = vpop.f32.mrf.mxu0
      %4509 = vmatprep.mubr.bf16.mxu0 0
      %4510 = vmatmul.mubr.bf16.gmra.mxu0 %v4316
      %v4511 = vpop.f32.mrf.mxu0
      %v4512 = vadd.f32 0.0, %v4511
      %v4513 = vpop.f32.mrf.mxu0
      %v4514 = vpop.f32.mrf.mxu0
      %v4515 = vadd.f32 0.0, %v4514
      %v4516 = vpop.f32.mrf.mxu0
      %4517 = vmatprep.mubr.bf16.mxu0 0
      %4518 = vmatmul.mubr.bf16.gmra.mxu0 %v4318
      %v4519 = vpop.f32.mrf.mxu0
      %v4520 = vadd.f32 0.0, %v4519
      %v4521 = vpop.f32.mrf.mxu0
      %v4522 = vpop.f32.mrf.mxu0
      %v4523 = vadd.f32 0.0, %v4522
      %v4524 = vpop.f32.mrf.mxu0
      %4525 = vmatprep.mubr.bf16.mxu0 0
      %4526 = vmatmul.mubr.bf16.gmra.mxu0 %v4320
      %v4527 = vpop.f32.mrf.mxu0
      %v4528 = vadd.f32 0.0, %v4527
      %v4529 = vpop.f32.mrf.mxu0
      %v4530 = vpop.f32.mrf.mxu0
      %v4531 = vadd.f32 0.0, %v4530
      %v4532 = vpop.f32.mrf.mxu0
      %4533 = vmatprep.mubr.bf16.mxu0 0
      %4534 = vmatmul.mubr.bf16.gmra.mxu0 %v4322
      %v4535 = vpop.f32.mrf.mxu0
      %v4536 = vadd.f32 0.0, %v4535
      %v4537 = vpop.f32.mrf.mxu0
      %v4538 = vpop.f32.mrf.mxu0
      %v4539 = vadd.f32 0.0, %v4538
      %v4540 = vpop.f32.mrf.mxu0
      %4541 = vmatprep.mubr.bf16.mxu0 0
      %4542 = vmatmul.mubr.bf16.gmra.mxu0 %v4324
      %v4543 = vpop.f32.mrf.mxu0
      %v4544 = vadd.f32 0.0, %v4543
      %v4545 = vpop.f32.mrf.mxu0
      %v4546 = vpop.f32.mrf.mxu0
      %v4547 = vadd.f32 0.0, %v4546
      %v4548 = vpop.f32.mrf.mxu0
      %4549 = vmatprep.mubr.bf16.mxu0 0
      %4550 = vmatmul.mubr.bf16.gmra.mxu0 %v4326
      %v4551 = vpop.f32.mrf.mxu0
      %v4552 = vadd.f32 0.0, %v4551
      %v4553 = vpop.f32.mrf.mxu0
      %v4554 = vpop.f32.mrf.mxu0
      %v4555 = vadd.f32 0.0, %v4554
      %v4556 = vpop.f32.mrf.mxu0
      %4557 = vmatprep.mubr.bf16.mxu0 0
      %4558 = vmatmul.mubr.bf16.gmra.mxu0 %v4328
      %v4559 = vpop.f32.mrf.mxu0
      %v4560 = vadd.f32 0.0, %v4559
      %v4561 = vpop.f32.mrf.mxu0
      %v4562 = vpop.f32.mrf.mxu0
      %v4563 = vadd.f32 0.0, %v4562
      %v4564 = vpop.f32.mrf.mxu0
      %4565 = vmatprep.mubr.bf16.mxu0 0
      %4566 = vmatmul.mubr.bf16.gmra.mxu0 %v4330
      %v4567 = vpop.f32.mrf.mxu0
      %v4568 = vadd.f32 0.0, %v4567
      %v4569 = vpop.f32.mrf.mxu0
      %v4570 = vpop.f32.mrf.mxu0
      %v4571 = vadd.f32 0.0, %v4570
      %v4572 = vpop.f32.mrf.mxu0
      %4573 = vdwg.mxu0
      %v4574 = vadd.f32 %v4236, %v4432
      %v4575 = vadd.f32 %v4237, %v4435
      %v4576 = vadd.f32 %v4238, %v4440
      %v4577 = vadd.f32 %v4239, %v4443
      %v4578 = vadd.f32 %v4240, %v4448
      %v4579 = vadd.f32 %v4241, %v4451
      %v4580 = vadd.f32 %v4242, %v4456
      %v4581 = vadd.f32 %v4243, %v4459
      %v4582 = vadd.f32 %v4244, %v4464
      %v4583 = vadd.f32 %v4245, %v4467
      %v4584 = vadd.f32 %v4246, %v4472
      %v4585 = vadd.f32 %v4247, %v4475
      %v4586 = vadd.f32 %v4248, %v4480
      %v4587 = vadd.f32 %v4249, %v4483
      %v4588 = vadd.f32 %v4250, %v4488
      %v4589 = vadd.f32 %v4251, %v4491
      %v4590 = vadd.f32 %v4252, %v4496
      %v4591 = vadd.f32 %v4253, %v4499
      %v4592 = vadd.f32 %v4254, %v4504
      %v4593 = vadd.f32 %v4255, %v4507
      %v4594 = vadd.f32 %v4256, %v4512
      %v4595 = vadd.f32 %v4257, %v4515
      %v4596 = vadd.f32 %v4258, %v4520
      %v4597 = vadd.f32 %v4259, %v4523
      %v4598 = vadd.f32 %v4260, %v4528
      %v4599 = vadd.f32 %v4261, %v4531
      %v4600 = vadd.f32 %v4262, %v4536
      %v4601 = vadd.f32 %v4263, %v4539
      %v4602 = vadd.f32 %v4264, %v4544
      %v4603 = vadd.f32 %v4265, %v4547
      %v4604 = vadd.f32 %v4266, %v4552
      %v4605 = vadd.f32 %v4267, %v4555
      %v4606 = vadd.f32 %v4268, %v4560
      %v4607 = vadd.f32 %v4269, %v4563
      %v4608 = vadd.f32 %v4270, %v4568
      %v4609 = vadd.f32 %v4271, %v4571
      %v4610 = vld [vmem:[#allocation2 + $0xa8] sm:$0x3]
      %s4611 = scalar_lea.vmem %s2, 512
      %v4612 = vld [vmem:[%s4611] sm:$0xf]
      %v4613 = vld [vmem:[%s4611 + $0x4] sm:$0xf]
      %v4614 = vld [vmem:[%s4611 + $0x8] sm:$0xf]
      %v4615 = vld [vmem:[%s4611 + $0xc] sm:$0xf]
      %v4616 = vld [vmem:[%s4611 + $0x10] sm:$0xf]
      %v4617 = vld [vmem:[%s4611 + $0x14] sm:$0xf]
      %v4618 = vld [vmem:[%s4611 + $0x18] sm:$0xf]
      %v4619 = vld [vmem:[%s4611 + $0x1c] sm:$0xf]
      %v4620 = vld [vmem:[%s4611 + $0x20] sm:$0xf]
      %v4621 = vld [vmem:[%s4611 + $0x24] sm:$0xf]
      %v4622 = vld [vmem:[%s4611 + $0x28] sm:$0xf]
      %v4623 = vld [vmem:[%s4611 + $0x2c] sm:$0xf]
      %v4624 = vld [vmem:[%s4611 + $0x30] sm:$0xf]
      %v4625 = vld [vmem:[%s4611 + $0x34] sm:$0xf]
      %v4626 = vld [vmem:[%s4611 + $0x38] sm:$0xf]
      %v4627 = vld [vmem:[%s4611 + $0x3c] sm:$0xf]
      %v4629 = vunpack.c.l.b16 %v4610
      %v4630 = vpack.c.b16 %v4629, %v4629
      %vm4631 = vsmask.f32 6400
      %v4633 = vshrl.u32 %v4292, 16
      %v4635 = vrot.slane %v4633, 1
      %v4636 = vshll.u32 %v4292, 16
      %v4638 = vrot.slane %v4636, 2
      %v4639 = vor.u32 %v4635, %v4638
      %v4640 = vrot.slane %v3857, 1
      %v4641 = vrot.slane %v3853, 2
      %v4642 = vor.u32 %v4640, %v4641
      %v4643 = vsel %vm4631, %v4639, %v4642
      %v4644 = vrot.slane %v3865, 1
      %v4645 = vrot.slane %v3861, 2
      %v4646 = vor.u32 %v4644, %v4645
      %v4647 = vsel %vm4631, %v4642, %v4646
      %v4648 = vrot.slane %v3873, 1
      %v4649 = vrot.slane %v3869, 2
      %v4650 = vor.u32 %v4648, %v4649
      %v4651 = vsel %vm4631, %v4646, %v4650
      %v4652 = vrot.slane %v3881, 1
      %v4653 = vrot.slane %v3877, 2
      %v4654 = vor.u32 %v4652, %v4653
      %v4655 = vsel %vm4631, %v4650, %v4654
      %v4656 = vrot.slane %v3889, 1
      %v4657 = vrot.slane %v3885, 2
      %v4658 = vor.u32 %v4656, %v4657
      %v4659 = vsel %vm4631, %v4654, %v4658
      %v4660 = vrot.slane %v3897, 1
      %v4661 = vrot.slane %v3893, 2
      %v4662 = vor.u32 %v4660, %v4661
      %v4663 = vsel %vm4631, %v4658, %v4662
      %v4664 = vrot.slane %v3905, 1
      %v4665 = vrot.slane %v3901, 2
      %v4666 = vor.u32 %v4664, %v4665
      %v4667 = vsel %vm4631, %v4662, %v4666
      %v4668 = vrot.slane %v3913, 1
      %v4669 = vrot.slane %v3909, 2
      %v4670 = vor.u32 %v4668, %v4669
      %v4671 = vsel %vm4631, %v4666, %v4670
      %v4672 = vrot.slane %v3921, 1
      %v4673 = vrot.slane %v3917, 2
      %v4674 = vor.u32 %v4672, %v4673
      %v4675 = vsel %vm4631, %v4670, %v4674
      %v4676 = vrot.slane %v3929, 1
      %v4677 = vrot.slane %v3925, 2
      %v4678 = vor.u32 %v4676, %v4677
      %v4679 = vsel %vm4631, %v4674, %v4678
      %v4680 = vrot.slane %v3937, 1
      %v4681 = vrot.slane %v3933, 2
      %v4682 = vor.u32 %v4680, %v4681
      %v4683 = vsel %vm4631, %v4678, %v4682
      %v4684 = vrot.slane %v3945, 1
      %v4685 = vrot.slane %v3941, 2
      %v4686 = vor.u32 %v4684, %v4685
      %v4687 = vsel %vm4631, %v4682, %v4686
      %v4688 = vrot.slane %v3953, 1
      %v4689 = vrot.slane %v3949, 2
      %v4690 = vor.u32 %v4688, %v4689
      %v4691 = vsel %vm4631, %v4686, %v4690
      %v4692 = vrot.slane %v3961, 1
      %v4693 = vrot.slane %v3957, 2
      %v4694 = vor.u32 %v4692, %v4693
      %v4695 = vsel %vm4631, %v4690, %v4694
      %v4696 = vrot.slane %v3969, 1
      %v4697 = vrot.slane %v3965, 2
      %v4698 = vor.u32 %v4696, %v4697
      %v4699 = vsel %vm4631, %v4694, %v4698
      %v4700 = vrot.slane %v3977, 1
      %v4701 = vrot.slane %v3973, 2
      %v4702 = vor.u32 %v4700, %v4701
      %v4703 = vsel %vm4631, %v4698, %v4702
      %v4704 = vrot.slane %v3985, 1
      %v4705 = vrot.slane %v3981, 2
      %v4706 = vor.u32 %v4704, %v4705
      %v4707 = vsel %vm4631, %v4702, %v4706
      %v4709 = vshrl.u32 %v4630, 16
      %v4711 = vrot.slane %v4709, 1
      %v4712 = vshll.u32 %v4630, 16
      %v4714 = vrot.slane %v4712, 2
      %v4715 = vor.u32 %v4711, %v4714
      %v4716 = vsel %vm4631, %v4706, %v4715
      %v4751 = vunpack.c.l.b16 %v4612
      %v4752 = vunpack.c.l.b16 %v4613
      %v4753 = vunpack.c.l.b16 %v4614
      %v4754 = vunpack.c.l.b16 %v4615
      %v4755 = vunpack.c.l.b16 %v4616
      %v4756 = vunpack.c.l.b16 %v4617
      %v4757 = vunpack.c.l.b16 %v4618
      %v4758 = vunpack.c.l.b16 %v4619
      %v4759 = vunpack.c.l.b16 %v4620
      %v4760 = vunpack.c.l.b16 %v4621
      %v4761 = vunpack.c.l.b16 %v4622
      %v4762 = vunpack.c.l.b16 %v4623
      %v4763 = vunpack.c.l.b16 %v4624
      %v4764 = vunpack.c.l.b16 %v4625
      %v4765 = vunpack.c.l.b16 %v4626
      %v4766 = vunpack.c.l.b16 %v4627
      %v4767 = vpack.c.b16 %v4752, %v4751
      %v4768 = vpack.c.b16 %v4754, %v4753
      %v4769 = vpack.c.b16 %v4756, %v4755
      %v4770 = vpack.c.b16 %v4758, %v4757
      %v4771 = vpack.c.b16 %v4760, %v4759
      %v4772 = vpack.c.b16 %v4762, %v4761
      %v4773 = vpack.c.b16 %v4764, %v4763
      %v4774 = vpack.c.b16 %v4766, %v4765
      %4783 = vmatprep.subr.bf16.mxu0 0
      %4784 = vmatpush1.bf16.msra.mxu0 %v4774
      %4785 = vmatprep.subr.bf16.mxu0 0
      %4786 = vmatpush1.bf16.msra.mxu0 %v4773
      %4787 = vmatprep.subr.bf16.mxu0 0
      %4788 = vmatpush1.bf16.msra.mxu0 %v4772
      %4789 = vmatprep.subr.bf16.mxu0 0
      %4790 = vmatpush1.bf16.msra.mxu0 %v4771
      %4791 = vmatprep.subr.bf16.mxu0 0
      %4792 = vmatpush1.bf16.msra.mxu0 %v4770
      %4793 = vmatprep.subr.bf16.mxu0 0
      %4794 = vmatpush1.bf16.msra.mxu0 %v4769
      %4795 = vmatprep.subr.bf16.mxu0 0
      %4796 = vmatpush1.bf16.msra.mxu0 %v4768
      %4797 = vmatprep.subr.bf16.mxu0 0
      %4798 = vmatpush1.bf16.msra.mxu0 %v4767
      %4799 = vmatprep.subr.bf16.mxu0 0
      %4800 = vmatpush2.bf16.msra.mxu0 0
      %4801 = vmatprep.subr.bf16.mxu0 0
      %4802 = vmatpush2.bf16.msra.mxu0 0
      %4803 = vmatprep.subr.bf16.mxu0 0
      %4804 = vmatpush2.bf16.msra.mxu0 0
      %4805 = vmatprep.subr.bf16.mxu0 0
      %4806 = vmatpush2.bf16.msra.mxu0 0
      %4807 = vmatprep.subr.bf16.mxu0 0
      %4808 = vmatpush2.bf16.msra.mxu0 0
      %4809 = vmatprep.subr.bf16.mxu0 0
      %4810 = vmatpush2.bf16.msra.mxu0 0
      %4811 = vmatprep.subr.bf16.mxu0 0
      %4812 = vmatpush2.bf16.msra.mxu0 0
      %4813 = vmatprep.subr.bf16.mxu0 0
      %4814 = vmatpush2.bf16.msra.mxu0 0
      %4815 = vmatprep.mubr.bf16.mxu0 0
      %4816 = vmatmul.mubr.bf16.gmra.mxu0 %v4643
      %v4817 = vpop.f32.mrf.mxu0
      %v4818 = vadd.f32 0.0, %v4817
      %v4819 = vpop.f32.mrf.mxu0
      %v4820 = vpop.f32.mrf.mxu0
      %v4821 = vadd.f32 0.0, %v4820
      %v4822 = vpop.f32.mrf.mxu0
      %4823 = vmatprep.mubr.bf16.mxu0 0
      %4824 = vmatmul.mubr.bf16.gmra.mxu0 %v4647
      %v4825 = vpop.f32.mrf.mxu0
      %v4826 = vadd.f32 0.0, %v4825
      %v4827 = vpop.f32.mrf.mxu0
      %v4828 = vpop.f32.mrf.mxu0
      %v4829 = vadd.f32 0.0, %v4828
      %v4830 = vpop.f32.mrf.mxu0
      %4831 = vmatprep.mubr.bf16.mxu0 0
      %4832 = vmatmul.mubr.bf16.gmra.mxu0 %v4651
      %v4833 = vpop.f32.mrf.mxu0
      %v4834 = vadd.f32 0.0, %v4833
      %v4835 = vpop.f32.mrf.mxu0
      %v4836 = vpop.f32.mrf.mxu0
      %v4837 = vadd.f32 0.0, %v4836
      %v4838 = vpop.f32.mrf.mxu0
      %4839 = vmatprep.mubr.bf16.mxu0 0
      %4840 = vmatmul.mubr.bf16.gmra.mxu0 %v4655
      %v4841 = vpop.f32.mrf.mxu0
      %v4842 = vadd.f32 0.0, %v4841
      %v4843 = vpop.f32.mrf.mxu0
      %v4844 = vpop.f32.mrf.mxu0
      %v4845 = vadd.f32 0.0, %v4844
      %v4846 = vpop.f32.mrf.mxu0
      %4847 = vmatprep.mubr.bf16.mxu0 0
      %4848 = vmatmul.mubr.bf16.gmra.mxu0 %v4659
      %v4849 = vpop.f32.mrf.mxu0
      %v4850 = vadd.f32 0.0, %v4849
      %v4851 = vpop.f32.mrf.mxu0
      %v4852 = vpop.f32.mrf.mxu0
      %v4853 = vadd.f32 0.0, %v4852
      %v4854 = vpop.f32.mrf.mxu0
      %4855 = vmatprep.mubr.bf16.mxu0 0
      %4856 = vmatmul.mubr.bf16.gmra.mxu0 %v4663
      %v4857 = vpop.f32.mrf.mxu0
      %v4858 = vadd.f32 0.0, %v4857
      %v4859 = vpop.f32.mrf.mxu0
      %v4860 = vpop.f32.mrf.mxu0
      %v4861 = vadd.f32 0.0, %v4860
      %v4862 = vpop.f32.mrf.mxu0
      %4863 = vmatprep.mubr.bf16.mxu0 0
      %4864 = vmatmul.mubr.bf16.gmra.mxu0 %v4667
      %v4865 = vpop.f32.mrf.mxu0
      %v4866 = vadd.f32 0.0, %v4865
      %v4867 = vpop.f32.mrf.mxu0
      %v4868 = vpop.f32.mrf.mxu0
      %v4869 = vadd.f32 0.0, %v4868
      %v4870 = vpop.f32.mrf.mxu0
      %4871 = vmatprep.mubr.bf16.mxu0 0
      %4872 = vmatmul.mubr.bf16.gmra.mxu0 %v4671
      %v4873 = vpop.f32.mrf.mxu0
      %v4874 = vadd.f32 0.0, %v4873
      %v4875 = vpop.f32.mrf.mxu0
      %v4876 = vpop.f32.mrf.mxu0
      %v4877 = vadd.f32 0.0, %v4876
      %v4878 = vpop.f32.mrf.mxu0
      %4879 = vmatprep.mubr.bf16.mxu0 0
      %4880 = vmatmul.mubr.bf16.gmra.mxu0 %v4675
      %v4881 = vpop.f32.mrf.mxu0
      %v4882 = vadd.f32 0.0, %v4881
      %v4883 = vpop.f32.mrf.mxu0
      %v4884 = vpop.f32.mrf.mxu0
      %v4885 = vadd.f32 0.0, %v4884
      %v4886 = vpop.f32.mrf.mxu0
      %4887 = vmatprep.mubr.bf16.mxu0 0
      %4888 = vmatmul.mubr.bf16.gmra.mxu0 %v4679
      %v4889 = vpop.f32.mrf.mxu0
      %v4890 = vadd.f32 0.0, %v4889
      %v4891 = vpop.f32.mrf.mxu0
      %v4892 = vpop.f32.mrf.mxu0
      %v4893 = vadd.f32 0.0, %v4892
      %v4894 = vpop.f32.mrf.mxu0
      %4895 = vmatprep.mubr.bf16.mxu0 0
      %4896 = vmatmul.mubr.bf16.gmra.mxu0 %v4683
      %v4897 = vpop.f32.mrf.mxu0
      %v4898 = vadd.f32 0.0, %v4897
      %v4899 = vpop.f32.mrf.mxu0
      %v4900 = vpop.f32.mrf.mxu0
      %v4901 = vadd.f32 0.0, %v4900
      %v4902 = vpop.f32.mrf.mxu0
      %4903 = vmatprep.mubr.bf16.mxu0 0
      %4904 = vmatmul.mubr.bf16.gmra.mxu0 %v4687
      %v4905 = vpop.f32.mrf.mxu0
      %v4906 = vadd.f32 0.0, %v4905
      %v4907 = vpop.f32.mrf.mxu0
      %v4908 = vpop.f32.mrf.mxu0
      %v4909 = vadd.f32 0.0, %v4908
      %v4910 = vpop.f32.mrf.mxu0
      %4911 = vmatprep.mubr.bf16.mxu0 0
      %4912 = vmatmul.mubr.bf16.gmra.mxu0 %v4691
      %v4913 = vpop.f32.mrf.mxu0
      %v4914 = vadd.f32 0.0, %v4913
      %v4915 = vpop.f32.mrf.mxu0
      %v4916 = vpop.f32.mrf.mxu0
      %v4917 = vadd.f32 0.0, %v4916
      %v4918 = vpop.f32.mrf.mxu0
      %4919 = vmatprep.mubr.bf16.mxu0 0
      %4920 = vmatmul.mubr.bf16.gmra.mxu0 %v4695
      %v4921 = vpop.f32.mrf.mxu0
      %v4922 = vadd.f32 0.0, %v4921
      %v4923 = vpop.f32.mrf.mxu0
      %v4924 = vpop.f32.mrf.mxu0
      %v4925 = vadd.f32 0.0, %v4924
      %v4926 = vpop.f32.mrf.mxu0
      %4927 = vmatprep.mubr.bf16.mxu0 0
      %4928 = vmatmul.mubr.bf16.gmra.mxu0 %v4699
      %v4929 = vpop.f32.mrf.mxu0
      %v4930 = vadd.f32 0.0, %v4929
      %v4931 = vpop.f32.mrf.mxu0
      %v4932 = vpop.f32.mrf.mxu0
      %v4933 = vadd.f32 0.0, %v4932
      %v4934 = vpop.f32.mrf.mxu0
      %4935 = vmatprep.mubr.bf16.mxu0 0
      %4936 = vmatmul.mubr.bf16.gmra.mxu0 %v4703
      %v4937 = vpop.f32.mrf.mxu0
      %v4938 = vadd.f32 0.0, %v4937
      %v4939 = vpop.f32.mrf.mxu0
      %v4940 = vpop.f32.mrf.mxu0
      %v4941 = vadd.f32 0.0, %v4940
      %v4942 = vpop.f32.mrf.mxu0
      %4943 = vmatprep.mubr.bf16.mxu0 0
      %4944 = vmatmul.mubr.bf16.gmra.mxu0 %v4707
      %v4945 = vpop.f32.mrf.mxu0
      %v4946 = vadd.f32 0.0, %v4945
      %v4947 = vpop.f32.mrf.mxu0
      %v4948 = vpop.f32.mrf.mxu0
      %v4949 = vadd.f32 0.0, %v4948
      %v4950 = vpop.f32.mrf.mxu0
      %4951 = vmatprep.mubr.bf16.mxu0 0
      %4952 = vmatmul.mubr.bf16.gmra.mxu0 %v4716
      %v4953 = vpop.f32.mrf.mxu0
      %v4954 = vadd.f32 0.0, %v4953
      %v4955 = vpop.f32.mrf.mxu0
      %v4956 = vpop.f32.mrf.mxu0
      %v4957 = vadd.f32 0.0, %v4956
      %v4958 = vpop.f32.mrf.mxu0
      %4959 = vdwg.mxu0
      %v4960 = vadd.f32 %v4574, %v4818
      %v4961 = vadd.f32 %v4575, %v4821
      %v4962 = vadd.f32 %v4576, %v4826
      %v4963 = vadd.f32 %v4577, %v4829
      %v4964 = vadd.f32 %v4578, %v4834
      %v4965 = vadd.f32 %v4579, %v4837
      %v4966 = vadd.f32 %v4580, %v4842
      %v4967 = vadd.f32 %v4581, %v4845
      %v4968 = vadd.f32 %v4582, %v4850
      %v4969 = vadd.f32 %v4583, %v4853
      %v4970 = vadd.f32 %v4584, %v4858
      %v4971 = vadd.f32 %v4585, %v4861
      %v4972 = vadd.f32 %v4586, %v4866
      %v4973 = vadd.f32 %v4587, %v4869
      %v4974 = vadd.f32 %v4588, %v4874
      %v4975 = vadd.f32 %v4589, %v4877
      %v4976 = vadd.f32 %v4590, %v4882
      %v4977 = vadd.f32 %v4591, %v4885
      %v4978 = vadd.f32 %v4592, %v4890
      %v4979 = vadd.f32 %v4593, %v4893
      %v4980 = vadd.f32 %v4594, %v4898
      %v4981 = vadd.f32 %v4595, %v4901
      %v4982 = vadd.f32 %v4596, %v4906
      %v4983 = vadd.f32 %v4597, %v4909
      %v4984 = vadd.f32 %v4598, %v4914
      %v4985 = vadd.f32 %v4599, %v4917
      %v4986 = vadd.f32 %v4600, %v4922
      %v4987 = vadd.f32 %v4601, %v4925
      %v4988 = vadd.f32 %v4602, %v4930
      %v4989 = vadd.f32 %v4603, %v4933
      %v4990 = vadd.f32 %v4604, %v4938
      %v4991 = vadd.f32 %v4605, %v4941
      %v4992 = vadd.f32 %v4606, %v4946
      %v4993 = vadd.f32 %v4607, %v4949
      %v4994 = vadd.f32 %v4608, %v4954
      %v4995 = vadd.f32 %v4609, %v4957
      %v4996 = vld [vmem:[%s3] sm:$0xff]
      %v4997 = vld [vmem:[%s3 + $0x8] sm:$0xf]
      %v4998 = vld [vmem:[%s3 + $0xc] sm:$0xff]
      %v4999 = vld [vmem:[%s3 + $0x14] sm:$0xf]
      %v5000 = vld [vmem:[%s3 + $0x18] sm:$0xff]
      %v5001 = vld [vmem:[%s3 + $0x20] sm:$0xf]
      %v5002 = vld [vmem:[%s3 + $0x24] sm:$0xff]
      %v5003 = vld [vmem:[%s3 + $0x2c] sm:$0xf]
      %v5004 = vld [vmem:[%s3 + $0x30] sm:$0xff]
      %v5005 = vld [vmem:[%s3 + $0x38] sm:$0xf]
      %v5006 = vld [vmem:[%s3 + $0x3c] sm:$0xff]
      %v5007 = vld [vmem:[%s3 + $0x44] sm:$0xf]
      %v5008 = vld [vmem:[%s3 + $0x48] sm:$0xff]
      %v5009 = vld [vmem:[%s3 + $0x50] sm:$0xf]
      %v5010 = vld [vmem:[%s3 + $0x54] sm:$0xff]
      %v5011 = vld [vmem:[%s3 + $0x5c] sm:$0xf]
      %v5012 = vld [vmem:[%s3 + $0x60] sm:$0xff]
      %v5013 = vld [vmem:[%s3 + $0x68] sm:$0xf]
      %v5014 = vld [vmem:[%s3 + $0x6c] sm:$0xff]
      %v5015 = vld [vmem:[%s3 + $0x74] sm:$0xf]
      %v5016 = vpack.c.bf16 %v4961, %v4960
      %v5017 = vpack.c.bf16 %v4963, %v4962
      %v5018 = vpack.c.bf16 %v4965, %v4964
      %v5019 = vpack.c.bf16 %v4967, %v4966
      %v5020 = vpack.c.bf16 %v4969, %v4968
      %v5021 = vpack.c.bf16 %v4971, %v4970
      %v5022 = vpack.c.bf16 %v4973, %v4972
      %v5023 = vpack.c.bf16 %v4975, %v4974
      %v5024 = vpack.c.bf16 %v4977, %v4976
      %v5025 = vpack.c.bf16 %v4979, %v4978
      %v5026 = vpack.c.bf16 %v4981, %v4980
      %v5027 = vpack.c.bf16 %v4983, %v4982
      %v5028 = vpack.c.bf16 %v4985, %v4984
      %v5029 = vpack.c.bf16 %v4987, %v4986
      %v5030 = vpack.c.bf16 %v4989, %v4988
      %v5031 = vpack.c.bf16 %v4991, %v4990
      %v5032 = vpack.c.bf16 %v4993, %v4992
      %v5033 = vpack.c.bf16 %v4995, %v4994
      %v5054 = vunpack.c.l.b16 %v4996
      %v5055 = vunpack.c.h.b16 %v4996
      %v5056 = vunpack.c.l.b16 %v4997
      %v5057 = vunpack.c.l.b16 %v4998
      %v5058 = vunpack.c.h.b16 %v4998
      %v5059 = vunpack.c.l.b16 %v4999
      %v5060 = vunpack.c.l.b16 %v5000
      %v5061 = vunpack.c.h.b16 %v5000
      %v5062 = vunpack.c.l.b16 %v5001
      %v5063 = vunpack.c.l.b16 %v5002
      %v5064 = vunpack.c.h.b16 %v5002
      %v5065 = vunpack.c.l.b16 %v5003
      %v5066 = vunpack.c.l.b16 %v5004
      %v5067 = vunpack.c.h.b16 %v5004
      %v5068 = vunpack.c.l.b16 %v5005
      %v5069 = vunpack.c.l.b16 %v5006
      %v5070 = vunpack.c.h.b16 %v5006
      %v5071 = vunpack.c.l.b16 %v5007
      %v5072 = vunpack.c.l.b16 %v5008
      %v5073 = vunpack.c.h.b16 %v5008
      %v5074 = vunpack.c.l.b16 %v5009
      %v5075 = vunpack.c.l.b16 %v5010
      %v5076 = vunpack.c.h.b16 %v5010
      %v5077 = vunpack.c.l.b16 %v5011
      %v5078 = vunpack.c.l.b16 %v5012
      %v5079 = vunpack.c.h.b16 %v5012
      %v5080 = vunpack.c.l.b16 %v5013
      %v5081 = vunpack.c.l.b16 %v5014
      %v5082 = vunpack.c.h.b16 %v5014
      %v5083 = vunpack.c.l.b16 %v5015
      %v5084 = vpack.c.b16 %v5057, %v5054
      %v5085 = vpack.c.b16 %v5058, %v5055
      %v5086 = vpack.c.b16 %v5059, %v5056
      %v5087 = vpack.c.b16 %v5063, %v5060
      %v5088 = vpack.c.b16 %v5064, %v5061
      %v5089 = vpack.c.b16 %v5065, %v5062
      %v5090 = vpack.c.b16 %v5069, %v5066
      %v5091 = vpack.c.b16 %v5070, %v5067
      %v5092 = vpack.c.b16 %v5071, %v5068
      %v5093 = vpack.c.b16 %v5075, %v5072
      %v5094 = vpack.c.b16 %v5076, %v5073
      %v5095 = vpack.c.b16 %v5077, %v5074
      %v5096 = vpack.c.b16 %v5081, %v5078
      %v5097 = vpack.c.b16 %v5082, %v5079
      %v5098 = vpack.c.b16 %v5083, %v5080
      %vm5109 = vcmask 261120
      %v5111 = vsel %vm5109, %v5086, 0
      %v5114 = vsel %vm5109, %v5089, 0
      %v5117 = vsel %vm5109, %v5092, 0
      %v5120 = vsel %vm5109, %v5095, 0
      %v5123 = vsel %vm5109, %v5098, 0
      %5125 = vmatprep.subr.bf16.mxu0 0
      %5126 = vmatpush1.bf16.msra.mxu0 %v5023
      %5127 = vmatprep.subr.bf16.mxu0 0
      %5128 = vmatpush1.bf16.msra.mxu0 %v5022
      %5129 = vmatprep.subr.bf16.mxu0 0
      %5130 = vmatpush1.bf16.msra.mxu0 %v5021
      %5131 = vmatprep.subr.bf16.mxu0 0
      %5132 = vmatpush1.bf16.msra.mxu0 %v5020
      %5133 = vmatprep.subr.bf16.mxu0 0
      %5134 = vmatpush1.bf16.msra.mxu0 %v5019
      %5135 = vmatprep.subr.bf16.mxu0 0
      %5136 = vmatpush1.bf16.msra.mxu0 %v5018
      %5137 = vmatprep.subr.bf16.mxu0 0
      %5138 = vmatpush1.bf16.msra.mxu0 %v5017
      %5139 = vmatprep.subr.bf16.mxu0 0
      %5140 = vmatpush1.bf16.msra.mxu0 %v5016
      %5141 = vmatprep.subr.bf16.mxu0 0
      %5142 = vmatpush2.bf16.msra.mxu0 %v5031
      %5143 = vmatprep.subr.bf16.mxu0 0
      %5144 = vmatpush2.bf16.msra.mxu0 %v5030
      %5145 = vmatprep.subr.bf16.mxu0 0
      %5146 = vmatpush2.bf16.msra.mxu0 %v5029
      %5147 = vmatprep.subr.bf16.mxu0 0
      %5148 = vmatpush2.bf16.msra.mxu0 %v5028
      %5149 = vmatprep.subr.bf16.mxu0 0
      %5150 = vmatpush2.bf16.msra.mxu0 %v5027
      %5151 = vmatprep.subr.bf16.mxu0 0
      %5152 = vmatpush2.bf16.msra.mxu0 %v5026
      %5153 = vmatprep.subr.bf16.mxu0 0
      %5154 = vmatpush2.bf16.msra.mxu0 %v5025
      %5155 = vmatprep.subr.bf16.mxu0 0
      %5156 = vmatpush2.bf16.msra.mxu0 %v5024
      %5157 = vmatprep.mubr.bf16.mxu0 %v5085
      %5158 = vmatmul.mubr.bf16.gmra.mxu0 %v5084
      %v5159 = vpop.f32.mrf.mxu0
      %v5160 = vadd.f32 0.0, %v5159
      %v5161 = vpop.f32.mrf.mxu0
      %v5162 = vpop.f32.mrf.mxu0
      %v5163 = vadd.f32 0.0, %v5162
      %v5164 = vpop.f32.mrf.mxu0
      %5165 = vmatprep.mubr.bf16.mxu0 %v5088
      %5166 = vmatmul.mubr.bf16.gmra.mxu0 %v5087
      %v5167 = vpop.f32.mrf.mxu0
      %v5168 = vadd.f32 0.0, %v5167
      %v5169 = vpop.f32.mrf.mxu0
      %v5170 = vpop.f32.mrf.mxu0
      %v5171 = vadd.f32 0.0, %v5170
      %v5172 = vpop.f32.mrf.mxu0
      %5173 = vmatprep.mubr.bf16.mxu0 %v5091
      %5174 = vmatmul.mubr.bf16.gmra.mxu0 %v5090
      %v5175 = vpop.f32.mrf.mxu0
      %v5176 = vadd.f32 0.0, %v5175
      %v5177 = vpop.f32.mrf.mxu0
      %v5178 = vpop.f32.mrf.mxu0
      %v5179 = vadd.f32 0.0, %v5178
      %v5180 = vpop.f32.mrf.mxu0
      %5181 = vmatprep.mubr.bf16.mxu0 %v5094
      %5182 = vmatmul.mubr.bf16.gmra.mxu0 %v5093
      %v5183 = vpop.f32.mrf.mxu0
      %v5184 = vadd.f32 0.0, %v5183
      %v5185 = vpop.f32.mrf.mxu0
      %v5186 = vpop.f32.mrf.mxu0
      %v5187 = vadd.f32 0.0, %v5186
      %v5188 = vpop.f32.mrf.mxu0
      %5189 = vmatprep.mubr.bf16.mxu0 %v5097
      %5190 = vmatmul.mubr.bf16.gmra.mxu0 %v5096
      %v5191 = vpop.f32.mrf.mxu0
      %v5192 = vadd.f32 0.0, %v5191
      %v5193 = vpop.f32.mrf.mxu0
      %v5194 = vpop.f32.mrf.mxu0
      %v5195 = vadd.f32 0.0, %v5194
      %v5196 = vpop.f32.mrf.mxu0
      %5197 = vdwg.mxu0
      %5198 = vmatprep.subr.bf16.mxu0 0
      %5199 = vmatpush1.bf16.msra.mxu0 0
      %5200 = vmatprep.subr.bf16.mxu0 0
      %5201 = vmatpush1.bf16.msra.mxu0 0
      %5202 = vmatprep.subr.bf16.mxu0 0
      %5203 = vmatpush1.bf16.msra.mxu0 0
      %5204 = vmatprep.subr.bf16.mxu0 0
      %5205 = vmatpush1.bf16.msra.mxu0 0
      %5206 = vmatprep.subr.bf16.mxu0 0
      %5207 = vmatpush1.bf16.msra.mxu0 0
      %5208 = vmatprep.subr.bf16.mxu0 0
      %5209 = vmatpush1.bf16.msra.mxu0 0
      %5210 = vmatprep.subr.bf16.mxu0 0
      %5211 = vmatpush1.bf16.msra.mxu0 %v5033
      %5212 = vmatprep.subr.bf16.mxu0 0
      %5213 = vmatpush1.bf16.msra.mxu0 %v5032
      %5214 = vmatprep.subr.bf16.mxu0 0
      %5215 = vmatpush2.bf16.msra.mxu0 0
      %5216 = vmatprep.subr.bf16.mxu0 0
      %5217 = vmatpush2.bf16.msra.mxu0 0
      %5218 = vmatprep.subr.bf16.mxu0 0
      %5219 = vmatpush2.bf16.msra.mxu0 0
      %5220 = vmatprep.subr.bf16.mxu0 0
      %5221 = vmatpush2.bf16.msra.mxu0 0
      %5222 = vmatprep.subr.bf16.mxu0 0
      %5223 = vmatpush2.bf16.msra.mxu0 0
      %5224 = vmatprep.subr.bf16.mxu0 0
      %5225 = vmatpush2.bf16.msra.mxu0 0
      %5226 = vmatprep.subr.bf16.mxu0 0
      %5227 = vmatpush2.bf16.msra.mxu0 0
      %5228 = vmatprep.subr.bf16.mxu0 0
      %5229 = vmatpush2.bf16.msra.mxu0 0
      %5230 = vmatprep.mubr.bf16.mxu0 0
      %5231 = vmatmul.mubr.bf16.gmra.mxu0 %v5111
      %v5232 = vpop.f32.mrf.mxu0
      %v5233 = vadd.f32 %v5160, %v5232
      %v5234 = vpop.f32.mrf.mxu0
      %v5235 = vpop.f32.mrf.mxu0
      %v5236 = vadd.f32 %v5163, %v5235
      %v5237 = vpop.f32.mrf.mxu0
      %5238 = vmatprep.mubr.bf16.mxu0 0
      %5239 = vmatmul.mubr.bf16.gmra.mxu0 %v5114
      %v5240 = vpop.f32.mrf.mxu0
      %v5241 = vadd.f32 %v5168, %v5240
      %v5242 = vpop.f32.mrf.mxu0
      %v5243 = vpop.f32.mrf.mxu0
      %v5244 = vadd.f32 %v5171, %v5243
      %v5245 = vpop.f32.mrf.mxu0
      %5246 = vmatprep.mubr.bf16.mxu0 0
      %5247 = vmatmul.mubr.bf16.gmra.mxu0 %v5117
      %v5248 = vpop.f32.mrf.mxu0
      %v5249 = vadd.f32 %v5176, %v5248
      %v5250 = vpop.f32.mrf.mxu0
      %v5251 = vpop.f32.mrf.mxu0
      %v5252 = vadd.f32 %v5179, %v5251
      %v5253 = vpop.f32.mrf.mxu0
      %5254 = vmatprep.mubr.bf16.mxu0 0
      %5255 = vmatmul.mubr.bf16.gmra.mxu0 %v5120
      %v5256 = vpop.f32.mrf.mxu0
      %v5257 = vadd.f32 %v5184, %v5256
      %v5258 = vpop.f32.mrf.mxu0
      %v5259 = vpop.f32.mrf.mxu0
      %v5260 = vadd.f32 %v5187, %v5259
      %v5261 = vpop.f32.mrf.mxu0
      %5262 = vmatprep.mubr.bf16.mxu0 0
      %5263 = vmatmul.mubr.bf16.gmra.mxu0 %v5123
      %v5264 = vpop.f32.mrf.mxu0
      %v5265 = vadd.f32 %v5192, %v5264
      %v5266 = vpop.f32.mrf.mxu0
      %v5267 = vpop.f32.mrf.mxu0
      %v5268 = vadd.f32 %v5195, %v5267
      %v5269 = vpop.f32.mrf.mxu0
      %5270 = vdwg.mxu0
      %vm5271 = vcmp.ge.f32.partialorder %v5233, 0.0
      %vm5272 = vcmp.ge.f32.partialorder %v5236, 0.0
      %vm5273 = vcmp.ge.f32.partialorder %v5241, 0.0
      %vm5274 = vcmp.ge.f32.partialorder %v5244, 0.0
      %vm5275 = vcmp.ge.f32.partialorder %v5249, 0.0
      %vm5276 = vcmp.ge.f32.partialorder %v5252, 0.0
      %vm5277 = vcmp.ge.f32.partialorder %v5257, 0.0
      %vm5278 = vcmp.ge.f32.partialorder %v5260, 0.0
      %vm5279 = vcmp.ge.f32.partialorder %v5265, 0.0
      %vm5280 = vcmp.ge.f32.partialorder %v5268, 0.0
      %v5281 = vmul.f32 %v5233, 0.2
      %v5282 = vmul.f32 %v5236, 0.2
      %v5283 = vmul.f32 %v5241, 0.2
      %v5284 = vmul.f32 %v5244, 0.2
      %v5285 = vmul.f32 %v5249, 0.2
      %v5286 = vmul.f32 %v5252, 0.2
      %v5287 = vmul.f32 %v5257, 0.2
      %v5288 = vmul.f32 %v5260, 0.2
      %v5289 = vmul.f32 %v5265, 0.2
      %v5290 = vmul.f32 %v5268, 0.2
      %v5291 = vsel %vm5271, %v5233, %v5281
      %v5292 = vsel %vm5272, %v5236, %v5282
      %v5293 = vsel %vm5273, %v5241, %v5283
      %v5294 = vsel %vm5274, %v5244, %v5284
      %v5295 = vsel %vm5275, %v5249, %v5285
      %v5296 = vsel %vm5276, %v5252, %v5286
      %v5297 = vsel %vm5277, %v5257, %v5287
      %v5298 = vsel %vm5278, %v5260, %v5288
      %v5299 = vsel %vm5279, %v5265, %v5289
      %v5300 = vsel %vm5280, %v5268, %v5290
      %v5301 = vpack.c.bf16 %v5292, %v5291
      %v5302 = vpack.c.bf16 %v5294, %v5293
      %v5303 = vpack.c.bf16 %v5296, %v5295
      %v5304 = vpack.c.bf16 %v5298, %v5297
      %v5305 = vpack.c.bf16 %v5300, %v5299
      %v5311 = vunpack.c.l.b16 %v5301
      %v5312 = vunpack.c.h.b16 %v5301
      %v5313 = vunpack.c.l.b16 %v5302
      %v5314 = vunpack.c.h.b16 %v5302
      %v5315 = vunpack.c.l.b16 %v5303
      %v5316 = vunpack.c.h.b16 %v5303
      %v5317 = vunpack.c.l.b16 %v5304
      %v5318 = vunpack.c.h.b16 %v5304
      %v5319 = vunpack.c.l.b16 %v5305
      %v5320 = vunpack.c.h.b16 %v5305
      %v5321 = vpack.c.b16 %v5311, %v5311
      %v5322 = vpack.c.b16 %v5312, %v5312
      %v5323 = vpack.c.b16 %v5313, %v5313
      %v5324 = vpack.c.b16 %v5314, %v5314
      %v5325 = vpack.c.b16 %v5315, %v5315
      %v5326 = vpack.c.b16 %v5316, %v5316
      %v5327 = vpack.c.b16 %v5317, %v5317
      %v5328 = vpack.c.b16 %v5318, %v5318
      %v5329 = vpack.c.b16 %v5319, %v5319
      %v5330 = vpack.c.b16 %v5320, %v5320
      %5341 = vst [vmem:[#allocation3 + $0x8] sm:$0xf] %v5321
      %5342 = vst [vmem:[#allocation3 + $0xc] sm:$0xf] %v5322
      %5343 = vst [vmem:[#allocation3 + $0x10] sm:$0xf] %v5323
      %5344 = vst [vmem:[#allocation3 + $0x14] sm:$0xf] %v5324
      %5345 = vst [vmem:[#allocation3 + $0x18] sm:$0xf] %v5325
      %5346 = vst [vmem:[#allocation3 + $0x1c] sm:$0xf] %v5326
      %5347 = vst [vmem:[#allocation3 + $0x20] sm:$0xf] %v5327
      %5348 = vst [vmem:[#allocation3 + $0x24] sm:$0xf] %v5328
      %5349 = vst [vmem:[#allocation3 + $0x28] sm:$0xf] %v5329
      %5350 = vst [vmem:[#allocation3 + $0x2c] sm:$0xf] %v5330
      %v5351 = vld [vmem:[#allocation3] sm:$0xc]
      %v5352 = vld [vmem:[#allocation3 + $0x4] sm:$0xf]
      %v5353 = vld [vmem:[#allocation3 + $0x8] sm:$0xf]
      %v5354 = vld [vmem:[#allocation3 + $0xc] sm:$0xf]
      %v5355 = vld [vmem:[#allocation3 + $0x10] sm:$0xf]
      %v5356 = vld [vmem:[#allocation3 + $0x14] sm:$0xf]
      %v5357 = vld [vmem:[#allocation3 + $0x18] sm:$0xf]
      %v5358 = vld [vmem:[#allocation3 + $0x1c] sm:$0xf]
      %v5359 = vld [vmem:[#allocation3 + $0x20] sm:$0xf]
      %v5360 = vld [vmem:[#allocation3 + $0x24] sm:$0xf]
      %v5361 = vld [vmem:[#allocation3 + $0x28] sm:$0x7]
      %s5362 = scalar_lea.vmem %s2, 576
      %v5363 = vld [vmem:[%s5362] sm:$0xf]
      %v5364 = vld [vmem:[%s5362 + $0x4] sm:$0xf]
      %v5365 = vld [vmem:[%s5362 + $0x8] sm:$0xf]
      %v5366 = vld [vmem:[%s5362 + $0xc] sm:$0xf]
      %v5367 = vld [vmem:[%s5362 + $0x10] sm:$0xf]
      %v5368 = vld [vmem:[%s5362 + $0x14] sm:$0xf]
      %v5369 = vld [vmem:[%s5362 + $0x18] sm:$0xf]
      %v5370 = vld [vmem:[%s5362 + $0x1c] sm:$0xf]
      %v5371 = vld [vmem:[%s5362 + $0x20] sm:$0xf]
      %v5372 = vld [vmem:[%s5362 + $0x24] sm:$0xf]
      %v5373 = vld [vmem:[%s5362 + $0x28] sm:$0xf]
      %v5374 = vld [vmem:[%s5362 + $0x2c] sm:$0xf]
      %v5375 = vld [vmem:[%s5362 + $0x30] sm:$0xf]
      %v5376 = vld [vmem:[%s5362 + $0x34] sm:$0xf]
      %v5377 = vld [vmem:[%s5362 + $0x38] sm:$0xf]
      %v5378 = vld [vmem:[%s5362 + $0x3c] sm:$0xf]
      %v5379 = vld [vmem:[#allocation3] sm:$0x8]
      %s5380 = scalar_lea.vmem %s2, 640
      %v5381 = vld [vmem:[%s5380] sm:$0xf]
      %v5382 = vld [vmem:[%s5380 + $0x4] sm:$0xf]
      %v5383 = vld [vmem:[%s5380 + $0x8] sm:$0xf]
      %v5384 = vld [vmem:[%s5380 + $0xc] sm:$0xf]
      %v5385 = vld [vmem:[%s5380 + $0x10] sm:$0xf]
      %v5386 = vld [vmem:[%s5380 + $0x14] sm:$0xf]
      %v5387 = vld [vmem:[%s5380 + $0x18] sm:$0xf]
      %v5388 = vld [vmem:[%s5380 + $0x1c] sm:$0xf]
      %v5389 = vld [vmem:[%s5380 + $0x20] sm:$0xf]
      %v5390 = vld [vmem:[%s5380 + $0x24] sm:$0xf]
      %v5391 = vld [vmem:[%s5380 + $0x28] sm:$0xf]
      %v5392 = vld [vmem:[%s5380 + $0x2c] sm:$0xf]
      %v5393 = vld [vmem:[%s5380 + $0x30] sm:$0xf]
      %v5394 = vld [vmem:[%s5380 + $0x34] sm:$0xf]
      %v5395 = vld [vmem:[%s5380 + $0x38] sm:$0xf]
      %v5396 = vld [vmem:[%s5380 + $0x3c] sm:$0xf]
      %v5408 = vunpack.c.l.b16 %v5379
      %v5409 = vunpack.c.l.b16 %v5352
      %v5410 = vunpack.c.l.b16 %v5353
      %v5411 = vunpack.c.l.b16 %v5354
      %v5412 = vunpack.c.l.b16 %v5355
      %v5413 = vunpack.c.l.b16 %v5356
      %v5414 = vunpack.c.l.b16 %v5357
      %v5415 = vunpack.c.l.b16 %v5358
      %v5416 = vunpack.c.l.b16 %v5359
      %v5417 = vunpack.c.l.b16 %v5360
      %v5418 = vunpack.c.l.b16 %v5361
      %v5419 = vpack.c.b16 %v5409, %v5408
      %v5420 = vpack.c.b16 %v5411, %v5410
      %v5421 = vpack.c.b16 %v5413, %v5412
      %v5422 = vpack.c.b16 %v5415, %v5414
      %v5423 = vpack.c.b16 %v5417, %v5416
      %v5424 = vpack.c.b16 %v5418, %v5418
      %v5425 = vrot.slane %v5419, 3
      %v5426 = vrot.slane %v5420, 3
      %v5427 = vsel %vm1129, %v5425, %v5426
      %v5428 = vrot.slane %v5421, 3
      %v5429 = vsel %vm1129, %v5426, %v5428
      %v5430 = vrot.slane %v5422, 3
      %v5431 = vsel %vm1129, %v5428, %v5430
      %v5432 = vrot.slane %v5423, 3
      %v5433 = vsel %vm1129, %v5430, %v5432
      %v5434 = vrot.slane %v5424, 3
      %v5435 = vsel %vm1129, %v5432, %v5434
      %v5457 = vunpack.c.l.b16 %v5381
      %v5458 = vunpack.c.l.b16 %v5382
      %v5459 = vunpack.c.l.b16 %v5383
      %v5460 = vunpack.c.l.b16 %v5384
      %v5461 = vunpack.c.l.b16 %v5385
      %v5462 = vunpack.c.l.b16 %v5386
      %v5463 = vunpack.c.l.b16 %v5387
      %v5464 = vunpack.c.l.b16 %v5388
      %v5465 = vunpack.c.l.b16 %v5389
      %v5466 = vunpack.c.l.b16 %v5390
      %v5467 = vunpack.c.l.b16 %v5391
      %v5468 = vunpack.c.l.b16 %v5392
      %v5469 = vunpack.c.l.b16 %v5393
      %v5470 = vunpack.c.l.b16 %v5394
      %v5471 = vunpack.c.l.b16 %v5395
      %v5472 = vunpack.c.l.b16 %v5396
      %v5473 = vpack.c.b16 %v5458, %v5457
      %v5474 = vpack.c.b16 %v5460, %v5459
      %v5475 = vpack.c.b16 %v5462, %v5461
      %v5476 = vpack.c.b16 %v5464, %v5463
      %v5477 = vpack.c.b16 %v5466, %v5465
      %v5478 = vpack.c.b16 %v5468, %v5467
      %v5479 = vpack.c.b16 %v5470, %v5469
      %v5480 = vpack.c.b16 %v5472, %v5471
      %5489 = vmatprep.subr.bf16.mxu0 0
      %5490 = vmatpush1.bf16.msra.mxu0 %v5480
      %5491 = vmatprep.subr.bf16.mxu0 0
      %5492 = vmatpush1.bf16.msra.mxu0 %v5479
      %5493 = vmatprep.subr.bf16.mxu0 0
      %5494 = vmatpush1.bf16.msra.mxu0 %v5478
      %5495 = vmatprep.subr.bf16.mxu0 0
      %5496 = vmatpush1.bf16.msra.mxu0 %v5477
      %5497 = vmatprep.subr.bf16.mxu0 0
      %5498 = vmatpush1.bf16.msra.mxu0 %v5476
      %5499 = vmatprep.subr.bf16.mxu0 0
      %5500 = vmatpush1.bf16.msra.mxu0 %v5475
      %5501 = vmatprep.subr.bf16.mxu0 0
      %5502 = vmatpush1.bf16.msra.mxu0 %v5474
      %5503 = vmatprep.subr.bf16.mxu0 0
      %5504 = vmatpush1.bf16.msra.mxu0 %v5473
      %5505 = vmatprep.subr.bf16.mxu0 0
      %5506 = vmatpush2.bf16.msra.mxu0 0
      %5507 = vmatprep.subr.bf16.mxu0 0
      %5508 = vmatpush2.bf16.msra.mxu0 0
      %5509 = vmatprep.subr.bf16.mxu0 0
      %5510 = vmatpush2.bf16.msra.mxu0 0
      %5511 = vmatprep.subr.bf16.mxu0 0
      %5512 = vmatpush2.bf16.msra.mxu0 0
      %5513 = vmatprep.subr.bf16.mxu0 0
      %5514 = vmatpush2.bf16.msra.mxu0 0
      %5515 = vmatprep.subr.bf16.mxu0 0
      %5516 = vmatpush2.bf16.msra.mxu0 0
      %5517 = vmatprep.subr.bf16.mxu0 0
      %5518 = vmatpush2.bf16.msra.mxu0 0
      %5519 = vmatprep.subr.bf16.mxu0 0
      %5520 = vmatpush2.bf16.msra.mxu0 0
      %5521 = vmatprep.mubr.bf16.mxu0 0
      %5522 = vmatmul.mubr.bf16.gmra.mxu0 %v5427
      %v5523 = vpop.f32.mrf.mxu0
      %v5524 = vadd.f32 0.0, %v5523
      %v5525 = vpop.f32.mrf.mxu0
      %v5526 = vpop.f32.mrf.mxu0
      %v5527 = vadd.f32 0.0, %v5526
      %v5528 = vpop.f32.mrf.mxu0
      %5529 = vmatprep.mubr.bf16.mxu0 0
      %5530 = vmatmul.mubr.bf16.gmra.mxu0 %v5429
      %v5531 = vpop.f32.mrf.mxu0
      %v5532 = vadd.f32 0.0, %v5531
      %v5533 = vpop.f32.mrf.mxu0
      %v5534 = vpop.f32.mrf.mxu0
      %v5535 = vadd.f32 0.0, %v5534
      %v5536 = vpop.f32.mrf.mxu0
      %5537 = vmatprep.mubr.bf16.mxu0 0
      %5538 = vmatmul.mubr.bf16.gmra.mxu0 %v5431
      %v5539 = vpop.f32.mrf.mxu0
      %v5540 = vadd.f32 0.0, %v5539
      %v5541 = vpop.f32.mrf.mxu0
      %v5542 = vpop.f32.mrf.mxu0
      %v5543 = vadd.f32 0.0, %v5542
      %v5544 = vpop.f32.mrf.mxu0
      %5545 = vmatprep.mubr.bf16.mxu0 0
      %5546 = vmatmul.mubr.bf16.gmra.mxu0 %v5433
      %v5547 = vpop.f32.mrf.mxu0
      %v5548 = vadd.f32 0.0, %v5547
      %v5549 = vpop.f32.mrf.mxu0
      %v5550 = vpop.f32.mrf.mxu0
      %v5551 = vadd.f32 0.0, %v5550
      %v5552 = vpop.f32.mrf.mxu0
      %5553 = vmatprep.mubr.bf16.mxu0 0
      %5554 = vmatmul.mubr.bf16.gmra.mxu0 %v5435
      %v5555 = vpop.f32.mrf.mxu0
      %v5556 = vadd.f32 0.0, %v5555
      %v5557 = vpop.f32.mrf.mxu0
      %v5558 = vpop.f32.mrf.mxu0
      %v5559 = vadd.f32 0.0, %v5558
      %v5560 = vpop.f32.mrf.mxu0
      %5561 = vdwg.mxu0
      %v5563 = vunpack.c.l.b16 %v5351
      %v5564 = vpack.c.b16 %v5409, %v5563
      %v5566 = vshrl.u32 %v5564, 16
      %v5568 = vrot.slane %v5566, 2
      %v5569 = vshll.u32 %v5564, 16
      %v5571 = vrot.slane %v5569, 3
      %v5572 = vor.u32 %v5568, %v5571
      %v5574 = vshrl.u32 %v5420, 16
      %v5576 = vrot.slane %v5574, 2
      %v5577 = vshll.u32 %v5420, 16
      %v5579 = vrot.slane %v5577, 3
      %v5580 = vor.u32 %v5576, %v5579
      %v5581 = vsel %vm1413, %v5572, %v5580
      %v5583 = vshrl.u32 %v5421, 16
      %v5585 = vrot.slane %v5583, 2
      %v5586 = vshll.u32 %v5421, 16
      %v5588 = vrot.slane %v5586, 3
      %v5589 = vor.u32 %v5585, %v5588
      %v5590 = vsel %vm1413, %v5580, %v5589
      %v5592 = vshrl.u32 %v5422, 16
      %v5594 = vrot.slane %v5592, 2
      %v5595 = vshll.u32 %v5422, 16
      %v5597 = vrot.slane %v5595, 3
      %v5598 = vor.u32 %v5594, %v5597
      %v5599 = vsel %vm1413, %v5589, %v5598
      %v5601 = vshrl.u32 %v5423, 16
      %v5603 = vrot.slane %v5601, 2
      %v5604 = vshll.u32 %v5423, 16
      %v5606 = vrot.slane %v5604, 3
      %v5607 = vor.u32 %v5603, %v5606
      %v5608 = vsel %vm1413, %v5598, %v5607
      %v5610 = vshrl.u32 %v5424, 16
      %v5612 = vrot.slane %v5610, 2
      %v5613 = vshll.u32 %v5424, 16
      %v5615 = vrot.slane %v5613, 3
      %v5616 = vor.u32 %v5612, %v5615
      %v5617 = vsel %vm1413, %v5607, %v5616
      %v5639 = vunpack.c.l.b16 %v5363
      %v5640 = vunpack.c.l.b16 %v5364
      %v5641 = vunpack.c.l.b16 %v5365
      %v5642 = vunpack.c.l.b16 %v5366
      %v5643 = vunpack.c.l.b16 %v5367
      %v5644 = vunpack.c.l.b16 %v5368
      %v5645 = vunpack.c.l.b16 %v5369
      %v5646 = vunpack.c.l.b16 %v5370
      %v5647 = vunpack.c.l.b16 %v5371
      %v5648 = vunpack.c.l.b16 %v5372
      %v5649 = vunpack.c.l.b16 %v5373
      %v5650 = vunpack.c.l.b16 %v5374
      %v5651 = vunpack.c.l.b16 %v5375
      %v5652 = vunpack.c.l.b16 %v5376
      %v5653 = vunpack.c.l.b16 %v5377
      %v5654 = vunpack.c.l.b16 %v5378
      %v5655 = vpack.c.b16 %v5640, %v5639
      %v5656 = vpack.c.b16 %v5642, %v5641
      %v5657 = vpack.c.b16 %v5644, %v5643
      %v5658 = vpack.c.b16 %v5646, %v5645
      %v5659 = vpack.c.b16 %v5648, %v5647
      %v5660 = vpack.c.b16 %v5650, %v5649
      %v5661 = vpack.c.b16 %v5652, %v5651
      %v5662 = vpack.c.b16 %v5654, %v5653
      %5671 = vmatprep.subr.bf16.mxu0 0
      %5672 = vmatpush1.bf16.msra.mxu0 %v5662
      %5673 = vmatprep.subr.bf16.mxu0 0
      %5674 = vmatpush1.bf16.msra.mxu0 %v5661
      %5675 = vmatprep.subr.bf16.mxu0 0
      %5676 = vmatpush1.bf16.msra.mxu0 %v5660
      %5677 = vmatprep.subr.bf16.mxu0 0
      %5678 = vmatpush1.bf16.msra.mxu0 %v5659
      %5679 = vmatprep.subr.bf16.mxu0 0
      %5680 = vmatpush1.bf16.msra.mxu0 %v5658
      %5681 = vmatprep.subr.bf16.mxu0 0
      %5682 = vmatpush1.bf16.msra.mxu0 %v5657
      %5683 = vmatprep.subr.bf16.mxu0 0
      %5684 = vmatpush1.bf16.msra.mxu0 %v5656
      %5685 = vmatprep.subr.bf16.mxu0 0
      %5686 = vmatpush1.bf16.msra.mxu0 %v5655
      %5687 = vmatprep.subr.bf16.mxu0 0
      %5688 = vmatpush2.bf16.msra.mxu0 0
      %5689 = vmatprep.subr.bf16.mxu0 0
      %5690 = vmatpush2.bf16.msra.mxu0 0
      %5691 = vmatprep.subr.bf16.mxu0 0
      %5692 = vmatpush2.bf16.msra.mxu0 0
      %5693 = vmatprep.subr.bf16.mxu0 0
      %5694 = vmatpush2.bf16.msra.mxu0 0
      %5695 = vmatprep.subr.bf16.mxu0 0
      %5696 = vmatpush2.bf16.msra.mxu0 0
      %5697 = vmatprep.subr.bf16.mxu0 0
      %5698 = vmatpush2.bf16.msra.mxu0 0
      %5699 = vmatprep.subr.bf16.mxu0 0
      %5700 = vmatpush2.bf16.msra.mxu0 0
      %5701 = vmatprep.subr.bf16.mxu0 0
      %5702 = vmatpush2.bf16.msra.mxu0 0
      %5703 = vmatprep.mubr.bf16.mxu0 0
      %5704 = vmatmul.mubr.bf16.gmra.mxu0 %v5581
      %v5705 = vpop.f32.mrf.mxu0
      %v5706 = vadd.f32 %v5524, %v5705
      %v5707 = vpop.f32.mrf.mxu0
      %v5708 = vpop.f32.mrf.mxu0
      %v5709 = vadd.f32 %v5527, %v5708
      %v5710 = vpop.f32.mrf.mxu0
      %5711 = vmatprep.mubr.bf16.mxu0 0
      %5712 = vmatmul.mubr.bf16.gmra.mxu0 %v5590
      %v5713 = vpop.f32.mrf.mxu0
      %v5714 = vadd.f32 %v5532, %v5713
      %v5715 = vpop.f32.mrf.mxu0
      %v5716 = vpop.f32.mrf.mxu0
      %v5717 = vadd.f32 %v5535, %v5716
      %v5718 = vpop.f32.mrf.mxu0
      %5719 = vmatprep.mubr.bf16.mxu0 0
      %5720 = vmatmul.mubr.bf16.gmra.mxu0 %v5599
      %v5721 = vpop.f32.mrf.mxu0
      %v5722 = vadd.f32 %v5540, %v5721
      %v5723 = vpop.f32.mrf.mxu0
      %v5724 = vpop.f32.mrf.mxu0
      %v5725 = vadd.f32 %v5543, %v5724
      %v5726 = vpop.f32.mrf.mxu0
      %5727 = vmatprep.mubr.bf16.mxu0 0
      %5728 = vmatmul.mubr.bf16.gmra.mxu0 %v5608
      %v5729 = vpop.f32.mrf.mxu0
      %v5730 = vadd.f32 %v5548, %v5729
      %v5731 = vpop.f32.mrf.mxu0
      %v5732 = vpop.f32.mrf.mxu0
      %v5733 = vadd.f32 %v5551, %v5732
      %v5734 = vpop.f32.mrf.mxu0
      %5735 = vmatprep.mubr.bf16.mxu0 0
      %5736 = vmatmul.mubr.bf16.gmra.mxu0 %v5617
      %v5737 = vpop.f32.mrf.mxu0
      %v5738 = vadd.f32 %v5556, %v5737
      %v5739 = vpop.f32.mrf.mxu0
      %v5740 = vpop.f32.mrf.mxu0
      %v5741 = vadd.f32 %v5559, %v5740
      %v5742 = vpop.f32.mrf.mxu0
      %5743 = vdwg.mxu0
      %v5744 = vld [vmem:[#allocation3 + $0x28] sm:$0xf]
      %s5745 = scalar_lea.vmem %s2, 704
      %v5746 = vld [vmem:[%s5745] sm:$0xf]
      %v5747 = vld [vmem:[%s5745 + $0x4] sm:$0xf]
      %v5748 = vld [vmem:[%s5745 + $0x8] sm:$0xf]
      %v5749 = vld [vmem:[%s5745 + $0xc] sm:$0xf]
      %v5750 = vld [vmem:[%s5745 + $0x10] sm:$0xf]
      %v5751 = vld [vmem:[%s5745 + $0x14] sm:$0xf]
      %v5752 = vld [vmem:[%s5745 + $0x18] sm:$0xf]
      %v5753 = vld [vmem:[%s5745 + $0x1c] sm:$0xf]
      %v5754 = vld [vmem:[%s5745 + $0x20] sm:$0xf]
      %v5755 = vld [vmem:[%s5745 + $0x24] sm:$0xf]
      %v5756 = vld [vmem:[%s5745 + $0x28] sm:$0xf]
      %v5757 = vld [vmem:[%s5745 + $0x2c] sm:$0xf]
      %v5758 = vld [vmem:[%s5745 + $0x30] sm:$0xf]
      %v5759 = vld [vmem:[%s5745 + $0x34] sm:$0xf]
      %v5760 = vld [vmem:[%s5745 + $0x38] sm:$0xf]
      %v5761 = vld [vmem:[%s5745 + $0x3c] sm:$0xf]
      %v5763 = vunpack.c.l.b16 %v5744
      %v5764 = vpack.c.b16 %v5763, %v5763
      %v5766 = vshrl.u32 %v5419, 16
      %v5768 = vrot.slane %v5766, 3
      %v5769 = vshll.u32 %v5419, 16
      %v5771 = vrot.slane %v5769, 4
      %v5772 = vor.u32 %v5768, %v5771
      %v5773 = vrot.slane %v5574, 3
      %v5774 = vrot.slane %v5577, 4
      %v5775 = vor.u32 %v5773, %v5774
      %v5776 = vsel %vm1848, %v5772, %v5775
      %v5777 = vrot.slane %v5583, 3
      %v5778 = vrot.slane %v5586, 4
      %v5779 = vor.u32 %v5777, %v5778
      %v5780 = vsel %vm1848, %v5775, %v5779
      %v5781 = vrot.slane %v5592, 3
      %v5782 = vrot.slane %v5595, 4
      %v5783 = vor.u32 %v5781, %v5782
      %v5784 = vsel %vm1848, %v5779, %v5783
      %v5785 = vrot.slane %v5601, 3
      %v5786 = vrot.slane %v5604, 4
      %v5787 = vor.u32 %v5785, %v5786
      %v5788 = vsel %vm1848, %v5783, %v5787
      %v5790 = vshrl.u32 %v5764, 16
      %v5792 = vrot.slane %v5790, 3
      %v5793 = vshll.u32 %v5764, 16
      %v5795 = vrot.slane %v5793, 4
      %v5796 = vor.u32 %v5792, %v5795
      %v5797 = vsel %vm1848, %v5787, %v5796
      %v5819 = vunpack.c.l.b16 %v5746
      %v5820 = vunpack.c.l.b16 %v5747
      %v5821 = vunpack.c.l.b16 %v5748
      %v5822 = vunpack.c.l.b16 %v5749
      %v5823 = vunpack.c.l.b16 %v5750
      %v5824 = vunpack.c.l.b16 %v5751
      %v5825 = vunpack.c.l.b16 %v5752
      %v5826 = vunpack.c.l.b16 %v5753
      %v5827 = vunpack.c.l.b16 %v5754
      %v5828 = vunpack.c.l.b16 %v5755
      %v5829 = vunpack.c.l.b16 %v5756
      %v5830 = vunpack.c.l.b16 %v5757
      %v5831 = vunpack.c.l.b16 %v5758
      %v5832 = vunpack.c.l.b16 %v5759
      %v5833 = vunpack.c.l.b16 %v5760
      %v5834 = vunpack.c.l.b16 %v5761
      %v5835 = vpack.c.b16 %v5820, %v5819
      %v5836 = vpack.c.b16 %v5822, %v5821
      %v5837 = vpack.c.b16 %v5824, %v5823
      %v5838 = vpack.c.b16 %v5826, %v5825
      %v5839 = vpack.c.b16 %v5828, %v5827
      %v5840 = vpack.c.b16 %v5830, %v5829
      %v5841 = vpack.c.b16 %v5832, %v5831
      %v5842 = vpack.c.b16 %v5834, %v5833
      %5851 = vmatprep.subr.bf16.mxu0 0
      %5852 = vmatpush1.bf16.msra.mxu0 %v5842
      %5853 = vmatprep.subr.bf16.mxu0 0
      %5854 = vmatpush1.bf16.msra.mxu0 %v5841
      %5855 = vmatprep.subr.bf16.mxu0 0
      %5856 = vmatpush1.bf16.msra.mxu0 %v5840
      %5857 = vmatprep.subr.bf16.mxu0 0
      %5858 = vmatpush1.bf16.msra.mxu0 %v5839
      %5859 = vmatprep.subr.bf16.mxu0 0
      %5860 = vmatpush1.bf16.msra.mxu0 %v5838
      %5861 = vmatprep.subr.bf16.mxu0 0
      %5862 = vmatpush1.bf16.msra.mxu0 %v5837
      %5863 = vmatprep.subr.bf16.mxu0 0
      %5864 = vmatpush1.bf16.msra.mxu0 %v5836
      %5865 = vmatprep.subr.bf16.mxu0 0
      %5866 = vmatpush1.bf16.msra.mxu0 %v5835
      %5867 = vmatprep.subr.bf16.mxu0 0
      %5868 = vmatpush2.bf16.msra.mxu0 0
      %5869 = vmatprep.subr.bf16.mxu0 0
      %5870 = vmatpush2.bf16.msra.mxu0 0
      %5871 = vmatprep.subr.bf16.mxu0 0
      %5872 = vmatpush2.bf16.msra.mxu0 0
      %5873 = vmatprep.subr.bf16.mxu0 0
      %5874 = vmatpush2.bf16.msra.mxu0 0
      %5875 = vmatprep.subr.bf16.mxu0 0
      %5876 = vmatpush2.bf16.msra.mxu0 0
      %5877 = vmatprep.subr.bf16.mxu0 0
      %5878 = vmatpush2.bf16.msra.mxu0 0
      %5879 = vmatprep.subr.bf16.mxu0 0
      %5880 = vmatpush2.bf16.msra.mxu0 0
      %5881 = vmatprep.subr.bf16.mxu0 0
      %5882 = vmatpush2.bf16.msra.mxu0 0
      %5883 = vmatprep.mubr.bf16.mxu0 0
      %5884 = vmatmul.mubr.bf16.gmra.mxu0 %v5776
      %v5885 = vpop.f32.mrf.mxu0
      %v5886 = vadd.f32 0.0, %v5885
      %v5887 = vpop.f32.mrf.mxu0
      %v5888 = vpop.f32.mrf.mxu0
      %v5889 = vadd.f32 0.0, %v5888
      %v5890 = vpop.f32.mrf.mxu0
      %5891 = vmatprep.mubr.bf16.mxu0 0
      %5892 = vmatmul.mubr.bf16.gmra.mxu0 %v5780
      %v5893 = vpop.f32.mrf.mxu0
      %v5894 = vadd.f32 0.0, %v5893
      %v5895 = vpop.f32.mrf.mxu0
      %v5896 = vpop.f32.mrf.mxu0
      %v5897 = vadd.f32 0.0, %v5896
      %v5898 = vpop.f32.mrf.mxu0
      %5899 = vmatprep.mubr.bf16.mxu0 0
      %5900 = vmatmul.mubr.bf16.gmra.mxu0 %v5784
      %v5901 = vpop.f32.mrf.mxu0
      %v5902 = vadd.f32 0.0, %v5901
      %v5903 = vpop.f32.mrf.mxu0
      %v5904 = vpop.f32.mrf.mxu0
      %v5905 = vadd.f32 0.0, %v5904
      %v5906 = vpop.f32.mrf.mxu0
      %5907 = vmatprep.mubr.bf16.mxu0 0
      %5908 = vmatmul.mubr.bf16.gmra.mxu0 %v5788
      %v5909 = vpop.f32.mrf.mxu0
      %v5910 = vadd.f32 0.0, %v5909
      %v5911 = vpop.f32.mrf.mxu0
      %v5912 = vpop.f32.mrf.mxu0
      %v5913 = vadd.f32 0.0, %v5912
      %v5914 = vpop.f32.mrf.mxu0
      %5915 = vmatprep.mubr.bf16.mxu0 0
      %5916 = vmatmul.mubr.bf16.gmra.mxu0 %v5797
      %v5917 = vpop.f32.mrf.mxu0
      %v5918 = vadd.f32 0.0, %v5917
      %v5919 = vpop.f32.mrf.mxu0
      %v5920 = vpop.f32.mrf.mxu0
      %v5921 = vadd.f32 0.0, %v5920
      %v5922 = vpop.f32.mrf.mxu0
      %5923 = vdwg.mxu0
      %v5924 = vadd.f32 %v5706, %v5886
      %v5925 = vadd.f32 %v5709, %v5889
      %v5926 = vadd.f32 %v5714, %v5894
      %v5927 = vadd.f32 %v5717, %v5897
      %v5928 = vadd.f32 %v5722, %v5902
      %v5929 = vadd.f32 %v5725, %v5905
      %v5930 = vadd.f32 %v5730, %v5910
      %v5931 = vadd.f32 %v5733, %v5913
      %v5932 = vadd.f32 %v5738, %v5918
      %v5933 = vadd.f32 %v5741, %v5921
      %v5934 = vld [vmem:[#allocation3 + $0x4] sm:$0x8]
      %v5935 = vld [vmem:[#allocation3 + $0x8] sm:$0xf]
      %v5936 = vld [vmem:[#allocation3 + $0xc] sm:$0xf]
      %v5937 = vld [vmem:[#allocation3 + $0x10] sm:$0xf]
      %v5938 = vld [vmem:[#allocation3 + $0x14] sm:$0xf]
      %v5939 = vld [vmem:[#allocation3 + $0x18] sm:$0xf]
      %v5940 = vld [vmem:[#allocation3 + $0x1c] sm:$0xf]
      %v5941 = vld [vmem:[#allocation3 + $0x20] sm:$0xf]
      %v5942 = vld [vmem:[#allocation3 + $0x24] sm:$0xf]
      %v5943 = vld [vmem:[#allocation3 + $0x28] sm:$0xf]
      %v5944 = vld [vmem:[#allocation3 + $0x2c] sm:$0xf]
      %s5945 = scalar_lea.vmem %s2, 768
      %v5946 = vld [vmem:[%s5945] sm:$0xf]
      %v5947 = vld [vmem:[%s5945 + $0x4] sm:$0xf]
      %v5948 = vld [vmem:[%s5945 + $0x8] sm:$0xf]
      %v5949 = vld [vmem:[%s5945 + $0xc] sm:$0xf]
      %v5950 = vld [vmem:[%s5945 + $0x10] sm:$0xf]
      %v5951 = vld [vmem:[%s5945 + $0x14] sm:$0xf]
      %v5952 = vld [vmem:[%s5945 + $0x18] sm:$0xf]
      %v5953 = vld [vmem:[%s5945 + $0x1c] sm:$0xf]
      %v5954 = vld [vmem:[%s5945 + $0x20] sm:$0xf]
      %v5955 = vld [vmem:[%s5945 + $0x24] sm:$0xf]
      %v5956 = vld [vmem:[%s5945 + $0x28] sm:$0xf]
      %v5957 = vld [vmem:[%s5945 + $0x2c] sm:$0xf]
      %v5958 = vld [vmem:[%s5945 + $0x30] sm:$0xf]
      %v5959 = vld [vmem:[%s5945 + $0x34] sm:$0xf]
      %v5960 = vld [vmem:[%s5945 + $0x38] sm:$0xf]
      %v5961 = vld [vmem:[%s5945 + $0x3c] sm:$0xf]
      %v5973 = vunpack.c.l.b16 %v5934
      %v5974 = vunpack.c.l.b16 %v5935
      %v5975 = vunpack.c.l.b16 %v5936
      %v5976 = vunpack.c.l.b16 %v5937
      %v5977 = vunpack.c.l.b16 %v5938
      %v5978 = vunpack.c.l.b16 %v5939
      %v5979 = vunpack.c.l.b16 %v5940
      %v5980 = vunpack.c.l.b16 %v5941
      %v5981 = vunpack.c.l.b16 %v5942
      %v5982 = vunpack.c.l.b16 %v5943
      %v5983 = vunpack.c.l.b16 %v5944
      %v5984 = vpack.c.b16 %v5974, %v5973
      %v5985 = vpack.c.b16 %v5976, %v5975
      %v5986 = vpack.c.b16 %v5978, %v5977
      %v5987 = vpack.c.b16 %v5980, %v5979
      %v5988 = vpack.c.b16 %v5982, %v5981
      %v5989 = vpack.c.b16 %v5983, %v5983
      %v5991 = vshrl.u32 %v5984, 16
      %v5993 = vrot.slane %v5991, 3
      %v5994 = vshll.u32 %v5984, 16
      %v5996 = vrot.slane %v5994, 4
      %v5997 = vor.u32 %v5993, %v5996
      %v5999 = vshrl.u32 %v5985, 16
      %v6001 = vrot.slane %v5999, 3
      %v6002 = vshll.u32 %v5985, 16
      %v6004 = vrot.slane %v6002, 4
      %v6005 = vor.u32 %v6001, %v6004
      %v6006 = vsel %vm1848, %v5997, %v6005
      %v6008 = vshrl.u32 %v5986, 16
      %v6010 = vrot.slane %v6008, 3
      %v6011 = vshll.u32 %v5986, 16
      %v6013 = vrot.slane %v6011, 4
      %v6014 = vor.u32 %v6010, %v6013
      %v6015 = vsel %vm1848, %v6005, %v6014
      %v6017 = vshrl.u32 %v5987, 16
      %v6019 = vrot.slane %v6017, 3
      %v6020 = vshll.u32 %v5987, 16
      %v6022 = vrot.slane %v6020, 4
      %v6023 = vor.u32 %v6019, %v6022
      %v6024 = vsel %vm1848, %v6014, %v6023
      %v6026 = vshrl.u32 %v5988, 16
      %v6028 = vrot.slane %v6026, 3
      %v6029 = vshll.u32 %v5988, 16
      %v6031 = vrot.slane %v6029, 4
      %v6032 = vor.u32 %v6028, %v6031
      %v6033 = vsel %vm1848, %v6023, %v6032
      %v6035 = vshrl.u32 %v5989, 16
      %v6037 = vrot.slane %v6035, 3
      %v6038 = vshll.u32 %v5989, 16
      %v6040 = vrot.slane %v6038, 4
      %v6041 = vor.u32 %v6037, %v6040
      %v6042 = vsel %vm1848, %v6032, %v6041
      %v6064 = vunpack.c.l.b16 %v5946
      %v6065 = vunpack.c.l.b16 %v5947
      %v6066 = vunpack.c.l.b16 %v5948
      %v6067 = vunpack.c.l.b16 %v5949
      %v6068 = vunpack.c.l.b16 %v5950
      %v6069 = vunpack.c.l.b16 %v5951
      %v6070 = vunpack.c.l.b16 %v5952
      %v6071 = vunpack.c.l.b16 %v5953
      %v6072 = vunpack.c.l.b16 %v5954
      %v6073 = vunpack.c.l.b16 %v5955
      %v6074 = vunpack.c.l.b16 %v5956
      %v6075 = vunpack.c.l.b16 %v5957
      %v6076 = vunpack.c.l.b16 %v5958
      %v6077 = vunpack.c.l.b16 %v5959
      %v6078 = vunpack.c.l.b16 %v5960
      %v6079 = vunpack.c.l.b16 %v5961
      %v6080 = vpack.c.b16 %v6065, %v6064
      %v6081 = vpack.c.b16 %v6067, %v6066
      %v6082 = vpack.c.b16 %v6069, %v6068
      %v6083 = vpack.c.b16 %v6071, %v6070
      %v6084 = vpack.c.b16 %v6073, %v6072
      %v6085 = vpack.c.b16 %v6075, %v6074
      %v6086 = vpack.c.b16 %v6077, %v6076
      %v6087 = vpack.c.b16 %v6079, %v6078
      %6096 = vmatprep.subr.bf16.mxu0 0
      %6097 = vmatpush1.bf16.msra.mxu0 %v6087
      %6098 = vmatprep.subr.bf16.mxu0 0
      %6099 = vmatpush1.bf16.msra.mxu0 %v6086
      %6100 = vmatprep.subr.bf16.mxu0 0
      %6101 = vmatpush1.bf16.msra.mxu0 %v6085
      %6102 = vmatprep.subr.bf16.mxu0 0
      %6103 = vmatpush1.bf16.msra.mxu0 %v6084
      %6104 = vmatprep.subr.bf16.mxu0 0
      %6105 = vmatpush1.bf16.msra.mxu0 %v6083
      %6106 = vmatprep.subr.bf16.mxu0 0
      %6107 = vmatpush1.bf16.msra.mxu0 %v6082
      %6108 = vmatprep.subr.bf16.mxu0 0
      %6109 = vmatpush1.bf16.msra.mxu0 %v6081
      %6110 = vmatprep.subr.bf16.mxu0 0
      %6111 = vmatpush1.bf16.msra.mxu0 %v6080
      %6112 = vmatprep.subr.bf16.mxu0 0
      %6113 = vmatpush2.bf16.msra.mxu0 0
      %6114 = vmatprep.subr.bf16.mxu0 0
      %6115 = vmatpush2.bf16.msra.mxu0 0
      %6116 = vmatprep.subr.bf16.mxu0 0
      %6117 = vmatpush2.bf16.msra.mxu0 0
      %6118 = vmatprep.subr.bf16.mxu0 0
      %6119 = vmatpush2.bf16.msra.mxu0 0
      %6120 = vmatprep.subr.bf16.mxu0 0
      %6121 = vmatpush2.bf16.msra.mxu0 0
      %6122 = vmatprep.subr.bf16.mxu0 0
      %6123 = vmatpush2.bf16.msra.mxu0 0
      %6124 = vmatprep.subr.bf16.mxu0 0
      %6125 = vmatpush2.bf16.msra.mxu0 0
      %6126 = vmatprep.subr.bf16.mxu0 0
      %6127 = vmatpush2.bf16.msra.mxu0 0
      %6128 = vmatprep.mubr.bf16.mxu0 0
      %6129 = vmatmul.mubr.bf16.gmra.mxu0 %v6006
      %v6130 = vpop.f32.mrf.mxu0
      %v6131 = vadd.f32 0.0, %v6130
      %v6132 = vpop.f32.mrf.mxu0
      %v6133 = vpop.f32.mrf.mxu0
      %v6134 = vadd.f32 0.0, %v6133
      %v6135 = vpop.f32.mrf.mxu0
      %6136 = vmatprep.mubr.bf16.mxu0 0
      %6137 = vmatmul.mubr.bf16.gmra.mxu0 %v6015
      %v6138 = vpop.f32.mrf.mxu0
      %v6139 = vadd.f32 0.0, %v6138
      %v6140 = vpop.f32.mrf.mxu0
      %v6141 = vpop.f32.mrf.mxu0
      %v6142 = vadd.f32 0.0, %v6141
      %v6143 = vpop.f32.mrf.mxu0
      %6144 = vmatprep.mubr.bf16.mxu0 0
      %6145 = vmatmul.mubr.bf16.gmra.mxu0 %v6024
      %v6146 = vpop.f32.mrf.mxu0
      %v6147 = vadd.f32 0.0, %v6146
      %v6148 = vpop.f32.mrf.mxu0
      %v6149 = vpop.f32.mrf.mxu0
      %v6150 = vadd.f32 0.0, %v6149
      %v6151 = vpop.f32.mrf.mxu0
      %6152 = vmatprep.mubr.bf16.mxu0 0
      %6153 = vmatmul.mubr.bf16.gmra.mxu0 %v6033
      %v6154 = vpop.f32.mrf.mxu0
      %v6155 = vadd.f32 0.0, %v6154
      %v6156 = vpop.f32.mrf.mxu0
      %v6157 = vpop.f32.mrf.mxu0
      %v6158 = vadd.f32 0.0, %v6157
      %v6159 = vpop.f32.mrf.mxu0
      %6160 = vmatprep.mubr.bf16.mxu0 0
      %6161 = vmatmul.mubr.bf16.gmra.mxu0 %v6042
      %v6162 = vpop.f32.mrf.mxu0
      %v6163 = vadd.f32 0.0, %v6162
      %v6164 = vpop.f32.mrf.mxu0
      %v6165 = vpop.f32.mrf.mxu0
      %v6166 = vadd.f32 0.0, %v6165
      %v6167 = vpop.f32.mrf.mxu0
      %6168 = vdwg.mxu0
      %v6169 = vadd.f32 %v5924, %v6131
      %v6170 = vadd.f32 %v5925, %v6134
      %v6171 = vadd.f32 %v5926, %v6139
      %v6172 = vadd.f32 %v5927, %v6142
      %v6173 = vadd.f32 %v5928, %v6147
      %v6174 = vadd.f32 %v5929, %v6150
      %v6175 = vadd.f32 %v5930, %v6155
      %v6176 = vadd.f32 %v5931, %v6158
      %v6177 = vadd.f32 %v5932, %v6163
      %v6178 = vadd.f32 %v5933, %v6166
      %s6179 = scalar_lea.vmem %s2, 832
      %v6180 = vld [vmem:[%s6179] sm:$0xf]
      %v6181 = vld [vmem:[%s6179 + $0x4] sm:$0xf]
      %v6182 = vld [vmem:[%s6179 + $0x8] sm:$0xf]
      %v6183 = vld [vmem:[%s6179 + $0xc] sm:$0xf]
      %v6184 = vld [vmem:[%s6179 + $0x10] sm:$0xf]
      %v6185 = vld [vmem:[%s6179 + $0x14] sm:$0xf]
      %v6186 = vld [vmem:[%s6179 + $0x18] sm:$0xf]
      %v6187 = vld [vmem:[%s6179 + $0x1c] sm:$0xf]
      %v6188 = vld [vmem:[%s6179 + $0x20] sm:$0xf]
      %v6189 = vld [vmem:[%s6179 + $0x24] sm:$0xf]
      %v6190 = vld [vmem:[%s6179 + $0x28] sm:$0xf]
      %v6191 = vld [vmem:[%s6179 + $0x2c] sm:$0xf]
      %v6192 = vld [vmem:[%s6179 + $0x30] sm:$0xf]
      %v6193 = vld [vmem:[%s6179 + $0x34] sm:$0xf]
      %v6194 = vld [vmem:[%s6179 + $0x38] sm:$0xf]
      %v6195 = vld [vmem:[%s6179 + $0x3c] sm:$0xf]
      %v6196 = vpack.c.b16 %v5975, %v5974
      %v6197 = vpack.c.b16 %v5977, %v5976
      %v6198 = vpack.c.b16 %v5979, %v5978
      %v6199 = vpack.c.b16 %v5981, %v5980
      %v6200 = vpack.c.b16 %v5983, %v5982
      %v6222 = vunpack.c.l.b16 %v6180
      %v6223 = vunpack.c.l.b16 %v6181
      %v6224 = vunpack.c.l.b16 %v6182
      %v6225 = vunpack.c.l.b16 %v6183
      %v6226 = vunpack.c.l.b16 %v6184
      %v6227 = vunpack.c.l.b16 %v6185
      %v6228 = vunpack.c.l.b16 %v6186
      %v6229 = vunpack.c.l.b16 %v6187
      %v6230 = vunpack.c.l.b16 %v6188
      %v6231 = vunpack.c.l.b16 %v6189
      %v6232 = vunpack.c.l.b16 %v6190
      %v6233 = vunpack.c.l.b16 %v6191
      %v6234 = vunpack.c.l.b16 %v6192
      %v6235 = vunpack.c.l.b16 %v6193
      %v6236 = vunpack.c.l.b16 %v6194
      %v6237 = vunpack.c.l.b16 %v6195
      %v6238 = vpack.c.b16 %v6223, %v6222
      %v6239 = vpack.c.b16 %v6225, %v6224
      %v6240 = vpack.c.b16 %v6227, %v6226
      %v6241 = vpack.c.b16 %v6229, %v6228
      %v6242 = vpack.c.b16 %v6231, %v6230
      %v6243 = vpack.c.b16 %v6233, %v6232
      %v6244 = vpack.c.b16 %v6235, %v6234
      %v6245 = vpack.c.b16 %v6237, %v6236
      %6254 = vmatprep.subr.bf16.mxu0 0
      %6255 = vmatpush1.bf16.msra.mxu0 %v6245
      %6256 = vmatprep.subr.bf16.mxu0 0
      %6257 = vmatpush1.bf16.msra.mxu0 %v6244
      %6258 = vmatprep.subr.bf16.mxu0 0
      %6259 = vmatpush1.bf16.msra.mxu0 %v6243
      %6260 = vmatprep.subr.bf16.mxu0 0
      %6261 = vmatpush1.bf16.msra.mxu0 %v6242
      %6262 = vmatprep.subr.bf16.mxu0 0
      %6263 = vmatpush1.bf16.msra.mxu0 %v6241
      %6264 = vmatprep.subr.bf16.mxu0 0
      %6265 = vmatpush1.bf16.msra.mxu0 %v6240
      %6266 = vmatprep.subr.bf16.mxu0 0
      %6267 = vmatpush1.bf16.msra.mxu0 %v6239
      %6268 = vmatprep.subr.bf16.mxu0 0
      %6269 = vmatpush1.bf16.msra.mxu0 %v6238
      %6270 = vmatprep.subr.bf16.mxu0 0
      %6271 = vmatpush2.bf16.msra.mxu0 0
      %6272 = vmatprep.subr.bf16.mxu0 0
      %6273 = vmatpush2.bf16.msra.mxu0 0
      %6274 = vmatprep.subr.bf16.mxu0 0
      %6275 = vmatpush2.bf16.msra.mxu0 0
      %6276 = vmatprep.subr.bf16.mxu0 0
      %6277 = vmatpush2.bf16.msra.mxu0 0
      %6278 = vmatprep.subr.bf16.mxu0 0
      %6279 = vmatpush2.bf16.msra.mxu0 0
      %6280 = vmatprep.subr.bf16.mxu0 0
      %6281 = vmatpush2.bf16.msra.mxu0 0
      %6282 = vmatprep.subr.bf16.mxu0 0
      %6283 = vmatpush2.bf16.msra.mxu0 0
      %6284 = vmatprep.subr.bf16.mxu0 0
      %6285 = vmatpush2.bf16.msra.mxu0 0
      %6286 = vmatprep.mubr.bf16.mxu0 0
      %6287 = vmatmul.mubr.bf16.gmra.mxu0 %v6196
      %v6288 = vpop.f32.mrf.mxu0
      %v6289 = vadd.f32 0.0, %v6288
      %v6290 = vpop.f32.mrf.mxu0
      %v6291 = vpop.f32.mrf.mxu0
      %v6292 = vadd.f32 0.0, %v6291
      %v6293 = vpop.f32.mrf.mxu0
      %6294 = vmatprep.mubr.bf16.mxu0 0
      %6295 = vmatmul.mubr.bf16.gmra.mxu0 %v6197
      %v6296 = vpop.f32.mrf.mxu0
      %v6297 = vadd.f32 0.0, %v6296
      %v6298 = vpop.f32.mrf.mxu0
      %v6299 = vpop.f32.mrf.mxu0
      %v6300 = vadd.f32 0.0, %v6299
      %v6301 = vpop.f32.mrf.mxu0
      %6302 = vmatprep.mubr.bf16.mxu0 0
      %6303 = vmatmul.mubr.bf16.gmra.mxu0 %v6198
      %v6304 = vpop.f32.mrf.mxu0
      %v6305 = vadd.f32 0.0, %v6304
      %v6306 = vpop.f32.mrf.mxu0
      %v6307 = vpop.f32.mrf.mxu0
      %v6308 = vadd.f32 0.0, %v6307
      %v6309 = vpop.f32.mrf.mxu0
      %6310 = vmatprep.mubr.bf16.mxu0 0
      %6311 = vmatmul.mubr.bf16.gmra.mxu0 %v6199
      %v6312 = vpop.f32.mrf.mxu0
      %v6313 = vadd.f32 0.0, %v6312
      %v6314 = vpop.f32.mrf.mxu0
      %v6315 = vpop.f32.mrf.mxu0
      %v6316 = vadd.f32 0.0, %v6315
      %v6317 = vpop.f32.mrf.mxu0
      %6318 = vmatprep.mubr.bf16.mxu0 0
      %6319 = vmatmul.mubr.bf16.gmra.mxu0 %v6200
      %v6320 = vpop.f32.mrf.mxu0
      %v6321 = vadd.f32 0.0, %v6320
      %v6322 = vpop.f32.mrf.mxu0
      %v6323 = vpop.f32.mrf.mxu0
      %v6324 = vadd.f32 0.0, %v6323
      %v6325 = vpop.f32.mrf.mxu0
      %6326 = vdwg.mxu0
      %v6327 = vadd.f32 %v6169, %v6289
      %v6328 = vadd.f32 %v6170, %v6292
      %v6329 = vadd.f32 %v6171, %v6297
      %v6330 = vadd.f32 %v6172, %v6300
      %v6331 = vadd.f32 %v6173, %v6305
      %v6332 = vadd.f32 %v6174, %v6308
      %v6333 = vadd.f32 %v6175, %v6313
      %v6334 = vadd.f32 %v6176, %v6316
      %v6335 = vadd.f32 %v6177, %v6321
      %v6336 = vadd.f32 %v6178, %v6324
      %v6337 = vld [vmem:[#allocation3 + $0x8] sm:$0xf]
      %v6338 = vld [vmem:[#allocation3 + $0xc] sm:$0xf]
      %v6339 = vld [vmem:[#allocation3 + $0x10] sm:$0xf]
      %v6340 = vld [vmem:[#allocation3 + $0x14] sm:$0xf]
      %v6341 = vld [vmem:[#allocation3 + $0x18] sm:$0xf]
      %v6342 = vld [vmem:[#allocation3 + $0x1c] sm:$0xf]
      %v6343 = vld [vmem:[#allocation3 + $0x20] sm:$0xf]
      %v6344 = vld [vmem:[#allocation3 + $0x24] sm:$0xf]
      %v6345 = vld [vmem:[#allocation3 + $0x28] sm:$0xf]
      %v6346 = vld [vmem:[#allocation3 + $0x2c] sm:$0xf]
      %v6347 = vld [vmem:[#allocation3 + $0x30] sm:$0x1]
      %s6348 = scalar_lea.vmem %s2, 896
      %v6349 = vld [vmem:[%s6348] sm:$0xf]
      %v6350 = vld [vmem:[%s6348 + $0x4] sm:$0xf]
      %v6351 = vld [vmem:[%s6348 + $0x8] sm:$0xf]
      %v6352 = vld [vmem:[%s6348 + $0xc] sm:$0xf]
      %v6353 = vld [vmem:[%s6348 + $0x10] sm:$0xf]
      %v6354 = vld [vmem:[%s6348 + $0x14] sm:$0xf]
      %v6355 = vld [vmem:[%s6348 + $0x18] sm:$0xf]
      %v6356 = vld [vmem:[%s6348 + $0x1c] sm:$0xf]
      %v6357 = vld [vmem:[%s6348 + $0x20] sm:$0xf]
      %v6358 = vld [vmem:[%s6348 + $0x24] sm:$0xf]
      %v6359 = vld [vmem:[%s6348 + $0x28] sm:$0xf]
      %v6360 = vld [vmem:[%s6348 + $0x2c] sm:$0xf]
      %v6361 = vld [vmem:[%s6348 + $0x30] sm:$0xf]
      %v6362 = vld [vmem:[%s6348 + $0x34] sm:$0xf]
      %v6363 = vld [vmem:[%s6348 + $0x38] sm:$0xf]
      %v6364 = vld [vmem:[%s6348 + $0x3c] sm:$0xf]
      %v6376 = vunpack.c.l.b16 %v6337
      %v6377 = vunpack.c.l.b16 %v6338
      %v6378 = vunpack.c.l.b16 %v6339
      %v6379 = vunpack.c.l.b16 %v6340
      %v6380 = vunpack.c.l.b16 %v6341
      %v6381 = vunpack.c.l.b16 %v6342
      %v6382 = vunpack.c.l.b16 %v6343
      %v6383 = vunpack.c.l.b16 %v6344
      %v6384 = vunpack.c.l.b16 %v6345
      %v6385 = vunpack.c.l.b16 %v6346
      %v6386 = vunpack.c.l.b16 %v6347
      %v6387 = vpack.c.b16 %v6377, %v6376
      %v6388 = vpack.c.b16 %v6379, %v6378
      %v6389 = vpack.c.b16 %v6381, %v6380
      %v6390 = vpack.c.b16 %v6383, %v6382
      %v6391 = vpack.c.b16 %v6385, %v6384
      %v6392 = vpack.c.b16 %v6386, %v6386
      %v6394 = vshrl.u32 %v6387, 16
      %v6396 = vshll.u32 %v6387, 16
      %v6398 = vrot.slane %v6396, 1
      %v6399 = vor.u32 %v6394, %v6398
      %v6401 = vshll.u32 %v6388, 16
      %v6403 = vrot.slane %v6401, 1
      %v6404 = vsel %vm3270, %v6399, %v6403
      %v6405 = vshrl.u32 %v6388, 16
      %v6407 = vor.u32 %v6405, %v6403
      %v6409 = vshll.u32 %v6389, 16
      %v6411 = vrot.slane %v6409, 1
      %v6412 = vsel %vm3270, %v6407, %v6411
      %v6413 = vshrl.u32 %v6389, 16
      %v6415 = vor.u32 %v6413, %v6411
      %v6417 = vshll.u32 %v6390, 16
      %v6419 = vrot.slane %v6417, 1
      %v6420 = vsel %vm3270, %v6415, %v6419
      %v6421 = vshrl.u32 %v6390, 16
      %v6423 = vor.u32 %v6421, %v6419
      %v6425 = vshll.u32 %v6391, 16
      %v6427 = vrot.slane %v6425, 1
      %v6428 = vsel %vm3270, %v6423, %v6427
      %v6429 = vshrl.u32 %v6391, 16
      %v6431 = vor.u32 %v6429, %v6427
      %v6433 = vshll.u32 %v6392, 16
      %v6435 = vrot.slane %v6433, 1
      %v6436 = vsel %vm3270, %v6431, %v6435
      %v6458 = vunpack.c.l.b16 %v6349
      %v6459 = vunpack.c.l.b16 %v6350
      %v6460 = vunpack.c.l.b16 %v6351
      %v6461 = vunpack.c.l.b16 %v6352
      %v6462 = vunpack.c.l.b16 %v6353
      %v6463 = vunpack.c.l.b16 %v6354
      %v6464 = vunpack.c.l.b16 %v6355
      %v6465 = vunpack.c.l.b16 %v6356
      %v6466 = vunpack.c.l.b16 %v6357
      %v6467 = vunpack.c.l.b16 %v6358
      %v6468 = vunpack.c.l.b16 %v6359
      %v6469 = vunpack.c.l.b16 %v6360
      %v6470 = vunpack.c.l.b16 %v6361
      %v6471 = vunpack.c.l.b16 %v6362
      %v6472 = vunpack.c.l.b16 %v6363
      %v6473 = vunpack.c.l.b16 %v6364
      %v6474 = vpack.c.b16 %v6459, %v6458
      %v6475 = vpack.c.b16 %v6461, %v6460
      %v6476 = vpack.c.b16 %v6463, %v6462
      %v6477 = vpack.c.b16 %v6465, %v6464
      %v6478 = vpack.c.b16 %v6467, %v6466
      %v6479 = vpack.c.b16 %v6469, %v6468
      %v6480 = vpack.c.b16 %v6471, %v6470
      %v6481 = vpack.c.b16 %v6473, %v6472
      %6490 = vmatprep.subr.bf16.mxu0 0
      %6491 = vmatpush1.bf16.msra.mxu0 %v6481
      %6492 = vmatprep.subr.bf16.mxu0 0
      %6493 = vmatpush1.bf16.msra.mxu0 %v6480
      %6494 = vmatprep.subr.bf16.mxu0 0
      %6495 = vmatpush1.bf16.msra.mxu0 %v6479
      %6496 = vmatprep.subr.bf16.mxu0 0
      %6497 = vmatpush1.bf16.msra.mxu0 %v6478
      %6498 = vmatprep.subr.bf16.mxu0 0
      %6499 = vmatpush1.bf16.msra.mxu0 %v6477
      %6500 = vmatprep.subr.bf16.mxu0 0
      %6501 = vmatpush1.bf16.msra.mxu0 %v6476
      %6502 = vmatprep.subr.bf16.mxu0 0
      %6503 = vmatpush1.bf16.msra.mxu0 %v6475
      %6504 = vmatprep.subr.bf16.mxu0 0
      %6505 = vmatpush1.bf16.msra.mxu0 %v6474
      %6506 = vmatprep.subr.bf16.mxu0 0
      %6507 = vmatpush2.bf16.msra.mxu0 0
      %6508 = vmatprep.subr.bf16.mxu0 0
      %6509 = vmatpush2.bf16.msra.mxu0 0
      %6510 = vmatprep.subr.bf16.mxu0 0
      %6511 = vmatpush2.bf16.msra.mxu0 0
      %6512 = vmatprep.subr.bf16.mxu0 0
      %6513 = vmatpush2.bf16.msra.mxu0 0
      %6514 = vmatprep.subr.bf16.mxu0 0
      %6515 = vmatpush2.bf16.msra.mxu0 0
      %6516 = vmatprep.subr.bf16.mxu0 0
      %6517 = vmatpush2.bf16.msra.mxu0 0
      %6518 = vmatprep.subr.bf16.mxu0 0
      %6519 = vmatpush2.bf16.msra.mxu0 0
      %6520 = vmatprep.subr.bf16.mxu0 0
      %6521 = vmatpush2.bf16.msra.mxu0 0
      %6522 = vmatprep.mubr.bf16.mxu0 0
      %6523 = vmatmul.mubr.bf16.gmra.mxu0 %v6404
      %v6524 = vpop.f32.mrf.mxu0
      %v6525 = vadd.f32 0.0, %v6524
      %v6526 = vpop.f32.mrf.mxu0
      %v6527 = vpop.f32.mrf.mxu0
      %v6528 = vadd.f32 0.0, %v6527
      %v6529 = vpop.f32.mrf.mxu0
      %6530 = vmatprep.mubr.bf16.mxu0 0
      %6531 = vmatmul.mubr.bf16.gmra.mxu0 %v6412
      %v6532 = vpop.f32.mrf.mxu0
      %v6533 = vadd.f32 0.0, %v6532
      %v6534 = vpop.f32.mrf.mxu0
      %v6535 = vpop.f32.mrf.mxu0
      %v6536 = vadd.f32 0.0, %v6535
      %v6537 = vpop.f32.mrf.mxu0
      %6538 = vmatprep.mubr.bf16.mxu0 0
      %6539 = vmatmul.mubr.bf16.gmra.mxu0 %v6420
      %v6540 = vpop.f32.mrf.mxu0
      %v6541 = vadd.f32 0.0, %v6540
      %v6542 = vpop.f32.mrf.mxu0
      %v6543 = vpop.f32.mrf.mxu0
      %v6544 = vadd.f32 0.0, %v6543
      %v6545 = vpop.f32.mrf.mxu0
      %6546 = vmatprep.mubr.bf16.mxu0 0
      %6547 = vmatmul.mubr.bf16.gmra.mxu0 %v6428
      %v6548 = vpop.f32.mrf.mxu0
      %v6549 = vadd.f32 0.0, %v6548
      %v6550 = vpop.f32.mrf.mxu0
      %v6551 = vpop.f32.mrf.mxu0
      %v6552 = vadd.f32 0.0, %v6551
      %v6553 = vpop.f32.mrf.mxu0
      %6554 = vmatprep.mubr.bf16.mxu0 0
      %6555 = vmatmul.mubr.bf16.gmra.mxu0 %v6436
      %v6556 = vpop.f32.mrf.mxu0
      %v6557 = vadd.f32 0.0, %v6556
      %v6558 = vpop.f32.mrf.mxu0
      %v6559 = vpop.f32.mrf.mxu0
      %v6560 = vadd.f32 0.0, %v6559
      %v6561 = vpop.f32.mrf.mxu0
      %6562 = vdwg.mxu0
      %v6563 = vadd.f32 %v6327, %v6525
      %v6564 = vadd.f32 %v6328, %v6528
      %v6565 = vadd.f32 %v6329, %v6533
      %v6566 = vadd.f32 %v6330, %v6536
      %v6567 = vadd.f32 %v6331, %v6541
      %v6568 = vadd.f32 %v6332, %v6544
      %v6569 = vadd.f32 %v6333, %v6549
      %v6570 = vadd.f32 %v6334, %v6552
      %v6571 = vadd.f32 %v6335, %v6557
      %v6572 = vadd.f32 %v6336, %v6560
      %v6573 = vld [vmem:[#allocation3 + $0xc] sm:$0xf]
      %v6574 = vld [vmem:[#allocation3 + $0x10] sm:$0xf]
      %v6575 = vld [vmem:[#allocation3 + $0x14] sm:$0xf]
      %v6576 = vld [vmem:[#allocation3 + $0x18] sm:$0xf]
      %v6577 = vld [vmem:[#allocation3 + $0x1c] sm:$0xf]
      %v6578 = vld [vmem:[#allocation3 + $0x20] sm:$0xf]
      %v6579 = vld [vmem:[#allocation3 + $0x24] sm:$0xf]
      %v6580 = vld [vmem:[#allocation3 + $0x28] sm:$0xf]
      %v6581 = vld [vmem:[#allocation3 + $0x2c] sm:$0xf]
      %v6582 = vld [vmem:[#allocation3 + $0x30] sm:$0xf]
      %v6583 = vld [vmem:[#allocation3 + $0x34] sm:$0x1]
      %s6584 = scalar_lea.vmem %s2, 960
      %v6585 = vld [vmem:[%s6584] sm:$0xf]
      %v6586 = vld [vmem:[%s6584 + $0x4] sm:$0xf]
      %v6587 = vld [vmem:[%s6584 + $0x8] sm:$0xf]
      %v6588 = vld [vmem:[%s6584 + $0xc] sm:$0xf]
      %v6589 = vld [vmem:[%s6584 + $0x10] sm:$0xf]
      %v6590 = vld [vmem:[%s6584 + $0x14] sm:$0xf]
      %v6591 = vld [vmem:[%s6584 + $0x18] sm:$0xf]
      %v6592 = vld [vmem:[%s6584 + $0x1c] sm:$0xf]
      %v6593 = vld [vmem:[%s6584 + $0x20] sm:$0xf]
      %v6594 = vld [vmem:[%s6584 + $0x24] sm:$0xf]
      %v6595 = vld [vmem:[%s6584 + $0x28] sm:$0xf]
      %v6596 = vld [vmem:[%s6584 + $0x2c] sm:$0xf]
      %v6597 = vld [vmem:[%s6584 + $0x30] sm:$0xf]
      %v6598 = vld [vmem:[%s6584 + $0x34] sm:$0xf]
      %v6599 = vld [vmem:[%s6584 + $0x38] sm:$0xf]
      %v6600 = vld [vmem:[%s6584 + $0x3c] sm:$0xf]
      %v6612 = vunpack.c.l.b16 %v6573
      %v6613 = vunpack.c.l.b16 %v6574
      %v6614 = vunpack.c.l.b16 %v6575
      %v6615 = vunpack.c.l.b16 %v6576
      %v6616 = vunpack.c.l.b16 %v6577
      %v6617 = vunpack.c.l.b16 %v6578
      %v6618 = vunpack.c.l.b16 %v6579
      %v6619 = vunpack.c.l.b16 %v6580
      %v6620 = vunpack.c.l.b16 %v6581
      %v6621 = vunpack.c.l.b16 %v6582
      %v6622 = vunpack.c.l.b16 %v6583
      %v6623 = vpack.c.b16 %v6613, %v6612
      %v6624 = vpack.c.b16 %v6615, %v6614
      %v6625 = vpack.c.b16 %v6617, %v6616
      %v6626 = vpack.c.b16 %v6619, %v6618
      %v6627 = vpack.c.b16 %v6621, %v6620
      %v6628 = vpack.c.b16 %v6622, %v6622
      %v6630 = vshrl.u32 %v6623, 16
      %v6632 = vshll.u32 %v6623, 16
      %v6634 = vrot.slane %v6632, 1
      %v6635 = vor.u32 %v6630, %v6634
      %v6637 = vshll.u32 %v6624, 16
      %v6639 = vrot.slane %v6637, 1
      %v6640 = vsel %vm3270, %v6635, %v6639
      %v6641 = vshrl.u32 %v6624, 16
      %v6643 = vor.u32 %v6641, %v6639
      %v6645 = vshll.u32 %v6625, 16
      %v6647 = vrot.slane %v6645, 1
      %v6648 = vsel %vm3270, %v6643, %v6647
      %v6649 = vshrl.u32 %v6625, 16
      %v6651 = vor.u32 %v6649, %v6647
      %v6653 = vshll.u32 %v6626, 16
      %v6655 = vrot.slane %v6653, 1
      %v6656 = vsel %vm3270, %v6651, %v6655
      %v6657 = vshrl.u32 %v6626, 16
      %v6659 = vor.u32 %v6657, %v6655
      %v6661 = vshll.u32 %v6627, 16
      %v6663 = vrot.slane %v6661, 1
      %v6664 = vsel %vm3270, %v6659, %v6663
      %v6665 = vshrl.u32 %v6627, 16
      %v6667 = vor.u32 %v6665, %v6663
      %v6669 = vshll.u32 %v6628, 16
      %v6671 = vrot.slane %v6669, 1
      %v6672 = vsel %vm3270, %v6667, %v6671
      %v6694 = vunpack.c.l.b16 %v6585
      %v6695 = vunpack.c.l.b16 %v6586
      %v6696 = vunpack.c.l.b16 %v6587
      %v6697 = vunpack.c.l.b16 %v6588
      %v6698 = vunpack.c.l.b16 %v6589
      %v6699 = vunpack.c.l.b16 %v6590
      %v6700 = vunpack.c.l.b16 %v6591
      %v6701 = vunpack.c.l.b16 %v6592
      %v6702 = vunpack.c.l.b16 %v6593
      %v6703 = vunpack.c.l.b16 %v6594
      %v6704 = vunpack.c.l.b16 %v6595
      %v6705 = vunpack.c.l.b16 %v6596
      %v6706 = vunpack.c.l.b16 %v6597
      %v6707 = vunpack.c.l.b16 %v6598
      %v6708 = vunpack.c.l.b16 %v6599
      %v6709 = vunpack.c.l.b16 %v6600
      %v6710 = vpack.c.b16 %v6695, %v6694
      %v6711 = vpack.c.b16 %v6697, %v6696
      %v6712 = vpack.c.b16 %v6699, %v6698
      %v6713 = vpack.c.b16 %v6701, %v6700
      %v6714 = vpack.c.b16 %v6703, %v6702
      %v6715 = vpack.c.b16 %v6705, %v6704
      %v6716 = vpack.c.b16 %v6707, %v6706
      %v6717 = vpack.c.b16 %v6709, %v6708
      %6726 = vmatprep.subr.bf16.mxu0 0
      %6727 = vmatpush1.bf16.msra.mxu0 %v6717
      %6728 = vmatprep.subr.bf16.mxu0 0
      %6729 = vmatpush1.bf16.msra.mxu0 %v6716
      %6730 = vmatprep.subr.bf16.mxu0 0
      %6731 = vmatpush1.bf16.msra.mxu0 %v6715
      %6732 = vmatprep.subr.bf16.mxu0 0
      %6733 = vmatpush1.bf16.msra.mxu0 %v6714
      %6734 = vmatprep.subr.bf16.mxu0 0
      %6735 = vmatpush1.bf16.msra.mxu0 %v6713
      %6736 = vmatprep.subr.bf16.mxu0 0
      %6737 = vmatpush1.bf16.msra.mxu0 %v6712
      %6738 = vmatprep.subr.bf16.mxu0 0
      %6739 = vmatpush1.bf16.msra.mxu0 %v6711
      %6740 = vmatprep.subr.bf16.mxu0 0
      %6741 = vmatpush1.bf16.msra.mxu0 %v6710
      %6742 = vmatprep.subr.bf16.mxu0 0
      %6743 = vmatpush2.bf16.msra.mxu0 0
      %6744 = vmatprep.subr.bf16.mxu0 0
      %6745 = vmatpush2.bf16.msra.mxu0 0
      %6746 = vmatprep.subr.bf16.mxu0 0
      %6747 = vmatpush2.bf16.msra.mxu0 0
      %6748 = vmatprep.subr.bf16.mxu0 0
      %6749 = vmatpush2.bf16.msra.mxu0 0
      %6750 = vmatprep.subr.bf16.mxu0 0
      %6751 = vmatpush2.bf16.msra.mxu0 0
      %6752 = vmatprep.subr.bf16.mxu0 0
      %6753 = vmatpush2.bf16.msra.mxu0 0
      %6754 = vmatprep.subr.bf16.mxu0 0
      %6755 = vmatpush2.bf16.msra.mxu0 0
      %6756 = vmatprep.subr.bf16.mxu0 0
      %6757 = vmatpush2.bf16.msra.mxu0 0
      %6758 = vmatprep.mubr.bf16.mxu0 0
      %6759 = vmatmul.mubr.bf16.gmra.mxu0 %v6640
      %v6760 = vpop.f32.mrf.mxu0
      %v6761 = vadd.f32 0.0, %v6760
      %v6762 = vpop.f32.mrf.mxu0
      %v6763 = vpop.f32.mrf.mxu0
      %v6764 = vadd.f32 0.0, %v6763
      %v6765 = vpop.f32.mrf.mxu0
      %6766 = vmatprep.mubr.bf16.mxu0 0
      %6767 = vmatmul.mubr.bf16.gmra.mxu0 %v6648
      %v6768 = vpop.f32.mrf.mxu0
      %v6769 = vadd.f32 0.0, %v6768
      %v6770 = vpop.f32.mrf.mxu0
      %v6771 = vpop.f32.mrf.mxu0
      %v6772 = vadd.f32 0.0, %v6771
      %v6773 = vpop.f32.mrf.mxu0
      %6774 = vmatprep.mubr.bf16.mxu0 0
      %6775 = vmatmul.mubr.bf16.gmra.mxu0 %v6656
      %v6776 = vpop.f32.mrf.mxu0
      %v6777 = vadd.f32 0.0, %v6776
      %v6778 = vpop.f32.mrf.mxu0
      %v6779 = vpop.f32.mrf.mxu0
      %v6780 = vadd.f32 0.0, %v6779
      %v6781 = vpop.f32.mrf.mxu0
      %6782 = vmatprep.mubr.bf16.mxu0 0
      %6783 = vmatmul.mubr.bf16.gmra.mxu0 %v6664
      %v6784 = vpop.f32.mrf.mxu0
      %v6785 = vadd.f32 0.0, %v6784
      %v6786 = vpop.f32.mrf.mxu0
      %v6787 = vpop.f32.mrf.mxu0
      %v6788 = vadd.f32 0.0, %v6787
      %v6789 = vpop.f32.mrf.mxu0
      %6790 = vmatprep.mubr.bf16.mxu0 0
      %6791 = vmatmul.mubr.bf16.gmra.mxu0 %v6672
      %v6792 = vpop.f32.mrf.mxu0
      %v6793 = vadd.f32 0.0, %v6792
      %v6794 = vpop.f32.mrf.mxu0
      %v6795 = vpop.f32.mrf.mxu0
      %v6796 = vadd.f32 0.0, %v6795
      %v6797 = vpop.f32.mrf.mxu0
      %6798 = vdwg.mxu0
      %v6799 = vadd.f32 %v6563, %v6761
      %v6800 = vadd.f32 %v6564, %v6764
      %v6801 = vadd.f32 %v6565, %v6769
      %v6802 = vadd.f32 %v6566, %v6772
      %v6803 = vadd.f32 %v6567, %v6777
      %v6804 = vadd.f32 %v6568, %v6780
      %v6805 = vadd.f32 %v6569, %v6785
      %v6806 = vadd.f32 %v6570, %v6788
      %v6807 = vadd.f32 %v6571, %v6793
      %v6808 = vadd.f32 %v6572, %v6796
      %v6809 = vld [vmem:[#allocation3 + $0xc] sm:$0xe]
      %s6810 = scalar_lea.vmem %s2, 1024
      %v6811 = vld [vmem:[%s6810] sm:$0xf]
      %v6812 = vld [vmem:[%s6810 + $0x4] sm:$0xf]
      %v6813 = vld [vmem:[%s6810 + $0x8] sm:$0xf]
      %v6814 = vld [vmem:[%s6810 + $0xc] sm:$0xf]
      %v6815 = vld [vmem:[%s6810 + $0x10] sm:$0xf]
      %v6816 = vld [vmem:[%s6810 + $0x14] sm:$0xf]
      %v6817 = vld [vmem:[%s6810 + $0x18] sm:$0xf]
      %v6818 = vld [vmem:[%s6810 + $0x1c] sm:$0xf]
      %v6819 = vld [vmem:[%s6810 + $0x20] sm:$0xf]
      %v6820 = vld [vmem:[%s6810 + $0x24] sm:$0xf]
      %v6821 = vld [vmem:[%s6810 + $0x28] sm:$0xf]
      %v6822 = vld [vmem:[%s6810 + $0x2c] sm:$0xf]
      %v6823 = vld [vmem:[%s6810 + $0x30] sm:$0xf]
      %v6824 = vld [vmem:[%s6810 + $0x34] sm:$0xf]
      %v6825 = vld [vmem:[%s6810 + $0x38] sm:$0xf]
      %v6826 = vld [vmem:[%s6810 + $0x3c] sm:$0xf]
      %v6828 = vunpack.c.l.b16 %v6809
      %v6829 = vpack.c.b16 %v6613, %v6828
      %v6830 = vrot.slane %v6829, 1
      %v6831 = vrot.slane %v6624, 1
      %v6832 = vsel %vm4293, %v6830, %v6831
      %v6833 = vrot.slane %v6625, 1
      %v6834 = vsel %vm4293, %v6831, %v6833
      %v6835 = vrot.slane %v6626, 1
      %v6836 = vsel %vm4293, %v6833, %v6835
      %v6837 = vrot.slane %v6627, 1
      %v6838 = vsel %vm4293, %v6835, %v6837
      %v6839 = vrot.slane %v6628, 1
      %v6840 = vsel %vm4293, %v6837, %v6839
      %v6862 = vunpack.c.l.b16 %v6811
      %v6863 = vunpack.c.l.b16 %v6812
      %v6864 = vunpack.c.l.b16 %v6813
      %v6865 = vunpack.c.l.b16 %v6814
      %v6866 = vunpack.c.l.b16 %v6815
      %v6867 = vunpack.c.l.b16 %v6816
      %v6868 = vunpack.c.l.b16 %v6817
      %v6869 = vunpack.c.l.b16 %v6818
      %v6870 = vunpack.c.l.b16 %v6819
      %v6871 = vunpack.c.l.b16 %v6820
      %v6872 = vunpack.c.l.b16 %v6821
      %v6873 = vunpack.c.l.b16 %v6822
      %v6874 = vunpack.c.l.b16 %v6823
      %v6875 = vunpack.c.l.b16 %v6824
      %v6876 = vunpack.c.l.b16 %v6825
      %v6877 = vunpack.c.l.b16 %v6826
      %v6878 = vpack.c.b16 %v6863, %v6862
      %v6879 = vpack.c.b16 %v6865, %v6864
      %v6880 = vpack.c.b16 %v6867, %v6866
      %v6881 = vpack.c.b16 %v6869, %v6868
      %v6882 = vpack.c.b16 %v6871, %v6870
      %v6883 = vpack.c.b16 %v6873, %v6872
      %v6884 = vpack.c.b16 %v6875, %v6874
      %v6885 = vpack.c.b16 %v6877, %v6876
      %6894 = vmatprep.subr.bf16.mxu0 0
      %6895 = vmatpush1.bf16.msra.mxu0 %v6885
      %6896 = vmatprep.subr.bf16.mxu0 0
      %6897 = vmatpush1.bf16.msra.mxu0 %v6884
      %6898 = vmatprep.subr.bf16.mxu0 0
      %6899 = vmatpush1.bf16.msra.mxu0 %v6883
      %6900 = vmatprep.subr.bf16.mxu0 0
      %6901 = vmatpush1.bf16.msra.mxu0 %v6882
      %6902 = vmatprep.subr.bf16.mxu0 0
      %6903 = vmatpush1.bf16.msra.mxu0 %v6881
      %6904 = vmatprep.subr.bf16.mxu0 0
      %6905 = vmatpush1.bf16.msra.mxu0 %v6880
      %6906 = vmatprep.subr.bf16.mxu0 0
      %6907 = vmatpush1.bf16.msra.mxu0 %v6879
      %6908 = vmatprep.subr.bf16.mxu0 0
      %6909 = vmatpush1.bf16.msra.mxu0 %v6878
      %6910 = vmatprep.subr.bf16.mxu0 0
      %6911 = vmatpush2.bf16.msra.mxu0 0
      %6912 = vmatprep.subr.bf16.mxu0 0
      %6913 = vmatpush2.bf16.msra.mxu0 0
      %6914 = vmatprep.subr.bf16.mxu0 0
      %6915 = vmatpush2.bf16.msra.mxu0 0
      %6916 = vmatprep.subr.bf16.mxu0 0
      %6917 = vmatpush2.bf16.msra.mxu0 0
      %6918 = vmatprep.subr.bf16.mxu0 0
      %6919 = vmatpush2.bf16.msra.mxu0 0
      %6920 = vmatprep.subr.bf16.mxu0 0
      %6921 = vmatpush2.bf16.msra.mxu0 0
      %6922 = vmatprep.subr.bf16.mxu0 0
      %6923 = vmatpush2.bf16.msra.mxu0 0
      %6924 = vmatprep.subr.bf16.mxu0 0
      %6925 = vmatpush2.bf16.msra.mxu0 0
      %6926 = vmatprep.mubr.bf16.mxu0 0
      %6927 = vmatmul.mubr.bf16.gmra.mxu0 %v6832
      %v6928 = vpop.f32.mrf.mxu0
      %v6929 = vadd.f32 0.0, %v6928
      %v6930 = vpop.f32.mrf.mxu0
      %v6931 = vpop.f32.mrf.mxu0
      %v6932 = vadd.f32 0.0, %v6931
      %v6933 = vpop.f32.mrf.mxu0
      %6934 = vmatprep.mubr.bf16.mxu0 0
      %6935 = vmatmul.mubr.bf16.gmra.mxu0 %v6834
      %v6936 = vpop.f32.mrf.mxu0
      %v6937 = vadd.f32 0.0, %v6936
      %v6938 = vpop.f32.mrf.mxu0
      %v6939 = vpop.f32.mrf.mxu0
      %v6940 = vadd.f32 0.0, %v6939
      %v6941 = vpop.f32.mrf.mxu0
      %6942 = vmatprep.mubr.bf16.mxu0 0
      %6943 = vmatmul.mubr.bf16.gmra.mxu0 %v6836
      %v6944 = vpop.f32.mrf.mxu0
      %v6945 = vadd.f32 0.0, %v6944
      %v6946 = vpop.f32.mrf.mxu0
      %v6947 = vpop.f32.mrf.mxu0
      %v6948 = vadd.f32 0.0, %v6947
      %v6949 = vpop.f32.mrf.mxu0
      %6950 = vmatprep.mubr.bf16.mxu0 0
      %6951 = vmatmul.mubr.bf16.gmra.mxu0 %v6838
      %v6952 = vpop.f32.mrf.mxu0
      %v6953 = vadd.f32 0.0, %v6952
      %v6954 = vpop.f32.mrf.mxu0
      %v6955 = vpop.f32.mrf.mxu0
      %v6956 = vadd.f32 0.0, %v6955
      %v6957 = vpop.f32.mrf.mxu0
      %6958 = vmatprep.mubr.bf16.mxu0 0
      %6959 = vmatmul.mubr.bf16.gmra.mxu0 %v6840
      %v6960 = vpop.f32.mrf.mxu0
      %v6961 = vadd.f32 0.0, %v6960
      %v6962 = vpop.f32.mrf.mxu0
      %v6963 = vpop.f32.mrf.mxu0
      %v6964 = vadd.f32 0.0, %v6963
      %v6965 = vpop.f32.mrf.mxu0
      %6966 = vdwg.mxu0
      %v6967 = vadd.f32 %v6799, %v6929
      %v6968 = vadd.f32 %v6800, %v6932
      %v6969 = vadd.f32 %v6801, %v6937
      %v6970 = vadd.f32 %v6802, %v6940
      %v6971 = vadd.f32 %v6803, %v6945
      %v6972 = vadd.f32 %v6804, %v6948
      %v6973 = vadd.f32 %v6805, %v6953
      %v6974 = vadd.f32 %v6806, %v6956
      %v6975 = vadd.f32 %v6807, %v6961
      %v6976 = vadd.f32 %v6808, %v6964
      %v6977 = vld [vmem:[#allocation3 + $0x34] sm:$0x3]
      %s6978 = scalar_lea.vmem %s2, 1088
      %v6979 = vld [vmem:[%s6978] sm:$0xf]
      %v6980 = vld [vmem:[%s6978 + $0x4] sm:$0xf]
      %v6981 = vld [vmem:[%s6978 + $0x8] sm:$0xf]
      %v6982 = vld [vmem:[%s6978 + $0xc] sm:$0xf]
      %v6983 = vld [vmem:[%s6978 + $0x10] sm:$0xf]
      %v6984 = vld [vmem:[%s6978 + $0x14] sm:$0xf]
      %v6985 = vld [vmem:[%s6978 + $0x18] sm:$0xf]
      %v6986 = vld [vmem:[%s6978 + $0x1c] sm:$0xf]
      %v6987 = vld [vmem:[%s6978 + $0x20] sm:$0xf]
      %v6988 = vld [vmem:[%s6978 + $0x24] sm:$0xf]
      %v6989 = vld [vmem:[%s6978 + $0x28] sm:$0xf]
      %v6990 = vld [vmem:[%s6978 + $0x2c] sm:$0xf]
      %v6991 = vld [vmem:[%s6978 + $0x30] sm:$0xf]
      %v6992 = vld [vmem:[%s6978 + $0x34] sm:$0xf]
      %v6993 = vld [vmem:[%s6978 + $0x38] sm:$0xf]
      %v6994 = vld [vmem:[%s6978 + $0x3c] sm:$0xf]
      %v6996 = vunpack.c.l.b16 %v6977
      %v6997 = vpack.c.b16 %v6996, %v6996
      %v6999 = vshrl.u32 %v6829, 16
      %v7001 = vrot.slane %v6999, 1
      %v7002 = vshll.u32 %v6829, 16
      %v7004 = vrot.slane %v7002, 2
      %v7005 = vor.u32 %v7001, %v7004
      %v7006 = vrot.slane %v6641, 1
      %v7007 = vrot.slane %v6637, 2
      %v7008 = vor.u32 %v7006, %v7007
      %v7009 = vsel %vm4631, %v7005, %v7008
      %v7010 = vrot.slane %v6649, 1
      %v7011 = vrot.slane %v6645, 2
      %v7012 = vor.u32 %v7010, %v7011
      %v7013 = vsel %vm4631, %v7008, %v7012
      %v7014 = vrot.slane %v6657, 1
      %v7015 = vrot.slane %v6653, 2
      %v7016 = vor.u32 %v7014, %v7015
      %v7017 = vsel %vm4631, %v7012, %v7016
      %v7018 = vrot.slane %v6665, 1
      %v7019 = vrot.slane %v6661, 2
      %v7020 = vor.u32 %v7018, %v7019
      %v7021 = vsel %vm4631, %v7016, %v7020
      %v7023 = vshrl.u32 %v6997, 16
      %v7025 = vrot.slane %v7023, 1
      %v7026 = vshll.u32 %v6997, 16
      %v7028 = vrot.slane %v7026, 2
      %v7029 = vor.u32 %v7025, %v7028
      %v7030 = vsel %vm4631, %v7020, %v7029
      %v7052 = vunpack.c.l.b16 %v6979
      %v7053 = vunpack.c.l.b16 %v6980
      %v7054 = vunpack.c.l.b16 %v6981
      %v7055 = vunpack.c.l.b16 %v6982
      %v7056 = vunpack.c.l.b16 %v6983
      %v7057 = vunpack.c.l.b16 %v6984
      %v7058 = vunpack.c.l.b16 %v6985
      %v7059 = vunpack.c.l.b16 %v6986
      %v7060 = vunpack.c.l.b16 %v6987
      %v7061 = vunpack.c.l.b16 %v6988
      %v7062 = vunpack.c.l.b16 %v6989
      %v7063 = vunpack.c.l.b16 %v6990
      %v7064 = vunpack.c.l.b16 %v6991
      %v7065 = vunpack.c.l.b16 %v6992
      %v7066 = vunpack.c.l.b16 %v6993
      %v7067 = vunpack.c.l.b16 %v6994
      %v7068 = vpack.c.b16 %v7053, %v7052
      %v7069 = vpack.c.b16 %v7055, %v7054
      %v7070 = vpack.c.b16 %v7057, %v7056
      %v7071 = vpack.c.b16 %v7059, %v7058
      %v7072 = vpack.c.b16 %v7061, %v7060
      %v7073 = vpack.c.b16 %v7063, %v7062
      %v7074 = vpack.c.b16 %v7065, %v7064
      %v7075 = vpack.c.b16 %v7067, %v7066
      %7084 = vmatprep.subr.bf16.mxu0 0
      %7085 = vmatpush1.bf16.msra.mxu0 %v7075
      %7086 = vmatprep.subr.bf16.mxu0 0
      %7087 = vmatpush1.bf16.msra.mxu0 %v7074
      %7088 = vmatprep.subr.bf16.mxu0 0
      %7089 = vmatpush1.bf16.msra.mxu0 %v7073
      %7090 = vmatprep.subr.bf16.mxu0 0
      %7091 = vmatpush1.bf16.msra.mxu0 %v7072
      %7092 = vmatprep.subr.bf16.mxu0 0
      %7093 = vmatpush1.bf16.msra.mxu0 %v7071
      %7094 = vmatprep.subr.bf16.mxu0 0
      %7095 = vmatpush1.bf16.msra.mxu0 %v7070
      %7096 = vmatprep.subr.bf16.mxu0 0
      %7097 = vmatpush1.bf16.msra.mxu0 %v7069
      %7098 = vmatprep.subr.bf16.mxu0 0
      %7099 = vmatpush1.bf16.msra.mxu0 %v7068
      %7100 = vmatprep.subr.bf16.mxu0 0
      %7101 = vmatpush2.bf16.msra.mxu0 0
      %7102 = vmatprep.subr.bf16.mxu0 0
      %7103 = vmatpush2.bf16.msra.mxu0 0
      %7104 = vmatprep.subr.bf16.mxu0 0
      %7105 = vmatpush2.bf16.msra.mxu0 0
      %7106 = vmatprep.subr.bf16.mxu0 0
      %7107 = vmatpush2.bf16.msra.mxu0 0
      %7108 = vmatprep.subr.bf16.mxu0 0
      %7109 = vmatpush2.bf16.msra.mxu0 0
      %7110 = vmatprep.subr.bf16.mxu0 0
      %7111 = vmatpush2.bf16.msra.mxu0 0
      %7112 = vmatprep.subr.bf16.mxu0 0
      %7113 = vmatpush2.bf16.msra.mxu0 0
      %7114 = vmatprep.subr.bf16.mxu0 0
      %7115 = vmatpush2.bf16.msra.mxu0 0
      %7116 = vmatprep.mubr.bf16.mxu0 0
      %7117 = vmatmul.mubr.bf16.gmra.mxu0 %v7009
      %v7118 = vpop.f32.mrf.mxu0
      %v7119 = vadd.f32 0.0, %v7118
      %v7120 = vpop.f32.mrf.mxu0
      %v7121 = vpop.f32.mrf.mxu0
      %v7122 = vadd.f32 0.0, %v7121
      %v7123 = vpop.f32.mrf.mxu0
      %7124 = vmatprep.mubr.bf16.mxu0 0
      %7125 = vmatmul.mubr.bf16.gmra.mxu0 %v7013
      %v7126 = vpop.f32.mrf.mxu0
      %v7127 = vadd.f32 0.0, %v7126
      %v7128 = vpop.f32.mrf.mxu0
      %v7129 = vpop.f32.mrf.mxu0
      %v7130 = vadd.f32 0.0, %v7129
      %v7131 = vpop.f32.mrf.mxu0
      %7132 = vmatprep.mubr.bf16.mxu0 0
      %7133 = vmatmul.mubr.bf16.gmra.mxu0 %v7017
      %v7134 = vpop.f32.mrf.mxu0
      %v7135 = vadd.f32 0.0, %v7134
      %v7136 = vpop.f32.mrf.mxu0
      %v7137 = vpop.f32.mrf.mxu0
      %v7138 = vadd.f32 0.0, %v7137
      %v7139 = vpop.f32.mrf.mxu0
      %7140 = vmatprep.mubr.bf16.mxu0 0
      %7141 = vmatmul.mubr.bf16.gmra.mxu0 %v7021
      %v7142 = vpop.f32.mrf.mxu0
      %v7143 = vadd.f32 0.0, %v7142
      %v7144 = vpop.f32.mrf.mxu0
      %v7145 = vpop.f32.mrf.mxu0
      %v7146 = vadd.f32 0.0, %v7145
      %v7147 = vpop.f32.mrf.mxu0
      %7148 = vmatprep.mubr.bf16.mxu0 0
      %7149 = vmatmul.mubr.bf16.gmra.mxu0 %v7030
      %v7150 = vpop.f32.mrf.mxu0
      %v7151 = vadd.f32 0.0, %v7150
      %v7152 = vpop.f32.mrf.mxu0
      %v7153 = vpop.f32.mrf.mxu0
      %v7154 = vadd.f32 0.0, %v7153
      %v7155 = vpop.f32.mrf.mxu0
      %7156 = vdwg.mxu0
      %v7157 = vadd.f32 %v6967, %v7119
      %v7158 = vadd.f32 %v6968, %v7122
      %v7159 = vadd.f32 %v6969, %v7127
      %v7160 = vadd.f32 %v6970, %v7130
      %v7161 = vadd.f32 %v6971, %v7135
      %v7162 = vadd.f32 %v6972, %v7138
      %v7163 = vadd.f32 %v6973, %v7143
      %v7164 = vadd.f32 %v6974, %v7146
      %v7165 = vadd.f32 %v6975, %v7151
      %v7166 = vadd.f32 %v6976, %v7154
      %v7167 = vld [vmem:[%s4] sm:$0xff]
      %v7168 = vld [vmem:[%s4 + $0x8] sm:$0xff]
      %v7169 = vld [vmem:[%s4 + $0x10] sm:$0xff]
      %v7170 = vld [vmem:[%s4 + $0x18] sm:$0xff]
      %v7171 = vld [vmem:[%s4 + $0x20] sm:$0xff]
      %v7172 = vld [vmem:[%s4 + $0x28] sm:$0xff]
      %v7173 = vld [vmem:[%s4 + $0x30] sm:$0xff]
      %v7174 = vld [vmem:[%s4 + $0x38] sm:$0xff]
      %v7175 = vld [vmem:[%s4 + $0x40] sm:$0xff]
      %v7176 = vld [vmem:[%s4 + $0x48] sm:$0xff]
      %v7177 = vmul.f32 %v7157, %v7167
      %v7178 = vmul.f32 %v7158, %v7168
      %v7179 = vmul.f32 %v7159, %v7169
      %v7180 = vmul.f32 %v7160, %v7170
      %v7181 = vmul.f32 %v7161, %v7171
      %v7182 = vmul.f32 %v7162, %v7172
      %v7183 = vmul.f32 %v7163, %v7173
      %v7184 = vmul.f32 %v7164, %v7174
      %v7185 = vmul.f32 %v7165, %v7175
      %v7186 = vmul.f32 %v7166, %v7176
      %v7187 = vadd.f32 %v7177, %v7178
      %v7188 = vadd.f32 %v7187, %v7179
      %v7189 = vadd.f32 %v7188, %v7180
      %v7190 = vadd.f32 %v7189, %v7181
      %v7191 = vadd.f32 %v7190, %v7182
      %v7192 = vadd.f32 %v7191, %v7183
      %v7193 = vadd.f32 %v7192, %v7184
      %v7194 = vadd.f32 %v7193, %v7185
      %v7195 = vadd.f32 %v7194, %v7186
      %7196 = vadd.xlane.f32.xlu0 %v7195
      %v7197 = vpop.xlane.xlu0 %7196
      %v7198 = vrot.slane %v7197, 4
      %v7199 = vadd.f32 %v7197, %v7198
      %v7200 = vrot.slane %v7199, 2
      %v7201 = vadd.f32 %v7199, %v7200
      %v7202 = vrot.slane %v7201, 1
      %v7203 = vadd.f32 %v7201, %v7202
      %s7204 = vtos %v7203
      %v7205 = vmul.f32 %v7177, %v7177
      %v7206 = vmul.f32 %v7178, %v7178
      %v7207 = vmul.f32 %v7179, %v7179
      %v7208 = vmul.f32 %v7180, %v7180
      %v7209 = vmul.f32 %v7181, %v7181
      %v7210 = vmul.f32 %v7182, %v7182
      %v7211 = vmul.f32 %v7183, %v7183
      %v7212 = vmul.f32 %v7184, %v7184
      %v7213 = vmul.f32 %v7185, %v7185
      %v7214 = vmul.f32 %v7186, %v7186
      %v7215 = vadd.f32 %v7205, %v7206
      %v7216 = vadd.f32 %v7215, %v7207
      %v7217 = vadd.f32 %v7216, %v7208
      %v7218 = vadd.f32 %v7217, %v7209
      %v7219 = vadd.f32 %v7218, %v7210
      %v7220 = vadd.f32 %v7219, %v7211
      %v7221 = vadd.f32 %v7220, %v7212
      %v7222 = vadd.f32 %v7221, %v7213
      %v7223 = vadd.f32 %v7222, %v7214
      %7224 = vadd.xlane.f32.xlu0 %v7223
      %v7225 = vpop.xlane.xlu0 %7224
      %v7226 = vrot.slane %v7225, 4
      %v7227 = vadd.f32 %v7225, %v7226
      %v7228 = vrot.slane %v7227, 2
      %v7229 = vadd.f32 %v7227, %v7228
      %v7230 = vrot.slane %v7229, 1
      %v7231 = vadd.f32 %v7229, %v7230
      %s7232 = vtos %v7231
      %v7233 = vrcp.pop 8192.0
      %s7234 = vtos %v7233
      %s7235 = smul.f32 %s7204, %s7234
      %v7236 = vrcp.pop 8192.0
      %s7237 = vtos %v7236
      %s7238 = smul.f32 %s7232, %s7237
      %s7239 = smul.f32 %s7235, %s7235
      %s7240 = ssub.f32 %s7238, %s7239
      %v7241 = vstv %s7235
      %v7242 = vsub.f32 %v7157, %v7241
      %v7243 = vsub.f32 %v7158, %v7241
      %v7244 = vsub.f32 %v7159, %v7241
      %v7245 = vsub.f32 %v7160, %v7241
      %v7246 = vsub.f32 %v7161, %v7241
      %v7247 = vsub.f32 %v7162, %v7241
      %v7248 = vsub.f32 %v7163, %v7241
      %v7249 = vsub.f32 %v7164, %v7241
      %v7250 = vsub.f32 %v7165, %v7241
      %v7251 = vsub.f32 %v7166, %v7241
      %s7252 = sadd.f32 %s7240, 1e-05
      %v7253 = vstv %s7252
      %v7254 = vrsqrt.pop %v7253
      %s7255 = vtos %v7254
      %v7256 = vstv %s7255
      %v7257 = vmul.f32 %v7242, %v7256
      %v7258 = vmul.f32 %v7243, %v7256
      %v7259 = vmul.f32 %v7244, %v7256
      %v7260 = vmul.f32 %v7245, %v7256
      %v7261 = vmul.f32 %v7246, %v7256
      %v7262 = vmul.f32 %v7247, %v7256
      %v7263 = vmul.f32 %v7248, %v7256
      %v7264 = vmul.f32 %v7249, %v7256
      %v7265 = vmul.f32 %v7250, %v7256
      %v7266 = vmul.f32 %v7251, %v7256
      %v7267 = vld [vmem:[%s5] sm:$0x1]
      %v7268 = vlaneseq
      %v7269 = vshrl.u32 %v7268, 7
      %v7270 = vsub.s32 0, %v7269
      %v7271 = vrot.slane %v7267, %v7270
      %v7272 = vmul.f32 %v7257, %v7271
      %v7273 = vmul.f32 %v7258, %v7271
      %v7274 = vmul.f32 %v7259, %v7271
      %v7275 = vmul.f32 %v7260, %v7271
      %v7276 = vmul.f32 %v7261, %v7271
      %v7277 = vmul.f32 %v7262, %v7271
      %v7278 = vmul.f32 %v7263, %v7271
      %v7279 = vmul.f32 %v7264, %v7271
      %v7280 = vmul.f32 %v7265, %v7271
      %v7281 = vmul.f32 %v7266, %v7271
      %v7282 = vld [vmem:[%s6] sm:$0x1]
      %v7283 = vlaneseq
      %v7284 = vshrl.u32 %v7283, 7
      %v7285 = vsub.s32 0, %v7284
      %v7286 = vrot.slane %v7282, %v7285
      %v7287 = vadd.f32 %v7272, %v7286
      %v7288 = vadd.f32 %v7273, %v7286
      %v7289 = vadd.f32 %v7274, %v7286
      %v7290 = vadd.f32 %v7275, %v7286
      %v7291 = vadd.f32 %v7276, %v7286
      %v7292 = vadd.f32 %v7277, %v7286
      %v7293 = vadd.f32 %v7278, %v7286
      %v7294 = vadd.f32 %v7279, %v7286
      %v7295 = vadd.f32 %v7280, %v7286
      %v7296 = vadd.f32 %v7281, %v7286
      %vm7297 = vcmp.ge.f32.partialorder %v7287, 0.0
      %vm7298 = vcmp.ge.f32.partialorder %v7288, 0.0
      %vm7299 = vcmp.ge.f32.partialorder %v7289, 0.0
      %vm7300 = vcmp.ge.f32.partialorder %v7290, 0.0
      %vm7301 = vcmp.ge.f32.partialorder %v7291, 0.0
      %vm7302 = vcmp.ge.f32.partialorder %v7292, 0.0
      %vm7303 = vcmp.ge.f32.partialorder %v7293, 0.0
      %vm7304 = vcmp.ge.f32.partialorder %v7294, 0.0
      %vm7305 = vcmp.ge.f32.partialorder %v7295, 0.0
      %vm7306 = vcmp.ge.f32.partialorder %v7296, 0.0
      %v7307 = vmul.f32 %v7287, 0.2
      %v7308 = vmul.f32 %v7288, 0.2
      %v7309 = vmul.f32 %v7289, 0.2
      %v7310 = vmul.f32 %v7290, 0.2
      %v7311 = vmul.f32 %v7291, 0.2
      %v7312 = vmul.f32 %v7292, 0.2
      %v7313 = vmul.f32 %v7293, 0.2
      %v7314 = vmul.f32 %v7294, 0.2
      %v7315 = vmul.f32 %v7295, 0.2
      %v7316 = vmul.f32 %v7296, 0.2
      %v7317 = vsel %vm7297, %v7287, %v7307
      %v7318 = vsel %vm7298, %v7288, %v7308
      %v7319 = vsel %vm7299, %v7289, %v7309
      %v7320 = vsel %vm7300, %v7290, %v7310
      %v7321 = vsel %vm7301, %v7291, %v7311
      %v7322 = vsel %vm7302, %v7292, %v7312
      %v7323 = vsel %vm7303, %v7293, %v7313
      %v7324 = vsel %vm7304, %v7294, %v7314
      %v7325 = vsel %vm7305, %v7295, %v7315
      %v7326 = vsel %vm7306, %v7296, %v7316
      %v7327 = vmul.f32 %v7317, %v7167
      %v7328 = vmul.f32 %v7318, %v7168
      %v7329 = vmul.f32 %v7319, %v7169
      %v7330 = vmul.f32 %v7320, %v7170
      %v7331 = vmul.f32 %v7321, %v7171
      %v7332 = vmul.f32 %v7322, %v7172
      %v7333 = vmul.f32 %v7323, %v7173
      %v7334 = vmul.f32 %v7324, %v7174
      %v7335 = vmul.f32 %v7325, %v7175
      %v7336 = vmul.f32 %v7326, %v7176
      %v7337 = vpack.c.bf16 %v7328, %v7327
      %v7338 = vpack.c.bf16 %v7330, %v7329
      %v7339 = vpack.c.bf16 %v7332, %v7331
      %v7340 = vpack.c.bf16 %v7334, %v7333
      %v7341 = vpack.c.bf16 %v7336, %v7335
      %v7347 = vunpack.c.l.b16 %v7337
      %v7348 = vunpack.c.h.b16 %v7337
      %v7349 = vunpack.c.l.b16 %v7338
      %v7350 = vunpack.c.h.b16 %v7338
      %v7351 = vunpack.c.l.b16 %v7339
      %v7352 = vunpack.c.h.b16 %v7339
      %v7353 = vunpack.c.l.b16 %v7340
      %v7354 = vunpack.c.h.b16 %v7340
      %v7355 = vunpack.c.l.b16 %v7341
      %v7356 = vunpack.c.h.b16 %v7341
      %v7357 = vpack.c.b16 %v7347, %v7347
      %v7358 = vpack.c.b16 %v7348, %v7348
      %v7359 = vpack.c.b16 %v7349, %v7349
      %v7360 = vpack.c.b16 %v7350, %v7350
      %v7361 = vpack.c.b16 %v7351, %v7351
      %v7362 = vpack.c.b16 %v7352, %v7352
      %v7363 = vpack.c.b16 %v7353, %v7353
      %v7364 = vpack.c.b16 %v7354, %v7354
      %v7365 = vpack.c.b16 %v7355, %v7355
      %v7366 = vpack.c.b16 %v7356, %v7356
      %7377 = vst [vmem:[#allocation3 + $0x8] sm:$0xf] %v7357
      %7378 = vst [vmem:[#allocation3 + $0xc] sm:$0xf] %v7358
      %7379 = vst [vmem:[#allocation3 + $0x10] sm:$0xf] %v7359
      %7380 = vst [vmem:[#allocation3 + $0x14] sm:$0xf] %v7360
      %7381 = vst [vmem:[#allocation3 + $0x18] sm:$0xf] %v7361
      %7382 = vst [vmem:[#allocation3 + $0x1c] sm:$0xf] %v7362
      %7383 = vst [vmem:[#allocation3 + $0x20] sm:$0xf] %v7363
      %7384 = vst [vmem:[#allocation3 + $0x24] sm:$0xf] %v7364
      %7385 = vst [vmem:[#allocation3 + $0x28] sm:$0xf] %v7365
      %7386 = vst [vmem:[#allocation3 + $0x2c] sm:$0xf] %v7366
      %v7387 = vld [vmem:[#allocation3] sm:$0xc]
      %v7388 = vld [vmem:[#allocation3 + $0x4] sm:$0xf]
      %v7389 = vld [vmem:[#allocation3 + $0x8] sm:$0xf]
      %v7390 = vld [vmem:[#allocation3 + $0xc] sm:$0xf]
      %v7391 = vld [vmem:[#allocation3 + $0x10] sm:$0xf]
      %v7392 = vld [vmem:[#allocation3 + $0x14] sm:$0xf]
      %v7393 = vld [vmem:[#allocation3 + $0x18] sm:$0xf]
      %v7394 = vld [vmem:[#allocation3 + $0x1c] sm:$0xf]
      %v7395 = vld [vmem:[#allocation3 + $0x20] sm:$0xf]
      %v7396 = vld [vmem:[#allocation3 + $0x24] sm:$0xf]
      %v7397 = vld [vmem:[#allocation3 + $0x28] sm:$0x7]
      %s7398 = scalar_lea.vmem %s2, 1152
      %v7399 = vld [vmem:[%s7398] sm:$0xf]
      %v7400 = vld [vmem:[%s7398 + $0x4] sm:$0xf]
      %v7401 = vld [vmem:[%s7398 + $0x8] sm:$0xf]
      %v7402 = vld [vmem:[%s7398 + $0xc] sm:$0xf]
      %v7403 = vld [vmem:[%s7398 + $0x10] sm:$0xf]
      %v7404 = vld [vmem:[%s7398 + $0x14] sm:$0xf]
      %v7405 = vld [vmem:[%s7398 + $0x18] sm:$0xf]
      %v7406 = vld [vmem:[%s7398 + $0x1c] sm:$0xf]
      %v7407 = vld [vmem:[%s7398 + $0x20] sm:$0xf]
      %v7408 = vld [vmem:[%s7398 + $0x24] sm:$0xf]
      %v7409 = vld [vmem:[%s7398 + $0x28] sm:$0xf]
      %v7410 = vld [vmem:[%s7398 + $0x2c] sm:$0xf]
      %v7411 = vld [vmem:[%s7398 + $0x30] sm:$0xf]
      %v7412 = vld [vmem:[%s7398 + $0x34] sm:$0xf]
      %v7413 = vld [vmem:[%s7398 + $0x38] sm:$0xf]
      %v7414 = vld [vmem:[%s7398 + $0x3c] sm:$0xf]
      %v7415 = vld [vmem:[#allocation3] sm:$0x8]
      %s7416 = scalar_lea.vmem %s2, 1216
      %v7417 = vld [vmem:[%s7416] sm:$0xf]
      %v7418 = vld [vmem:[%s7416 + $0x4] sm:$0xf]
      %v7419 = vld [vmem:[%s7416 + $0x8] sm:$0xf]
      %v7420 = vld [vmem:[%s7416 + $0xc] sm:$0xf]
      %v7421 = vld [vmem:[%s7416 + $0x10] sm:$0xf]
      %v7422 = vld [vmem:[%s7416 + $0x14] sm:$0xf]
      %v7423 = vld [vmem:[%s7416 + $0x18] sm:$0xf]
      %v7424 = vld [vmem:[%s7416 + $0x1c] sm:$0xf]
      %v7425 = vld [vmem:[%s7416 + $0x20] sm:$0xf]
      %v7426 = vld [vmem:[%s7416 + $0x24] sm:$0xf]
      %v7427 = vld [vmem:[%s7416 + $0x28] sm:$0xf]
      %v7428 = vld [vmem:[%s7416 + $0x2c] sm:$0xf]
      %v7429 = vld [vmem:[%s7416 + $0x30] sm:$0xf]
      %v7430 = vld [vmem:[%s7416 + $0x34] sm:$0xf]
      %v7431 = vld [vmem:[%s7416 + $0x38] sm:$0xf]
      %v7432 = vld [vmem:[%s7416 + $0x3c] sm:$0xf]
      %v7444 = vunpack.c.l.b16 %v7415
      %v7445 = vunpack.c.l.b16 %v7388
      %v7446 = vunpack.c.l.b16 %v7389
      %v7447 = vunpack.c.l.b16 %v7390
      %v7448 = vunpack.c.l.b16 %v7391
      %v7449 = vunpack.c.l.b16 %v7392
      %v7450 = vunpack.c.l.b16 %v7393
      %v7451 = vunpack.c.l.b16 %v7394
      %v7452 = vunpack.c.l.b16 %v7395
      %v7453 = vunpack.c.l.b16 %v7396
      %v7454 = vunpack.c.l.b16 %v7397
      %v7455 = vpack.c.b16 %v7445, %v7444
      %v7456 = vpack.c.b16 %v7447, %v7446
      %v7457 = vpack.c.b16 %v7449, %v7448
      %v7458 = vpack.c.b16 %v7451, %v7450
      %v7459 = vpack.c.b16 %v7453, %v7452
      %v7460 = vpack.c.b16 %v7454, %v7454
      %v7461 = vrot.slane %v7455, 3
      %v7462 = vrot.slane %v7456, 3
      %v7463 = vsel %vm1129, %v7461, %v7462
      %v7464 = vrot.slane %v7457, 3
      %v7465 = vsel %vm1129, %v7462, %v7464
      %v7466 = vrot.slane %v7458, 3
      %v7467 = vsel %vm1129, %v7464, %v7466
      %v7468 = vrot.slane %v7459, 3
      %v7469 = vsel %vm1129, %v7466, %v7468
      %v7470 = vrot.slane %v7460, 3
      %v7471 = vsel %vm1129, %v7468, %v7470
      %v7493 = vunpack.c.l.b16 %v7417
      %v7494 = vunpack.c.l.b16 %v7418
      %v7495 = vunpack.c.l.b16 %v7419
      %v7496 = vunpack.c.l.b16 %v7420
      %v7497 = vunpack.c.l.b16 %v7421
      %v7498 = vunpack.c.l.b16 %v7422
      %v7499 = vunpack.c.l.b16 %v7423
      %v7500 = vunpack.c.l.b16 %v7424
      %v7501 = vunpack.c.l.b16 %v7425
      %v7502 = vunpack.c.l.b16 %v7426
      %v7503 = vunpack.c.l.b16 %v7427
      %v7504 = vunpack.c.l.b16 %v7428
      %v7505 = vunpack.c.l.b16 %v7429
      %v7506 = vunpack.c.l.b16 %v7430
      %v7507 = vunpack.c.l.b16 %v7431
      %v7508 = vunpack.c.l.b16 %v7432
      %v7509 = vpack.c.b16 %v7494, %v7493
      %v7510 = vpack.c.b16 %v7496, %v7495
      %v7511 = vpack.c.b16 %v7498, %v7497
      %v7512 = vpack.c.b16 %v7500, %v7499
      %v7513 = vpack.c.b16 %v7502, %v7501
      %v7514 = vpack.c.b16 %v7504, %v7503
      %v7515 = vpack.c.b16 %v7506, %v7505
      %v7516 = vpack.c.b16 %v7508, %v7507
      %7525 = vmatprep.subr.bf16.mxu0 0
      %7526 = vmatpush1.bf16.msra.mxu0 %v7516
      %7527 = vmatprep.subr.bf16.mxu0 0
      %7528 = vmatpush1.bf16.msra.mxu0 %v7515
      %7529 = vmatprep.subr.bf16.mxu0 0
      %7530 = vmatpush1.bf16.msra.mxu0 %v7514
      %7531 = vmatprep.subr.bf16.mxu0 0
      %7532 = vmatpush1.bf16.msra.mxu0 %v7513
      %7533 = vmatprep.subr.bf16.mxu0 0
      %7534 = vmatpush1.bf16.msra.mxu0 %v7512
      %7535 = vmatprep.subr.bf16.mxu0 0
      %7536 = vmatpush1.bf16.msra.mxu0 %v7511
      %7537 = vmatprep.subr.bf16.mxu0 0
      %7538 = vmatpush1.bf16.msra.mxu0 %v7510
      %7539 = vmatprep.subr.bf16.mxu0 0
      %7540 = vmatpush1.bf16.msra.mxu0 %v7509
      %7541 = vmatprep.subr.bf16.mxu0 0
      %7542 = vmatpush2.bf16.msra.mxu0 0
      %7543 = vmatprep.subr.bf16.mxu0 0
      %7544 = vmatpush2.bf16.msra.mxu0 0
      %7545 = vmatprep.subr.bf16.mxu0 0
      %7546 = vmatpush2.bf16.msra.mxu0 0
      %7547 = vmatprep.subr.bf16.mxu0 0
      %7548 = vmatpush2.bf16.msra.mxu0 0
      %7549 = vmatprep.subr.bf16.mxu0 0
      %7550 = vmatpush2.bf16.msra.mxu0 0
      %7551 = vmatprep.subr.bf16.mxu0 0
      %7552 = vmatpush2.bf16.msra.mxu0 0
      %7553 = vmatprep.subr.bf16.mxu0 0
      %7554 = vmatpush2.bf16.msra.mxu0 0
      %7555 = vmatprep.subr.bf16.mxu0 0
      %7556 = vmatpush2.bf16.msra.mxu0 0
      %7557 = vmatprep.mubr.bf16.mxu0 0
      %7558 = vmatmul.mubr.bf16.gmra.mxu0 %v7463
      %v7559 = vpop.f32.mrf.mxu0
      %v7560 = vadd.f32 0.0, %v7559
      %v7561 = vpop.f32.mrf.mxu0
      %v7562 = vpop.f32.mrf.mxu0
      %v7563 = vadd.f32 0.0, %v7562
      %v7564 = vpop.f32.mrf.mxu0
      %7565 = vmatprep.mubr.bf16.mxu0 0
      %7566 = vmatmul.mubr.bf16.gmra.mxu0 %v7465
      %v7567 = vpop.f32.mrf.mxu0
      %v7568 = vadd.f32 0.0, %v7567
      %v7569 = vpop.f32.mrf.mxu0
      %v7570 = vpop.f32.mrf.mxu0
      %v7571 = vadd.f32 0.0, %v7570
      %v7572 = vpop.f32.mrf.mxu0
      %7573 = vmatprep.mubr.bf16.mxu0 0
      %7574 = vmatmul.mubr.bf16.gmra.mxu0 %v7467
      %v7575 = vpop.f32.mrf.mxu0
      %v7576 = vadd.f32 0.0, %v7575
      %v7577 = vpop.f32.mrf.mxu0
      %v7578 = vpop.f32.mrf.mxu0
      %v7579 = vadd.f32 0.0, %v7578
      %v7580 = vpop.f32.mrf.mxu0
      %7581 = vmatprep.mubr.bf16.mxu0 0
      %7582 = vmatmul.mubr.bf16.gmra.mxu0 %v7469
      %v7583 = vpop.f32.mrf.mxu0
      %v7584 = vadd.f32 0.0, %v7583
      %v7585 = vpop.f32.mrf.mxu0
      %v7586 = vpop.f32.mrf.mxu0
      %v7587 = vadd.f32 0.0, %v7586
      %v7588 = vpop.f32.mrf.mxu0
      %7589 = vmatprep.mubr.bf16.mxu0 0
      %7590 = vmatmul.mubr.bf16.gmra.mxu0 %v7471
      %v7591 = vpop.f32.mrf.mxu0
      %v7592 = vadd.f32 0.0, %v7591
      %v7593 = vpop.f32.mrf.mxu0
      %v7594 = vpop.f32.mrf.mxu0
      %v7595 = vadd.f32 0.0, %v7594
      %v7596 = vpop.f32.mrf.mxu0
      %7597 = vdwg.mxu0
      %v7599 = vunpack.c.l.b16 %v7387
      %v7600 = vpack.c.b16 %v7445, %v7599
      %v7602 = vshrl.u32 %v7600, 16
      %v7604 = vrot.slane %v7602, 2
      %v7605 = vshll.u32 %v7600, 16
      %v7607 = vrot.slane %v7605, 3
      %v7608 = vor.u32 %v7604, %v7607
      %v7610 = vshrl.u32 %v7456, 16
      %v7612 = vrot.slane %v7610, 2
      %v7613 = vshll.u32 %v7456, 16
      %v7615 = vrot.slane %v7613, 3
      %v7616 = vor.u32 %v7612, %v7615
      %v7617 = vsel %vm1413, %v7608, %v7616
      %v7619 = vshrl.u32 %v7457, 16
      %v7621 = vrot.slane %v7619, 2
      %v7622 = vshll.u32 %v7457, 16
      %v7624 = vrot.slane %v7622, 3
      %v7625 = vor.u32 %v7621, %v7624
      %v7626 = vsel %vm1413, %v7616, %v7625
      %v7628 = vshrl.u32 %v7458, 16
      %v7630 = vrot.slane %v7628, 2
      %v7631 = vshll.u32 %v7458, 16
      %v7633 = vrot.slane %v7631, 3
      %v7634 = vor.u32 %v7630, %v7633
      %v7635 = vsel %vm1413, %v7625, %v7634
      %v7637 = vshrl.u32 %v7459, 16
      %v7639 = vrot.slane %v7637, 2
      %v7640 = vshll.u32 %v7459, 16
      %v7642 = vrot.slane %v7640, 3
      %v7643 = vor.u32 %v7639, %v7642
      %v7644 = vsel %vm1413, %v7634, %v7643
      %v7646 = vshrl.u32 %v7460, 16
      %v7648 = vrot.slane %v7646, 2
      %v7649 = vshll.u32 %v7460, 16
      %v7651 = vrot.slane %v7649, 3
      %v7652 = vor.u32 %v7648, %v7651
      %v7653 = vsel %vm1413, %v7643, %v7652
      %v7675 = vunpack.c.l.b16 %v7399
      %v7676 = vunpack.c.l.b16 %v7400
      %v7677 = vunpack.c.l.b16 %v7401
      %v7678 = vunpack.c.l.b16 %v7402
      %v7679 = vunpack.c.l.b16 %v7403
      %v7680 = vunpack.c.l.b16 %v7404
      %v7681 = vunpack.c.l.b16 %v7405
      %v7682 = vunpack.c.l.b16 %v7406
      %v7683 = vunpack.c.l.b16 %v7407
      %v7684 = vunpack.c.l.b16 %v7408
      %v7685 = vunpack.c.l.b16 %v7409
      %v7686 = vunpack.c.l.b16 %v7410
      %v7687 = vunpack.c.l.b16 %v7411
      %v7688 = vunpack.c.l.b16 %v7412
      %v7689 = vunpack.c.l.b16 %v7413
      %v7690 = vunpack.c.l.b16 %v7414
      %v7691 = vpack.c.b16 %v7676, %v7675
      %v7692 = vpack.c.b16 %v7678, %v7677
      %v7693 = vpack.c.b16 %v7680, %v7679
      %v7694 = vpack.c.b16 %v7682, %v7681
      %v7695 = vpack.c.b16 %v7684, %v7683
      %v7696 = vpack.c.b16 %v7686, %v7685
      %v7697 = vpack.c.b16 %v7688, %v7687
      %v7698 = vpack.c.b16 %v7690, %v7689
      %7707 = vmatprep.subr.bf16.mxu0 0
      %7708 = vmatpush1.bf16.msra.mxu0 %v7698
      %7709 = vmatprep.subr.bf16.mxu0 0
      %7710 = vmatpush1.bf16.msra.mxu0 %v7697
      %7711 = vmatprep.subr.bf16.mxu0 0
      %7712 = vmatpush1.bf16.msra.mxu0 %v7696
      %7713 = vmatprep.subr.bf16.mxu0 0
      %7714 = vmatpush1.bf16.msra.mxu0 %v7695
      %7715 = vmatprep.subr.bf16.mxu0 0
      %7716 = vmatpush1.bf16.msra.mxu0 %v7694
      %7717 = vmatprep.subr.bf16.mxu0 0
      %7718 = vmatpush1.bf16.msra.mxu0 %v7693
      %7719 = vmatprep.subr.bf16.mxu0 0
      %7720 = vmatpush1.bf16.msra.mxu0 %v7692
      %7721 = vmatprep.subr.bf16.mxu0 0
      %7722 = vmatpush1.bf16.msra.mxu0 %v7691
      %7723 = vmatprep.subr.bf16.mxu0 0
      %7724 = vmatpush2.bf16.msra.mxu0 0
      %7725 = vmatprep.subr.bf16.mxu0 0
      %7726 = vmatpush2.bf16.msra.mxu0 0
      %7727 = vmatprep.subr.bf16.mxu0 0
      %7728 = vmatpush2.bf16.msra.mxu0 0
      %7729 = vmatprep.subr.bf16.mxu0 0
      %7730 = vmatpush2.bf16.msra.mxu0 0
      %7731 = vmatprep.subr.bf16.mxu0 0
      %7732 = vmatpush2.bf16.msra.mxu0 0
      %7733 = vmatprep.subr.bf16.mxu0 0
      %7734 = vmatpush2.bf16.msra.mxu0 0
      %7735 = vmatprep.subr.bf16.mxu0 0
      %7736 = vmatpush2.bf16.msra.mxu0 0
      %7737 = vmatprep.subr.bf16.mxu0 0
      %7738 = vmatpush2.bf16.msra.mxu0 0
      %7739 = vmatprep.mubr.bf16.mxu0 0
      %7740 = vmatmul.mubr.bf16.gmra.mxu0 %v7617
      %v7741 = vpop.f32.mrf.mxu0
      %v7742 = vadd.f32 %v7560, %v7741
      %v7743 = vpop.f32.mrf.mxu0
      %v7744 = vpop.f32.mrf.mxu0
      %v7745 = vadd.f32 %v7563, %v7744
      %v7746 = vpop.f32.mrf.mxu0
      %7747 = vmatprep.mubr.bf16.mxu0 0
      %7748 = vmatmul.mubr.bf16.gmra.mxu0 %v7626
      %v7749 = vpop.f32.mrf.mxu0
      %v7750 = vadd.f32 %v7568, %v7749
      %v7751 = vpop.f32.mrf.mxu0
      %v7752 = vpop.f32.mrf.mxu0
      %v7753 = vadd.f32 %v7571, %v7752
      %v7754 = vpop.f32.mrf.mxu0
      %7755 = vmatprep.mubr.bf16.mxu0 0
      %7756 = vmatmul.mubr.bf16.gmra.mxu0 %v7635
      %v7757 = vpop.f32.mrf.mxu0
      %v7758 = vadd.f32 %v7576, %v7757
      %v7759 = vpop.f32.mrf.mxu0
      %v7760 = vpop.f32.mrf.mxu0
      %v7761 = vadd.f32 %v7579, %v7760
      %v7762 = vpop.f32.mrf.mxu0
      %7763 = vmatprep.mubr.bf16.mxu0 0
      %7764 = vmatmul.mubr.bf16.gmra.mxu0 %v7644
      %v7765 = vpop.f32.mrf.mxu0
      %v7766 = vadd.f32 %v7584, %v7765
      %v7767 = vpop.f32.mrf.mxu0
      %v7768 = vpop.f32.mrf.mxu0
      %v7769 = vadd.f32 %v7587, %v7768
      %v7770 = vpop.f32.mrf.mxu0
      %7771 = vmatprep.mubr.bf16.mxu0 0
      %7772 = vmatmul.mubr.bf16.gmra.mxu0 %v7653
      %v7773 = vpop.f32.mrf.mxu0
      %v7774 = vadd.f32 %v7592, %v7773
      %v7775 = vpop.f32.mrf.mxu0
      %v7776 = vpop.f32.mrf.mxu0
      %v7777 = vadd.f32 %v7595, %v7776
      %v7778 = vpop.f32.mrf.mxu0
      %7779 = vdwg.mxu0
      %v7780 = vld [vmem:[#allocation3 + $0x28] sm:$0xf]
      %s7781 = scalar_lea.vmem %s2, 1280
      %v7782 = vld [vmem:[%s7781] sm:$0xf]
      %v7783 = vld [vmem:[%s7781 + $0x4] sm:$0xf]
      %v7784 = vld [vmem:[%s7781 + $0x8] sm:$0xf]
      %v7785 = vld [vmem:[%s7781 + $0xc] sm:$0xf]
      %v7786 = vld [vmem:[%s7781 + $0x10] sm:$0xf]
      %v7787 = vld [vmem:[%s7781 + $0x14] sm:$0xf]
      %v7788 = vld [vmem:[%s7781 + $0x18] sm:$0xf]
      %v7789 = vld [vmem:[%s7781 + $0x1c] sm:$0xf]
      %v7790 = vld [vmem:[%s7781 + $0x20] sm:$0xf]
      %v7791 = vld [vmem:[%s7781 + $0x24] sm:$0xf]
      %v7792 = vld [vmem:[%s7781 + $0x28] sm:$0xf]
      %v7793 = vld [vmem:[%s7781 + $0x2c] sm:$0xf]
      %v7794 = vld [vmem:[%s7781 + $0x30] sm:$0xf]
      %v7795 = vld [vmem:[%s7781 + $0x34] sm:$0xf]
      %v7796 = vld [vmem:[%s7781 + $0x38] sm:$0xf]
      %v7797 = vld [vmem:[%s7781 + $0x3c] sm:$0xf]
      %v7799 = vunpack.c.l.b16 %v7780
      %v7800 = vpack.c.b16 %v7799, %v7799
      %v7802 = vshrl.u32 %v7455, 16
      %v7804 = vrot.slane %v7802, 3
      %v7805 = vshll.u32 %v7455, 16
      %v7807 = vrot.slane %v7805, 4
      %v7808 = vor.u32 %v7804, %v7807
      %v7809 = vrot.slane %v7610, 3
      %v7810 = vrot.slane %v7613, 4
      %v7811 = vor.u32 %v7809, %v7810
      %v7812 = vsel %vm1848, %v7808, %v7811
      %v7813 = vrot.slane %v7619, 3
      %v7814 = vrot.slane %v7622, 4
      %v7815 = vor.u32 %v7813, %v7814
      %v7816 = vsel %vm1848, %v7811, %v7815
      %v7817 = vrot.slane %v7628, 3
      %v7818 = vrot.slane %v7631, 4
      %v7819 = vor.u32 %v7817, %v7818
      %v7820 = vsel %vm1848, %v7815, %v7819
      %v7821 = vrot.slane %v7637, 3
      %v7822 = vrot.slane %v7640, 4
      %v7823 = vor.u32 %v7821, %v7822
      %v7824 = vsel %vm1848, %v7819, %v7823
      %v7826 = vshrl.u32 %v7800, 16
      %v7828 = vrot.slane %v7826, 3
      %v7829 = vshll.u32 %v7800, 16
      %v7831 = vrot.slane %v7829, 4
      %v7832 = vor.u32 %v7828, %v7831
      %v7833 = vsel %vm1848, %v7823, %v7832
      %v7855 = vunpack.c.l.b16 %v7782
      %v7856 = vunpack.c.l.b16 %v7783
      %v7857 = vunpack.c.l.b16 %v7784
      %v7858 = vunpack.c.l.b16 %v7785
      %v7859 = vunpack.c.l.b16 %v7786
      %v7860 = vunpack.c.l.b16 %v7787
      %v7861 = vunpack.c.l.b16 %v7788
      %v7862 = vunpack.c.l.b16 %v7789
      %v7863 = vunpack.c.l.b16 %v7790
      %v7864 = vunpack.c.l.b16 %v7791
      %v7865 = vunpack.c.l.b16 %v7792
      %v7866 = vunpack.c.l.b16 %v7793
      %v7867 = vunpack.c.l.b16 %v7794
      %v7868 = vunpack.c.l.b16 %v7795
      %v7869 = vunpack.c.l.b16 %v7796
      %v7870 = vunpack.c.l.b16 %v7797
      %v7871 = vpack.c.b16 %v7856, %v7855
      %v7872 = vpack.c.b16 %v7858, %v7857
      %v7873 = vpack.c.b16 %v7860, %v7859
      %v7874 = vpack.c.b16 %v7862, %v7861
      %v7875 = vpack.c.b16 %v7864, %v7863
      %v7876 = vpack.c.b16 %v7866, %v7865
      %v7877 = vpack.c.b16 %v7868, %v7867
      %v7878 = vpack.c.b16 %v7870, %v7869
      %7887 = vmatprep.subr.bf16.mxu0 0
      %7888 = vmatpush1.bf16.msra.mxu0 %v7878
      %7889 = vmatprep.subr.bf16.mxu0 0
      %7890 = vmatpush1.bf16.msra.mxu0 %v7877
      %7891 = vmatprep.subr.bf16.mxu0 0
      %7892 = vmatpush1.bf16.msra.mxu0 %v7876
      %7893 = vmatprep.subr.bf16.mxu0 0
      %7894 = vmatpush1.bf16.msra.mxu0 %v7875
      %7895 = vmatprep.subr.bf16.mxu0 0
      %7896 = vmatpush1.bf16.msra.mxu0 %v7874
      %7897 = vmatprep.subr.bf16.mxu0 0
      %7898 = vmatpush1.bf16.msra.mxu0 %v7873
      %7899 = vmatprep.subr.bf16.mxu0 0
      %7900 = vmatpush1.bf16.msra.mxu0 %v7872
      %7901 = vmatprep.subr.bf16.mxu0 0
      %7902 = vmatpush1.bf16.msra.mxu0 %v7871
      %7903 = vmatprep.subr.bf16.mxu0 0
      %7904 = vmatpush2.bf16.msra.mxu0 0
      %7905 = vmatprep.subr.bf16.mxu0 0
      %7906 = vmatpush2.bf16.msra.mxu0 0
      %7907 = vmatprep.subr.bf16.mxu0 0
      %7908 = vmatpush2.bf16.msra.mxu0 0
      %7909 = vmatprep.subr.bf16.mxu0 0
      %7910 = vmatpush2.bf16.msra.mxu0 0
      %7911 = vmatprep.subr.bf16.mxu0 0
      %7912 = vmatpush2.bf16.msra.mxu0 0
      %7913 = vmatprep.subr.bf16.mxu0 0
      %7914 = vmatpush2.bf16.msra.mxu0 0
      %7915 = vmatprep.subr.bf16.mxu0 0
      %7916 = vmatpush2.bf16.msra.mxu0 0
      %7917 = vmatprep.subr.bf16.mxu0 0
      %7918 = vmatpush2.bf16.msra.mxu0 0
      %7919 = vmatprep.mubr.bf16.mxu0 0
      %7920 = vmatmul.mubr.bf16.gmra.mxu0 %v7812
      %v7921 = vpop.f32.mrf.mxu0
      %v7922 = vadd.f32 0.0, %v7921
      %v7923 = vpop.f32.mrf.mxu0
      %v7924 = vpop.f32.mrf.mxu0
      %v7925 = vadd.f32 0.0, %v7924
      %v7926 = vpop.f32.mrf.mxu0
      %7927 = vmatprep.mubr.bf16.mxu0 0
      %7928 = vmatmul.mubr.bf16.gmra.mxu0 %v7816
      %v7929 = vpop.f32.mrf.mxu0
      %v7930 = vadd.f32 0.0, %v7929
      %v7931 = vpop.f32.mrf.mxu0
      %v7932 = vpop.f32.mrf.mxu0
      %v7933 = vadd.f32 0.0, %v7932
      %v7934 = vpop.f32.mrf.mxu0
      %7935 = vmatprep.mubr.bf16.mxu0 0
      %7936 = vmatmul.mubr.bf16.gmra.mxu0 %v7820
      %v7937 = vpop.f32.mrf.mxu0
      %v7938 = vadd.f32 0.0, %v7937
      %v7939 = vpop.f32.mrf.mxu0
      %v7940 = vpop.f32.mrf.mxu0
      %v7941 = vadd.f32 0.0, %v7940
      %v7942 = vpop.f32.mrf.mxu0
      %7943 = vmatprep.mubr.bf16.mxu0 0
      %7944 = vmatmul.mubr.bf16.gmra.mxu0 %v7824
      %v7945 = vpop.f32.mrf.mxu0
      %v7946 = vadd.f32 0.0, %v7945
      %v7947 = vpop.f32.mrf.mxu0
      %v7948 = vpop.f32.mrf.mxu0
      %v7949 = vadd.f32 0.0, %v7948
      %v7950 = vpop.f32.mrf.mxu0
      %7951 = vmatprep.mubr.bf16.mxu0 0
      %7952 = vmatmul.mubr.bf16.gmra.mxu0 %v7833
      %v7953 = vpop.f32.mrf.mxu0
      %v7954 = vadd.f32 0.0, %v7953
      %v7955 = vpop.f32.mrf.mxu0
      %v7956 = vpop.f32.mrf.mxu0
      %v7957 = vadd.f32 0.0, %v7956
      %v7958 = vpop.f32.mrf.mxu0
      %7959 = vdwg.mxu0
      %v7960 = vadd.f32 %v7742, %v7922
      %v7961 = vadd.f32 %v7745, %v7925
      %v7962 = vadd.f32 %v7750, %v7930
      %v7963 = vadd.f32 %v7753, %v7933
      %v7964 = vadd.f32 %v7758, %v7938
      %v7965 = vadd.f32 %v7761, %v7941
      %v7966 = vadd.f32 %v7766, %v7946
      %v7967 = vadd.f32 %v7769, %v7949
      %v7968 = vadd.f32 %v7774, %v7954
      %v7969 = vadd.f32 %v7777, %v7957
      %v7970 = vld [vmem:[#allocation3 + $0x4] sm:$0x8]
      %v7971 = vld [vmem:[#allocation3 + $0x8] sm:$0xf]
      %v7972 = vld [vmem:[#allocation3 + $0xc] sm:$0xf]
      %v7973 = vld [vmem:[#allocation3 + $0x10] sm:$0xf]
      %v7974 = vld [vmem:[#allocation3 + $0x14] sm:$0xf]
      %v7975 = vld [vmem:[#allocation3 + $0x18] sm:$0xf]
      %v7976 = vld [vmem:[#allocation3 + $0x1c] sm:$0xf]
      %v7977 = vld [vmem:[#allocation3 + $0x20] sm:$0xf]
      %v7978 = vld [vmem:[#allocation3 + $0x24] sm:$0xf]
      %v7979 = vld [vmem:[#allocation3 + $0x28] sm:$0xf]
      %v7980 = vld [vmem:[#allocation3 + $0x2c] sm:$0xf]
      %s7981 = scalar_lea.vmem %s2, 1344
      %v7982 = vld [vmem:[%s7981] sm:$0xf]
      %v7983 = vld [vmem:[%s7981 + $0x4] sm:$0xf]
      %v7984 = vld [vmem:[%s7981 + $0x8] sm:$0xf]
      %v7985 = vld [vmem:[%s7981 + $0xc] sm:$0xf]
      %v7986 = vld [vmem:[%s7981 + $0x10] sm:$0xf]
      %v7987 = vld [vmem:[%s7981 + $0x14] sm:$0xf]
      %v7988 = vld [vmem:[%s7981 + $0x18] sm:$0xf]
      %v7989 = vld [vmem:[%s7981 + $0x1c] sm:$0xf]
      %v7990 = vld [vmem:[%s7981 + $0x20] sm:$0xf]
      %v7991 = vld [vmem:[%s7981 + $0x24] sm:$0xf]
      %v7992 = vld [vmem:[%s7981 + $0x28] sm:$0xf]
      %v7993 = vld [vmem:[%s7981 + $0x2c] sm:$0xf]
      %v7994 = vld [vmem:[%s7981 + $0x30] sm:$0xf]
      %v7995 = vld [vmem:[%s7981 + $0x34] sm:$0xf]
      %v7996 = vld [vmem:[%s7981 + $0x38] sm:$0xf]
      %v7997 = vld [vmem:[%s7981 + $0x3c] sm:$0xf]
      %v8009 = vunpack.c.l.b16 %v7970
      %v8010 = vunpack.c.l.b16 %v7971
      %v8011 = vunpack.c.l.b16 %v7972
      %v8012 = vunpack.c.l.b16 %v7973
      %v8013 = vunpack.c.l.b16 %v7974
      %v8014 = vunpack.c.l.b16 %v7975
      %v8015 = vunpack.c.l.b16 %v7976
      %v8016 = vunpack.c.l.b16 %v7977
      %v8017 = vunpack.c.l.b16 %v7978
      %v8018 = vunpack.c.l.b16 %v7979
      %v8019 = vunpack.c.l.b16 %v7980
      %v8020 = vpack.c.b16 %v8010, %v8009
      %v8021 = vpack.c.b16 %v8012, %v8011
      %v8022 = vpack.c.b16 %v8014, %v8013
      %v8023 = vpack.c.b16 %v8016, %v8015
      %v8024 = vpack.c.b16 %v8018, %v8017
      %v8025 = vpack.c.b16 %v8019, %v8019
      %v8027 = vshrl.u32 %v8020, 16
      %v8029 = vrot.slane %v8027, 3
      %v8030 = vshll.u32 %v8020, 16
      %v8032 = vrot.slane %v8030, 4
      %v8033 = vor.u32 %v8029, %v8032
      %v8035 = vshrl.u32 %v8021, 16
      %v8037 = vrot.slane %v8035, 3
      %v8038 = vshll.u32 %v8021, 16
      %v8040 = vrot.slane %v8038, 4
      %v8041 = vor.u32 %v8037, %v8040
      %v8042 = vsel %vm1848, %v8033, %v8041
      %v8044 = vshrl.u32 %v8022, 16
      %v8046 = vrot.slane %v8044, 3
      %v8047 = vshll.u32 %v8022, 16
      %v8049 = vrot.slane %v8047, 4
      %v8050 = vor.u32 %v8046, %v8049
      %v8051 = vsel %vm1848, %v8041, %v8050
      %v8053 = vshrl.u32 %v8023, 16
      %v8055 = vrot.slane %v8053, 3
      %v8056 = vshll.u32 %v8023, 16
      %v8058 = vrot.slane %v8056, 4
      %v8059 = vor.u32 %v8055, %v8058
      %v8060 = vsel %vm1848, %v8050, %v8059
      %v8062 = vshrl.u32 %v8024, 16
      %v8064 = vrot.slane %v8062, 3
      %v8065 = vshll.u32 %v8024, 16
      %v8067 = vrot.slane %v8065, 4
      %v8068 = vor.u32 %v8064, %v8067
      %v8069 = vsel %vm1848, %v8059, %v8068
      %v8071 = vshrl.u32 %v8025, 16
      %v8073 = vrot.slane %v8071, 3
      %v8074 = vshll.u32 %v8025, 16
      %v8076 = vrot.slane %v8074, 4
      %v8077 = vor.u32 %v8073, %v8076
      %v8078 = vsel %vm1848, %v8068, %v8077
      %v8100 = vunpack.c.l.b16 %v7982
      %v8101 = vunpack.c.l.b16 %v7983
      %v8102 = vunpack.c.l.b16 %v7984
      %v8103 = vunpack.c.l.b16 %v7985
      %v8104 = vunpack.c.l.b16 %v7986
      %v8105 = vunpack.c.l.b16 %v7987
      %v8106 = vunpack.c.l.b16 %v7988
      %v8107 = vunpack.c.l.b16 %v7989
      %v8108 = vunpack.c.l.b16 %v7990
      %v8109 = vunpack.c.l.b16 %v7991
      %v8110 = vunpack.c.l.b16 %v7992
      %v8111 = vunpack.c.l.b16 %v7993
      %v8112 = vunpack.c.l.b16 %v7994
      %v8113 = vunpack.c.l.b16 %v7995
      %v8114 = vunpack.c.l.b16 %v7996
      %v8115 = vunpack.c.l.b16 %v7997
      %v8116 = vpack.c.b16 %v8101, %v8100
      %v8117 = vpack.c.b16 %v8103, %v8102
      %v8118 = vpack.c.b16 %v8105, %v8104
      %v8119 = vpack.c.b16 %v8107, %v8106
      %v8120 = vpack.c.b16 %v8109, %v8108
      %v8121 = vpack.c.b16 %v8111, %v8110
      %v8122 = vpack.c.b16 %v8113, %v8112
      %v8123 = vpack.c.b16 %v8115, %v8114
      %8132 = vmatprep.subr.bf16.mxu0 0
      %8133 = vmatpush1.bf16.msra.mxu0 %v8123
      %8134 = vmatprep.subr.bf16.mxu0 0
      %8135 = vmatpush1.bf16.msra.mxu0 %v8122
      %8136 = vmatprep.subr.bf16.mxu0 0
      %8137 = vmatpush1.bf16.msra.mxu0 %v8121
      %8138 = vmatprep.subr.bf16.mxu0 0
      %8139 = vmatpush1.bf16.msra.mxu0 %v8120
      %8140 = vmatprep.subr.bf16.mxu0 0
      %8141 = vmatpush1.bf16.msra.mxu0 %v8119
      %8142 = vmatprep.subr.bf16.mxu0 0
      %8143 = vmatpush1.bf16.msra.mxu0 %v8118
      %8144 = vmatprep.subr.bf16.mxu0 0
      %8145 = vmatpush1.bf16.msra.mxu0 %v8117
      %8146 = vmatprep.subr.bf16.mxu0 0
      %8147 = vmatpush1.bf16.msra.mxu0 %v8116
      %8148 = vmatprep.subr.bf16.mxu0 0
      %8149 = vmatpush2.bf16.msra.mxu0 0
      %8150 = vmatprep.subr.bf16.mxu0 0
      %8151 = vmatpush2.bf16.msra.mxu0 0
      %8152 = vmatprep.subr.bf16.mxu0 0
      %8153 = vmatpush2.bf16.msra.mxu0 0
      %8154 = vmatprep.subr.bf16.mxu0 0
      %8155 = vmatpush2.bf16.msra.mxu0 0
      %8156 = vmatprep.subr.bf16.mxu0 0
      %8157 = vmatpush2.bf16.msra.mxu0 0
      %8158 = vmatprep.subr.bf16.mxu0 0
      %8159 = vmatpush2.bf16.msra.mxu0 0
      %8160 = vmatprep.subr.bf16.mxu0 0
      %8161 = vmatpush2.bf16.msra.mxu0 0
      %8162 = vmatprep.subr.bf16.mxu0 0
      %8163 = vmatpush2.bf16.msra.mxu0 0
      %8164 = vmatprep.mubr.bf16.mxu0 0
      %8165 = vmatmul.mubr.bf16.gmra.mxu0 %v8042
      %v8166 = vpop.f32.mrf.mxu0
      %v8167 = vadd.f32 0.0, %v8166
      %v8168 = vpop.f32.mrf.mxu0
      %v8169 = vpop.f32.mrf.mxu0
      %v8170 = vadd.f32 0.0, %v8169
      %v8171 = vpop.f32.mrf.mxu0
      %8172 = vmatprep.mubr.bf16.mxu0 0
      %8173 = vmatmul.mubr.bf16.gmra.mxu0 %v8051
      %v8174 = vpop.f32.mrf.mxu0
      %v8175 = vadd.f32 0.0, %v8174
      %v8176 = vpop.f32.mrf.mxu0
      %v8177 = vpop.f32.mrf.mxu0
      %v8178 = vadd.f32 0.0, %v8177
      %v8179 = vpop.f32.mrf.mxu0
      %8180 = vmatprep.mubr.bf16.mxu0 0
      %8181 = vmatmul.mubr.bf16.gmra.mxu0 %v8060
      %v8182 = vpop.f32.mrf.mxu0
      %v8183 = vadd.f32 0.0, %v8182
      %v8184 = vpop.f32.mrf.mxu0
      %v8185 = vpop.f32.mrf.mxu0
      %v8186 = vadd.f32 0.0, %v8185
      %v8187 = vpop.f32.mrf.mxu0
      %8188 = vmatprep.mubr.bf16.mxu0 0
      %8189 = vmatmul.mubr.bf16.gmra.mxu0 %v8069
      %v8190 = vpop.f32.mrf.mxu0
      %v8191 = vadd.f32 0.0, %v8190
      %v8192 = vpop.f32.mrf.mxu0
      %v8193 = vpop.f32.mrf.mxu0
      %v8194 = vadd.f32 0.0, %v8193
      %v8195 = vpop.f32.mrf.mxu0
      %8196 = vmatprep.mubr.bf16.mxu0 0
      %8197 = vmatmul.mubr.bf16.gmra.mxu0 %v8078
      %v8198 = vpop.f32.mrf.mxu0
      %v8199 = vadd.f32 0.0, %v8198
      %v8200 = vpop.f32.mrf.mxu0
      %v8201 = vpop.f32.mrf.mxu0
      %v8202 = vadd.f32 0.0, %v8201
      %v8203 = vpop.f32.mrf.mxu0
      %8204 = vdwg.mxu0
      %v8205 = vadd.f32 %v7960, %v8167
      %v8206 = vadd.f32 %v7961, %v8170
      %v8207 = vadd.f32 %v7962, %v8175
      %v8208 = vadd.f32 %v7963, %v8178
      %v8209 = vadd.f32 %v7964, %v8183
      %v8210 = vadd.f32 %v7965, %v8186
      %v8211 = vadd.f32 %v7966, %v8191
      %v8212 = vadd.f32 %v7967, %v8194
      %v8213 = vadd.f32 %v7968, %v8199
      %v8214 = vadd.f32 %v7969, %v8202
      %s8215 = scalar_lea.vmem %s2, 1408
      %v8216 = vld [vmem:[%s8215] sm:$0xf]
      %v8217 = vld [vmem:[%s8215 + $0x4] sm:$0xf]
      %v8218 = vld [vmem:[%s8215 + $0x8] sm:$0xf]
      %v8219 = vld [vmem:[%s8215 + $0xc] sm:$0xf]
      %v8220 = vld [vmem:[%s8215 + $0x10] sm:$0xf]
      %v8221 = vld [vmem:[%s8215 + $0x14] sm:$0xf]
      %v8222 = vld [vmem:[%s8215 + $0x18] sm:$0xf]
      %v8223 = vld [vmem:[%s8215 + $0x1c] sm:$0xf]
      %v8224 = vld [vmem:[%s8215 + $0x20] sm:$0xf]
      %v8225 = vld [vmem:[%s8215 + $0x24] sm:$0xf]
      %v8226 = vld [vmem:[%s8215 + $0x28] sm:$0xf]
      %v8227 = vld [vmem:[%s8215 + $0x2c] sm:$0xf]
      %v8228 = vld [vmem:[%s8215 + $0x30] sm:$0xf]
      %v8229 = vld [vmem:[%s8215 + $0x34] sm:$0xf]
      %v8230 = vld [vmem:[%s8215 + $0x38] sm:$0xf]
      %v8231 = vld [vmem:[%s8215 + $0x3c] sm:$0xf]
      %v8232 = vpack.c.b16 %v8011, %v8010
      %v8233 = vpack.c.b16 %v8013, %v8012
      %v8234 = vpack.c.b16 %v8015, %v8014
      %v8235 = vpack.c.b16 %v8017, %v8016
      %v8236 = vpack.c.b16 %v8019, %v8018
      %v8258 = vunpack.c.l.b16 %v8216
      %v8259 = vunpack.c.l.b16 %v8217
      %v8260 = vunpack.c.l.b16 %v8218
      %v8261 = vunpack.c.l.b16 %v8219
      %v8262 = vunpack.c.l.b16 %v8220
      %v8263 = vunpack.c.l.b16 %v8221
      %v8264 = vunpack.c.l.b16 %v8222
      %v8265 = vunpack.c.l.b16 %v8223
      %v8266 = vunpack.c.l.b16 %v8224
      %v8267 = vunpack.c.l.b16 %v8225
      %v8268 = vunpack.c.l.b16 %v8226
      %v8269 = vunpack.c.l.b16 %v8227
      %v8270 = vunpack.c.l.b16 %v8228
      %v8271 = vunpack.c.l.b16 %v8229
      %v8272 = vunpack.c.l.b16 %v8230
      %v8273 = vunpack.c.l.b16 %v8231
      %v8274 = vpack.c.b16 %v8259, %v8258
      %v8275 = vpack.c.b16 %v8261, %v8260
      %v8276 = vpack.c.b16 %v8263, %v8262
      %v8277 = vpack.c.b16 %v8265, %v8264
      %v8278 = vpack.c.b16 %v8267, %v8266
      %v8279 = vpack.c.b16 %v8269, %v8268
      %v8280 = vpack.c.b16 %v8271, %v8270
      %v8281 = vpack.c.b16 %v8273, %v8272
      %8290 = vmatprep.subr.bf16.mxu0 0
      %8291 = vmatpush1.bf16.msra.mxu0 %v8281
      %8292 = vmatprep.subr.bf16.mxu0 0
      %8293 = vmatpush1.bf16.msra.mxu0 %v8280
      %8294 = vmatprep.subr.bf16.mxu0 0
      %8295 = vmatpush1.bf16.msra.mxu0 %v8279
      %8296 = vmatprep.subr.bf16.mxu0 0
      %8297 = vmatpush1.bf16.msra.mxu0 %v8278
      %8298 = vmatprep.subr.bf16.mxu0 0
      %8299 = vmatpush1.bf16.msra.mxu0 %v8277
      %8300 = vmatprep.subr.bf16.mxu0 0
      %8301 = vmatpush1.bf16.msra.mxu0 %v8276
      %8302 = vmatprep.subr.bf16.mxu0 0
      %8303 = vmatpush1.bf16.msra.mxu0 %v8275
      %8304 = vmatprep.subr.bf16.mxu0 0
      %8305 = vmatpush1.bf16.msra.mxu0 %v8274
      %8306 = vmatprep.subr.bf16.mxu0 0
      %8307 = vmatpush2.bf16.msra.mxu0 0
      %8308 = vmatprep.subr.bf16.mxu0 0
      %8309 = vmatpush2.bf16.msra.mxu0 0
      %8310 = vmatprep.subr.bf16.mxu0 0
      %8311 = vmatpush2.bf16.msra.mxu0 0
      %8312 = vmatprep.subr.bf16.mxu0 0
      %8313 = vmatpush2.bf16.msra.mxu0 0
      %8314 = vmatprep.subr.bf16.mxu0 0
      %8315 = vmatpush2.bf16.msra.mxu0 0
      %8316 = vmatprep.subr.bf16.mxu0 0
      %8317 = vmatpush2.bf16.msra.mxu0 0
      %8318 = vmatprep.subr.bf16.mxu0 0
      %8319 = vmatpush2.bf16.msra.mxu0 0
      %8320 = vmatprep.subr.bf16.mxu0 0
      %8321 = vmatpush2.bf16.msra.mxu0 0
      %8322 = vmatprep.mubr.bf16.mxu0 0
      %8323 = vmatmul.mubr.bf16.gmra.mxu0 %v8232
      %v8324 = vpop.f32.mrf.mxu0
      %v8325 = vadd.f32 0.0, %v8324
      %v8326 = vpop.f32.mrf.mxu0
      %v8327 = vpop.f32.mrf.mxu0
      %v8328 = vadd.f32 0.0, %v8327
      %v8329 = vpop.f32.mrf.mxu0
      %8330 = vmatprep.mubr.bf16.mxu0 0
      %8331 = vmatmul.mubr.bf16.gmra.mxu0 %v8233
      %v8332 = vpop.f32.mrf.mxu0
      %v8333 = vadd.f32 0.0, %v8332
      %v8334 = vpop.f32.mrf.mxu0
      %v8335 = vpop.f32.mrf.mxu0
      %v8336 = vadd.f32 0.0, %v8335
      %v8337 = vpop.f32.mrf.mxu0
      %8338 = vmatprep.mubr.bf16.mxu0 0
      %8339 = vmatmul.mubr.bf16.gmra.mxu0 %v8234
      %v8340 = vpop.f32.mrf.mxu0
      %v8341 = vadd.f32 0.0, %v8340
      %v8342 = vpop.f32.mrf.mxu0
      %v8343 = vpop.f32.mrf.mxu0
      %v8344 = vadd.f32 0.0, %v8343
      %v8345 = vpop.f32.mrf.mxu0
      %8346 = vmatprep.mubr.bf16.mxu0 0
      %8347 = vmatmul.mubr.bf16.gmra.mxu0 %v8235
      %v8348 = vpop.f32.mrf.mxu0
      %v8349 = vadd.f32 0.0, %v8348
      %v8350 = vpop.f32.mrf.mxu0
      %v8351 = vpop.f32.mrf.mxu0
      %v8352 = vadd.f32 0.0, %v8351
      %v8353 = vpop.f32.mrf.mxu0
      %8354 = vmatprep.mubr.bf16.mxu0 0
      %8355 = vmatmul.mubr.bf16.gmra.mxu0 %v8236
      %v8356 = vpop.f32.mrf.mxu0
      %v8357 = vadd.f32 0.0, %v8356
      %v8358 = vpop.f32.mrf.mxu0
      %v8359 = vpop.f32.mrf.mxu0
      %v8360 = vadd.f32 0.0, %v8359
      %v8361 = vpop.f32.mrf.mxu0
      %8362 = vdwg.mxu0
      %v8363 = vadd.f32 %v8205, %v8325
      %v8364 = vadd.f32 %v8206, %v8328
      %v8365 = vadd.f32 %v8207, %v8333
      %v8366 = vadd.f32 %v8208, %v8336
      %v8367 = vadd.f32 %v8209, %v8341
      %v8368 = vadd.f32 %v8210, %v8344
      %v8369 = vadd.f32 %v8211, %v8349
      %v8370 = vadd.f32 %v8212, %v8352
      %v8371 = vadd.f32 %v8213, %v8357
      %v8372 = vadd.f32 %v8214, %v8360
      %v8373 = vld [vmem:[#allocation3 + $0x8] sm:$0xf]
      %v8374 = vld [vmem:[#allocation3 + $0xc] sm:$0xf]
      %v8375 = vld [vmem:[#allocation3 + $0x10] sm:$0xf]
      %v8376 = vld [vmem:[#allocation3 + $0x14] sm:$0xf]
      %v8377 = vld [vmem:[#allocation3 + $0x18] sm:$0xf]
      %v8378 = vld [vmem:[#allocation3 + $0x1c] sm:$0xf]
      %v8379 = vld [vmem:[#allocation3 + $0x20] sm:$0xf]
      %v8380 = vld [vmem:[#allocation3 + $0x24] sm:$0xf]
      %v8381 = vld [vmem:[#allocation3 + $0x28] sm:$0xf]
      %v8382 = vld [vmem:[#allocation3 + $0x2c] sm:$0xf]
      %v8383 = vld [vmem:[#allocation3 + $0x30] sm:$0x1]
      %s8384 = scalar_lea.vmem %s2, 1472
      %v8385 = vld [vmem:[%s8384] sm:$0xf]
      %v8386 = vld [vmem:[%s8384 + $0x4] sm:$0xf]
      %v8387 = vld [vmem:[%s8384 + $0x8] sm:$0xf]
      %v8388 = vld [vmem:[%s8384 + $0xc] sm:$0xf]
      %v8389 = vld [vmem:[%s8384 + $0x10] sm:$0xf]
      %v8390 = vld [vmem:[%s8384 + $0x14] sm:$0xf]
      %v8391 = vld [vmem:[%s8384 + $0x18] sm:$0xf]
      %v8392 = vld [vmem:[%s8384 + $0x1c] sm:$0xf]
      %v8393 = vld [vmem:[%s8384 + $0x20] sm:$0xf]
      %v8394 = vld [vmem:[%s8384 + $0x24] sm:$0xf]
      %v8395 = vld [vmem:[%s8384 + $0x28] sm:$0xf]
      %v8396 = vld [vmem:[%s8384 + $0x2c] sm:$0xf]
      %v8397 = vld [vmem:[%s8384 + $0x30] sm:$0xf]
      %v8398 = vld [vmem:[%s8384 + $0x34] sm:$0xf]
      %v8399 = vld [vmem:[%s8384 + $0x38] sm:$0xf]
      %v8400 = vld [vmem:[%s8384 + $0x3c] sm:$0xf]
      %v8412 = vunpack.c.l.b16 %v8373
      %v8413 = vunpack.c.l.b16 %v8374
      %v8414 = vunpack.c.l.b16 %v8375
      %v8415 = vunpack.c.l.b16 %v8376
      %v8416 = vunpack.c.l.b16 %v8377
      %v8417 = vunpack.c.l.b16 %v8378
      %v8418 = vunpack.c.l.b16 %v8379
      %v8419 = vunpack.c.l.b16 %v8380
      %v8420 = vunpack.c.l.b16 %v8381
      %v8421 = vunpack.c.l.b16 %v8382
      %v8422 = vunpack.c.l.b16 %v8383
      %v8423 = vpack.c.b16 %v8413, %v8412
      %v8424 = vpack.c.b16 %v8415, %v8414
      %v8425 = vpack.c.b16 %v8417, %v8416
      %v8426 = vpack.c.b16 %v8419, %v8418
      %v8427 = vpack.c.b16 %v8421, %v8420
      %v8428 = vpack.c.b16 %v8422, %v8422
      %v8430 = vshrl.u32 %v8423, 16
      %v8432 = vshll.u32 %v8423, 16
      %v8434 = vrot.slane %v8432, 1
      %v8435 = vor.u32 %v8430, %v8434
      %v8437 = vshll.u32 %v8424, 16
      %v8439 = vrot.slane %v8437, 1
      %v8440 = vsel %vm3270, %v8435, %v8439
      %v8441 = vshrl.u32 %v8424, 16
      %v8443 = vor.u32 %v8441, %v8439
      %v8445 = vshll.u32 %v8425, 16
      %v8447 = vrot.slane %v8445, 1
      %v8448 = vsel %vm3270, %v8443, %v8447
      %v8449 = vshrl.u32 %v8425, 16
      %v8451 = vor.u32 %v8449, %v8447
      %v8453 = vshll.u32 %v8426, 16
      %v8455 = vrot.slane %v8453, 1
      %v8456 = vsel %vm3270, %v8451, %v8455
      %v8457 = vshrl.u32 %v8426, 16
      %v8459 = vor.u32 %v8457, %v8455
      %v8461 = vshll.u32 %v8427, 16
      %v8463 = vrot.slane %v8461, 1
      %v8464 = vsel %vm3270, %v8459, %v8463
      %v8465 = vshrl.u32 %v8427, 16
      %v8467 = vor.u32 %v8465, %v8463
      %v8469 = vshll.u32 %v8428, 16
      %v8471 = vrot.slane %v8469, 1
      %v8472 = vsel %vm3270, %v8467, %v8471
      %v8494 = vunpack.c.l.b16 %v8385
      %v8495 = vunpack.c.l.b16 %v8386
      %v8496 = vunpack.c.l.b16 %v8387
      %v8497 = vunpack.c.l.b16 %v8388
      %v8498 = vunpack.c.l.b16 %v8389
      %v8499 = vunpack.c.l.b16 %v8390
      %v8500 = vunpack.c.l.b16 %v8391
      %v8501 = vunpack.c.l.b16 %v8392
      %v8502 = vunpack.c.l.b16 %v8393
      %v8503 = vunpack.c.l.b16 %v8394
      %v8504 = vunpack.c.l.b16 %v8395
      %v8505 = vunpack.c.l.b16 %v8396
      %v8506 = vunpack.c.l.b16 %v8397
      %v8507 = vunpack.c.l.b16 %v8398
      %v8508 = vunpack.c.l.b16 %v8399
      %v8509 = vunpack.c.l.b16 %v8400
      %v8510 = vpack.c.b16 %v8495, %v8494
      %v8511 = vpack.c.b16 %v8497, %v8496
      %v8512 = vpack.c.b16 %v8499, %v8498
      %v8513 = vpack.c.b16 %v8501, %v8500
      %v8514 = vpack.c.b16 %v8503, %v8502
      %v8515 = vpack.c.b16 %v8505, %v8504
      %v8516 = vpack.c.b16 %v8507, %v8506
      %v8517 = vpack.c.b16 %v8509, %v8508
      %8526 = vmatprep.subr.bf16.mxu0 0
      %8527 = vmatpush1.bf16.msra.mxu0 %v8517
      %8528 = vmatprep.subr.bf16.mxu0 0
      %8529 = vmatpush1.bf16.msra.mxu0 %v8516
      %8530 = vmatprep.subr.bf16.mxu0 0
      %8531 = vmatpush1.bf16.msra.mxu0 %v8515
      %8532 = vmatprep.subr.bf16.mxu0 0
      %8533 = vmatpush1.bf16.msra.mxu0 %v8514
      %8534 = vmatprep.subr.bf16.mxu0 0
      %8535 = vmatpush1.bf16.msra.mxu0 %v8513
      %8536 = vmatprep.subr.bf16.mxu0 0
      %8537 = vmatpush1.bf16.msra.mxu0 %v8512
      %8538 = vmatprep.subr.bf16.mxu0 0
      %8539 = vmatpush1.bf16.msra.mxu0 %v8511
      %8540 = vmatprep.subr.bf16.mxu0 0
      %8541 = vmatpush1.bf16.msra.mxu0 %v8510
      %8542 = vmatprep.subr.bf16.mxu0 0
      %8543 = vmatpush2.bf16.msra.mxu0 0
      %8544 = vmatprep.subr.bf16.mxu0 0
      %8545 = vmatpush2.bf16.msra.mxu0 0
      %8546 = vmatprep.subr.bf16.mxu0 0
      %8547 = vmatpush2.bf16.msra.mxu0 0
      %8548 = vmatprep.subr.bf16.mxu0 0
      %8549 = vmatpush2.bf16.msra.mxu0 0
      %8550 = vmatprep.subr.bf16.mxu0 0
      %8551 = vmatpush2.bf16.msra.mxu0 0
      %8552 = vmatprep.subr.bf16.mxu0 0
      %8553 = vmatpush2.bf16.msra.mxu0 0
      %8554 = vmatprep.subr.bf16.mxu0 0
      %8555 = vmatpush2.bf16.msra.mxu0 0
      %8556 = vmatprep.subr.bf16.mxu0 0
      %8557 = vmatpush2.bf16.msra.mxu0 0
      %8558 = vmatprep.mubr.bf16.mxu0 0
      %8559 = vmatmul.mubr.bf16.gmra.mxu0 %v8440
      %v8560 = vpop.f32.mrf.mxu0
      %v8561 = vadd.f32 0.0, %v8560
      %v8562 = vpop.f32.mrf.mxu0
      %v8563 = vpop.f32.mrf.mxu0
      %v8564 = vadd.f32 0.0, %v8563
      %v8565 = vpop.f32.mrf.mxu0
      %8566 = vmatprep.mubr.bf16.mxu0 0
      %8567 = vmatmul.mubr.bf16.gmra.mxu0 %v8448
      %v8568 = vpop.f32.mrf.mxu0
      %v8569 = vadd.f32 0.0, %v8568
      %v8570 = vpop.f32.mrf.mxu0
      %v8571 = vpop.f32.mrf.mxu0
      %v8572 = vadd.f32 0.0, %v8571
      %v8573 = vpop.f32.mrf.mxu0
      %8574 = vmatprep.mubr.bf16.mxu0 0
      %8575 = vmatmul.mubr.bf16.gmra.mxu0 %v8456
      %v8576 = vpop.f32.mrf.mxu0
      %v8577 = vadd.f32 0.0, %v8576
      %v8578 = vpop.f32.mrf.mxu0
      %v8579 = vpop.f32.mrf.mxu0
      %v8580 = vadd.f32 0.0, %v8579
      %v8581 = vpop.f32.mrf.mxu0
      %8582 = vmatprep.mubr.bf16.mxu0 0
      %8583 = vmatmul.mubr.bf16.gmra.mxu0 %v8464
      %v8584 = vpop.f32.mrf.mxu0
      %v8585 = vadd.f32 0.0, %v8584
      %v8586 = vpop.f32.mrf.mxu0
      %v8587 = vpop.f32.mrf.mxu0
      %v8588 = vadd.f32 0.0, %v8587
      %v8589 = vpop.f32.mrf.mxu0
      %8590 = vmatprep.mubr.bf16.mxu0 0
      %8591 = vmatmul.mubr.bf16.gmra.mxu0 %v8472
      %v8592 = vpop.f32.mrf.mxu0
      %v8593 = vadd.f32 0.0, %v8592
      %v8594 = vpop.f32.mrf.mxu0
      %v8595 = vpop.f32.mrf.mxu0
      %v8596 = vadd.f32 0.0, %v8595
      %v8597 = vpop.f32.mrf.mxu0
      %8598 = vdwg.mxu0
      %v8599 = vadd.f32 %v8363, %v8561
      %v8600 = vadd.f32 %v8364, %v8564
      %v8601 = vadd.f32 %v8365, %v8569
      %v8602 = vadd.f32 %v8366, %v8572
      %v8603 = vadd.f32 %v8367, %v8577
      %v8604 = vadd.f32 %v8368, %v8580
      %v8605 = vadd.f32 %v8369, %v8585
      %v8606 = vadd.f32 %v8370, %v8588
      %v8607 = vadd.f32 %v8371, %v8593
      %v8608 = vadd.f32 %v8372, %v8596
      %v8609 = vld [vmem:[#allocation3 + $0xc] sm:$0xf]
      %v8610 = vld [vmem:[#allocation3 + $0x10] sm:$0xf]
      %v8611 = vld [vmem:[#allocation3 + $0x14] sm:$0xf]
      %v8612 = vld [vmem:[#allocation3 + $0x18] sm:$0xf]
      %v8613 = vld [vmem:[#allocation3 + $0x1c] sm:$0xf]
      %v8614 = vld [vmem:[#allocation3 + $0x20] sm:$0xf]
      %v8615 = vld [vmem:[#allocation3 + $0x24] sm:$0xf]
      %v8616 = vld [vmem:[#allocation3 + $0x28] sm:$0xf]
      %v8617 = vld [vmem:[#allocation3 + $0x2c] sm:$0xf]
      %v8618 = vld [vmem:[#allocation3 + $0x30] sm:$0xf]
      %v8619 = vld [vmem:[#allocation3 + $0x34] sm:$0x1]
      %s8620 = scalar_lea.vmem %s2, 1536
      %v8621 = vld [vmem:[%s8620] sm:$0xf]
      %v8622 = vld [vmem:[%s8620 + $0x4] sm:$0xf]
      %v8623 = vld [vmem:[%s8620 + $0x8] sm:$0xf]
      %v8624 = vld [vmem:[%s8620 + $0xc] sm:$0xf]
      %v8625 = vld [vmem:[%s8620 + $0x10] sm:$0xf]
      %v8626 = vld [vmem:[%s8620 + $0x14] sm:$0xf]
      %v8627 = vld [vmem:[%s8620 + $0x18] sm:$0xf]
      %v8628 = vld [vmem:[%s8620 + $0x1c] sm:$0xf]
      %v8629 = vld [vmem:[%s8620 + $0x20] sm:$0xf]
      %v8630 = vld [vmem:[%s8620 + $0x24] sm:$0xf]
      %v8631 = vld [vmem:[%s8620 + $0x28] sm:$0xf]
      %v8632 = vld [vmem:[%s8620 + $0x2c] sm:$0xf]
      %v8633 = vld [vmem:[%s8620 + $0x30] sm:$0xf]
      %v8634 = vld [vmem:[%s8620 + $0x34] sm:$0xf]
      %v8635 = vld [vmem:[%s8620 + $0x38] sm:$0xf]
      %v8636 = vld [vmem:[%s8620 + $0x3c] sm:$0xf]
      %v8648 = vunpack.c.l.b16 %v8609
      %v8649 = vunpack.c.l.b16 %v8610
      %v8650 = vunpack.c.l.b16 %v8611
      %v8651 = vunpack.c.l.b16 %v8612
      %v8652 = vunpack.c.l.b16 %v8613
      %v8653 = vunpack.c.l.b16 %v8614
      %v8654 = vunpack.c.l.b16 %v8615
      %v8655 = vunpack.c.l.b16 %v8616
      %v8656 = vunpack.c.l.b16 %v8617
      %v8657 = vunpack.c.l.b16 %v8618
      %v8658 = vunpack.c.l.b16 %v8619
      %v8659 = vpack.c.b16 %v8649, %v8648
      %v8660 = vpack.c.b16 %v8651, %v8650
      %v8661 = vpack.c.b16 %v8653, %v8652
      %v8662 = vpack.c.b16 %v8655, %v8654
      %v8663 = vpack.c.b16 %v8657, %v8656
      %v8664 = vpack.c.b16 %v8658, %v8658
      %v8666 = vshrl.u32 %v8659, 16
      %v8668 = vshll.u32 %v8659, 16
      %v8670 = vrot.slane %v8668, 1
      %v8671 = vor.u32 %v8666, %v8670
      %v8673 = vshll.u32 %v8660, 16
      %v8675 = vrot.slane %v8673, 1
      %v8676 = vsel %vm3270, %v8671, %v8675
      %v8677 = vshrl.u32 %v8660, 16
      %v8679 = vor.u32 %v8677, %v8675
      %v8681 = vshll.u32 %v8661, 16
      %v8683 = vrot.slane %v8681, 1
      %v8684 = vsel %vm3270, %v8679, %v8683
      %v8685 = vshrl.u32 %v8661, 16
      %v8687 = vor.u32 %v8685, %v8683
      %v8689 = vshll.u32 %v8662, 16
      %v8691 = vrot.slane %v8689, 1
      %v8692 = vsel %vm3270, %v8687, %v8691
      %v8693 = vshrl.u32 %v8662, 16
      %v8695 = vor.u32 %v8693, %v8691
      %v8697 = vshll.u32 %v8663, 16
      %v8699 = vrot.slane %v8697, 1
      %v8700 = vsel %vm3270, %v8695, %v8699
      %v8701 = vshrl.u32 %v8663, 16
      %v8703 = vor.u32 %v8701, %v8699
      %v8705 = vshll.u32 %v8664, 16
      %v8707 = vrot.slane %v8705, 1
      %v8708 = vsel %vm3270, %v8703, %v8707
      %v8730 = vunpack.c.l.b16 %v8621
      %v8731 = vunpack.c.l.b16 %v8622
      %v8732 = vunpack.c.l.b16 %v8623
      %v8733 = vunpack.c.l.b16 %v8624
      %v8734 = vunpack.c.l.b16 %v8625
      %v8735 = vunpack.c.l.b16 %v8626
      %v8736 = vunpack.c.l.b16 %v8627
      %v8737 = vunpack.c.l.b16 %v8628
      %v8738 = vunpack.c.l.b16 %v8629
      %v8739 = vunpack.c.l.b16 %v8630
      %v8740 = vunpack.c.l.b16 %v8631
      %v8741 = vunpack.c.l.b16 %v8632
      %v8742 = vunpack.c.l.b16 %v8633
      %v8743 = vunpack.c.l.b16 %v8634
      %v8744 = vunpack.c.l.b16 %v8635
      %v8745 = vunpack.c.l.b16 %v8636
      %v8746 = vpack.c.b16 %v8731, %v8730
      %v8747 = vpack.c.b16 %v8733, %v8732
      %v8748 = vpack.c.b16 %v8735, %v8734
      %v8749 = vpack.c.b16 %v8737, %v8736
      %v8750 = vpack.c.b16 %v8739, %v8738
      %v8751 = vpack.c.b16 %v8741, %v8740
      %v8752 = vpack.c.b16 %v8743, %v8742
      %v8753 = vpack.c.b16 %v8745, %v8744
      %8762 = vmatprep.subr.bf16.mxu0 0
      %8763 = vmatpush1.bf16.msra.mxu0 %v8753
      %8764 = vmatprep.subr.bf16.mxu0 0
      %8765 = vmatpush1.bf16.msra.mxu0 %v8752
      %8766 = vmatprep.subr.bf16.mxu0 0
      %8767 = vmatpush1.bf16.msra.mxu0 %v8751
      %8768 = vmatprep.subr.bf16.mxu0 0
      %8769 = vmatpush1.bf16.msra.mxu0 %v8750
      %8770 = vmatprep.subr.bf16.mxu0 0
      %8771 = vmatpush1.bf16.msra.mxu0 %v8749
      %8772 = vmatprep.subr.bf16.mxu0 0
      %8773 = vmatpush1.bf16.msra.mxu0 %v8748
      %8774 = vmatprep.subr.bf16.mxu0 0
      %8775 = vmatpush1.bf16.msra.mxu0 %v8747
      %8776 = vmatprep.subr.bf16.mxu0 0
      %8777 = vmatpush1.bf16.msra.mxu0 %v8746
      %8778 = vmatprep.subr.bf16.mxu0 0
      %8779 = vmatpush2.bf16.msra.mxu0 0
      %8780 = vmatprep.subr.bf16.mxu0 0
      %8781 = vmatpush2.bf16.msra.mxu0 0
      %8782 = vmatprep.subr.bf16.mxu0 0
      %8783 = vmatpush2.bf16.msra.mxu0 0
      %8784 = vmatprep.subr.bf16.mxu0 0
      %8785 = vmatpush2.bf16.msra.mxu0 0
      %8786 = vmatprep.subr.bf16.mxu0 0
      %8787 = vmatpush2.bf16.msra.mxu0 0
      %8788 = vmatprep.subr.bf16.mxu0 0
      %8789 = vmatpush2.bf16.msra.mxu0 0
      %8790 = vmatprep.subr.bf16.mxu0 0
      %8791 = vmatpush2.bf16.msra.mxu0 0
      %8792 = vmatprep.subr.bf16.mxu0 0
      %8793 = vmatpush2.bf16.msra.mxu0 0
      %8794 = vmatprep.mubr.bf16.mxu0 0
      %8795 = vmatmul.mubr.bf16.gmra.mxu0 %v8676
      %v8796 = vpop.f32.mrf.mxu0
      %v8797 = vadd.f32 0.0, %v8796
      %v8798 = vpop.f32.mrf.mxu0
      %v8799 = vpop.f32.mrf.mxu0
      %v8800 = vadd.f32 0.0, %v8799
      %v8801 = vpop.f32.mrf.mxu0
      %8802 = vmatprep.mubr.bf16.mxu0 0
      %8803 = vmatmul.mubr.bf16.gmra.mxu0 %v8684
      %v8804 = vpop.f32.mrf.mxu0
      %v8805 = vadd.f32 0.0, %v8804
      %v8806 = vpop.f32.mrf.mxu0
      %v8807 = vpop.f32.mrf.mxu0
      %v8808 = vadd.f32 0.0, %v8807
      %v8809 = vpop.f32.mrf.mxu0
      %8810 = vmatprep.mubr.bf16.mxu0 0
      %8811 = vmatmul.mubr.bf16.gmra.mxu0 %v8692
      %v8812 = vpop.f32.mrf.mxu0
      %v8813 = vadd.f32 0.0, %v8812
      %v8814 = vpop.f32.mrf.mxu0
      %v8815 = vpop.f32.mrf.mxu0
      %v8816 = vadd.f32 0.0, %v8815
      %v8817 = vpop.f32.mrf.mxu0
      %8818 = vmatprep.mubr.bf16.mxu0 0
      %8819 = vmatmul.mubr.bf16.gmra.mxu0 %v8700
      %v8820 = vpop.f32.mrf.mxu0
      %v8821 = vadd.f32 0.0, %v8820
      %v8822 = vpop.f32.mrf.mxu0
      %v8823 = vpop.f32.mrf.mxu0
      %v8824 = vadd.f32 0.0, %v8823
      %v8825 = vpop.f32.mrf.mxu0
      %8826 = vmatprep.mubr.bf16.mxu0 0
      %8827 = vmatmul.mubr.bf16.gmra.mxu0 %v8708
      %v8828 = vpop.f32.mrf.mxu0
      %v8829 = vadd.f32 0.0, %v8828
      %v8830 = vpop.f32.mrf.mxu0
      %v8831 = vpop.f32.mrf.mxu0
      %v8832 = vadd.f32 0.0, %v8831
      %v8833 = vpop.f32.mrf.mxu0
      %8834 = vdwg.mxu0
      %v8835 = vadd.f32 %v8599, %v8797
      %v8836 = vadd.f32 %v8600, %v8800
      %v8837 = vadd.f32 %v8601, %v8805
      %v8838 = vadd.f32 %v8602, %v8808
      %v8839 = vadd.f32 %v8603, %v8813
      %v8840 = vadd.f32 %v8604, %v8816
      %v8841 = vadd.f32 %v8605, %v8821
      %v8842 = vadd.f32 %v8606, %v8824
      %v8843 = vadd.f32 %v8607, %v8829
      %v8844 = vadd.f32 %v8608, %v8832
      %v8845 = vld [vmem:[#allocation3 + $0xc] sm:$0xe]
      %s8846 = scalar_lea.vmem %s2, 1600
      %v8847 = vld [vmem:[%s8846] sm:$0xf]
      %v8848 = vld [vmem:[%s8846 + $0x4] sm:$0xf]
      %v8849 = vld [vmem:[%s8846 + $0x8] sm:$0xf]
      %v8850 = vld [vmem:[%s8846 + $0xc] sm:$0xf]
      %v8851 = vld [vmem:[%s8846 + $0x10] sm:$0xf]
      %v8852 = vld [vmem:[%s8846 + $0x14] sm:$0xf]
      %v8853 = vld [vmem:[%s8846 + $0x18] sm:$0xf]
      %v8854 = vld [vmem:[%s8846 + $0x1c] sm:$0xf]
      %v8855 = vld [vmem:[%s8846 + $0x20] sm:$0xf]
      %v8856 = vld [vmem:[%s8846 + $0x24] sm:$0xf]
      %v8857 = vld [vmem:[%s8846 + $0x28] sm:$0xf]
      %v8858 = vld [vmem:[%s8846 + $0x2c] sm:$0xf]
      %v8859 = vld [vmem:[%s8846 + $0x30] sm:$0xf]
      %v8860 = vld [vmem:[%s8846 + $0x34] sm:$0xf]
      %v8861 = vld [vmem:[%s8846 + $0x38] sm:$0xf]
      %v8862 = vld [vmem:[%s8846 + $0x3c] sm:$0xf]
      %v8864 = vunpack.c.l.b16 %v8845
      %v8865 = vpack.c.b16 %v8649, %v8864
      %v8866 = vrot.slane %v8865, 1
      %v8867 = vrot.slane %v8660, 1
      %v8868 = vsel %vm4293, %v8866, %v8867
      %v8869 = vrot.slane %v8661, 1
      %v8870 = vsel %vm4293, %v8867, %v8869
      %v8871 = vrot.slane %v8662, 1
      %v8872 = vsel %vm4293, %v8869, %v8871
      %v8873 = vrot.slane %v8663, 1
      %v8874 = vsel %vm4293, %v8871, %v8873
      %v8875 = vrot.slane %v8664, 1
      %v8876 = vsel %vm4293, %v8873, %v8875
      %v8898 = vunpack.c.l.b16 %v8847
      %v8899 = vunpack.c.l.b16 %v8848
      %v8900 = vunpack.c.l.b16 %v8849
      %v8901 = vunpack.c.l.b16 %v8850
      %v8902 = vunpack.c.l.b16 %v8851
      %v8903 = vunpack.c.l.b16 %v8852
      %v8904 = vunpack.c.l.b16 %v8853
      %v8905 = vunpack.c.l.b16 %v8854
      %v8906 = vunpack.c.l.b16 %v8855
      %v8907 = vunpack.c.l.b16 %v8856
      %v8908 = vunpack.c.l.b16 %v8857
      %v8909 = vunpack.c.l.b16 %v8858
      %v8910 = vunpack.c.l.b16 %v8859
      %v8911 = vunpack.c.l.b16 %v8860
      %v8912 = vunpack.c.l.b16 %v8861
      %v8913 = vunpack.c.l.b16 %v8862
      %v8914 = vpack.c.b16 %v8899, %v8898
      %v8915 = vpack.c.b16 %v8901, %v8900
      %v8916 = vpack.c.b16 %v8903, %v8902
      %v8917 = vpack.c.b16 %v8905, %v8904
      %v8918 = vpack.c.b16 %v8907, %v8906
      %v8919 = vpack.c.b16 %v8909, %v8908
      %v8920 = vpack.c.b16 %v8911, %v8910
      %v8921 = vpack.c.b16 %v8913, %v8912
      %8930 = vmatprep.subr.bf16.mxu0 0
      %8931 = vmatpush1.bf16.msra.mxu0 %v8921
      %8932 = vmatprep.subr.bf16.mxu0 0
      %8933 = vmatpush1.bf16.msra.mxu0 %v8920
      %8934 = vmatprep.subr.bf16.mxu0 0
      %8935 = vmatpush1.bf16.msra.mxu0 %v8919
      %8936 = vmatprep.subr.bf16.mxu0 0
      %8937 = vmatpush1.bf16.msra.mxu0 %v8918
      %8938 = vmatprep.subr.bf16.mxu0 0
      %8939 = vmatpush1.bf16.msra.mxu0 %v8917
      %8940 = vmatprep.subr.bf16.mxu0 0
      %8941 = vmatpush1.bf16.msra.mxu0 %v8916
      %8942 = vmatprep.subr.bf16.mxu0 0
      %8943 = vmatpush1.bf16.msra.mxu0 %v8915
      %8944 = vmatprep.subr.bf16.mxu0 0
      %8945 = vmatpush1.bf16.msra.mxu0 %v8914
      %8946 = vmatprep.subr.bf16.mxu0 0
      %8947 = vmatpush2.bf16.msra.mxu0 0
      %8948 = vmatprep.subr.bf16.mxu0 0
      %8949 = vmatpush2.bf16.msra.mxu0 0
      %8950 = vmatprep.subr.bf16.mxu0 0
      %8951 = vmatpush2.bf16.msra.mxu0 0
      %8952 = vmatprep.subr.bf16.mxu0 0
      %8953 = vmatpush2.bf16.msra.mxu0 0
      %8954 = vmatprep.subr.bf16.mxu0 0
      %8955 = vmatpush2.bf16.msra.mxu0 0
      %8956 = vmatprep.subr.bf16.mxu0 0
      %8957 = vmatpush2.bf16.msra.mxu0 0
      %8958 = vmatprep.subr.bf16.mxu0 0
      %8959 = vmatpush2.bf16.msra.mxu0 0
      %8960 = vmatprep.subr.bf16.mxu0 0
      %8961 = vmatpush2.bf16.msra.mxu0 0
      %8962 = vmatprep.mubr.bf16.mxu0 0
      %8963 = vmatmul.mubr.bf16.gmra.mxu0 %v8868
      %v8964 = vpop.f32.mrf.mxu0
      %v8965 = vadd.f32 0.0, %v8964
      %v8966 = vpop.f32.mrf.mxu0
      %v8967 = vpop.f32.mrf.mxu0
      %v8968 = vadd.f32 0.0, %v8967
      %v8969 = vpop.f32.mrf.mxu0
      %8970 = vmatprep.mubr.bf16.mxu0 0
      %8971 = vmatmul.mubr.bf16.gmra.mxu0 %v8870
      %v8972 = vpop.f32.mrf.mxu0
      %v8973 = vadd.f32 0.0, %v8972
      %v8974 = vpop.f32.mrf.mxu0
      %v8975 = vpop.f32.mrf.mxu0
      %v8976 = vadd.f32 0.0, %v8975
      %v8977 = vpop.f32.mrf.mxu0
      %8978 = vmatprep.mubr.bf16.mxu0 0
      %8979 = vmatmul.mubr.bf16.gmra.mxu0 %v8872
      %v8980 = vpop.f32.mrf.mxu0
      %v8981 = vadd.f32 0.0, %v8980
      %v8982 = vpop.f32.mrf.mxu0
      %v8983 = vpop.f32.mrf.mxu0
      %v8984 = vadd.f32 0.0, %v8983
      %v8985 = vpop.f32.mrf.mxu0
      %8986 = vmatprep.mubr.bf16.mxu0 0
      %8987 = vmatmul.mubr.bf16.gmra.mxu0 %v8874
      %v8988 = vpop.f32.mrf.mxu0
      %v8989 = vadd.f32 0.0, %v8988
      %v8990 = vpop.f32.mrf.mxu0
      %v8991 = vpop.f32.mrf.mxu0
      %v8992 = vadd.f32 0.0, %v8991
      %v8993 = vpop.f32.mrf.mxu0
      %8994 = vmatprep.mubr.bf16.mxu0 0
      %8995 = vmatmul.mubr.bf16.gmra.mxu0 %v8876
      %v8996 = vpop.f32.mrf.mxu0
      %v8997 = vadd.f32 0.0, %v8996
      %v8998 = vpop.f32.mrf.mxu0
      %v8999 = vpop.f32.mrf.mxu0
      %v9000 = vadd.f32 0.0, %v8999
      %v9001 = vpop.f32.mrf.mxu0
      %9002 = vdwg.mxu0
      %v9003 = vadd.f32 %v8835, %v8965
      %v9004 = vadd.f32 %v8836, %v8968
      %v9005 = vadd.f32 %v8837, %v8973
      %v9006 = vadd.f32 %v8838, %v8976
      %v9007 = vadd.f32 %v8839, %v8981
      %v9008 = vadd.f32 %v8840, %v8984
      %v9009 = vadd.f32 %v8841, %v8989
      %v9010 = vadd.f32 %v8842, %v8992
      %v9011 = vadd.f32 %v8843, %v8997
      %v9012 = vadd.f32 %v8844, %v9000
      %v9013 = vld [vmem:[#allocation3 + $0x34] sm:$0x3]
      %s9014 = scalar_lea.vmem %s2, 1664
      %v9015 = vld [vmem:[%s9014] sm:$0xf]
      %v9016 = vld [vmem:[%s9014 + $0x4] sm:$0xf]
      %v9017 = vld [vmem:[%s9014 + $0x8] sm:$0xf]
      %v9018 = vld [vmem:[%s9014 + $0xc] sm:$0xf]
      %v9019 = vld [vmem:[%s9014 + $0x10] sm:$0xf]
      %v9020 = vld [vmem:[%s9014 + $0x14] sm:$0xf]
      %v9021 = vld [vmem:[%s9014 + $0x18] sm:$0xf]
      %v9022 = vld [vmem:[%s9014 + $0x1c] sm:$0xf]
      %v9023 = vld [vmem:[%s9014 + $0x20] sm:$0xf]
      %v9024 = vld [vmem:[%s9014 + $0x24] sm:$0xf]
      %v9025 = vld [vmem:[%s9014 + $0x28] sm:$0xf]
      %v9026 = vld [vmem:[%s9014 + $0x2c] sm:$0xf]
      %v9027 = vld [vmem:[%s9014 + $0x30] sm:$0xf]
      %v9028 = vld [vmem:[%s9014 + $0x34] sm:$0xf]
      %v9029 = vld [vmem:[%s9014 + $0x38] sm:$0xf]
      %v9030 = vld [vmem:[%s9014 + $0x3c] sm:$0xf]
      %v9032 = vunpack.c.l.b16 %v9013
      %v9033 = vpack.c.b16 %v9032, %v9032
      %v9035 = vshrl.u32 %v8865, 16
      %v9037 = vrot.slane %v9035, 1
      %v9038 = vshll.u32 %v8865, 16
      %v9040 = vrot.slane %v9038, 2
      %v9041 = vor.u32 %v9037, %v9040
      %v9042 = vrot.slane %v8677, 1
      %v9043 = vrot.slane %v8673, 2
      %v9044 = vor.u32 %v9042, %v9043
      %v9045 = vsel %vm4631, %v9041, %v9044
      %v9046 = vrot.slane %v8685, 1
      %v9047 = vrot.slane %v8681, 2
      %v9048 = vor.u32 %v9046, %v9047
      %v9049 = vsel %vm4631, %v9044, %v9048
      %v9050 = vrot.slane %v8693, 1
      %v9051 = vrot.slane %v8689, 2
      %v9052 = vor.u32 %v9050, %v9051
      %v9053 = vsel %vm4631, %v9048, %v9052
      %v9054 = vrot.slane %v8701, 1
      %v9055 = vrot.slane %v8697, 2
      %v9056 = vor.u32 %v9054, %v9055
      %v9057 = vsel %vm4631, %v9052, %v9056
      %v9059 = vshrl.u32 %v9033, 16
      %v9061 = vrot.slane %v9059, 1
      %v9062 = vshll.u32 %v9033, 16
      %v9064 = vrot.slane %v9062, 2
      %v9065 = vor.u32 %v9061, %v9064
      %v9066 = vsel %vm4631, %v9056, %v9065
      %v9088 = vunpack.c.l.b16 %v9015
      %v9089 = vunpack.c.l.b16 %v9016
      %v9090 = vunpack.c.l.b16 %v9017
      %v9091 = vunpack.c.l.b16 %v9018
      %v9092 = vunpack.c.l.b16 %v9019
      %v9093 = vunpack.c.l.b16 %v9020
      %v9094 = vunpack.c.l.b16 %v9021
      %v9095 = vunpack.c.l.b16 %v9022
      %v9096 = vunpack.c.l.b16 %v9023
      %v9097 = vunpack.c.l.b16 %v9024
      %v9098 = vunpack.c.l.b16 %v9025
      %v9099 = vunpack.c.l.b16 %v9026
      %v9100 = vunpack.c.l.b16 %v9027
      %v9101 = vunpack.c.l.b16 %v9028
      %v9102 = vunpack.c.l.b16 %v9029
      %v9103 = vunpack.c.l.b16 %v9030
      %v9104 = vpack.c.b16 %v9089, %v9088
      %v9105 = vpack.c.b16 %v9091, %v9090
      %v9106 = vpack.c.b16 %v9093, %v9092
      %v9107 = vpack.c.b16 %v9095, %v9094
      %v9108 = vpack.c.b16 %v9097, %v9096
      %v9109 = vpack.c.b16 %v9099, %v9098
      %v9110 = vpack.c.b16 %v9101, %v9100
      %v9111 = vpack.c.b16 %v9103, %v9102
      %9120 = vmatprep.subr.bf16.mxu0 0
      %9121 = vmatpush1.bf16.msra.mxu0 %v9111
      %9122 = vmatprep.subr.bf16.mxu0 0
      %9123 = vmatpush1.bf16.msra.mxu0 %v9110
      %9124 = vmatprep.subr.bf16.mxu0 0
      %9125 = vmatpush1.bf16.msra.mxu0 %v9109
      %9126 = vmatprep.subr.bf16.mxu0 0
      %9127 = vmatpush1.bf16.msra.mxu0 %v9108
      %9128 = vmatprep.subr.bf16.mxu0 0
      %9129 = vmatpush1.bf16.msra.mxu0 %v9107
      %9130 = vmatprep.subr.bf16.mxu0 0
      %9131 = vmatpush1.bf16.msra.mxu0 %v9106
      %9132 = vmatprep.subr.bf16.mxu0 0
      %9133 = vmatpush1.bf16.msra.mxu0 %v9105
      %9134 = vmatprep.subr.bf16.mxu0 0
      %9135 = vmatpush1.bf16.msra.mxu0 %v9104
      %9136 = vmatprep.subr.bf16.mxu0 0
      %9137 = vmatpush2.bf16.msra.mxu0 0
      %9138 = vmatprep.subr.bf16.mxu0 0
      %9139 = vmatpush2.bf16.msra.mxu0 0
      %9140 = vmatprep.subr.bf16.mxu0 0
      %9141 = vmatpush2.bf16.msra.mxu0 0
      %9142 = vmatprep.subr.bf16.mxu0 0
      %9143 = vmatpush2.bf16.msra.mxu0 0
      %9144 = vmatprep.subr.bf16.mxu0 0
      %9145 = vmatpush2.bf16.msra.mxu0 0
      %9146 = vmatprep.subr.bf16.mxu0 0
      %9147 = vmatpush2.bf16.msra.mxu0 0
      %9148 = vmatprep.subr.bf16.mxu0 0
      %9149 = vmatpush2.bf16.msra.mxu0 0
      %9150 = vmatprep.subr.bf16.mxu0 0
      %9151 = vmatpush2.bf16.msra.mxu0 0
      %9152 = vmatprep.mubr.bf16.mxu0 0
      %9153 = vmatmul.mubr.bf16.gmra.mxu0 %v9045
      %v9154 = vpop.f32.mrf.mxu0
      %v9155 = vadd.f32 0.0, %v9154
      %v9156 = vpop.f32.mrf.mxu0
      %v9157 = vpop.f32.mrf.mxu0
      %v9158 = vadd.f32 0.0, %v9157
      %v9159 = vpop.f32.mrf.mxu0
      %9160 = vmatprep.mubr.bf16.mxu0 0
      %9161 = vmatmul.mubr.bf16.gmra.mxu0 %v9049
      %v9162 = vpop.f32.mrf.mxu0
      %v9163 = vadd.f32 0.0, %v9162
      %v9164 = vpop.f32.mrf.mxu0
      %v9165 = vpop.f32.mrf.mxu0
      %v9166 = vadd.f32 0.0, %v9165
      %v9167 = vpop.f32.mrf.mxu0
      %9168 = vmatprep.mubr.bf16.mxu0 0
      %9169 = vmatmul.mubr.bf16.gmra.mxu0 %v9053
      %v9170 = vpop.f32.mrf.mxu0
      %v9171 = vadd.f32 0.0, %v9170
      %v9172 = vpop.f32.mrf.mxu0
      %v9173 = vpop.f32.mrf.mxu0
      %v9174 = vadd.f32 0.0, %v9173
      %v9175 = vpop.f32.mrf.mxu0
      %9176 = vmatprep.mubr.bf16.mxu0 0
      %9177 = vmatmul.mubr.bf16.gmra.mxu0 %v9057
      %v9178 = vpop.f32.mrf.mxu0
      %v9179 = vadd.f32 0.0, %v9178
      %v9180 = vpop.f32.mrf.mxu0
      %v9181 = vpop.f32.mrf.mxu0
      %v9182 = vadd.f32 0.0, %v9181
      %v9183 = vpop.f32.mrf.mxu0
      %9184 = vmatprep.mubr.bf16.mxu0 0
      %9185 = vmatmul.mubr.bf16.gmra.mxu0 %v9066
      %v9186 = vpop.f32.mrf.mxu0
      %v9187 = vadd.f32 0.0, %v9186
      %v9188 = vpop.f32.mrf.mxu0
      %v9189 = vpop.f32.mrf.mxu0
      %v9190 = vadd.f32 0.0, %v9189
      %v9191 = vpop.f32.mrf.mxu0
      %9192 = vdwg.mxu0
      %v9193 = vadd.f32 %v9003, %v9155
      %v9194 = vadd.f32 %v9004, %v9158
      %v9195 = vadd.f32 %v9005, %v9163
      %v9196 = vadd.f32 %v9006, %v9166
      %v9197 = vadd.f32 %v9007, %v9171
      %v9198 = vadd.f32 %v9008, %v9174
      %v9199 = vadd.f32 %v9009, %v9179
      %v9200 = vadd.f32 %v9010, %v9182
      %v9201 = vadd.f32 %v9011, %v9187
      %v9202 = vadd.f32 %v9012, %v9190
      %v9203 = vld [vmem:[%s4] sm:$0xff]
      %v9204 = vld [vmem:[%s4 + $0x8] sm:$0xff]
      %v9205 = vld [vmem:[%s4 + $0x10] sm:$0xff]
      %v9206 = vld [vmem:[%s4 + $0x18] sm:$0xff]
      %v9207 = vld [vmem:[%s4 + $0x20] sm:$0xff]
      %v9208 = vld [vmem:[%s4 + $0x28] sm:$0xff]
      %v9209 = vld [vmem:[%s4 + $0x30] sm:$0xff]
      %v9210 = vld [vmem:[%s4 + $0x38] sm:$0xff]
      %v9211 = vld [vmem:[%s4 + $0x40] sm:$0xff]
      %v9212 = vld [vmem:[%s4 + $0x48] sm:$0xff]
      %v9213 = vmul.f32 %v9193, %v9203
      %v9214 = vmul.f32 %v9194, %v9204
      %v9215 = vmul.f32 %v9195, %v9205
      %v9216 = vmul.f32 %v9196, %v9206
      %v9217 = vmul.f32 %v9197, %v9207
      %v9218 = vmul.f32 %v9198, %v9208
      %v9219 = vmul.f32 %v9199, %v9209
      %v9220 = vmul.f32 %v9200, %v9210
      %v9221 = vmul.f32 %v9201, %v9211
      %v9222 = vmul.f32 %v9202, %v9212
      %v9223 = vadd.f32 %v9213, %v9214
      %v9224 = vadd.f32 %v9223, %v9215
      %v9225 = vadd.f32 %v9224, %v9216
      %v9226 = vadd.f32 %v9225, %v9217
      %v9227 = vadd.f32 %v9226, %v9218
      %v9228 = vadd.f32 %v9227, %v9219
      %v9229 = vadd.f32 %v9228, %v9220
      %v9230 = vadd.f32 %v9229, %v9221
      %v9231 = vadd.f32 %v9230, %v9222
      %9232 = vadd.xlane.f32.xlu0 %v9231
      %v9233 = vpop.xlane.xlu0 %9232
      %v9234 = vrot.slane %v9233, 4
      %v9235 = vadd.f32 %v9233, %v9234
      %v9236 = vrot.slane %v9235, 2
      %v9237 = vadd.f32 %v9235, %v9236
      %v9238 = vrot.slane %v9237, 1
      %v9239 = vadd.f32 %v9237, %v9238
      %s9240 = vtos %v9239
      %v9241 = vmul.f32 %v9213, %v9213
      %v9242 = vmul.f32 %v9214, %v9214
      %v9243 = vmul.f32 %v9215, %v9215
      %v9244 = vmul.f32 %v9216, %v9216
      %v9245 = vmul.f32 %v9217, %v9217
      %v9246 = vmul.f32 %v9218, %v9218
      %v9247 = vmul.f32 %v9219, %v9219
      %v9248 = vmul.f32 %v9220, %v9220
      %v9249 = vmul.f32 %v9221, %v9221
      %v9250 = vmul.f32 %v9222, %v9222
      %v9251 = vadd.f32 %v9241, %v9242
      %v9252 = vadd.f32 %v9251, %v9243
      %v9253 = vadd.f32 %v9252, %v9244
      %v9254 = vadd.f32 %v9253, %v9245
      %v9255 = vadd.f32 %v9254, %v9246
      %v9256 = vadd.f32 %v9255, %v9247
      %v9257 = vadd.f32 %v9256, %v9248
      %v9258 = vadd.f32 %v9257, %v9249
      %v9259 = vadd.f32 %v9258, %v9250
      %9260 = vadd.xlane.f32.xlu0 %v9259
      %v9261 = vpop.xlane.xlu0 %9260
      %v9262 = vrot.slane %v9261, 4
      %v9263 = vadd.f32 %v9261, %v9262
      %v9264 = vrot.slane %v9263, 2
      %v9265 = vadd.f32 %v9263, %v9264
      %v9266 = vrot.slane %v9265, 1
      %v9267 = vadd.f32 %v9265, %v9266
      %s9268 = vtos %v9267
      %v9269 = vrcp.pop 8192.0
      %s9270 = vtos %v9269
      %s9271 = smul.f32 %s9240, %s9270
      %v9272 = vrcp.pop 8192.0
      %s9273 = vtos %v9272
      %s9274 = smul.f32 %s9268, %s9273
      %s9275 = smul.f32 %s9271, %s9271
      %s9276 = ssub.f32 %s9274, %s9275
      %v9277 = vstv %s9271
      %v9278 = vsub.f32 %v9193, %v9277
      %v9279 = vsub.f32 %v9194, %v9277
      %v9280 = vsub.f32 %v9195, %v9277
      %v9281 = vsub.f32 %v9196, %v9277
      %v9282 = vsub.f32 %v9197, %v9277
      %v9283 = vsub.f32 %v9198, %v9277
      %v9284 = vsub.f32 %v9199, %v9277
      %v9285 = vsub.f32 %v9200, %v9277
      %v9286 = vsub.f32 %v9201, %v9277
      %v9287 = vsub.f32 %v9202, %v9277
      %s9288 = sadd.f32 %s9276, 1e-05
      %v9289 = vstv %s9288
      %v9290 = vrsqrt.pop %v9289
      %s9291 = vtos %v9290
      %v9292 = vstv %s9291
      %v9293 = vmul.f32 %v9278, %v9292
      %v9294 = vmul.f32 %v9279, %v9292
      %v9295 = vmul.f32 %v9280, %v9292
      %v9296 = vmul.f32 %v9281, %v9292
      %v9297 = vmul.f32 %v9282, %v9292
      %v9298 = vmul.f32 %v9283, %v9292
      %v9299 = vmul.f32 %v9284, %v9292
      %v9300 = vmul.f32 %v9285, %v9292
      %v9301 = vmul.f32 %v9286, %v9292
      %v9302 = vmul.f32 %v9287, %v9292
      %v9303 = vld [vmem:[%s5 + $0x1] sm:$0x1]
      %v9304 = vlaneseq
      %v9305 = vshrl.u32 %v9304, 7
      %v9306 = vsub.s32 0, %v9305
      %v9307 = vrot.slane %v9303, %v9306
      %v9308 = vmul.f32 %v9293, %v9307
      %v9309 = vmul.f32 %v9294, %v9307
      %v9310 = vmul.f32 %v9295, %v9307
      %v9311 = vmul.f32 %v9296, %v9307
      %v9312 = vmul.f32 %v9297, %v9307
      %v9313 = vmul.f32 %v9298, %v9307
      %v9314 = vmul.f32 %v9299, %v9307
      %v9315 = vmul.f32 %v9300, %v9307
      %v9316 = vmul.f32 %v9301, %v9307
      %v9317 = vmul.f32 %v9302, %v9307
      %v9318 = vld [vmem:[%s6 + $0x1] sm:$0x1]
      %v9319 = vlaneseq
      %v9320 = vshrl.u32 %v9319, 7
      %v9321 = vsub.s32 0, %v9320
      %v9322 = vrot.slane %v9318, %v9321
      %v9323 = vadd.f32 %v9308, %v9322
      %v9324 = vadd.f32 %v9309, %v9322
      %v9325 = vadd.f32 %v9310, %v9322
      %v9326 = vadd.f32 %v9311, %v9322
      %v9327 = vadd.f32 %v9312, %v9322
      %v9328 = vadd.f32 %v9313, %v9322
      %v9329 = vadd.f32 %v9314, %v9322
      %v9330 = vadd.f32 %v9315, %v9322
      %v9331 = vadd.f32 %v9316, %v9322
      %v9332 = vadd.f32 %v9317, %v9322
      %vm9333 = vcmp.ge.f32.partialorder %v9323, 0.0
      %vm9334 = vcmp.ge.f32.partialorder %v9324, 0.0
      %vm9335 = vcmp.ge.f32.partialorder %v9325, 0.0
      %vm9336 = vcmp.ge.f32.partialorder %v9326, 0.0
      %vm9337 = vcmp.ge.f32.partialorder %v9327, 0.0
      %vm9338 = vcmp.ge.f32.partialorder %v9328, 0.0
      %vm9339 = vcmp.ge.f32.partialorder %v9329, 0.0
      %vm9340 = vcmp.ge.f32.partialorder %v9330, 0.0
      %vm9341 = vcmp.ge.f32.partialorder %v9331, 0.0
      %vm9342 = vcmp.ge.f32.partialorder %v9332, 0.0
      %v9343 = vmul.f32 %v9323, 0.2
      %v9344 = vmul.f32 %v9324, 0.2
      %v9345 = vmul.f32 %v9325, 0.2
      %v9346 = vmul.f32 %v9326, 0.2
      %v9347 = vmul.f32 %v9327, 0.2
      %v9348 = vmul.f32 %v9328, 0.2
      %v9349 = vmul.f32 %v9329, 0.2
      %v9350 = vmul.f32 %v9330, 0.2
      %v9351 = vmul.f32 %v9331, 0.2
      %v9352 = vmul.f32 %v9332, 0.2
      %v9353 = vsel %vm9333, %v9323, %v9343
      %v9354 = vsel %vm9334, %v9324, %v9344
      %v9355 = vsel %vm9335, %v9325, %v9345
      %v9356 = vsel %vm9336, %v9326, %v9346
      %v9357 = vsel %vm9337, %v9327, %v9347
      %v9358 = vsel %vm9338, %v9328, %v9348
      %v9359 = vsel %vm9339, %v9329, %v9349
      %v9360 = vsel %vm9340, %v9330, %v9350
      %v9361 = vsel %vm9341, %v9331, %v9351
      %v9362 = vsel %vm9342, %v9332, %v9352
      %v9363 = vmul.f32 %v9353, %v9203
      %v9364 = vmul.f32 %v9354, %v9204
      %v9365 = vmul.f32 %v9355, %v9205
      %v9366 = vmul.f32 %v9356, %v9206
      %v9367 = vmul.f32 %v9357, %v9207
      %v9368 = vmul.f32 %v9358, %v9208
      %v9369 = vmul.f32 %v9359, %v9209
      %v9370 = vmul.f32 %v9360, %v9210
      %v9371 = vmul.f32 %v9361, %v9211
      %v9372 = vmul.f32 %v9362, %v9212
      %v9373 = vpack.c.bf16 %v9364, %v9363
      %v9374 = vpack.c.bf16 %v9366, %v9365
      %v9375 = vpack.c.bf16 %v9368, %v9367
      %v9376 = vpack.c.bf16 %v9370, %v9369
      %v9377 = vpack.c.bf16 %v9372, %v9371
      %v9383 = vunpack.c.l.b16 %v9373
      %v9384 = vunpack.c.h.b16 %v9373
      %v9385 = vunpack.c.l.b16 %v9374
      %v9386 = vunpack.c.h.b16 %v9374
      %v9387 = vunpack.c.l.b16 %v9375
      %v9388 = vunpack.c.h.b16 %v9375
      %v9389 = vunpack.c.l.b16 %v9376
      %v9390 = vunpack.c.h.b16 %v9376
      %v9391 = vunpack.c.l.b16 %v9377
      %v9392 = vunpack.c.h.b16 %v9377
      %v9393 = vpack.c.b16 %v9383, %v9383
      %v9394 = vpack.c.b16 %v9384, %v9384
      %v9395 = vpack.c.b16 %v9385, %v9385
      %v9396 = vpack.c.b16 %v9386, %v9386
      %v9397 = vpack.c.b16 %v9387, %v9387
      %v9398 = vpack.c.b16 %v9388, %v9388
      %v9399 = vpack.c.b16 %v9389, %v9389
      %v9400 = vpack.c.b16 %v9390, %v9390
      %v9401 = vpack.c.b16 %v9391, %v9391
      %v9402 = vpack.c.b16 %v9392, %v9392
      %9413 = vst [vmem:[#allocation3 + $0x8] sm:$0xf] %v9393
      %9414 = vst [vmem:[#allocation3 + $0xc] sm:$0xf] %v9394
      %9415 = vst [vmem:[#allocation3 + $0x10] sm:$0xf] %v9395
      %9416 = vst [vmem:[#allocation3 + $0x14] sm:$0xf] %v9396
      %9417 = vst [vmem:[#allocation3 + $0x18] sm:$0xf] %v9397
      %9418 = vst [vmem:[#allocation3 + $0x1c] sm:$0xf] %v9398
      %9419 = vst [vmem:[#allocation3 + $0x20] sm:$0xf] %v9399
      %9420 = vst [vmem:[#allocation3 + $0x24] sm:$0xf] %v9400
      %9421 = vst [vmem:[#allocation3 + $0x28] sm:$0xf] %v9401
      %9422 = vst [vmem:[#allocation3 + $0x2c] sm:$0xf] %v9402
      %v9423 = vld [vmem:[#allocation3] sm:$0xc]
      %v9424 = vld [vmem:[#allocation3 + $0x4] sm:$0xf]
      %v9425 = vld [vmem:[#allocation3 + $0x8] sm:$0xf]
      %v9426 = vld [vmem:[#allocation3 + $0xc] sm:$0xf]
      %v9427 = vld [vmem:[#allocation3 + $0x10] sm:$0xf]
      %v9428 = vld [vmem:[#allocation3 + $0x14] sm:$0xf]
      %v9429 = vld [vmem:[#allocation3 + $0x18] sm:$0xf]
      %v9430 = vld [vmem:[#allocation3 + $0x1c] sm:$0xf]
      %v9431 = vld [vmem:[#allocation3 + $0x20] sm:$0xf]
      %v9432 = vld [vmem:[#allocation3 + $0x24] sm:$0xf]
      %v9433 = vld [vmem:[#allocation3 + $0x28] sm:$0x7]
      %s9434 = scalar_lea.vmem %s2, 1728
      %v9435 = vld [vmem:[%s9434] sm:$0xf]
      %v9436 = vld [vmem:[%s9434 + $0x4] sm:$0xf]
      %v9437 = vld [vmem:[%s9434 + $0x8] sm:$0xf]
      %v9438 = vld [vmem:[%s9434 + $0xc] sm:$0xf]
      %v9439 = vld [vmem:[%s9434 + $0x10] sm:$0xf]
      %v9440 = vld [vmem:[%s9434 + $0x14] sm:$0xf]
      %v9441 = vld [vmem:[%s9434 + $0x18] sm:$0xf]
      %v9442 = vld [vmem:[%s9434 + $0x1c] sm:$0xf]
      %v9443 = vld [vmem:[%s9434 + $0x20] sm:$0xf]
      %v9444 = vld [vmem:[%s9434 + $0x24] sm:$0xf]
      %v9445 = vld [vmem:[%s9434 + $0x28] sm:$0xf]
      %v9446 = vld [vmem:[%s9434 + $0x2c] sm:$0xf]
      %v9447 = vld [vmem:[%s9434 + $0x30] sm:$0xf]
      %v9448 = vld [vmem:[%s9434 + $0x34] sm:$0xf]
      %v9449 = vld [vmem:[%s9434 + $0x38] sm:$0xf]
      %v9450 = vld [vmem:[%s9434 + $0x3c] sm:$0xf]
      %v9451 = vld [vmem:[#allocation3] sm:$0x8]
      %s9452 = scalar_lea.vmem %s2, 1792
      %v9453 = vld [vmem:[%s9452] sm:$0xf]
      %v9454 = vld [vmem:[%s9452 + $0x4] sm:$0xf]
      %v9455 = vld [vmem:[%s9452 + $0x8] sm:$0xf]
      %v9456 = vld [vmem:[%s9452 + $0xc] sm:$0xf]
      %v9457 = vld [vmem:[%s9452 + $0x10] sm:$0xf]
      %v9458 = vld [vmem:[%s9452 + $0x14] sm:$0xf]
      %v9459 = vld [vmem:[%s9452 + $0x18] sm:$0xf]
      %v9460 = vld [vmem:[%s9452 + $0x1c] sm:$0xf]
      %v9461 = vld [vmem:[%s9452 + $0x20] sm:$0xf]
      %v9462 = vld [vmem:[%s9452 + $0x24] sm:$0xf]
      %v9463 = vld [vmem:[%s9452 + $0x28] sm:$0xf]
      %v9464 = vld [vmem:[%s9452 + $0x2c] sm:$0xf]
      %v9465 = vld [vmem:[%s9452 + $0x30] sm:$0xf]
      %v9466 = vld [vmem:[%s9452 + $0x34] sm:$0xf]
      %v9467 = vld [vmem:[%s9452 + $0x38] sm:$0xf]
      %v9468 = vld [vmem:[%s9452 + $0x3c] sm:$0xf]
      %v9480 = vunpack.c.l.b16 %v9451
      %v9481 = vunpack.c.l.b16 %v9424
      %v9482 = vunpack.c.l.b16 %v9425
      %v9483 = vunpack.c.l.b16 %v9426
      %v9484 = vunpack.c.l.b16 %v9427
      %v9485 = vunpack.c.l.b16 %v9428
      %v9486 = vunpack.c.l.b16 %v9429
      %v9487 = vunpack.c.l.b16 %v9430
      %v9488 = vunpack.c.l.b16 %v9431
      %v9489 = vunpack.c.l.b16 %v9432
      %v9490 = vunpack.c.l.b16 %v9433
      %v9491 = vpack.c.b16 %v9481, %v9480
      %v9492 = vpack.c.b16 %v9483, %v9482
      %v9493 = vpack.c.b16 %v9485, %v9484
      %v9494 = vpack.c.b16 %v9487, %v9486
      %v9495 = vpack.c.b16 %v9489, %v9488
      %v9496 = vpack.c.b16 %v9490, %v9490
      %v9497 = vrot.slane %v9491, 3
      %v9498 = vrot.slane %v9492, 3
      %v9499 = vsel %vm1129, %v9497, %v9498
      %v9500 = vrot.slane %v9493, 3
      %v9501 = vsel %vm1129, %v9498, %v9500
      %v9502 = vrot.slane %v9494, 3
      %v9503 = vsel %vm1129, %v9500, %v9502
      %v9504 = vrot.slane %v9495, 3
      %v9505 = vsel %vm1129, %v9502, %v9504
      %v9506 = vrot.slane %v9496, 3
      %v9507 = vsel %vm1129, %v9504, %v9506
      %v9529 = vunpack.c.l.b16 %v9453
      %v9530 = vunpack.c.l.b16 %v9454
      %v9531 = vunpack.c.l.b16 %v9455
      %v9532 = vunpack.c.l.b16 %v9456
      %v9533 = vunpack.c.l.b16 %v9457
      %v9534 = vunpack.c.l.b16 %v9458
      %v9535 = vunpack.c.l.b16 %v9459
      %v9536 = vunpack.c.l.b16 %v9460
      %v9537 = vunpack.c.l.b16 %v9461
      %v9538 = vunpack.c.l.b16 %v9462
      %v9539 = vunpack.c.l.b16 %v9463
      %v9540 = vunpack.c.l.b16 %v9464
      %v9541 = vunpack.c.l.b16 %v9465
      %v9542 = vunpack.c.l.b16 %v9466
      %v9543 = vunpack.c.l.b16 %v9467
      %v9544 = vunpack.c.l.b16 %v9468
      %v9545 = vpack.c.b16 %v9530, %v9529
      %v9546 = vpack.c.b16 %v9532, %v9531
      %v9547 = vpack.c.b16 %v9534, %v9533
      %v9548 = vpack.c.b16 %v9536, %v9535
      %v9549 = vpack.c.b16 %v9538, %v9537
      %v9550 = vpack.c.b16 %v9540, %v9539
      %v9551 = vpack.c.b16 %v9542, %v9541
      %v9552 = vpack.c.b16 %v9544, %v9543
      %9561 = vmatprep.subr.bf16.mxu0 0
      %9562 = vmatpush1.bf16.msra.mxu0 %v9552
      %9563 = vmatprep.subr.bf16.mxu0 0
      %9564 = vmatpush1.bf16.msra.mxu0 %v9551
      %9565 = vmatprep.subr.bf16.mxu0 0
      %9566 = vmatpush1.bf16.msra.mxu0 %v9550
      %9567 = vmatprep.subr.bf16.mxu0 0
      %9568 = vmatpush1.bf16.msra.mxu0 %v9549
      %9569 = vmatprep.subr.bf16.mxu0 0
      %9570 = vmatpush1.bf16.msra.mxu0 %v9548
      %9571 = vmatprep.subr.bf16.mxu0 0
      %9572 = vmatpush1.bf16.msra.mxu0 %v9547
      %9573 = vmatprep.subr.bf16.mxu0 0
      %9574 = vmatpush1.bf16.msra.mxu0 %v9546
      %9575 = vmatprep.subr.bf16.mxu0 0
      %9576 = vmatpush1.bf16.msra.mxu0 %v9545
      %9577 = vmatprep.subr.bf16.mxu0 0
      %9578 = vmatpush2.bf16.msra.mxu0 0
      %9579 = vmatprep.subr.bf16.mxu0 0
      %9580 = vmatpush2.bf16.msra.mxu0 0
      %9581 = vmatprep.subr.bf16.mxu0 0
      %9582 = vmatpush2.bf16.msra.mxu0 0
      %9583 = vmatprep.subr.bf16.mxu0 0
      %9584 = vmatpush2.bf16.msra.mxu0 0
      %9585 = vmatprep.subr.bf16.mxu0 0
      %9586 = vmatpush2.bf16.msra.mxu0 0
      %9587 = vmatprep.subr.bf16.mxu0 0
      %9588 = vmatpush2.bf16.msra.mxu0 0
      %9589 = vmatprep.subr.bf16.mxu0 0
      %9590 = vmatpush2.bf16.msra.mxu0 0
      %9591 = vmatprep.subr.bf16.mxu0 0
      %9592 = vmatpush2.bf16.msra.mxu0 0
      %9593 = vmatprep.mubr.bf16.mxu0 0
      %9594 = vmatmul.mubr.bf16.gmra.mxu0 %v9499
      %v9595 = vpop.f32.mrf.mxu0
      %v9596 = vadd.f32 0.0, %v9595
      %v9597 = vpop.f32.mrf.mxu0
      %v9598 = vpop.f32.mrf.mxu0
      %v9599 = vadd.f32 0.0, %v9598
      %v9600 = vpop.f32.mrf.mxu0
      %9601 = vmatprep.mubr.bf16.mxu0 0
      %9602 = vmatmul.mubr.bf16.gmra.mxu0 %v9501
      %v9603 = vpop.f32.mrf.mxu0
      %v9604 = vadd.f32 0.0, %v9603
      %v9605 = vpop.f32.mrf.mxu0
      %v9606 = vpop.f32.mrf.mxu0
      %v9607 = vadd.f32 0.0, %v9606
      %v9608 = vpop.f32.mrf.mxu0
      %9609 = vmatprep.mubr.bf16.mxu0 0
      %9610 = vmatmul.mubr.bf16.gmra.mxu0 %v9503
      %v9611 = vpop.f32.mrf.mxu0
      %v9612 = vadd.f32 0.0, %v9611
      %v9613 = vpop.f32.mrf.mxu0
      %v9614 = vpop.f32.mrf.mxu0
      %v9615 = vadd.f32 0.0, %v9614
      %v9616 = vpop.f32.mrf.mxu0
      %9617 = vmatprep.mubr.bf16.mxu0 0
      %9618 = vmatmul.mubr.bf16.gmra.mxu0 %v9505
      %v9619 = vpop.f32.mrf.mxu0
      %v9620 = vadd.f32 0.0, %v9619
      %v9621 = vpop.f32.mrf.mxu0
      %v9622 = vpop.f32.mrf.mxu0
      %v9623 = vadd.f32 0.0, %v9622
      %v9624 = vpop.f32.mrf.mxu0
      %9625 = vmatprep.mubr.bf16.mxu0 0
      %9626 = vmatmul.mubr.bf16.gmra.mxu0 %v9507
      %v9627 = vpop.f32.mrf.mxu0
      %v9628 = vadd.f32 0.0, %v9627
      %v9629 = vpop.f32.mrf.mxu0
      %v9630 = vpop.f32.mrf.mxu0
      %v9631 = vadd.f32 0.0, %v9630
      %v9632 = vpop.f32.mrf.mxu0
      %9633 = vdwg.mxu0
      %v9635 = vunpack.c.l.b16 %v9423
      %v9636 = vpack.c.b16 %v9481, %v9635
      %v9638 = vshrl.u32 %v9636, 16
      %v9640 = vrot.slane %v9638, 2
      %v9641 = vshll.u32 %v9636, 16
      %v9643 = vrot.slane %v9641, 3
      %v9644 = vor.u32 %v9640, %v9643
      %v9646 = vshrl.u32 %v9492, 16
      %v9648 = vrot.slane %v9646, 2
      %v9649 = vshll.u32 %v9492, 16
      %v9651 = vrot.slane %v9649, 3
      %v9652 = vor.u32 %v9648, %v9651
      %v9653 = vsel %vm1413, %v9644, %v9652
      %v9655 = vshrl.u32 %v9493, 16
      %v9657 = vrot.slane %v9655, 2
      %v9658 = vshll.u32 %v9493, 16
      %v9660 = vrot.slane %v9658, 3
      %v9661 = vor.u32 %v9657, %v9660
      %v9662 = vsel %vm1413, %v9652, %v9661
      %v9664 = vshrl.u32 %v9494, 16
      %v9666 = vrot.slane %v9664, 2
      %v9667 = vshll.u32 %v9494, 16
      %v9669 = vrot.slane %v9667, 3
      %v9670 = vor.u32 %v9666, %v9669
      %v9671 = vsel %vm1413, %v9661, %v9670
      %v9673 = vshrl.u32 %v9495, 16
      %v9675 = vrot.slane %v9673, 2
      %v9676 = vshll.u32 %v9495, 16
      %v9678 = vrot.slane %v9676, 3
      %v9679 = vor.u32 %v9675, %v9678
      %v9680 = vsel %vm1413, %v9670, %v9679
      %v9682 = vshrl.u32 %v9496, 16
      %v9684 = vrot.slane %v9682, 2
      %v9685 = vshll.u32 %v9496, 16
      %v9687 = vrot.slane %v9685, 3
      %v9688 = vor.u32 %v9684, %v9687
      %v9689 = vsel %vm1413, %v9679, %v9688
      %v9711 = vunpack.c.l.b16 %v9435
      %v9712 = vunpack.c.l.b16 %v9436
      %v9713 = vunpack.c.l.b16 %v9437
      %v9714 = vunpack.c.l.b16 %v9438
      %v9715 = vunpack.c.l.b16 %v9439
      %v9716 = vunpack.c.l.b16 %v9440
      %v9717 = vunpack.c.l.b16 %v9441
      %v9718 = vunpack.c.l.b16 %v9442
      %v9719 = vunpack.c.l.b16 %v9443
      %v9720 = vunpack.c.l.b16 %v9444
      %v9721 = vunpack.c.l.b16 %v9445
      %v9722 = vunpack.c.l.b16 %v9446
      %v9723 = vunpack.c.l.b16 %v9447
      %v9724 = vunpack.c.l.b16 %v9448
      %v9725 = vunpack.c.l.b16 %v9449
      %v9726 = vunpack.c.l.b16 %v9450
      %v9727 = vpack.c.b16 %v9712, %v9711
      %v9728 = vpack.c.b16 %v9714, %v9713
      %v9729 = vpack.c.b16 %v9716, %v9715
      %v9730 = vpack.c.b16 %v9718, %v9717
      %v9731 = vpack.c.b16 %v9720, %v9719
      %v9732 = vpack.c.b16 %v9722, %v9721
      %v9733 = vpack.c.b16 %v9724, %v9723
      %v9734 = vpack.c.b16 %v9726, %v9725
      %9743 = vmatprep.subr.bf16.mxu0 0
      %9744 = vmatpush1.bf16.msra.mxu0 %v9734
      %9745 = vmatprep.subr.bf16.mxu0 0
      %9746 = vmatpush1.bf16.msra.mxu0 %v9733
      %9747 = vmatprep.subr.bf16.mxu0 0
      %9748 = vmatpush1.bf16.msra.mxu0 %v9732
      %9749 = vmatprep.subr.bf16.mxu0 0
      %9750 = vmatpush1.bf16.msra.mxu0 %v9731
      %9751 = vmatprep.subr.bf16.mxu0 0
      %9752 = vmatpush1.bf16.msra.mxu0 %v9730
      %9753 = vmatprep.subr.bf16.mxu0 0
      %9754 = vmatpush1.bf16.msra.mxu0 %v9729
      %9755 = vmatprep.subr.bf16.mxu0 0
      %9756 = vmatpush1.bf16.msra.mxu0 %v9728
      %9757 = vmatprep.subr.bf16.mxu0 0
      %9758 = vmatpush1.bf16.msra.mxu0 %v9727
      %9759 = vmatprep.subr.bf16.mxu0 0
      %9760 = vmatpush2.bf16.msra.mxu0 0
      %9761 = vmatprep.subr.bf16.mxu0 0
      %9762 = vmatpush2.bf16.msra.mxu0 0
      %9763 = vmatprep.subr.bf16.mxu0 0
      %9764 = vmatpush2.bf16.msra.mxu0 0
      %9765 = vmatprep.subr.bf16.mxu0 0
      %9766 = vmatpush2.bf16.msra.mxu0 0
      %9767 = vmatprep.subr.bf16.mxu0 0
      %9768 = vmatpush2.bf16.msra.mxu0 0
      %9769 = vmatprep.subr.bf16.mxu0 0
      %9770 = vmatpush2.bf16.msra.mxu0 0
      %9771 = vmatprep.subr.bf16.mxu0 0
      %9772 = vmatpush2.bf16.msra.mxu0 0
      %9773 = vmatprep.subr.bf16.mxu0 0
      %9774 = vmatpush2.bf16.msra.mxu0 0
      %9775 = vmatprep.mubr.bf16.mxu0 0
      %9776 = vmatmul.mubr.bf16.gmra.mxu0 %v9653
      %v9777 = vpop.f32.mrf.mxu0
      %v9778 = vadd.f32 %v9596, %v9777
      %v9779 = vpop.f32.mrf.mxu0
      %v9780 = vpop.f32.mrf.mxu0
      %v9781 = vadd.f32 %v9599, %v9780
      %v9782 = vpop.f32.mrf.mxu0
      %9783 = vmatprep.mubr.bf16.mxu0 0
      %9784 = vmatmul.mubr.bf16.gmra.mxu0 %v9662
      %v9785 = vpop.f32.mrf.mxu0
      %v9786 = vadd.f32 %v9604, %v9785
      %v9787 = vpop.f32.mrf.mxu0
      %v9788 = vpop.f32.mrf.mxu0
      %v9789 = vadd.f32 %v9607, %v9788
      %v9790 = vpop.f32.mrf.mxu0
      %9791 = vmatprep.mubr.bf16.mxu0 0
      %9792 = vmatmul.mubr.bf16.gmra.mxu0 %v9671
      %v9793 = vpop.f32.mrf.mxu0
      %v9794 = vadd.f32 %v9612, %v9793
      %v9795 = vpop.f32.mrf.mxu0
      %v9796 = vpop.f32.mrf.mxu0
      %v9797 = vadd.f32 %v9615, %v9796
      %v9798 = vpop.f32.mrf.mxu0
      %9799 = vmatprep.mubr.bf16.mxu0 0
      %9800 = vmatmul.mubr.bf16.gmra.mxu0 %v9680
      %v9801 = vpop.f32.mrf.mxu0
      %v9802 = vadd.f32 %v9620, %v9801
      %v9803 = vpop.f32.mrf.mxu0
      %v9804 = vpop.f32.mrf.mxu0
      %v9805 = vadd.f32 %v9623, %v9804
      %v9806 = vpop.f32.mrf.mxu0
      %9807 = vmatprep.mubr.bf16.mxu0 0
      %9808 = vmatmul.mubr.bf16.gmra.mxu0 %v9689
      %v9809 = vpop.f32.mrf.mxu0
      %v9810 = vadd.f32 %v9628, %v9809
      %v9811 = vpop.f32.mrf.mxu0
      %v9812 = vpop.f32.mrf.mxu0
      %v9813 = vadd.f32 %v9631, %v9812
      %v9814 = vpop.f32.mrf.mxu0
      %9815 = vdwg.mxu0
      %v9816 = vld [vmem:[#allocation3 + $0x28] sm:$0xf]
      %s9817 = scalar_lea.vmem %s2, 1856
      %v9818 = vld [vmem:[%s9817] sm:$0xf]
      %v9819 = vld [vmem:[%s9817 + $0x4] sm:$0xf]
      %v9820 = vld [vmem:[%s9817 + $0x8] sm:$0xf]
      %v9821 = vld [vmem:[%s9817 + $0xc] sm:$0xf]
      %v9822 = vld [vmem:[%s9817 + $0x10] sm:$0xf]
      %v9823 = vld [vmem:[%s9817 + $0x14] sm:$0xf]
      %v9824 = vld [vmem:[%s9817 + $0x18] sm:$0xf]
      %v9825 = vld [vmem:[%s9817 + $0x1c] sm:$0xf]
      %v9826 = vld [vmem:[%s9817 + $0x20] sm:$0xf]
      %v9827 = vld [vmem:[%s9817 + $0x24] sm:$0xf]
      %v9828 = vld [vmem:[%s9817 + $0x28] sm:$0xf]
      %v9829 = vld [vmem:[%s9817 + $0x2c] sm:$0xf]
      %v9830 = vld [vmem:[%s9817 + $0x30] sm:$0xf]
      %v9831 = vld [vmem:[%s9817 + $0x34] sm:$0xf]
      %v9832 = vld [vmem:[%s9817 + $0x38] sm:$0xf]
      %v9833 = vld [vmem:[%s9817 + $0x3c] sm:$0xf]
      %v9835 = vunpack.c.l.b16 %v9816
      %v9836 = vpack.c.b16 %v9835, %v9835
      %v9838 = vshrl.u32 %v9491, 16
      %v9840 = vrot.slane %v9838, 3
      %v9841 = vshll.u32 %v9491, 16
      %v9843 = vrot.slane %v9841, 4
      %v9844 = vor.u32 %v9840, %v9843
      %v9845 = vrot.slane %v9646, 3
      %v9846 = vrot.slane %v9649, 4
      %v9847 = vor.u32 %v9845, %v9846
      %v9848 = vsel %vm1848, %v9844, %v9847
      %v9849 = vrot.slane %v9655, 3
      %v9850 = vrot.slane %v9658, 4
      %v9851 = vor.u32 %v9849, %v9850
      %v9852 = vsel %vm1848, %v9847, %v9851
      %v9853 = vrot.slane %v9664, 3
      %v9854 = vrot.slane %v9667, 4
      %v9855 = vor.u32 %v9853, %v9854
      %v9856 = vsel %vm1848, %v9851, %v9855
      %v9857 = vrot.slane %v9673, 3
      %v9858 = vrot.slane %v9676, 4
      %v9859 = vor.u32 %v9857, %v9858
      %v9860 = vsel %vm1848, %v9855, %v9859
      %v9862 = vshrl.u32 %v9836, 16
      %v9864 = vrot.slane %v9862, 3
      %v9865 = vshll.u32 %v9836, 16
      %v9867 = vrot.slane %v9865, 4
      %v9868 = vor.u32 %v9864, %v9867
      %v9869 = vsel %vm1848, %v9859, %v9868
      %v9891 = vunpack.c.l.b16 %v9818
      %v9892 = vunpack.c.l.b16 %v9819
      %v9893 = vunpack.c.l.b16 %v9820
      %v9894 = vunpack.c.l.b16 %v9821
      %v9895 = vunpack.c.l.b16 %v9822
      %v9896 = vunpack.c.l.b16 %v9823
      %v9897 = vunpack.c.l.b16 %v9824
      %v9898 = vunpack.c.l.b16 %v9825
      %v9899 = vunpack.c.l.b16 %v9826
      %v9900 = vunpack.c.l.b16 %v9827
      %v9901 = vunpack.c.l.b16 %v9828
      %v9902 = vunpack.c.l.b16 %v9829
      %v9903 = vunpack.c.l.b16 %v9830
      %v9904 = vunpack.c.l.b16 %v9831
      %v9905 = vunpack.c.l.b16 %v9832
      %v9906 = vunpack.c.l.b16 %v9833
      %v9907 = vpack.c.b16 %v9892, %v9891
      %v9908 = vpack.c.b16 %v9894, %v9893
      %v9909 = vpack.c.b16 %v9896, %v9895
      %v9910 = vpack.c.b16 %v9898, %v9897
      %v9911 = vpack.c.b16 %v9900, %v9899
      %v9912 = vpack.c.b16 %v9902, %v9901
      %v9913 = vpack.c.b16 %v9904, %v9903
      %v9914 = vpack.c.b16 %v9906, %v9905
      %9923 = vmatprep.subr.bf16.mxu0 0
      %9924 = vmatpush1.bf16.msra.mxu0 %v9914
      %9925 = vmatprep.subr.bf16.mxu0 0
      %9926 = vmatpush1.bf16.msra.mxu0 %v9913
      %9927 = vmatprep.subr.bf16.mxu0 0
      %9928 = vmatpush1.bf16.msra.mxu0 %v9912
      %9929 = vmatprep.subr.bf16.mxu0 0
      %9930 = vmatpush1.bf16.msra.mxu0 %v9911
      %9931 = vmatprep.subr.bf16.mxu0 0
      %9932 = vmatpush1.bf16.msra.mxu0 %v9910
      %9933 = vmatprep.subr.bf16.mxu0 0
      %9934 = vmatpush1.bf16.msra.mxu0 %v9909
      %9935 = vmatprep.subr.bf16.mxu0 0
      %9936 = vmatpush1.bf16.msra.mxu0 %v9908
      %9937 = vmatprep.subr.bf16.mxu0 0
      %9938 = vmatpush1.bf16.msra.mxu0 %v9907
      %9939 = vmatprep.subr.bf16.mxu0 0
      %9940 = vmatpush2.bf16.msra.mxu0 0
      %9941 = vmatprep.subr.bf16.mxu0 0
      %9942 = vmatpush2.bf16.msra.mxu0 0
      %9943 = vmatprep.subr.bf16.mxu0 0
      %9944 = vmatpush2.bf16.msra.mxu0 0
      %9945 = vmatprep.subr.bf16.mxu0 0
      %9946 = vmatpush2.bf16.msra.mxu0 0
      %9947 = vmatprep.subr.bf16.mxu0 0
      %9948 = vmatpush2.bf16.msra.mxu0 0
      %9949 = vmatprep.subr.bf16.mxu0 0
      %9950 = vmatpush2.bf16.msra.mxu0 0
      %9951 = vmatprep.subr.bf16.mxu0 0
      %9952 = vmatpush2.bf16.msra.mxu0 0
      %9953 = vmatprep.subr.bf16.mxu0 0
      %9954 = vmatpush2.bf16.msra.mxu0 0
      %9955 = vmatprep.mubr.bf16.mxu0 0
      %9956 = vmatmul.mubr.bf16.gmra.mxu0 %v9848
      %v9957 = vpop.f32.mrf.mxu0
      %v9958 = vadd.f32 0.0, %v9957
      %v9959 = vpop.f32.mrf.mxu0
      %v9960 = vpop.f32.mrf.mxu0
      %v9961 = vadd.f32 0.0, %v9960
      %v9962 = vpop.f32.mrf.mxu0
      %9963 = vmatprep.mubr.bf16.mxu0 0
      %9964 = vmatmul.mubr.bf16.gmra.mxu0 %v9852
      %v9965 = vpop.f32.mrf.mxu0
      %v9966 = vadd.f32 0.0, %v9965
      %v9967 = vpop.f32.mrf.mxu0
      %v9968 = vpop.f32.mrf.mxu0
      %v9969 = vadd.f32 0.0, %v9968
      %v9970 = vpop.f32.mrf.mxu0
      %9971 = vmatprep.mubr.bf16.mxu0 0
      %9972 = vmatmul.mubr.bf16.gmra.mxu0 %v9856
      %v9973 = vpop.f32.mrf.mxu0
      %v9974 = vadd.f32 0.0, %v9973
      %v9975 = vpop.f32.mrf.mxu0
      %v9976 = vpop.f32.mrf.mxu0
      %v9977 = vadd.f32 0.0, %v9976
      %v9978 = vpop.f32.mrf.mxu0
      %9979 = vmatprep.mubr.bf16.mxu0 0
      %9980 = vmatmul.mubr.bf16.gmra.mxu0 %v9860
      %v9981 = vpop.f32.mrf.mxu0
      %v9982 = vadd.f32 0.0, %v9981
      %v9983 = vpop.f32.mrf.mxu0
      %v9984 = vpop.f32.mrf.mxu0
      %v9985 = vadd.f32 0.0, %v9984
      %v9986 = vpop.f32.mrf.mxu0
      %9987 = vmatprep.mubr.bf16.mxu0 0
      %9988 = vmatmul.mubr.bf16.gmra.mxu0 %v9869
      %v9989 = vpop.f32.mrf.mxu0
      %v9990 = vadd.f32 0.0, %v9989
      %v9991 = vpop.f32.mrf.mxu0
      %v9992 = vpop.f32.mrf.mxu0
      %v9993 = vadd.f32 0.0, %v9992
      %v9994 = vpop.f32.mrf.mxu0
      %9995 = vdwg.mxu0
      %v9996 = vadd.f32 %v9778, %v9958
      %v9997 = vadd.f32 %v9781, %v9961
      %v9998 = vadd.f32 %v9786, %v9966
      %v9999 = vadd.f32 %v9789, %v9969
      %v10000 = vadd.f32 %v9794, %v9974
      %v10001 = vadd.f32 %v9797, %v9977
      %v10002 = vadd.f32 %v9802, %v9982
      %v10003 = vadd.f32 %v9805, %v9985
      %v10004 = vadd.f32 %v9810, %v9990
      %v10005 = vadd.f32 %v9813, %v9993
      %v10006 = vld [vmem:[#allocation3 + $0x4] sm:$0x8]
      %v10007 = vld [vmem:[#allocation3 + $0x8] sm:$0xf]
      %v10008 = vld [vmem:[#allocation3 + $0xc] sm:$0xf]
      %v10009 = vld [vmem:[#allocation3 + $0x10] sm:$0xf]
      %v10010 = vld [vmem:[#allocation3 + $0x14] sm:$0xf]
      %v10011 = vld [vmem:[#allocation3 + $0x18] sm:$0xf]
      %v10012 = vld [vmem:[#allocation3 + $0x1c] sm:$0xf]
      %v10013 = vld [vmem:[#allocation3 + $0x20] sm:$0xf]
      %v10014 = vld [vmem:[#allocation3 + $0x24] sm:$0xf]
      %v10015 = vld [vmem:[#allocation3 + $0x28] sm:$0xf]
      %v10016 = vld [vmem:[#allocation3 + $0x2c] sm:$0xf]
      %s10017 = scalar_lea.vmem %s2, 1920
      %v10018 = vld [vmem:[%s10017] sm:$0xf]
      %v10019 = vld [vmem:[%s10017 + $0x4] sm:$0xf]
      %v10020 = vld [vmem:[%s10017 + $0x8] sm:$0xf]
      %v10021 = vld [vmem:[%s10017 + $0xc] sm:$0xf]
      %v10022 = vld [vmem:[%s10017 + $0x10] sm:$0xf]
      %v10023 = vld [vmem:[%s10017 + $0x14] sm:$0xf]
      %v10024 = vld [vmem:[%s10017 + $0x18] sm:$0xf]
      %v10025 = vld [vmem:[%s10017 + $0x1c] sm:$0xf]
      %v10026 = vld [vmem:[%s10017 + $0x20] sm:$0xf]
      %v10027 = vld [vmem:[%s10017 + $0x24] sm:$0xf]
      %v10028 = vld [vmem:[%s10017 + $0x28] sm:$0xf]
      %v10029 = vld [vmem:[%s10017 + $0x2c] sm:$0xf]
      %v10030 = vld [vmem:[%s10017 + $0x30] sm:$0xf]
      %v10031 = vld [vmem:[%s10017 + $0x34] sm:$0xf]
      %v10032 = vld [vmem:[%s10017 + $0x38] sm:$0xf]
      %v10033 = vld [vmem:[%s10017 + $0x3c] sm:$0xf]
      %v10045 = vunpack.c.l.b16 %v10006
      %v10046 = vunpack.c.l.b16 %v10007
      %v10047 = vunpack.c.l.b16 %v10008
      %v10048 = vunpack.c.l.b16 %v10009
      %v10049 = vunpack.c.l.b16 %v10010
      %v10050 = vunpack.c.l.b16 %v10011
      %v10051 = vunpack.c.l.b16 %v10012
      %v10052 = vunpack.c.l.b16 %v10013
      %v10053 = vunpack.c.l.b16 %v10014
      %v10054 = vunpack.c.l.b16 %v10015
      %v10055 = vunpack.c.l.b16 %v10016
      %v10056 = vpack.c.b16 %v10046, %v10045
      %v10057 = vpack.c.b16 %v10048, %v10047
      %v10058 = vpack.c.b16 %v10050, %v10049
      %v10059 = vpack.c.b16 %v10052, %v10051
      %v10060 = vpack.c.b16 %v10054, %v10053
      %v10061 = vpack.c.b16 %v10055, %v10055
      %v10063 = vshrl.u32 %v10056, 16
      %v10065 = vrot.slane %v10063, 3
      %v10066 = vshll.u32 %v10056, 16
      %v10068 = vrot.slane %v10066, 4
      %v10069 = vor.u32 %v10065, %v10068
      %v10071 = vshrl.u32 %v10057, 16
      %v10073 = vrot.slane %v10071, 3
      %v10074 = vshll.u32 %v10057, 16
      %v10076 = vrot.slane %v10074, 4
      %v10077 = vor.u32 %v10073, %v10076
      %v10078 = vsel %vm1848, %v10069, %v10077
      %v10080 = vshrl.u32 %v10058, 16
      %v10082 = vrot.slane %v10080, 3
      %v10083 = vshll.u32 %v10058, 16
      %v10085 = vrot.slane %v10083, 4
      %v10086 = vor.u32 %v10082, %v10085
      %v10087 = vsel %vm1848, %v10077, %v10086
      %v10089 = vshrl.u32 %v10059, 16
      %v10091 = vrot.slane %v10089, 3
      %v10092 = vshll.u32 %v10059, 16
      %v10094 = vrot.slane %v10092, 4
      %v10095 = vor.u32 %v10091, %v10094
      %v10096 = vsel %vm1848, %v10086, %v10095
      %v10098 = vshrl.u32 %v10060, 16
      %v10100 = vrot.slane %v10098, 3
      %v10101 = vshll.u32 %v10060, 16
      %v10103 = vrot.slane %v10101, 4
      %v10104 = vor.u32 %v10100, %v10103
      %v10105 = vsel %vm1848, %v10095, %v10104
      %v10107 = vshrl.u32 %v10061, 16
      %v10109 = vrot.slane %v10107, 3
      %v10110 = vshll.u32 %v10061, 16
      %v10112 = vrot.slane %v10110, 4
      %v10113 = vor.u32 %v10109, %v10112
      %v10114 = vsel %vm1848, %v10104, %v10113
      %v10136 = vunpack.c.l.b16 %v10018
      %v10137 = vunpack.c.l.b16 %v10019
      %v10138 = vunpack.c.l.b16 %v10020
      %v10139 = vunpack.c.l.b16 %v10021
      %v10140 = vunpack.c.l.b16 %v10022
      %v10141 = vunpack.c.l.b16 %v10023
      %v10142 = vunpack.c.l.b16 %v10024
      %v10143 = vunpack.c.l.b16 %v10025
      %v10144 = vunpack.c.l.b16 %v10026
      %v10145 = vunpack.c.l.b16 %v10027
      %v10146 = vunpack.c.l.b16 %v10028
      %v10147 = vunpack.c.l.b16 %v10029
      %v10148 = vunpack.c.l.b16 %v10030
      %v10149 = vunpack.c.l.b16 %v10031
      %v10150 = vunpack.c.l.b16 %v10032
      %v10151 = vunpack.c.l.b16 %v10033
      %v10152 = vpack.c.b16 %v10137, %v10136
      %v10153 = vpack.c.b16 %v10139, %v10138
      %v10154 = vpack.c.b16 %v10141, %v10140
      %v10155 = vpack.c.b16 %v10143, %v10142
      %v10156 = vpack.c.b16 %v10145, %v10144
      %v10157 = vpack.c.b16 %v10147, %v10146
      %v10158 = vpack.c.b16 %v10149, %v10148
      %v10159 = vpack.c.b16 %v10151, %v10150
      %10168 = vmatprep.subr.bf16.mxu0 0
      %10169 = vmatpush1.bf16.msra.mxu0 %v10159
      %10170 = vmatprep.subr.bf16.mxu0 0
      %10171 = vmatpush1.bf16.msra.mxu0 %v10158
      %10172 = vmatprep.subr.bf16.mxu0 0
      %10173 = vmatpush1.bf16.msra.mxu0 %v10157
      %10174 = vmatprep.subr.bf16.mxu0 0
      %10175 = vmatpush1.bf16.msra.mxu0 %v10156
      %10176 = vmatprep.subr.bf16.mxu0 0
      %10177 = vmatpush1.bf16.msra.mxu0 %v10155
      %10178 = vmatprep.subr.bf16.mxu0 0
      %10179 = vmatpush1.bf16.msra.mxu0 %v10154
      %10180 = vmatprep.subr.bf16.mxu0 0
      %10181 = vmatpush1.bf16.msra.mxu0 %v10153
      %10182 = vmatprep.subr.bf16.mxu0 0
      %10183 = vmatpush1.bf16.msra.mxu0 %v10152
      %10184 = vmatprep.subr.bf16.mxu0 0
      %10185 = vmatpush2.bf16.msra.mxu0 0
      %10186 = vmatprep.subr.bf16.mxu0 0
      %10187 = vmatpush2.bf16.msra.mxu0 0
      %10188 = vmatprep.subr.bf16.mxu0 0
      %10189 = vmatpush2.bf16.msra.mxu0 0
      %10190 = vmatprep.subr.bf16.mxu0 0
      %10191 = vmatpush2.bf16.msra.mxu0 0
      %10192 = vmatprep.subr.bf16.mxu0 0
      %10193 = vmatpush2.bf16.msra.mxu0 0
      %10194 = vmatprep.subr.bf16.mxu0 0
      %10195 = vmatpush2.bf16.msra.mxu0 0
      %10196 = vmatprep.subr.bf16.mxu0 0
      %10197 = vmatpush2.bf16.msra.mxu0 0
      %10198 = vmatprep.subr.bf16.mxu0 0
      %10199 = vmatpush2.bf16.msra.mxu0 0
      %10200 = vmatprep.mubr.bf16.mxu0 0
      %10201 = vmatmul.mubr.bf16.gmra.mxu0 %v10078
      %v10202 = vpop.f32.mrf.mxu0
      %v10203 = vadd.f32 0.0, %v10202
      %v10204 = vpop.f32.mrf.mxu0
      %v10205 = vpop.f32.mrf.mxu0
      %v10206 = vadd.f32 0.0, %v10205
      %v10207 = vpop.f32.mrf.mxu0
      %10208 = vmatprep.mubr.bf16.mxu0 0
      %10209 = vmatmul.mubr.bf16.gmra.mxu0 %v10087
      %v10210 = vpop.f32.mrf.mxu0
      %v10211 = vadd.f32 0.0, %v10210
      %v10212 = vpop.f32.mrf.mxu0
      %v10213 = vpop.f32.mrf.mxu0
      %v10214 = vadd.f32 0.0, %v10213
      %v10215 = vpop.f32.mrf.mxu0
      %10216 = vmatprep.mubr.bf16.mxu0 0
      %10217 = vmatmul.mubr.bf16.gmra.mxu0 %v10096
      %v10218 = vpop.f32.mrf.mxu0
      %v10219 = vadd.f32 0.0, %v10218
      %v10220 = vpop.f32.mrf.mxu0
      %v10221 = vpop.f32.mrf.mxu0
      %v10222 = vadd.f32 0.0, %v10221
      %v10223 = vpop.f32.mrf.mxu0
      %10224 = vmatprep.mubr.bf16.mxu0 0
      %10225 = vmatmul.mubr.bf16.gmra.mxu0 %v10105
      %v10226 = vpop.f32.mrf.mxu0
      %v10227 = vadd.f32 0.0, %v10226
      %v10228 = vpop.f32.mrf.mxu0
      %v10229 = vpop.f32.mrf.mxu0
      %v10230 = vadd.f32 0.0, %v10229
      %v10231 = vpop.f32.mrf.mxu0
      %10232 = vmatprep.mubr.bf16.mxu0 0
      %10233 = vmatmul.mubr.bf16.gmra.mxu0 %v10114
      %v10234 = vpop.f32.mrf.mxu0
      %v10235 = vadd.f32 0.0, %v10234
      %v10236 = vpop.f32.mrf.mxu0
      %v10237 = vpop.f32.mrf.mxu0
      %v10238 = vadd.f32 0.0, %v10237
      %v10239 = vpop.f32.mrf.mxu0
      %10240 = vdwg.mxu0
      %v10241 = vadd.f32 %v9996, %v10203
      %v10242 = vadd.f32 %v9997, %v10206
      %v10243 = vadd.f32 %v9998, %v10211
      %v10244 = vadd.f32 %v9999, %v10214
      %v10245 = vadd.f32 %v10000, %v10219
      %v10246 = vadd.f32 %v10001, %v10222
      %v10247 = vadd.f32 %v10002, %v10227
      %v10248 = vadd.f32 %v10003, %v10230
      %v10249 = vadd.f32 %v10004, %v10235
      %v10250 = vadd.f32 %v10005, %v10238
      %s10251 = scalar_lea.vmem %s2, 1984
      %v10252 = vld [vmem:[%s10251] sm:$0xf]
      %v10253 = vld [vmem:[%s10251 + $0x4] sm:$0xf]
      %v10254 = vld [vmem:[%s10251 + $0x8] sm:$0xf]
      %v10255 = vld [vmem:[%s10251 + $0xc] sm:$0xf]
      %v10256 = vld [vmem:[%s10251 + $0x10] sm:$0xf]
      %v10257 = vld [vmem:[%s10251 + $0x14] sm:$0xf]
      %v10258 = vld [vmem:[%s10251 + $0x18] sm:$0xf]
      %v10259 = vld [vmem:[%s10251 + $0x1c] sm:$0xf]
      %v10260 = vld [vmem:[%s10251 + $0x20] sm:$0xf]
      %v10261 = vld [vmem:[%s10251 + $0x24] sm:$0xf]
      %v10262 = vld [vmem:[%s10251 + $0x28] sm:$0xf]
      %v10263 = vld [vmem:[%s10251 + $0x2c] sm:$0xf]
      %v10264 = vld [vmem:[%s10251 + $0x30] sm:$0xf]
      %v10265 = vld [vmem:[%s10251 + $0x34] sm:$0xf]
      %v10266 = vld [vmem:[%s10251 + $0x38] sm:$0xf]
      %v10267 = vld [vmem:[%s10251 + $0x3c] sm:$0xf]
      %v10268 = vpack.c.b16 %v10047, %v10046
      %v10269 = vpack.c.b16 %v10049, %v10048
      %v10270 = vpack.c.b16 %v10051, %v10050
      %v10271 = vpack.c.b16 %v10053, %v10052
      %v10272 = vpack.c.b16 %v10055, %v10054
      %v10294 = vunpack.c.l.b16 %v10252
      %v10295 = vunpack.c.l.b16 %v10253
      %v10296 = vunpack.c.l.b16 %v10254
      %v10297 = vunpack.c.l.b16 %v10255
      %v10298 = vunpack.c.l.b16 %v10256
      %v10299 = vunpack.c.l.b16 %v10257
      %v10300 = vunpack.c.l.b16 %v10258
      %v10301 = vunpack.c.l.b16 %v10259
      %v10302 = vunpack.c.l.b16 %v10260
      %v10303 = vunpack.c.l.b16 %v10261
      %v10304 = vunpack.c.l.b16 %v10262
      %v10305 = vunpack.c.l.b16 %v10263
      %v10306 = vunpack.c.l.b16 %v10264
      %v10307 = vunpack.c.l.b16 %v10265
      %v10308 = vunpack.c.l.b16 %v10266
      %v10309 = vunpack.c.l.b16 %v10267
      %v10310 = vpack.c.b16 %v10295, %v10294
      %v10311 = vpack.c.b16 %v10297, %v10296
      %v10312 = vpack.c.b16 %v10299, %v10298
      %v10313 = vpack.c.b16 %v10301, %v10300
      %v10314 = vpack.c.b16 %v10303, %v10302
      %v10315 = vpack.c.b16 %v10305, %v10304
      %v10316 = vpack.c.b16 %v10307, %v10306
      %v10317 = vpack.c.b16 %v10309, %v10308
      %10326 = vmatprep.subr.bf16.mxu0 0
      %10327 = vmatpush1.bf16.msra.mxu0 %v10317
      %10328 = vmatprep.subr.bf16.mxu0 0
      %10329 = vmatpush1.bf16.msra.mxu0 %v10316
      %10330 = vmatprep.subr.bf16.mxu0 0
      %10331 = vmatpush1.bf16.msra.mxu0 %v10315
      %10332 = vmatprep.subr.bf16.mxu0 0
      %10333 = vmatpush1.bf16.msra.mxu0 %v10314
      %10334 = vmatprep.subr.bf16.mxu0 0
      %10335 = vmatpush1.bf16.msra.mxu0 %v10313
      %10336 = vmatprep.subr.bf16.mxu0 0
      %10337 = vmatpush1.bf16.msra.mxu0 %v10312
      %10338 = vmatprep.subr.bf16.mxu0 0
      %10339 = vmatpush1.bf16.msra.mxu0 %v10311
      %10340 = vmatprep.subr.bf16.mxu0 0
      %10341 = vmatpush1.bf16.msra.mxu0 %v10310
      %10342 = vmatprep.subr.bf16.mxu0 0
      %10343 = vmatpush2.bf16.msra.mxu0 0
      %10344 = vmatprep.subr.bf16.mxu0 0
      %10345 = vmatpush2.bf16.msra.mxu0 0
      %10346 = vmatprep.subr.bf16.mxu0 0
      %10347 = vmatpush2.bf16.msra.mxu0 0
      %10348 = vmatprep.subr.bf16.mxu0 0
      %10349 = vmatpush2.bf16.msra.mxu0 0
      %10350 = vmatprep.subr.bf16.mxu0 0
      %10351 = vmatpush2.bf16.msra.mxu0 0
      %10352 = vmatprep.subr.bf16.mxu0 0
      %10353 = vmatpush2.bf16.msra.mxu0 0
      %10354 = vmatprep.subr.bf16.mxu0 0
      %10355 = vmatpush2.bf16.msra.mxu0 0
      %10356 = vmatprep.subr.bf16.mxu0 0
      %10357 = vmatpush2.bf16.msra.mxu0 0
      %10358 = vmatprep.mubr.bf16.mxu0 0
      %10359 = vmatmul.mubr.bf16.gmra.mxu0 %v10268
      %v10360 = vpop.f32.mrf.mxu0
      %v10361 = vadd.f32 0.0, %v10360
      %v10362 = vpop.f32.mrf.mxu0
      %v10363 = vpop.f32.mrf.mxu0
      %v10364 = vadd.f32 0.0, %v10363
      %v10365 = vpop.f32.mrf.mxu0
      %10366 = vmatprep.mubr.bf16.mxu0 0
      %10367 = vmatmul.mubr.bf16.gmra.mxu0 %v10269
      %v10368 = vpop.f32.mrf.mxu0
      %v10369 = vadd.f32 0.0, %v10368
      %v10370 = vpop.f32.mrf.mxu0
      %v10371 = vpop.f32.mrf.mxu0
      %v10372 = vadd.f32 0.0, %v10371
      %v10373 = vpop.f32.mrf.mxu0
      %10374 = vmatprep.mubr.bf16.mxu0 0
      %10375 = vmatmul.mubr.bf16.gmra.mxu0 %v10270
      %v10376 = vpop.f32.mrf.mxu0
      %v10377 = vadd.f32 0.0, %v10376
      %v10378 = vpop.f32.mrf.mxu0
      %v10379 = vpop.f32.mrf.mxu0
      %v10380 = vadd.f32 0.0, %v10379
      %v10381 = vpop.f32.mrf.mxu0
      %10382 = vmatprep.mubr.bf16.mxu0 0
      %10383 = vmatmul.mubr.bf16.gmra.mxu0 %v10271
      %v10384 = vpop.f32.mrf.mxu0
      %v10385 = vadd.f32 0.0, %v10384
      %v10386 = vpop.f32.mrf.mxu0
      %v10387 = vpop.f32.mrf.mxu0
      %v10388 = vadd.f32 0.0, %v10387
      %v10389 = vpop.f32.mrf.mxu0
      %10390 = vmatprep.mubr.bf16.mxu0 0
      %10391 = vmatmul.mubr.bf16.gmra.mxu0 %v10272
      %v10392 = vpop.f32.mrf.mxu0
      %v10393 = vadd.f32 0.0, %v10392
      %v10394 = vpop.f32.mrf.mxu0
      %v10395 = vpop.f32.mrf.mxu0
      %v10396 = vadd.f32 0.0, %v10395
      %v10397 = vpop.f32.mrf.mxu0
      %10398 = vdwg.mxu0
      %v10399 = vadd.f32 %v10241, %v10361
      %v10400 = vadd.f32 %v10242, %v10364
      %v10401 = vadd.f32 %v10243, %v10369
      %v10402 = vadd.f32 %v10244, %v10372
      %v10403 = vadd.f32 %v10245, %v10377
      %v10404 = vadd.f32 %v10246, %v10380
      %v10405 = vadd.f32 %v10247, %v10385
      %v10406 = vadd.f32 %v10248, %v10388
      %v10407 = vadd.f32 %v10249, %v10393
      %v10408 = vadd.f32 %v10250, %v10396
      %v10409 = vld [vmem:[#allocation3 + $0x8] sm:$0xf]
      %v10410 = vld [vmem:[#allocation3 + $0xc] sm:$0xf]
      %v10411 = vld [vmem:[#allocation3 + $0x10] sm:$0xf]
      %v10412 = vld [vmem:[#allocation3 + $0x14] sm:$0xf]
      %v10413 = vld [vmem:[#allocation3 + $0x18] sm:$0xf]
      %v10414 = vld [vmem:[#allocation3 + $0x1c] sm:$0xf]
      %v10415 = vld [vmem:[#allocation3 + $0x20] sm:$0xf]
      %v10416 = vld [vmem:[#allocation3 + $0x24] sm:$0xf]
      %v10417 = vld [vmem:[#allocation3 + $0x28] sm:$0xf]
      %v10418 = vld [vmem:[#allocation3 + $0x2c] sm:$0xf]
      %v10419 = vld [vmem:[#allocation3 + $0x30] sm:$0x1]
      %s10420 = scalar_lea.vmem %s2, 2048
      %v10421 = vld [vmem:[%s10420] sm:$0xf]
      %v10422 = vld [vmem:[%s10420 + $0x4] sm:$0xf]
      %v10423 = vld [vmem:[%s10420 + $0x8] sm:$0xf]
      %v10424 = vld [vmem:[%s10420 + $0xc] sm:$0xf]
      %v10425 = vld [vmem:[%s10420 + $0x10] sm:$0xf]
      %v10426 = vld [vmem:[%s10420 + $0x14] sm:$0xf]
      %v10427 = vld [vmem:[%s10420 + $0x18] sm:$0xf]
      %v10428 = vld [vmem:[%s10420 + $0x1c] sm:$0xf]
      %v10429 = vld [vmem:[%s10420 + $0x20] sm:$0xf]
      %v10430 = vld [vmem:[%s10420 + $0x24] sm:$0xf]
      %v10431 = vld [vmem:[%s10420 + $0x28] sm:$0xf]
      %v10432 = vld [vmem:[%s10420 + $0x2c] sm:$0xf]
      %v10433 = vld [vmem:[%s10420 + $0x30] sm:$0xf]
      %v10434 = vld [vmem:[%s10420 + $0x34] sm:$0xf]
      %v10435 = vld [vmem:[%s10420 + $0x38] sm:$0xf]
      %v10436 = vld [vmem:[%s10420 + $0x3c] sm:$0xf]
      %v10448 = vunpack.c.l.b16 %v10409
      %v10449 = vunpack.c.l.b16 %v10410
      %v10450 = vunpack.c.l.b16 %v10411
      %v10451 = vunpack.c.l.b16 %v10412
      %v10452 = vunpack.c.l.b16 %v10413
      %v10453 = vunpack.c.l.b16 %v10414
      %v10454 = vunpack.c.l.b16 %v10415
      %v10455 = vunpack.c.l.b16 %v10416
      %v10456 = vunpack.c.l.b16 %v10417
      %v10457 = vunpack.c.l.b16 %v10418
      %v10458 = vunpack.c.l.b16 %v10419
      %v10459 = vpack.c.b16 %v10449, %v10448
      %v10460 = vpack.c.b16 %v10451, %v10450
      %v10461 = vpack.c.b16 %v10453, %v10452
      %v10462 = vpack.c.b16 %v10455, %v10454
      %v10463 = vpack.c.b16 %v10457, %v10456
      %v10464 = vpack.c.b16 %v10458, %v10458
      %v10466 = vshrl.u32 %v10459, 16
      %v10468 = vshll.u32 %v10459, 16
      %v10470 = vrot.slane %v10468, 1
      %v10471 = vor.u32 %v10466, %v10470
      %v10473 = vshll.u32 %v10460, 16
      %v10475 = vrot.slane %v10473, 1
      %v10476 = vsel %vm3270, %v10471, %v10475
      %v10477 = vshrl.u32 %v10460, 16
      %v10479 = vor.u32 %v10477, %v10475
      %v10481 = vshll.u32 %v10461, 16
      %v10483 = vrot.slane %v10481, 1
      %v10484 = vsel %vm3270, %v10479, %v10483
      %v10485 = vshrl.u32 %v10461, 16
      %v10487 = vor.u32 %v10485, %v10483
      %v10489 = vshll.u32 %v10462, 16
      %v10491 = vrot.slane %v10489, 1
      %v10492 = vsel %vm3270, %v10487, %v10491
      %v10493 = vshrl.u32 %v10462, 16
      %v10495 = vor.u32 %v10493, %v10491
      %v10497 = vshll.u32 %v10463, 16
      %v10499 = vrot.slane %v10497, 1
      %v10500 = vsel %vm3270, %v10495, %v10499
      %v10501 = vshrl.u32 %v10463, 16
      %v10503 = vor.u32 %v10501, %v10499
      %v10505 = vshll.u32 %v10464, 16
      %v10507 = vrot.slane %v10505, 1
      %v10508 = vsel %vm3270, %v10503, %v10507
      %v10530 = vunpack.c.l.b16 %v10421
      %v10531 = vunpack.c.l.b16 %v10422
      %v10532 = vunpack.c.l.b16 %v10423
      %v10533 = vunpack.c.l.b16 %v10424
      %v10534 = vunpack.c.l.b16 %v10425
      %v10535 = vunpack.c.l.b16 %v10426
      %v10536 = vunpack.c.l.b16 %v10427
      %v10537 = vunpack.c.l.b16 %v10428
      %v10538 = vunpack.c.l.b16 %v10429
      %v10539 = vunpack.c.l.b16 %v10430
      %v10540 = vunpack.c.l.b16 %v10431
      %v10541 = vunpack.c.l.b16 %v10432
      %v10542 = vunpack.c.l.b16 %v10433
      %v10543 = vunpack.c.l.b16 %v10434
      %v10544 = vunpack.c.l.b16 %v10435
      %v10545 = vunpack.c.l.b16 %v10436
      %v10546 = vpack.c.b16 %v10531, %v10530
      %v10547 = vpack.c.b16 %v10533, %v10532
      %v10548 = vpack.c.b16 %v10535, %v10534
      %v10549 = vpack.c.b16 %v10537, %v10536
      %v10550 = vpack.c.b16 %v10539, %v10538
      %v10551 = vpack.c.b16 %v10541, %v10540
      %v10552 = vpack.c.b16 %v10543, %v10542
      %v10553 = vpack.c.b16 %v10545, %v10544
      %10562 = vmatprep.subr.bf16.mxu0 0
      %10563 = vmatpush1.bf16.msra.mxu0 %v10553
      %10564 = vmatprep.subr.bf16.mxu0 0
      %10565 = vmatpush1.bf16.msra.mxu0 %v10552
      %10566 = vmatprep.subr.bf16.mxu0 0
      %10567 = vmatpush1.bf16.msra.mxu0 %v10551
      %10568 = vmatprep.subr.bf16.mxu0 0
      %10569 = vmatpush1.bf16.msra.mxu0 %v10550
      %10570 = vmatprep.subr.bf16.mxu0 0
      %10571 = vmatpush1.bf16.msra.mxu0 %v10549
      %10572 = vmatprep.subr.bf16.mxu0 0
      %10573 = vmatpush1.bf16.msra.mxu0 %v10548
      %10574 = vmatprep.subr.bf16.mxu0 0
      %10575 = vmatpush1.bf16.msra.mxu0 %v10547
      %10576 = vmatprep.subr.bf16.mxu0 0
      %10577 = vmatpush1.bf16.msra.mxu0 %v10546
      %10578 = vmatprep.subr.bf16.mxu0 0
      %10579 = vmatpush2.bf16.msra.mxu0 0
      %10580 = vmatprep.subr.bf16.mxu0 0
      %10581 = vmatpush2.bf16.msra.mxu0 0
      %10582 = vmatprep.subr.bf16.mxu0 0
      %10583 = vmatpush2.bf16.msra.mxu0 0
      %10584 = vmatprep.subr.bf16.mxu0 0
      %10585 = vmatpush2.bf16.msra.mxu0 0
      %10586 = vmatprep.subr.bf16.mxu0 0
      %10587 = vmatpush2.bf16.msra.mxu0 0
      %10588 = vmatprep.subr.bf16.mxu0 0
      %10589 = vmatpush2.bf16.msra.mxu0 0
      %10590 = vmatprep.subr.bf16.mxu0 0
      %10591 = vmatpush2.bf16.msra.mxu0 0
      %10592 = vmatprep.subr.bf16.mxu0 0
      %10593 = vmatpush2.bf16.msra.mxu0 0
      %10594 = vmatprep.mubr.bf16.mxu0 0
      %10595 = vmatmul.mubr.bf16.gmra.mxu0 %v10476
      %v10596 = vpop.f32.mrf.mxu0
      %v10597 = vadd.f32 0.0, %v10596
      %v10598 = vpop.f32.mrf.mxu0
      %v10599 = vpop.f32.mrf.mxu0
      %v10600 = vadd.f32 0.0, %v10599
      %v10601 = vpop.f32.mrf.mxu0
      %10602 = vmatprep.mubr.bf16.mxu0 0
      %10603 = vmatmul.mubr.bf16.gmra.mxu0 %v10484
      %v10604 = vpop.f32.mrf.mxu0
      %v10605 = vadd.f32 0.0, %v10604
      %v10606 = vpop.f32.mrf.mxu0
      %v10607 = vpop.f32.mrf.mxu0
      %v10608 = vadd.f32 0.0, %v10607
      %v10609 = vpop.f32.mrf.mxu0
      %10610 = vmatprep.mubr.bf16.mxu0 0
      %10611 = vmatmul.mubr.bf16.gmra.mxu0 %v10492
      %v10612 = vpop.f32.mrf.mxu0
      %v10613 = vadd.f32 0.0, %v10612
      %v10614 = vpop.f32.mrf.mxu0
      %v10615 = vpop.f32.mrf.mxu0
      %v10616 = vadd.f32 0.0, %v10615
      %v10617 = vpop.f32.mrf.mxu0
      %10618 = vmatprep.mubr.bf16.mxu0 0
      %10619 = vmatmul.mubr.bf16.gmra.mxu0 %v10500
      %v10620 = vpop.f32.mrf.mxu0
      %v10621 = vadd.f32 0.0, %v10620
      %v10622 = vpop.f32.mrf.mxu0
      %v10623 = vpop.f32.mrf.mxu0
      %v10624 = vadd.f32 0.0, %v10623
      %v10625 = vpop.f32.mrf.mxu0
      %10626 = vmatprep.mubr.bf16.mxu0 0
      %10627 = vmatmul.mubr.bf16.gmra.mxu0 %v10508
      %v10628 = vpop.f32.mrf.mxu0
      %v10629 = vadd.f32 0.0, %v10628
      %v10630 = vpop.f32.mrf.mxu0
      %v10631 = vpop.f32.mrf.mxu0
      %v10632 = vadd.f32 0.0, %v10631
      %v10633 = vpop.f32.mrf.mxu0
      %10634 = vdwg.mxu0
      %v10635 = vadd.f32 %v10399, %v10597
      %v10636 = vadd.f32 %v10400, %v10600
      %v10637 = vadd.f32 %v10401, %v10605
      %v10638 = vadd.f32 %v10402, %v10608
      %v10639 = vadd.f32 %v10403, %v10613
      %v10640 = vadd.f32 %v10404, %v10616
      %v10641 = vadd.f32 %v10405, %v10621
      %v10642 = vadd.f32 %v10406, %v10624
      %v10643 = vadd.f32 %v10407, %v10629
      %v10644 = vadd.f32 %v10408, %v10632
      %v10645 = vld [vmem:[#allocation3 + $0xc] sm:$0xf]
      %v10646 = vld [vmem:[#allocation3 + $0x10] sm:$0xf]
      %v10647 = vld [vmem:[#allocation3 + $0x14] sm:$0xf]
      %v10648 = vld [vmem:[#allocation3 + $0x18] sm:$0xf]
      %v10649 = vld [vmem:[#allocation3 + $0x1c] sm:$0xf]
      %v10650 = vld [vmem:[#allocation3 + $0x20] sm:$0xf]
      %v10651 = vld [vmem:[#allocation3 + $0x24] sm:$0xf]
      %v10652 = vld [vmem:[#allocation3 + $0x28] sm:$0xf]
      %v10653 = vld [vmem:[#allocation3 + $0x2c] sm:$0xf]
      %v10654 = vld [vmem:[#allocation3 + $0x30] sm:$0xf]
      %v10655 = vld [vmem:[#allocation3 + $0x34] sm:$0x1]
      %s10656 = scalar_lea.vmem %s2, 2112
      %v10657 = vld [vmem:[%s10656] sm:$0xf]
      %v10658 = vld [vmem:[%s10656 + $0x4] sm:$0xf]
      %v10659 = vld [vmem:[%s10656 + $0x8] sm:$0xf]
      %v10660 = vld [vmem:[%s10656 + $0xc] sm:$0xf]
      %v10661 = vld [vmem:[%s10656 + $0x10] sm:$0xf]
      %v10662 = vld [vmem:[%s10656 + $0x14] sm:$0xf]
      %v10663 = vld [vmem:[%s10656 + $0x18] sm:$0xf]
      %v10664 = vld [vmem:[%s10656 + $0x1c] sm:$0xf]
      %v10665 = vld [vmem:[%s10656 + $0x20] sm:$0xf]
      %v10666 = vld [vmem:[%s10656 + $0x24] sm:$0xf]
      %v10667 = vld [vmem:[%s10656 + $0x28] sm:$0xf]
      %v10668 = vld [vmem:[%s10656 + $0x2c] sm:$0xf]
      %v10669 = vld [vmem:[%s10656 + $0x30] sm:$0xf]
      %v10670 = vld [vmem:[%s10656 + $0x34] sm:$0xf]
      %v10671 = vld [vmem:[%s10656 + $0x38] sm:$0xf]
      %v10672 = vld [vmem:[%s10656 + $0x3c] sm:$0xf]
      %v10684 = vunpack.c.l.b16 %v10645
      %v10685 = vunpack.c.l.b16 %v10646
      %v10686 = vunpack.c.l.b16 %v10647
      %v10687 = vunpack.c.l.b16 %v10648
      %v10688 = vunpack.c.l.b16 %v10649
      %v10689 = vunpack.c.l.b16 %v10650
      %v10690 = vunpack.c.l.b16 %v10651
      %v10691 = vunpack.c.l.b16 %v10652
      %v10692 = vunpack.c.l.b16 %v10653
      %v10693 = vunpack.c.l.b16 %v10654
      %v10694 = vunpack.c.l.b16 %v10655
      %v10695 = vpack.c.b16 %v10685, %v10684
      %v10696 = vpack.c.b16 %v10687, %v10686
      %v10697 = vpack.c.b16 %v10689, %v10688
      %v10698 = vpack.c.b16 %v10691, %v10690
      %v10699 = vpack.c.b16 %v10693, %v10692
      %v10700 = vpack.c.b16 %v10694, %v10694
      %v10702 = vshrl.u32 %v10695, 16
      %v10704 = vshll.u32 %v10695, 16
      %v10706 = vrot.slane %v10704, 1
      %v10707 = vor.u32 %v10702, %v10706
      %v10709 = vshll.u32 %v10696, 16
      %v10711 = vrot.slane %v10709, 1
      %v10712 = vsel %vm3270, %v10707, %v10711
      %v10713 = vshrl.u32 %v10696, 16
      %v10715 = vor.u32 %v10713, %v10711
      %v10717 = vshll.u32 %v10697, 16
      %v10719 = vrot.slane %v10717, 1
      %v10720 = vsel %vm3270, %v10715, %v10719
      %v10721 = vshrl.u32 %v10697, 16
      %v10723 = vor.u32 %v10721, %v10719
      %v10725 = vshll.u32 %v10698, 16
      %v10727 = vrot.slane %v10725, 1
      %v10728 = vsel %vm3270, %v10723, %v10727
      %v10729 = vshrl.u32 %v10698, 16
      %v10731 = vor.u32 %v10729, %v10727
      %v10733 = vshll.u32 %v10699, 16
      %v10735 = vrot.slane %v10733, 1
      %v10736 = vsel %vm3270, %v10731, %v10735
      %v10737 = vshrl.u32 %v10699, 16
      %v10739 = vor.u32 %v10737, %v10735
      %v10741 = vshll.u32 %v10700, 16
      %v10743 = vrot.slane %v10741, 1
      %v10744 = vsel %vm3270, %v10739, %v10743
      %v10766 = vunpack.c.l.b16 %v10657
      %v10767 = vunpack.c.l.b16 %v10658
      %v10768 = vunpack.c.l.b16 %v10659
      %v10769 = vunpack.c.l.b16 %v10660
      %v10770 = vunpack.c.l.b16 %v10661
      %v10771 = vunpack.c.l.b16 %v10662
      %v10772 = vunpack.c.l.b16 %v10663
      %v10773 = vunpack.c.l.b16 %v10664
      %v10774 = vunpack.c.l.b16 %v10665
      %v10775 = vunpack.c.l.b16 %v10666
      %v10776 = vunpack.c.l.b16 %v10667
      %v10777 = vunpack.c.l.b16 %v10668
      %v10778 = vunpack.c.l.b16 %v10669
      %v10779 = vunpack.c.l.b16 %v10670
      %v10780 = vunpack.c.l.b16 %v10671
      %v10781 = vunpack.c.l.b16 %v10672
      %v10782 = vpack.c.b16 %v10767, %v10766
      %v10783 = vpack.c.b16 %v10769, %v10768
      %v10784 = vpack.c.b16 %v10771, %v10770
      %v10785 = vpack.c.b16 %v10773, %v10772
      %v10786 = vpack.c.b16 %v10775, %v10774
      %v10787 = vpack.c.b16 %v10777, %v10776
      %v10788 = vpack.c.b16 %v10779, %v10778
      %v10789 = vpack.c.b16 %v10781, %v10780
      %10798 = vmatprep.subr.bf16.mxu0 0
      %10799 = vmatpush1.bf16.msra.mxu0 %v10789
      %10800 = vmatprep.subr.bf16.mxu0 0
      %10801 = vmatpush1.bf16.msra.mxu0 %v10788
      %10802 = vmatprep.subr.bf16.mxu0 0
      %10803 = vmatpush1.bf16.msra.mxu0 %v10787
      %10804 = vmatprep.subr.bf16.mxu0 0
      %10805 = vmatpush1.bf16.msra.mxu0 %v10786
      %10806 = vmatprep.subr.bf16.mxu0 0
      %10807 = vmatpush1.bf16.msra.mxu0 %v10785
      %10808 = vmatprep.subr.bf16.mxu0 0
      %10809 = vmatpush1.bf16.msra.mxu0 %v10784
      %10810 = vmatprep.subr.bf16.mxu0 0
      %10811 = vmatpush1.bf16.msra.mxu0 %v10783
      %10812 = vmatprep.subr.bf16.mxu0 0
      %10813 = vmatpush1.bf16.msra.mxu0 %v10782
      %10814 = vmatprep.subr.bf16.mxu0 0
      %10815 = vmatpush2.bf16.msra.mxu0 0
      %10816 = vmatprep.subr.bf16.mxu0 0
      %10817 = vmatpush2.bf16.msra.mxu0 0
      %10818 = vmatprep.subr.bf16.mxu0 0
      %10819 = vmatpush2.bf16.msra.mxu0 0
      %10820 = vmatprep.subr.bf16.mxu0 0
      %10821 = vmatpush2.bf16.msra.mxu0 0
      %10822 = vmatprep.subr.bf16.mxu0 0
      %10823 = vmatpush2.bf16.msra.mxu0 0
      %10824 = vmatprep.subr.bf16.mxu0 0
      %10825 = vmatpush2.bf16.msra.mxu0 0
      %10826 = vmatprep.subr.bf16.mxu0 0
      %10827 = vmatpush2.bf16.msra.mxu0 0
      %10828 = vmatprep.subr.bf16.mxu0 0
      %10829 = vmatpush2.bf16.msra.mxu0 0
      %10830 = vmatprep.mubr.bf16.mxu0 0
      %10831 = vmatmul.mubr.bf16.gmra.mxu0 %v10712
      %v10832 = vpop.f32.mrf.mxu0
      %v10833 = vadd.f32 0.0, %v10832
      %v10834 = vpop.f32.mrf.mxu0
      %v10835 = vpop.f32.mrf.mxu0
      %v10836 = vadd.f32 0.0, %v10835
      %v10837 = vpop.f32.mrf.mxu0
      %10838 = vmatprep.mubr.bf16.mxu0 0
      %10839 = vmatmul.mubr.bf16.gmra.mxu0 %v10720
      %v10840 = vpop.f32.mrf.mxu0
      %v10841 = vadd.f32 0.0, %v10840
      %v10842 = vpop.f32.mrf.mxu0
      %v10843 = vpop.f32.mrf.mxu0
      %v10844 = vadd.f32 0.0, %v10843
      %v10845 = vpop.f32.mrf.mxu0
      %10846 = vmatprep.mubr.bf16.mxu0 0
      %10847 = vmatmul.mubr.bf16.gmra.mxu0 %v10728
      %v10848 = vpop.f32.mrf.mxu0
      %v10849 = vadd.f32 0.0, %v10848
      %v10850 = vpop.f32.mrf.mxu0
      %v10851 = vpop.f32.mrf.mxu0
      %v10852 = vadd.f32 0.0, %v10851
      %v10853 = vpop.f32.mrf.mxu0
      %10854 = vmatprep.mubr.bf16.mxu0 0
      %10855 = vmatmul.mubr.bf16.gmra.mxu0 %v10736
      %v10856 = vpop.f32.mrf.mxu0
      %v10857 = vadd.f32 0.0, %v10856
      %v10858 = vpop.f32.mrf.mxu0
      %v10859 = vpop.f32.mrf.mxu0
      %v10860 = vadd.f32 0.0, %v10859
      %v10861 = vpop.f32.mrf.mxu0
      %10862 = vmatprep.mubr.bf16.mxu0 0
      %10863 = vmatmul.mubr.bf16.gmra.mxu0 %v10744
      %v10864 = vpop.f32.mrf.mxu0
      %v10865 = vadd.f32 0.0, %v10864
      %v10866 = vpop.f32.mrf.mxu0
      %v10867 = vpop.f32.mrf.mxu0
      %v10868 = vadd.f32 0.0, %v10867
      %v10869 = vpop.f32.mrf.mxu0
      %10870 = vdwg.mxu0
      %v10871 = vadd.f32 %v10635, %v10833
      %v10872 = vadd.f32 %v10636, %v10836
      %v10873 = vadd.f32 %v10637, %v10841
      %v10874 = vadd.f32 %v10638, %v10844
      %v10875 = vadd.f32 %v10639, %v10849
      %v10876 = vadd.f32 %v10640, %v10852
      %v10877 = vadd.f32 %v10641, %v10857
      %v10878 = vadd.f32 %v10642, %v10860
      %v10879 = vadd.f32 %v10643, %v10865
      %v10880 = vadd.f32 %v10644, %v10868
      %v10881 = vld [vmem:[#allocation3 + $0xc] sm:$0xe]
      %s10882 = scalar_lea.vmem %s2, 2176
      %v10883 = vld [vmem:[%s10882] sm:$0xf]
      %v10884 = vld [vmem:[%s10882 + $0x4] sm:$0xf]
      %v10885 = vld [vmem:[%s10882 + $0x8] sm:$0xf]
      %v10886 = vld [vmem:[%s10882 + $0xc] sm:$0xf]
      %v10887 = vld [vmem:[%s10882 + $0x10] sm:$0xf]
      %v10888 = vld [vmem:[%s10882 + $0x14] sm:$0xf]
      %v10889 = vld [vmem:[%s10882 + $0x18] sm:$0xf]
      %v10890 = vld [vmem:[%s10882 + $0x1c] sm:$0xf]
      %v10891 = vld [vmem:[%s10882 + $0x20] sm:$0xf]
      %v10892 = vld [vmem:[%s10882 + $0x24] sm:$0xf]
      %v10893 = vld [vmem:[%s10882 + $0x28] sm:$0xf]
      %v10894 = vld [vmem:[%s10882 + $0x2c] sm:$0xf]
      %v10895 = vld [vmem:[%s10882 + $0x30] sm:$0xf]
      %v10896 = vld [vmem:[%s10882 + $0x34] sm:$0xf]
      %v10897 = vld [vmem:[%s10882 + $0x38] sm:$0xf]
      %v10898 = vld [vmem:[%s10882 + $0x3c] sm:$0xf]
      %v10900 = vunpack.c.l.b16 %v10881
      %v10901 = vpack.c.b16 %v10685, %v10900
      %v10902 = vrot.slane %v10901, 1
      %v10903 = vrot.slane %v10696, 1
      %v10904 = vsel %vm4293, %v10902, %v10903
      %v10905 = vrot.slane %v10697, 1
      %v10906 = vsel %vm4293, %v10903, %v10905
      %v10907 = vrot.slane %v10698, 1
      %v10908 = vsel %vm4293, %v10905, %v10907
      %v10909 = vrot.slane %v10699, 1
      %v10910 = vsel %vm4293, %v10907, %v10909
      %v10911 = vrot.slane %v10700, 1
      %v10912 = vsel %vm4293, %v10909, %v10911
      %v10934 = vunpack.c.l.b16 %v10883
      %v10935 = vunpack.c.l.b16 %v10884
      %v10936 = vunpack.c.l.b16 %v10885
      %v10937 = vunpack.c.l.b16 %v10886
      %v10938 = vunpack.c.l.b16 %v10887
      %v10939 = vunpack.c.l.b16 %v10888
      %v10940 = vunpack.c.l.b16 %v10889
      %v10941 = vunpack.c.l.b16 %v10890
      %v10942 = vunpack.c.l.b16 %v10891
      %v10943 = vunpack.c.l.b16 %v10892
      %v10944 = vunpack.c.l.b16 %v10893
      %v10945 = vunpack.c.l.b16 %v10894
      %v10946 = vunpack.c.l.b16 %v10895
      %v10947 = vunpack.c.l.b16 %v10896
      %v10948 = vunpack.c.l.b16 %v10897
      %v10949 = vunpack.c.l.b16 %v10898
      %v10950 = vpack.c.b16 %v10935, %v10934
      %v10951 = vpack.c.b16 %v10937, %v10936
      %v10952 = vpack.c.b16 %v10939, %v10938
      %v10953 = vpack.c.b16 %v10941, %v10940
      %v10954 = vpack.c.b16 %v10943, %v10942
      %v10955 = vpack.c.b16 %v10945, %v10944
      %v10956 = vpack.c.b16 %v10947, %v10946
      %v10957 = vpack.c.b16 %v10949, %v10948
      %10966 = vmatprep.subr.bf16.mxu0 0
      %10967 = vmatpush1.bf16.msra.mxu0 %v10957
      %10968 = vmatprep.subr.bf16.mxu0 0
      %10969 = vmatpush1.bf16.msra.mxu0 %v10956
      %10970 = vmatprep.subr.bf16.mxu0 0
      %10971 = vmatpush1.bf16.msra.mxu0 %v10955
      %10972 = vmatprep.subr.bf16.mxu0 0
      %10973 = vmatpush1.bf16.msra.mxu0 %v10954
      %10974 = vmatprep.subr.bf16.mxu0 0
      %10975 = vmatpush1.bf16.msra.mxu0 %v10953
      %10976 = vmatprep.subr.bf16.mxu0 0
      %10977 = vmatpush1.bf16.msra.mxu0 %v10952
      %10978 = vmatprep.subr.bf16.mxu0 0
      %10979 = vmatpush1.bf16.msra.mxu0 %v10951
      %10980 = vmatprep.subr.bf16.mxu0 0
      %10981 = vmatpush1.bf16.msra.mxu0 %v10950
      %10982 = vmatprep.subr.bf16.mxu0 0
      %10983 = vmatpush2.bf16.msra.mxu0 0
      %10984 = vmatprep.subr.bf16.mxu0 0
      %10985 = vmatpush2.bf16.msra.mxu0 0
      %10986 = vmatprep.subr.bf16.mxu0 0
      %10987 = vmatpush2.bf16.msra.mxu0 0
      %10988 = vmatprep.subr.bf16.mxu0 0
      %10989 = vmatpush2.bf16.msra.mxu0 0
      %10990 = vmatprep.subr.bf16.mxu0 0
      %10991 = vmatpush2.bf16.msra.mxu0 0
      %10992 = vmatprep.subr.bf16.mxu0 0
      %10993 = vmatpush2.bf16.msra.mxu0 0
      %10994 = vmatprep.subr.bf16.mxu0 0
      %10995 = vmatpush2.bf16.msra.mxu0 0
      %10996 = vmatprep.subr.bf16.mxu0 0
      %10997 = vmatpush2.bf16.msra.mxu0 0
      %10998 = vmatprep.mubr.bf16.mxu0 0
      %10999 = vmatmul.mubr.bf16.gmra.mxu0 %v10904
      %v11000 = vpop.f32.mrf.mxu0
      %v11001 = vadd.f32 0.0, %v11000
      %v11002 = vpop.f32.mrf.mxu0
      %v11003 = vpop.f32.mrf.mxu0
      %v11004 = vadd.f32 0.0, %v11003
      %v11005 = vpop.f32.mrf.mxu0
      %11006 = vmatprep.mubr.bf16.mxu0 0
      %11007 = vmatmul.mubr.bf16.gmra.mxu0 %v10906
      %v11008 = vpop.f32.mrf.mxu0
      %v11009 = vadd.f32 0.0, %v11008
      %v11010 = vpop.f32.mrf.mxu0
      %v11011 = vpop.f32.mrf.mxu0
      %v11012 = vadd.f32 0.0, %v11011
      %v11013 = vpop.f32.mrf.mxu0
      %11014 = vmatprep.mubr.bf16.mxu0 0
      %11015 = vmatmul.mubr.bf16.gmra.mxu0 %v10908
      %v11016 = vpop.f32.mrf.mxu0
      %v11017 = vadd.f32 0.0, %v11016
      %v11018 = vpop.f32.mrf.mxu0
      %v11019 = vpop.f32.mrf.mxu0
      %v11020 = vadd.f32 0.0, %v11019
      %v11021 = vpop.f32.mrf.mxu0
      %11022 = vmatprep.mubr.bf16.mxu0 0
      %11023 = vmatmul.mubr.bf16.gmra.mxu0 %v10910
      %v11024 = vpop.f32.mrf.mxu0
      %v11025 = vadd.f32 0.0, %v11024
      %v11026 = vpop.f32.mrf.mxu0
      %v11027 = vpop.f32.mrf.mxu0
      %v11028 = vadd.f32 0.0, %v11027
      %v11029 = vpop.f32.mrf.mxu0
      %11030 = vmatprep.mubr.bf16.mxu0 0
      %11031 = vmatmul.mubr.bf16.gmra.mxu0 %v10912
      %v11032 = vpop.f32.mrf.mxu0
      %v11033 = vadd.f32 0.0, %v11032
      %v11034 = vpop.f32.mrf.mxu0
      %v11035 = vpop.f32.mrf.mxu0
      %v11036 = vadd.f32 0.0, %v11035
      %v11037 = vpop.f32.mrf.mxu0
      %11038 = vdwg.mxu0
      %v11039 = vadd.f32 %v10871, %v11001
      %v11040 = vadd.f32 %v10872, %v11004
      %v11041 = vadd.f32 %v10873, %v11009
      %v11042 = vadd.f32 %v10874, %v11012
      %v11043 = vadd.f32 %v10875, %v11017
      %v11044 = vadd.f32 %v10876, %v11020
      %v11045 = vadd.f32 %v10877, %v11025
      %v11046 = vadd.f32 %v10878, %v11028
      %v11047 = vadd.f32 %v10879, %v11033
      %v11048 = vadd.f32 %v10880, %v11036
      %v11049 = vld [vmem:[#allocation3 + $0x34] sm:$0x3]
      %s11050 = scalar_lea.vmem %s2, 2240
      %v11051 = vld [vmem:[%s11050] sm:$0xf]
      %v11052 = vld [vmem:[%s11050 + $0x4] sm:$0xf]
      %v11053 = vld [vmem:[%s11050 + $0x8] sm:$0xf]
      %v11054 = vld [vmem:[%s11050 + $0xc] sm:$0xf]
      %v11055 = vld [vmem:[%s11050 + $0x10] sm:$0xf]
      %v11056 = vld [vmem:[%s11050 + $0x14] sm:$0xf]
      %v11057 = vld [vmem:[%s11050 + $0x18] sm:$0xf]
      %v11058 = vld [vmem:[%s11050 + $0x1c] sm:$0xf]
      %v11059 = vld [vmem:[%s11050 + $0x20] sm:$0xf]
      %v11060 = vld [vmem:[%s11050 + $0x24] sm:$0xf]
      %v11061 = vld [vmem:[%s11050 + $0x28] sm:$0xf]
      %v11062 = vld [vmem:[%s11050 + $0x2c] sm:$0xf]
      %v11063 = vld [vmem:[%s11050 + $0x30] sm:$0xf]
      %v11064 = vld [vmem:[%s11050 + $0x34] sm:$0xf]
      %v11065 = vld [vmem:[%s11050 + $0x38] sm:$0xf]
      %v11066 = vld [vmem:[%s11050 + $0x3c] sm:$0xf]
      %v11068 = vunpack.c.l.b16 %v11049
      %v11069 = vpack.c.b16 %v11068, %v11068
      %v11071 = vshrl.u32 %v10901, 16
      %v11073 = vrot.slane %v11071, 1
      %v11074 = vshll.u32 %v10901, 16
      %v11076 = vrot.slane %v11074, 2
      %v11077 = vor.u32 %v11073, %v11076
      %v11078 = vrot.slane %v10713, 1
      %v11079 = vrot.slane %v10709, 2
      %v11080 = vor.u32 %v11078, %v11079
      %v11081 = vsel %vm4631, %v11077, %v11080
      %v11082 = vrot.slane %v10721, 1
      %v11083 = vrot.slane %v10717, 2
      %v11084 = vor.u32 %v11082, %v11083
      %v11085 = vsel %vm4631, %v11080, %v11084
      %v11086 = vrot.slane %v10729, 1
      %v11087 = vrot.slane %v10725, 2
      %v11088 = vor.u32 %v11086, %v11087
      %v11089 = vsel %vm4631, %v11084, %v11088
      %v11090 = vrot.slane %v10737, 1
      %v11091 = vrot.slane %v10733, 2
      %v11092 = vor.u32 %v11090, %v11091
      %v11093 = vsel %vm4631, %v11088, %v11092
      %v11095 = vshrl.u32 %v11069, 16
      %v11097 = vrot.slane %v11095, 1
      %v11098 = vshll.u32 %v11069, 16
      %v11100 = vrot.slane %v11098, 2
      %v11101 = vor.u32 %v11097, %v11100
      %v11102 = vsel %vm4631, %v11092, %v11101
      %v11124 = vunpack.c.l.b16 %v11051
      %v11125 = vunpack.c.l.b16 %v11052
      %v11126 = vunpack.c.l.b16 %v11053
      %v11127 = vunpack.c.l.b16 %v11054
      %v11128 = vunpack.c.l.b16 %v11055
      %v11129 = vunpack.c.l.b16 %v11056
      %v11130 = vunpack.c.l.b16 %v11057
      %v11131 = vunpack.c.l.b16 %v11058
      %v11132 = vunpack.c.l.b16 %v11059
      %v11133 = vunpack.c.l.b16 %v11060
      %v11134 = vunpack.c.l.b16 %v11061
      %v11135 = vunpack.c.l.b16 %v11062
      %v11136 = vunpack.c.l.b16 %v11063
      %v11137 = vunpack.c.l.b16 %v11064
      %v11138 = vunpack.c.l.b16 %v11065
      %v11139 = vunpack.c.l.b16 %v11066
      %v11140 = vpack.c.b16 %v11125, %v11124
      %v11141 = vpack.c.b16 %v11127, %v11126
      %v11142 = vpack.c.b16 %v11129, %v11128
      %v11143 = vpack.c.b16 %v11131, %v11130
      %v11144 = vpack.c.b16 %v11133, %v11132
      %v11145 = vpack.c.b16 %v11135, %v11134
      %v11146 = vpack.c.b16 %v11137, %v11136
      %v11147 = vpack.c.b16 %v11139, %v11138
      %11156 = vmatprep.subr.bf16.mxu0 0
      %11157 = vmatpush1.bf16.msra.mxu0 %v11147
      %11158 = vmatprep.subr.bf16.mxu0 0
      %11159 = vmatpush1.bf16.msra.mxu0 %v11146
      %11160 = vmatprep.subr.bf16.mxu0 0
      %11161 = vmatpush1.bf16.msra.mxu0 %v11145
      %11162 = vmatprep.subr.bf16.mxu0 0
      %11163 = vmatpush1.bf16.msra.mxu0 %v11144
      %11164 = vmatprep.subr.bf16.mxu0 0
      %11165 = vmatpush1.bf16.msra.mxu0 %v11143
      %11166 = vmatprep.subr.bf16.mxu0 0
      %11167 = vmatpush1.bf16.msra.mxu0 %v11142
      %11168 = vmatprep.subr.bf16.mxu0 0
      %11169 = vmatpush1.bf16.msra.mxu0 %v11141
      %11170 = vmatprep.subr.bf16.mxu0 0
      %11171 = vmatpush1.bf16.msra.mxu0 %v11140
      %11172 = vmatprep.subr.bf16.mxu0 0
      %11173 = vmatpush2.bf16.msra.mxu0 0
      %11174 = vmatprep.subr.bf16.mxu0 0
      %11175 = vmatpush2.bf16.msra.mxu0 0
      %11176 = vmatprep.subr.bf16.mxu0 0
      %11177 = vmatpush2.bf16.msra.mxu0 0
      %11178 = vmatprep.subr.bf16.mxu0 0
      %11179 = vmatpush2.bf16.msra.mxu0 0
      %11180 = vmatprep.subr.bf16.mxu0 0
      %11181 = vmatpush2.bf16.msra.mxu0 0
      %11182 = vmatprep.subr.bf16.mxu0 0
      %11183 = vmatpush2.bf16.msra.mxu0 0
      %11184 = vmatprep.subr.bf16.mxu0 0
      %11185 = vmatpush2.bf16.msra.mxu0 0
      %11186 = vmatprep.subr.bf16.mxu0 0
      %11187 = vmatpush2.bf16.msra.mxu0 0
      %11188 = vmatprep.mubr.bf16.mxu0 0
      %11189 = vmatmul.mubr.bf16.gmra.mxu0 %v11081
      %v11190 = vpop.f32.mrf.mxu0
      %v11191 = vadd.f32 0.0, %v11190
      %v11192 = vpop.f32.mrf.mxu0
      %v11193 = vpop.f32.mrf.mxu0
      %v11194 = vadd.f32 0.0, %v11193
      %v11195 = vpop.f32.mrf.mxu0
      %11196 = vmatprep.mubr.bf16.mxu0 0
      %11197 = vmatmul.mubr.bf16.gmra.mxu0 %v11085
      %v11198 = vpop.f32.mrf.mxu0
      %v11199 = vadd.f32 0.0, %v11198
      %v11200 = vpop.f32.mrf.mxu0
      %v11201 = vpop.f32.mrf.mxu0
      %v11202 = vadd.f32 0.0, %v11201
      %v11203 = vpop.f32.mrf.mxu0
      %11204 = vmatprep.mubr.bf16.mxu0 0
      %11205 = vmatmul.mubr.bf16.gmra.mxu0 %v11089
      %v11206 = vpop.f32.mrf.mxu0
      %v11207 = vadd.f32 0.0, %v11206
      %v11208 = vpop.f32.mrf.mxu0
      %v11209 = vpop.f32.mrf.mxu0
      %v11210 = vadd.f32 0.0, %v11209
      %v11211 = vpop.f32.mrf.mxu0
      %11212 = vmatprep.mubr.bf16.mxu0 0
      %11213 = vmatmul.mubr.bf16.gmra.mxu0 %v11093
      %v11214 = vpop.f32.mrf.mxu0
      %v11215 = vadd.f32 0.0, %v11214
      %v11216 = vpop.f32.mrf.mxu0
      %v11217 = vpop.f32.mrf.mxu0
      %v11218 = vadd.f32 0.0, %v11217
      %v11219 = vpop.f32.mrf.mxu0
      %11220 = vmatprep.mubr.bf16.mxu0 0
      %11221 = vmatmul.mubr.bf16.gmra.mxu0 %v11102
      %v11222 = vpop.f32.mrf.mxu0
      %v11223 = vadd.f32 0.0, %v11222
      %v11224 = vpop.f32.mrf.mxu0
      %v11225 = vpop.f32.mrf.mxu0
      %v11226 = vadd.f32 0.0, %v11225
      %v11227 = vpop.f32.mrf.mxu0
      %11228 = vdwg.mxu0
      %v11229 = vadd.f32 %v11039, %v11191
      %v11230 = vadd.f32 %v11040, %v11194
      %v11231 = vadd.f32 %v11041, %v11199
      %v11232 = vadd.f32 %v11042, %v11202
      %v11233 = vadd.f32 %v11043, %v11207
      %v11234 = vadd.f32 %v11044, %v11210
      %v11235 = vadd.f32 %v11045, %v11215
      %v11236 = vadd.f32 %v11046, %v11218
      %v11237 = vadd.f32 %v11047, %v11223
      %v11238 = vadd.f32 %v11048, %v11226
      %11239 = vst [vmem:[%s278] sm:$0xff] %v11229
      %11240 = vst [vmem:[%s278 + $0x8] sm:$0xff] %v11230
      %11241 = vst [vmem:[%s278 + $0x10] sm:$0xff] %v11231
      %11242 = vst [vmem:[%s278 + $0x18] sm:$0xff] %v11232
      %11243 = vst [vmem:[%s278 + $0x20] sm:$0xff] %v11233
      %11244 = vst [vmem:[%s278 + $0x28] sm:$0xff] %v11234
      %11245 = vst [vmem:[%s278 + $0x30] sm:$0xff] %v11235
      %11246 = vst [vmem:[%s278 + $0x38] sm:$0xff] %v11236
      %11247 = vst [vmem:[%s278 + $0x40] sm:$0xff] %v11237
      %11248 = vst [vmem:[%s278 + $0x48] sm:$0xff] %v11238
      %p11249 = scmp.lt.s32.totalorder %s18, 1
      %s11250 = scalar_select %p11249, %s18, 1
      %s11251 = smul.addr %s11250, 10
      %s11252 = smul.addr %s11251, 8
      %s11253 = scalar_lea.vmem %s7, %s11252
      // Predicated region
      $region49: #{_discriminator_forward_impl.1} parent=47 // pred_check
        %p11254 = pneg %p188
      $region50: #{_discriminator_forward_impl.1} parent=47 // pred_check_branch
        %11256 = sbr.rel (%p11254) target = $region52
      $region51: #{_discriminator_forward_impl.1} parent=47 // pred_region
        _
      $region52: #{_discriminator_forward_impl.1} parent=47 // pred_fallthru
        _
    $region48: #{_discriminator_forward_impl.1} parent=5 // pred_fallthru
      _
    %p11257 = scmp.le.s32.totalorder 2, %s13
    // Predicated region
    $region53: #{_discriminator_forward_impl.1} parent=5 // pred_check
      %p11258 = pneg %p11257
    $region54: #{_discriminator_forward_impl.1} parent=5 // pred_check_branch
      %11260 = sbr.rel (%p11258) target = $region56
    $region55: #{_discriminator_forward_impl.1} parent=5 // pred_region
      %s11261 = ssub.s32 %s13, 2
      // Predicated region
      $region57: #{_discriminator_forward_impl.1} parent=55 // pred_check
        %p11262 = pneg %p194
      $region58: #{_discriminator_forward_impl.1} parent=55 // pred_check_branch
        %11264 = sbr.rel (%p11262) target = $region60
      $region59: #{_discriminator_forward_impl.1} parent=55 // pred_region
        %p11265 = scmp.lt.s32.totalorder %s19, 1
        %s11266 = scalar_select %p11265, %s19, 1
        %s11267 = smul.addr %s11266, 10
        %s11268 = smul.addr %s11267, 8
        %s11269 = scalar_lea.vmem %s7, %s11268
      $region60: #{_discriminator_forward_impl.1} parent=55 // pred_fallthru
        _
    $region56: #{_discriminator_forward_impl.1} parent=5 // pred_fallthru
      _
  $region6: #{_discriminator_forward_impl.1} parent=0 // loop_footer
    %s17 = sadd.s32 1, %s13
  $region7: #{_discriminator_forward_impl.1} parent=0 // loop_footer_branch
    %12 = sbr.rel target = $region3
  $region8: #{_discriminator_forward_impl.1} parent=0 // loop_exit
    _

</llo_original>
